<compile_context>
chip_gen: v6e
topology: v6e:2x2x1
jax: 0.10.0
libtpu: 0.0.40
codegen_flags: <defaults>
</compile_context>

<pallas_src>
import functools

import jax
import jax.numpy as jnp
from jax import lax
from jax.experimental import pallas as pl
from jax.experimental.pallas import tpu as pltpu

LANES = 128


def _round_up(v, m):
    return (v + m - 1) // m * m


# ----------------------------------------------------------------------------
# Fused RB kernel (one batch element per grid step)
# ----------------------------------------------------------------------------
def _rb_kernel(x_ref, mask_ref, w11_ref, b11_ref, w12_ref, b12_ref,
               w21_ref, b21_ref, o_ref, x1s_ref, *, k, pad, Wp, Np, G):
    """Refs:
      x_ref   : (1, Np+2G, Cp) f32  zero-padded flattened image + G guard rows/side
      mask_ref: (Np, 1)        f32  1.0 on real pixels, 0.0 on the spatial pad ring
      w*_ref  : bf16 weights (BN scale folded);  b*_ref: (1, Cp) f32 folded BN bias
      o_ref   : (1, Np, Cp)    f32  output on the padded grid (pad ring forced to 0)
      x1s_ref : (Np+2G, Cp)    f32  VMEM scratch holding the zero-padded x1
    """
    mask = mask_ref[...]                                    # (Np, 1)

    def conv_taps(load, w_ref):
        acc = None
        for t in range(k * k):                              # unrolled, static taps
            dy, dx = t // k, t % k
            s = (dy - pad) * Wp + (dx - pad)                # uniform flat shift
            xs = load(G + s).astype(jnp.bfloat16)           # (Np, Cp)
            y = jnp.dot(xs, w_ref[t], preferred_element_type=jnp.float32)
            acc = y if acc is None else acc + y
        return acc

    load_x = lambda start: x_ref[0, pl.ds(start, Np), :]
    load_x1 = lambda start: x1s_ref[pl.ds(start, Np), :]

    # x1 = relu(conv11(x)); zero its pad ring so conv12 sees true zero padding.
    x1 = jnp.maximum(conv_taps(load_x, w11_ref) + b11_ref[...], 0.0) * mask

    x1s_ref[...] = jnp.zeros(x1s_ref.shape, x1s_ref.dtype)   # guards + pad ring = 0
    x1s_ref[pl.ds(G, Np), :] = x1

    # x1 = relu(conv12(x1))
    x1 = jnp.maximum(conv_taps(load_x1, w12_ref) + b12_ref[...], 0.0)

    # x2 = relu(conv21(x)) -- the 1x1 conv is simply the zero-shift matmul.
    xc = x_ref[0, pl.ds(G, Np), :].astype(jnp.bfloat16)
    x2 = jnp.maximum(
        jnp.dot(xc, w21_ref[...], preferred_element_type=jnp.float32)
        + b21_ref[...], 0.0)

    # residual add fused; mask keeps the (discarded) pad-ring rows at exactly 0.
    o_ref[0] = (x1 + x2) * mask


# ----------------------------------------------------------------------------
# Wrapper: NCHW f32 in / NCHW f32 out
# ----------------------------------------------------------------------------
def rb_forward(params, x_nchw):
    k = params["kernel_size"]
    pad = k // 2
    Cp = params["cp"]
    B, C, H, W = x_nchw.shape
    Hp, Wp = H + 2 * pad, W + 2 * pad
    Np = Hp * Wp
    G = pad * Wp + pad                      # max |tap shift| -> guard rows per side
    NpExt = Np + 2 * G

    # NCHW -> NHWC, pad channels to a lane-dense multiple of 128, pad spatially,
    # flatten (Hp, Wp) and add G zero guard rows on both ends of the flat axis.
    x = jnp.transpose(x_nchw, (0, 2, 3, 1)).astype(jnp.float32)
    x = jnp.pad(x, ((0, 0), (pad, pad), (pad, pad), (0, Cp - C)))
    x = x.reshape(B, Np, Cp)
    x = jnp.pad(x, ((0, 0), (G, G), (0, 0)))

    ii = jnp.arange(Hp)
    jj = jnp.arange(Wp)
    interior = (((ii >= pad) & (ii < pad + H))[:, None]
                & ((jj >= pad) & (jj < pad + W))[None, :])
    mask = interior.astype(jnp.float32).reshape(Np, 1)

    kernel = functools.partial(_rb_kernel, k=k, pad=pad, Wp=Wp, Np=Np, G=G)

    out = pl.pallas_call(
        kernel,
        out_shape=jax.ShapeDtypeStruct((B, Np, Cp), jnp.float32),
        grid=(B,),
        in_specs=[
            pl.BlockSpec((1, NpExt, Cp), lambda b: (b, 0, 0)),    # x (per batch)
            pl.BlockSpec((Np, 1), lambda b: (0, 0)),              # interior mask
            pl.BlockSpec((k * k, Cp, Cp), lambda b: (0, 0, 0)),   # w11 (bf16)
            pl.BlockSpec((1, Cp), lambda b: (0, 0)),              # b11
            pl.BlockSpec((k * k, Cp, Cp), lambda b: (0, 0, 0)),   # w12 (bf16)
            pl.BlockSpec((1, Cp), lambda b: (0, 0)),              # b12
            pl.BlockSpec((Cp, Cp), lambda b: (0, 0)),             # w21 (bf16)
            pl.BlockSpec((1, Cp), lambda b: (0, 0)),              # b21
        ],
        out_specs=pl.BlockSpec((1, Np, Cp), lambda b: (b, 0, 0)),
        scratch_shapes=[pltpu.VMEM((NpExt, Cp), jnp.float32)],
        compiler_params=pltpu.CompilerParams(
            dimension_semantics=("parallel",)),
    )(x, mask, params["w11"], params["b11"], params["w12"], params["b12"],
      params["w21"], params["b21"])

    out = out.reshape(B, Hp, Wp, Cp)[:, pad:pad + H, pad:pad + W, :C]
    return jnp.transpose(out, (0, 3, 1, 2))


# ----------------------------------------------------------------------------
# Parameters (synthetic, deterministic) with BatchNorm folded into the weights
# ----------------------------------------------------------------------------
def _make_conv_bn(key, cin, cout, k, cp, eps=1e-5):
    kw, kg, kb, km, kv = jax.random.split(key, 5)
    fan = k * k * cin
    w = jax.random.normal(kw, (k, k, cin, cout), jnp.float32) / jnp.sqrt(fan * 1.0)
    gamma = 1.0 + 0.1 * jax.random.normal(kg, (cout,), jnp.float32)
    beta = 0.1 * jax.random.normal(kb, (cout,), jnp.float32)
    mean = 0.1 * jax.random.normal(km, (cout,), jnp.float32)
    var = jax.random.uniform(kv, (cout,), jnp.float32, minval=0.5, maxval=1.5)
    scale = gamma / jnp.sqrt(var + eps)
    w_fold = w * scale                       # fold BN scale into conv weights
    b_fold = beta - mean * scale
    w_pad = jnp.zeros((k, k, cp, cp), jnp.float32).at[:, :, :cin, :cout].set(w_fold)
    b_pad = jnp.zeros((cp,), jnp.float32).at[:cout].set(b_fold).reshape(1, cp)
    return {
        "w": w_pad.reshape(k * k, cp, cp).astype(jnp.bfloat16),  # kernel format
        "b": b_pad,
        "w_f32": w_fold,                                         # reference format
        "b_f32": b_fold,
    }


def make_rb_params(key, in_channels, kernel_size):
    cp = _round_up(max(in_channels, LANES), LANES)
    k1, k2, k3 = jax.random.split(key, 3)
    c11 = _make_conv_bn(k1, in_channels, in_channels, kernel_size, cp)
    c12 = _make_conv_bn(k2, in_channels, in_channels, kernel_size, cp)
    c21 = _make_conv_bn(k3, in_channels, in_channels, 1, cp)
    return {
        "kernel_size": kernel_size, "cp": cp,
        "w11": c11["w"], "b11": c11["b"],
        "w12": c12["w"], "b12": c12["b"],
        "w21": c21["w"].reshape(cp, cp), "b21": c21["b"],
        "ref": {"c11": c11, "c12": c12, "c21": c21},
    }


# ----------------------------------------------------------------------------
# Pure-JAX reference (f32) for correctness checking
# ----------------------------------------------------------------------------
def rb_reference(params, x_nchw):
    x = jnp.transpose(x_nchw, (0, 2, 3, 1)).astype(jnp.float32)

    def cbr(v, cv):
        y = lax.conv_general_dilated(
            v, cv["w_f32"], (1, 1), "SAME",
            dimension_numbers=("NHWC", "HWIO", "NHWC"),
            precision=lax.Precision.HIGHEST)
        return jnp.maximum(y + cv["b_f32"], 0.0)

    r = params["ref"]
    x1 = cbr(cbr(x, r["c11"]), r["c12"])
    x2 = cbr(x, r["c21"])
    return jnp.transpose(x1 + x2, (0, 3, 1, 2))


if __name__ == "__main__":
    key = jax.random.PRNGKey(0)
    pkey, xkey = jax.random.split(key)
    B, C, H, W = 2, 32, 16, 16
    kernel_size = 3

    params = make_rb_params(pkey, C, kernel_size)
    x = jax.random.normal(xkey, (B, C, H, W), jnp.float32)

    fwd = jax.jit(lambda inp: rb_forward(params, inp))
    out = jax.block_until_ready(fwd(x))

    assert out.shape == (B, C, H, W), out.shape
    assert bool(jnp.all(jnp.isfinite(out)))

    ref = jax.block_until_ready(rb_reference(params, x))
    err = float(jnp.max(jnp.abs(out - ref)))
    scale = float(jnp.max(jnp.abs(ref)))
    # bf16 MXU vs f32 reference tolerance
    assert err <= 0.05 * scale + 0.05, (err, scale)

    print("KERNEL_OK")
</pallas_src>

<mosaic_0001>
module attributes {stable_mosaic.version = 11 : i64} {
  func.func @_rb_kernel(%arg0: i32, %arg1: memref<1x362x128xf32, #tpu.memory_space<vmem>>, %arg2: memref<324x1xf32, #tpu.memory_space<vmem>>, %arg3: memref<9x128x128xbf16, #tpu.memory_space<vmem>>, %arg4: memref<1x128xf32, #tpu.memory_space<vmem>>, %arg5: memref<9x128x128xbf16, #tpu.memory_space<vmem>>, %arg6: memref<1x128xf32, #tpu.memory_space<vmem>>, %arg7: memref<128x128xbf16, #tpu.memory_space<vmem>>, %arg8: memref<1x128xf32, #tpu.memory_space<vmem>>, %arg9: memref<1x324x128xf32, #tpu.memory_space<vmem>>, %arg10: memref<362x128xf32, #tpu.memory_space<vmem>>) attributes {dimension_semantics = [#tpu.dimension_semantics<parallel>], iteration_bounds = array<i64: 2>, scalar_prefetch = 0 : i64, scratch_operands = 1 : i64, tpu.core_type = #tpu.core_type<tc>, window_params = [{transform_indices = @transform_0, window_bounds = array<i64: 1, 362, 128>}, {pipeline_mode = #tpu.pipeline_mode<synchronous>, transform_indices = @transform_1, window_bounds = array<i64: 324, 1>}, {pipeline_mode = #tpu.pipeline_mode<synchronous>, transform_indices = @transform_2, window_bounds = array<i64: 9, 128, 128>}, {pipeline_mode = #tpu.pipeline_mode<synchronous>, transform_indices = @transform_3, window_bounds = array<i64: 1, 128>}, {pipeline_mode = #tpu.pipeline_mode<synchronous>, transform_indices = @transform_4, window_bounds = array<i64: 9, 128, 128>}, {pipeline_mode = #tpu.pipeline_mode<synchronous>, transform_indices = @transform_5, window_bounds = array<i64: 1, 128>}, {pipeline_mode = #tpu.pipeline_mode<synchronous>, transform_indices = @transform_6, window_bounds = array<i64: 128, 128>}, {pipeline_mode = #tpu.pipeline_mode<synchronous>, transform_indices = @transform_7, window_bounds = array<i64: 1, 128>}, {transform_indices = @transform_8, window_bounds = array<i64: 1, 324, 128>}]} {
    %c0 = arith.constant 0 : index
    %c0_0 = arith.constant 0 : index
    %0 = vector.load %arg2[%c0, %c0_0] : memref<324x1xf32, #tpu.memory_space<vmem>>, vector<324x1xf32>
    %c0_1 = arith.constant 0 : index
    %c0_2 = arith.constant 0 : index
    %c0_3 = arith.constant 0 : index
    %1 = vector.load %arg1[%c0_1, %c0_2, %c0_3] : memref<1x362x128xf32, #tpu.memory_space<vmem>>, vector<1x324x128xf32>
    %2 = vector.shape_cast %1 : vector<1x324x128xf32> to vector<324x128xf32>
    %3 = arith.truncf %2 : vector<324x128xf32> to vector<324x128xbf16>
    %c0_4 = arith.constant 0 : index
    %c0_5 = arith.constant 0 : index
    %c0_6 = arith.constant 0 : index
    %4 = vector.load %arg3[%c0_4, %c0_5, %c0_6] : memref<9x128x128xbf16, #tpu.memory_space<vmem>>, vector<1x128x128xbf16>
    %5 = vector.shape_cast %4 : vector<1x128x128xbf16> to vector<128x128xbf16>
    %cst = arith.constant dense<0.000000e+00> : vector<324x128xf32>
    %6 = tpu.matmul %3, %5, %cst {dimension_numbers = #tpu.dot_dimension_numbers<[1], [0], [0], [1], [0, 0, 1, 1], [], []>} : vector<324x128xbf16>, vector<128x128xbf16>, vector<324x128xf32> -> vector<324x128xf32>
    %c0_7 = arith.constant 0 : index
    %c1 = arith.constant 1 : index
    %c0_8 = arith.constant 0 : index
    %7 = vector.load %arg1[%c0_7, %c1, %c0_8] : memref<1x362x128xf32, #tpu.memory_space<vmem>>, vector<1x324x128xf32>
    %8 = vector.shape_cast %7 : vector<1x324x128xf32> to vector<324x128xf32>
    %9 = arith.truncf %8 : vector<324x128xf32> to vector<324x128xbf16>
    %c1_9 = arith.constant 1 : index
    %c0_10 = arith.constant 0 : index
    %c0_11 = arith.constant 0 : index
    %10 = vector.load %arg3[%c1_9, %c0_10, %c0_11] : memref<9x128x128xbf16, #tpu.memory_space<vmem>>, vector<1x128x128xbf16>
    %11 = vector.shape_cast %10 : vector<1x128x128xbf16> to vector<128x128xbf16>
    %cst_12 = arith.constant dense<0.000000e+00> : vector<324x128xf32>
    %12 = tpu.matmul %9, %11, %cst_12 {dimension_numbers = #tpu.dot_dimension_numbers<[1], [0], [0], [1], [0, 0, 1, 1], [], []>} : vector<324x128xbf16>, vector<128x128xbf16>, vector<324x128xf32> -> vector<324x128xf32>
    %13 = arith.addf %6, %12 : vector<324x128xf32>
    %c0_13 = arith.constant 0 : index
    %c2 = arith.constant 2 : index
    %c0_14 = arith.constant 0 : index
    %14 = vector.load %arg1[%c0_13, %c2, %c0_14] : memref<1x362x128xf32, #tpu.memory_space<vmem>>, vector<1x324x128xf32>
    %15 = vector.shape_cast %14 : vector<1x324x128xf32> to vector<324x128xf32>
    %16 = arith.truncf %15 : vector<324x128xf32> to vector<324x128xbf16>
    %c2_15 = arith.constant 2 : index
    %c0_16 = arith.constant 0 : index
    %c0_17 = arith.constant 0 : index
    %17 = vector.load %arg3[%c2_15, %c0_16, %c0_17] : memref<9x128x128xbf16, #tpu.memory_space<vmem>>, vector<1x128x128xbf16>
    %18 = vector.shape_cast %17 : vector<1x128x128xbf16> to vector<128x128xbf16>
    %cst_18 = arith.constant dense<0.000000e+00> : vector<324x128xf32>
    %19 = tpu.matmul %16, %18, %cst_18 {dimension_numbers = #tpu.dot_dimension_numbers<[1], [0], [0], [1], [0, 0, 1, 1], [], []>} : vector<324x128xbf16>, vector<128x128xbf16>, vector<324x128xf32> -> vector<324x128xf32>
    %20 = arith.addf %13, %19 : vector<324x128xf32>
    %c0_19 = arith.constant 0 : index
    %c18 = arith.constant 18 : index
    %c0_20 = arith.constant 0 : index
    %21 = vector.load %arg1[%c0_19, %c18, %c0_20] : memref<1x362x128xf32, #tpu.memory_space<vmem>>, vector<1x324x128xf32>
    %22 = vector.shape_cast %21 : vector<1x324x128xf32> to vector<324x128xf32>
    %23 = arith.truncf %22 : vector<324x128xf32> to vector<324x128xbf16>
    %c3 = arith.constant 3 : index
    %c0_21 = arith.constant 0 : index
    %c0_22 = arith.constant 0 : index
    %24 = vector.load %arg3[%c3, %c0_21, %c0_22] : memref<9x128x128xbf16, #tpu.memory_space<vmem>>, vector<1x128x128xbf16>
    %25 = vector.shape_cast %24 : vector<1x128x128xbf16> to vector<128x128xbf16>
    %cst_23 = arith.constant dense<0.000000e+00> : vector<324x128xf32>
    %26 = tpu.matmul %23, %25, %cst_23 {dimension_numbers = #tpu.dot_dimension_numbers<[1], [0], [0], [1], [0, 0, 1, 1], [], []>} : vector<324x128xbf16>, vector<128x128xbf16>, vector<324x128xf32> -> vector<324x128xf32>
    %27 = arith.addf %20, %26 : vector<324x128xf32>
    %c0_24 = arith.constant 0 : index
    %c19 = arith.constant 19 : index
    %c0_25 = arith.constant 0 : index
    %28 = vector.load %arg1[%c0_24, %c19, %c0_25] : memref<1x362x128xf32, #tpu.memory_space<vmem>>, vector<1x324x128xf32>
    %29 = vector.shape_cast %28 : vector<1x324x128xf32> to vector<324x128xf32>
    %30 = arith.truncf %29 : vector<324x128xf32> to vector<324x128xbf16>
    %c4 = arith.constant 4 : index
    %c0_26 = arith.constant 0 : index
    %c0_27 = arith.constant 0 : index
    %31 = vector.load %arg3[%c4, %c0_26, %c0_27] : memref<9x128x128xbf16, #tpu.memory_space<vmem>>, vector<1x128x128xbf16>
    %32 = vector.shape_cast %31 : vector<1x128x128xbf16> to vector<128x128xbf16>
    %cst_28 = arith.constant dense<0.000000e+00> : vector<324x128xf32>
    %33 = tpu.matmul %30, %32, %cst_28 {dimension_numbers = #tpu.dot_dimension_numbers<[1], [0], [0], [1], [0, 0, 1, 1], [], []>} : vector<324x128xbf16>, vector<128x128xbf16>, vector<324x128xf32> -> vector<324x128xf32>
    %34 = arith.addf %27, %33 : vector<324x128xf32>
    %c0_29 = arith.constant 0 : index
    %c20 = arith.constant 20 : index
    %c0_30 = arith.constant 0 : index
    %35 = vector.load %arg1[%c0_29, %c20, %c0_30] : memref<1x362x128xf32, #tpu.memory_space<vmem>>, vector<1x324x128xf32>
    %36 = vector.shape_cast %35 : vector<1x324x128xf32> to vector<324x128xf32>
    %37 = arith.truncf %36 : vector<324x128xf32> to vector<324x128xbf16>
    %c5 = arith.constant 5 : index
    %c0_31 = arith.constant 0 : index
    %c0_32 = arith.constant 0 : index
    %38 = vector.load %arg3[%c5, %c0_31, %c0_32] : memref<9x128x128xbf16, #tpu.memory_space<vmem>>, vector<1x128x128xbf16>
    %39 = vector.shape_cast %38 : vector<1x128x128xbf16> to vector<128x128xbf16>
    %cst_33 = arith.constant dense<0.000000e+00> : vector<324x128xf32>
    %40 = tpu.matmul %37, %39, %cst_33 {dimension_numbers = #tpu.dot_dimension_numbers<[1], [0], [0], [1], [0, 0, 1, 1], [], []>} : vector<324x128xbf16>, vector<128x128xbf16>, vector<324x128xf32> -> vector<324x128xf32>
    %41 = arith.addf %34, %40 : vector<324x128xf32>
    %c0_34 = arith.constant 0 : index
    %c36 = arith.constant 36 : index
    %c0_35 = arith.constant 0 : index
    %42 = vector.load %arg1[%c0_34, %c36, %c0_35] : memref<1x362x128xf32, #tpu.memory_space<vmem>>, vector<1x324x128xf32>
    %43 = vector.shape_cast %42 : vector<1x324x128xf32> to vector<324x128xf32>
    %44 = arith.truncf %43 : vector<324x128xf32> to vector<324x128xbf16>
    %c6 = arith.constant 6 : index
    %c0_36 = arith.constant 0 : index
    %c0_37 = arith.constant 0 : index
    %45 = vector.load %arg3[%c6, %c0_36, %c0_37] : memref<9x128x128xbf16, #tpu.memory_space<vmem>>, vector<1x128x128xbf16>
    %46 = vector.shape_cast %45 : vector<1x128x128xbf16> to vector<128x128xbf16>
    %cst_38 = arith.constant dense<0.000000e+00> : vector<324x128xf32>
    %47 = tpu.matmul %44, %46, %cst_38 {dimension_numbers = #tpu.dot_dimension_numbers<[1], [0], [0], [1], [0, 0, 1, 1], [], []>} : vector<324x128xbf16>, vector<128x128xbf16>, vector<324x128xf32> -> vector<324x128xf32>
    %48 = arith.addf %41, %47 : vector<324x128xf32>
    %c0_39 = arith.constant 0 : index
    %c37 = arith.constant 37 : index
    %c0_40 = arith.constant 0 : index
    %49 = vector.load %arg1[%c0_39, %c37, %c0_40] : memref<1x362x128xf32, #tpu.memory_space<vmem>>, vector<1x324x128xf32>
    %50 = vector.shape_cast %49 : vector<1x324x128xf32> to vector<324x128xf32>
    %51 = arith.truncf %50 : vector<324x128xf32> to vector<324x128xbf16>
    %c7 = arith.constant 7 : index
    %c0_41 = arith.constant 0 : index
    %c0_42 = arith.constant 0 : index
    %52 = vector.load %arg3[%c7, %c0_41, %c0_42] : memref<9x128x128xbf16, #tpu.memory_space<vmem>>, vector<1x128x128xbf16>
    %53 = vector.shape_cast %52 : vector<1x128x128xbf16> to vector<128x128xbf16>
    %cst_43 = arith.constant dense<0.000000e+00> : vector<324x128xf32>
    %54 = tpu.matmul %51, %53, %cst_43 {dimension_numbers = #tpu.dot_dimension_numbers<[1], [0], [0], [1], [0, 0, 1, 1], [], []>} : vector<324x128xbf16>, vector<128x128xbf16>, vector<324x128xf32> -> vector<324x128xf32>
    %55 = arith.addf %48, %54 : vector<324x128xf32>
    %c0_44 = arith.constant 0 : index
    %c38 = arith.constant 38 : index
    %c0_45 = arith.constant 0 : index
    %56 = vector.load %arg1[%c0_44, %c38, %c0_45] : memref<1x362x128xf32, #tpu.memory_space<vmem>>, vector<1x324x128xf32>
    %57 = vector.shape_cast %56 : vector<1x324x128xf32> to vector<324x128xf32>
    %58 = arith.truncf %57 : vector<324x128xf32> to vector<324x128xbf16>
    %c8 = arith.constant 8 : index
    %c0_46 = arith.constant 0 : index
    %c0_47 = arith.constant 0 : index
    %59 = vector.load %arg3[%c8, %c0_46, %c0_47] : memref<9x128x128xbf16, #tpu.memory_space<vmem>>, vector<1x128x128xbf16>
    %60 = vector.shape_cast %59 : vector<1x128x128xbf16> to vector<128x128xbf16>
    %cst_48 = arith.constant dense<0.000000e+00> : vector<324x128xf32>
    %61 = tpu.matmul %58, %60, %cst_48 {dimension_numbers = #tpu.dot_dimension_numbers<[1], [0], [0], [1], [0, 0, 1, 1], [], []>} : vector<324x128xbf16>, vector<128x128xbf16>, vector<324x128xf32> -> vector<324x128xf32>
    %62 = arith.addf %55, %61 : vector<324x128xf32>
    %c0_49 = arith.constant 0 : index
    %c0_50 = arith.constant 0 : index
    %63 = vector.load %arg4[%c0_49, %c0_50] : memref<1x128xf32, #tpu.memory_space<vmem>>, vector<1x128xf32>
    %64 = vector.broadcast %63 : vector<1x128xf32> to vector<324x128xf32>
    %65 = arith.addf %62, %64 : vector<324x128xf32>
    %cst_51 = arith.constant 0.000000e+00 : f32
    %66 = vector.broadcast %cst_51 : f32 to vector<324x128xf32>
    %67 = arith.maximumf %65, %66 : vector<324x128xf32>
    %68 = vector.broadcast %0 : vector<324x1xf32> to vector<324x128xf32>
    %69 = arith.mulf %67, %68 : vector<324x128xf32>
    %cst_52 = arith.constant 0.000000e+00 : f32
    %70 = vector.broadcast %cst_52 : f32 to vector<362x128xf32>
    %c0_53 = arith.constant 0 : index
    %c0_54 = arith.constant 0 : index
    %71 = vector.load %arg10[%c0_53, %c0_54] : memref<362x128xf32, #tpu.memory_space<vmem>>, vector<362x128xf32>
    tpu.vector_store %arg10[%c0_53, %c0_54], %70 {strides = array<i32>} : memref<362x128xf32, #tpu.memory_space<vmem>>, vector<362x128xf32>,
    %c19_55 = arith.constant 19 : index
    %c0_56 = arith.constant 0 : index
    %72 = vector.load %arg10[%c19_55, %c0_56] : memref<362x128xf32, #tpu.memory_space<vmem>>, vector<324x128xf32>
    tpu.vector_store %arg10[%c19_55, %c0_56], %69 {strides = array<i32>} : memref<362x128xf32, #tpu.memory_space<vmem>>, vector<324x128xf32>,
    %c0_57 = arith.constant 0 : index
    %c0_58 = arith.constant 0 : index
    %73 = vector.load %arg10[%c0_57, %c0_58] : memref<362x128xf32, #tpu.memory_space<vmem>>, vector<324x128xf32>
    %74 = arith.truncf %73 : vector<324x128xf32> to vector<324x128xbf16>
    %c0_59 = arith.constant 0 : index
    %c0_60 = arith.constant 0 : index
    %c0_61 = arith.constant 0 : index
    %75 = vector.load %arg5[%c0_59, %c0_60, %c0_61] : memref<9x128x128xbf16, #tpu.memory_space<vmem>>, vector<1x128x128xbf16>
    %76 = vector.shape_cast %75 : vector<1x128x128xbf16> to vector<128x128xbf16>
    %cst_62 = arith.constant dense<0.000000e+00> : vector<324x128xf32>
    %77 = tpu.matmul %74, %76, %cst_62 {dimension_numbers = #tpu.dot_dimension_numbers<[1], [0], [0], [1], [0, 0, 1, 1], [], []>} : vector<324x128xbf16>, vector<128x128xbf16>, vector<324x128xf32> -> vector<324x128xf32>
    %c1_63 = arith.constant 1 : index
    %c0_64 = arith.constant 0 : index
    %78 = vector.load %arg10[%c1_63, %c0_64] : memref<362x128xf32, #tpu.memory_space<vmem>>, vector<324x128xf32>
    %79 = arith.truncf %78 : vector<324x128xf32> to vector<324x128xbf16>
    %c1_65 = arith.constant 1 : index
    %c0_66 = arith.constant 0 : index
    %c0_67 = arith.constant 0 : index
    %80 = vector.load %arg5[%c1_65, %c0_66, %c0_67] : memref<9x128x128xbf16, #tpu.memory_space<vmem>>, vector<1x128x128xbf16>
    %81 = vector.shape_cast %80 : vector<1x128x128xbf16> to vector<128x128xbf16>
    %cst_68 = arith.constant dense<0.000000e+00> : vector<324x128xf32>
    %82 = tpu.matmul %79, %81, %cst_68 {dimension_numbers = #tpu.dot_dimension_numbers<[1], [0], [0], [1], [0, 0, 1, 1], [], []>} : vector<324x128xbf16>, vector<128x128xbf16>, vector<324x128xf32> -> vector<324x128xf32>
    %83 = arith.addf %77, %82 : vector<324x128xf32>
    %c2_69 = arith.constant 2 : index
    %c0_70 = arith.constant 0 : index
    %84 = vector.load %arg10[%c2_69, %c0_70] : memref<362x128xf32, #tpu.memory_space<vmem>>, vector<324x128xf32>
    %85 = arith.truncf %84 : vector<324x128xf32> to vector<324x128xbf16>
    %c2_71 = arith.constant 2 : index
    %c0_72 = arith.constant 0 : index
    %c0_73 = arith.constant 0 : index
    %86 = vector.load %arg5[%c2_71, %c0_72, %c0_73] : memref<9x128x128xbf16, #tpu.memory_space<vmem>>, vector<1x128x128xbf16>
    %87 = vector.shape_cast %86 : vector<1x128x128xbf16> to vector<128x128xbf16>
    %cst_74 = arith.constant dense<0.000000e+00> : vector<324x128xf32>
    %88 = tpu.matmul %85, %87, %cst_74 {dimension_numbers = #tpu.dot_dimension_numbers<[1], [0], [0], [1], [0, 0, 1, 1], [], []>} : vector<324x128xbf16>, vector<128x128xbf16>, vector<324x128xf32> -> vector<324x128xf32>
    %89 = arith.addf %83, %88 : vector<324x128xf32>
    %c18_75 = arith.constant 18 : index
    %c0_76 = arith.constant 0 : index
    %90 = vector.load %arg10[%c18_75, %c0_76] : memref<362x128xf32, #tpu.memory_space<vmem>>, vector<324x128xf32>
    %91 = arith.truncf %90 : vector<324x128xf32> to vector<324x128xbf16>
    %c3_77 = arith.constant 3 : index
    %c0_78 = arith.constant 0 : index
    %c0_79 = arith.constant 0 : index
    %92 = vector.load %arg5[%c3_77, %c0_78, %c0_79] : memref<9x128x128xbf16, #tpu.memory_space<vmem>>, vector<1x128x128xbf16>
    %93 = vector.shape_cast %92 : vector<1x128x128xbf16> to vector<128x128xbf16>
    %cst_80 = arith.constant dense<0.000000e+00> : vector<324x128xf32>
    %94 = tpu.matmul %91, %93, %cst_80 {dimension_numbers = #tpu.dot_dimension_numbers<[1], [0], [0], [1], [0, 0, 1, 1], [], []>} : vector<324x128xbf16>, vector<128x128xbf16>, vector<324x128xf32> -> vector<324x128xf32>
    %95 = arith.addf %89, %94 : vector<324x128xf32>
    %c19_81 = arith.constant 19 : index
    %c0_82 = arith.constant 0 : index
    %96 = vector.load %arg10[%c19_81, %c0_82] : memref<362x128xf32, #tpu.memory_space<vmem>>, vector<324x128xf32>
    %97 = arith.truncf %96 : vector<324x128xf32> to vector<324x128xbf16>
    %c4_83 = arith.constant 4 : index
    %c0_84 = arith.constant 0 : index
    %c0_85 = arith.constant 0 : index
    %98 = vector.load %arg5[%c4_83, %c0_84, %c0_85] : memref<9x128x128xbf16, #tpu.memory_space<vmem>>, vector<1x128x128xbf16>
    %99 = vector.shape_cast %98 : vector<1x128x128xbf16> to vector<128x128xbf16>
    %cst_86 = arith.constant dense<0.000000e+00> : vector<324x128xf32>
    %100 = tpu.matmul %97, %99, %cst_86 {dimension_numbers = #tpu.dot_dimension_numbers<[1], [0], [0], [1], [0, 0, 1, 1], [], []>} : vector<324x128xbf16>, vector<128x128xbf16>, vector<324x128xf32> -> vector<324x128xf32>
    %101 = arith.addf %95, %100 : vector<324x128xf32>
    %c20_87 = arith.constant 20 : index
    %c0_88 = arith.constant 0 : index
    %102 = vector.load %arg10[%c20_87, %c0_88] : memref<362x128xf32, #tpu.memory_space<vmem>>, vector<324x128xf32>
    %103 = arith.truncf %102 : vector<324x128xf32> to vector<324x128xbf16>
    %c5_89 = arith.constant 5 : index
    %c0_90 = arith.constant 0 : index
    %c0_91 = arith.constant 0 : index
    %104 = vector.load %arg5[%c5_89, %c0_90, %c0_91] : memref<9x128x128xbf16, #tpu.memory_space<vmem>>, vector<1x128x128xbf16>
    %105 = vector.shape_cast %104 : vector<1x128x128xbf16> to vector<128x128xbf16>
    %cst_92 = arith.constant dense<0.000000e+00> : vector<324x128xf32>
    %106 = tpu.matmul %103, %105, %cst_92 {dimension_numbers = #tpu.dot_dimension_numbers<[1], [0], [0], [1], [0, 0, 1, 1], [], []>} : vector<324x128xbf16>, vector<128x128xbf16>, vector<324x128xf32> -> vector<324x128xf32>
    %107 = arith.addf %101, %106 : vector<324x128xf32>
    %c36_93 = arith.constant 36 : index
    %c0_94 = arith.constant 0 : index
    %108 = vector.load %arg10[%c36_93, %c0_94] : memref<362x128xf32, #tpu.memory_space<vmem>>, vector<324x128xf32>
    %109 = arith.truncf %108 : vector<324x128xf32> to vector<324x128xbf16>
    %c6_95 = arith.constant 6 : index
    %c0_96 = arith.constant 0 : index
    %c0_97 = arith.constant 0 : index
    %110 = vector.load %arg5[%c6_95, %c0_96, %c0_97] : memref<9x128x128xbf16, #tpu.memory_space<vmem>>, vector<1x128x128xbf16>
    %111 = vector.shape_cast %110 : vector<1x128x128xbf16> to vector<128x128xbf16>
    %cst_98 = arith.constant dense<0.000000e+00> : vector<324x128xf32>
    %112 = tpu.matmul %109, %111, %cst_98 {dimension_numbers = #tpu.dot_dimension_numbers<[1], [0], [0], [1], [0, 0, 1, 1], [], []>} : vector<324x128xbf16>, vector<128x128xbf16>, vector<324x128xf32> -> vector<324x128xf32>
    %113 = arith.addf %107, %112 : vector<324x128xf32>
    %c37_99 = arith.constant 37 : index
    %c0_100 = arith.constant 0 : index
    %114 = vector.load %arg10[%c37_99, %c0_100] : memref<362x128xf32, #tpu.memory_space<vmem>>, vector<324x128xf32>
    %115 = arith.truncf %114 : vector<324x128xf32> to vector<324x128xbf16>
    %c7_101 = arith.constant 7 : index
    %c0_102 = arith.constant 0 : index
    %c0_103 = arith.constant 0 : index
    %116 = vector.load %arg5[%c7_101, %c0_102, %c0_103] : memref<9x128x128xbf16, #tpu.memory_space<vmem>>, vector<1x128x128xbf16>
    %117 = vector.shape_cast %116 : vector<1x128x128xbf16> to vector<128x128xbf16>
    %cst_104 = arith.constant dense<0.000000e+00> : vector<324x128xf32>
    %118 = tpu.matmul %115, %117, %cst_104 {dimension_numbers = #tpu.dot_dimension_numbers<[1], [0], [0], [1], [0, 0, 1, 1], [], []>} : vector<324x128xbf16>, vector<128x128xbf16>, vector<324x128xf32> -> vector<324x128xf32>
    %119 = arith.addf %113, %118 : vector<324x128xf32>
    %c38_105 = arith.constant 38 : index
    %c0_106 = arith.constant 0 : index
    %120 = vector.load %arg10[%c38_105, %c0_106] : memref<362x128xf32, #tpu.memory_space<vmem>>, vector<324x128xf32>
    %121 = arith.truncf %120 : vector<324x128xf32> to vector<324x128xbf16>
    %c8_107 = arith.constant 8 : index
    %c0_108 = arith.constant 0 : index
    %c0_109 = arith.constant 0 : index
    %122 = vector.load %arg5[%c8_107, %c0_108, %c0_109] : memref<9x128x128xbf16, #tpu.memory_space<vmem>>, vector<1x128x128xbf16>
    %123 = vector.shape_cast %122 : vector<1x128x128xbf16> to vector<128x128xbf16>
    %cst_110 = arith.constant dense<0.000000e+00> : vector<324x128xf32>
    %124 = tpu.matmul %121, %123, %cst_110 {dimension_numbers = #tpu.dot_dimension_numbers<[1], [0], [0], [1], [0, 0, 1, 1], [], []>} : vector<324x128xbf16>, vector<128x128xbf16>, vector<324x128xf32> -> vector<324x128xf32>
    %125 = arith.addf %119, %124 : vector<324x128xf32>
    %c0_111 = arith.constant 0 : index
    %c0_112 = arith.constant 0 : index
    %126 = vector.load %arg6[%c0_111, %c0_112] : memref<1x128xf32, #tpu.memory_space<vmem>>, vector<1x128xf32>
    %127 = vector.broadcast %126 : vector<1x128xf32> to vector<324x128xf32>
    %128 = arith.addf %125, %127 : vector<324x128xf32>
    %cst_113 = arith.constant 0.000000e+00 : f32
    %129 = vector.broadcast %cst_113 : f32 to vector<324x128xf32>
    %130 = arith.maximumf %128, %129 : vector<324x128xf32>
    %c0_114 = arith.constant 0 : index
    %c19_115 = arith.constant 19 : index
    %c0_116 = arith.constant 0 : index
    %131 = vector.load %arg1[%c0_114, %c19_115, %c0_116] : memref<1x362x128xf32, #tpu.memory_space<vmem>>, vector<1x324x128xf32>
    %132 = vector.shape_cast %131 : vector<1x324x128xf32> to vector<324x128xf32>
    %133 = arith.truncf %132 : vector<324x128xf32> to vector<324x128xbf16>
    %c0_117 = arith.constant 0 : index
    %c0_118 = arith.constant 0 : index
    %134 = vector.load %arg7[%c0_117, %c0_118] : memref<128x128xbf16, #tpu.memory_space<vmem>>, vector<128x128xbf16>
    %cst_119 = arith.constant dense<0.000000e+00> : vector<324x128xf32>
    %135 = tpu.matmul %133, %134, %cst_119 {dimension_numbers = #tpu.dot_dimension_numbers<[1], [0], [0], [1], [0, 0, 1, 1], [], []>} : vector<324x128xbf16>, vector<128x128xbf16>, vector<324x128xf32> -> vector<324x128xf32>
    %c0_120 = arith.constant 0 : index
    %c0_121 = arith.constant 0 : index
    %136 = vector.load %arg8[%c0_120, %c0_121] : memref<1x128xf32, #tpu.memory_space<vmem>>, vector<1x128xf32>
    %137 = vector.broadcast %136 : vector<1x128xf32> to vector<324x128xf32>
    %138 = arith.addf %135, %137 : vector<324x128xf32>
    %cst_122 = arith.constant 0.000000e+00 : f32
    %139 = vector.broadcast %cst_122 : f32 to vector<324x128xf32>
    %140 = arith.maximumf %138, %139 : vector<324x128xf32>
    %141 = arith.addf %130, %140 : vector<324x128xf32>
    %142 = vector.broadcast %0 : vector<324x1xf32> to vector<324x128xf32>
    %143 = arith.mulf %141, %142 : vector<324x128xf32>
    %c0_123 = arith.constant 0 : index
    %c0_124 = arith.constant 0 : index
    %c0_125 = arith.constant 0 : index
    %144 = vector.load %arg9[%c0_123, %c0_124, %c0_125] : memref<1x324x128xf32, #tpu.memory_space<vmem>>, vector<1x324x128xf32>
    %145 = vector.shape_cast %144 : vector<1x324x128xf32> to vector<324x128xf32>
    %146 = vector.shape_cast %143 : vector<324x128xf32> to vector<1x324x128xf32>
    tpu.vector_store %arg9[%c0_123, %c0_124, %c0_125], %146 {strides = array<i32>} : memref<1x324x128xf32, #tpu.memory_space<vmem>>, vector<1x324x128xf32>,
    return
  }
  func.func @transform_0(%arg0: i32) -> (i32, i32, i32) {
    %c0_i32 = arith.constant 0 : i32
    %c0_i32_0 = arith.constant 0 : i32
    %c0_i32_1 = arith.constant 0 : i32
    return %arg0, %c0_i32, %c0_i32_0 : i32, i32, i32
  }
  func.func @transform_1(%arg0: i32) -> (i32, i32) {
    %c0_i32 = arith.constant 0 : i32
    %c0_i32_0 = arith.constant 0 : i32
    %c0_i32_1 = arith.constant 0 : i32
    return %c0_i32, %c0_i32_0 : i32, i32
  }
  func.func @transform_2(%arg0: i32) -> (i32, i32, i32) {
    %c0_i32 = arith.constant 0 : i32
    %c0_i32_0 = arith.constant 0 : i32
    %c0_i32_1 = arith.constant 0 : i32
    %c0_i32_2 = arith.constant 0 : i32
    return %c0_i32, %c0_i32_0, %c0_i32_1 : i32, i32, i32
  }
  func.func @transform_3(%arg0: i32) -> (i32, i32) {
    %c0_i32 = arith.constant 0 : i32
    %c0_i32_0 = arith.constant 0 : i32
    %c0_i32_1 = arith.constant 0 : i32
    return %c0_i32, %c0_i32_0 : i32, i32
  }
  func.func @transform_4(%arg0: i32) -> (i32, i32, i32) {
    %c0_i32 = arith.constant 0 : i32
    %c0_i32_0 = arith.constant 0 : i32
    %c0_i32_1 = arith.constant 0 : i32
    %c0_i32_2 = arith.constant 0 : i32
    return %c0_i32, %c0_i32_0, %c0_i32_1 : i32, i32, i32
  }
  func.func @transform_5(%arg0: i32) -> (i32, i32) {
    %c0_i32 = arith.constant 0 : i32
    %c0_i32_0 = arith.constant 0 : i32
    %c0_i32_1 = arith.constant 0 : i32
    return %c0_i32, %c0_i32_0 : i32, i32
  }
  func.func @transform_6(%arg0: i32) -> (i32, i32) {
    %c0_i32 = arith.constant 0 : i32
    %c0_i32_0 = arith.constant 0 : i32
    %c0_i32_1 = arith.constant 0 : i32
    return %c0_i32, %c0_i32_0 : i32, i32
  }
  func.func @transform_7(%arg0: i32) -> (i32, i32) {
    %c0_i32 = arith.constant 0 : i32
    %c0_i32_0 = arith.constant 0 : i32
    %c0_i32_1 = arith.constant 0 : i32
    return %c0_i32, %c0_i32_0 : i32, i32
  }
  func.func @transform_8(%arg0: i32) -> (i32, i32, i32) {
    %c0_i32 = arith.constant 0 : i32
    %c0_i32_0 = arith.constant 0 : i32
    %c0_i32_1 = arith.constant 0 : i32
    return %arg0, %c0_i32, %c0_i32_0 : i32, i32, i32
  }
}

</mosaic_0001>

<llo_original>
// kernel: _lambda_.1
$region0: #{_lambda_.1}
  #allocation0 [shape = 'u32[]', space=smem, size = 0x4, offset = 0x4, fixed_abs, tag = 'smem constant byte address 0x4 - core index']
  #allocation1 [shape = 'u32[144,128]{1,0:T(1,128)}', space=vmem, size = 0x12000, scoped, tag = 'internal scratch']
  #allocation2 [shape = 'f32[362,128]{1,0:T(8,128)}', space=vmem, size = 0x2e000, scoped, tag = 'scratch operand']
  %s0 = inlined_call_operand.vmem [shape: f32[2,362,128], index: 0, kind: input, shape index: {}]
  %s1 = inlined_call_operand.vmem [shape: f32[324,1], index: 1, kind: input, shape index: {}]
  %s2 = inlined_call_operand.vmem [shape: bf16[9,128,128], index: 2, kind: input, shape index: {}]
  %s3 = inlined_call_operand.vmem [shape: f32[1,128], index: 3, kind: input, shape index: {}]
  %s4 = inlined_call_operand.vmem [shape: bf16[9,128,128], index: 4, kind: input, shape index: {}]
  %s5 = inlined_call_operand.vmem [shape: f32[1,128], index: 5, kind: input, shape index: {}]
  %s6 = inlined_call_operand.vmem [shape: bf16[128,128], index: 6, kind: input, shape index: {}]
  %s7 = inlined_call_operand.vmem [shape: f32[1,128], index: 7, kind: input, shape index: {}]
  %s8 = inlined_call_operand.vmem [shape: f32[2,324,128], index: 8, kind: output, shape index: {}]
  %s9 = sld [smem:[#allocation0]]
  $region65: #{_lambda_.1} parent=0
    _
  %s11 = ssub.s32 1, %s9
  %s12 = scalar_select 0, %s11, %s9
  loop: start=0, step=1, limit=4
  $region2: #{_lambda_.1} parent=0 // loop_pre_header
    _
  $region3: #{_lambda_.1} parent=0 // loop_header
    %s14 = sphi 0, %s18
    %p15 = scmp.ge.s32.totalorder %s14, 4
    %s24 = sphi 0, %s26
    %s27 = sphi 0, %s24
    %s28 = sphi 0, %s27
    %s44 = sphi 0, %s28
    %s48 = sphi 0, %s48
    %s50 = sphi 0, %s48
    %s51 = sphi 0, %s50
    %s65 = sphi 0, %s51
    %s69 = sphi 0, %s69
    %s71 = sphi 0, %s69
    %s72 = sphi 0, %s71
    %s86 = sphi 0, %s72
    %s90 = sphi 0, %s90
    %s92 = sphi 0, %s90
    %s93 = sphi 0, %s92
    %s107 = sphi 0, %s93
    %s111 = sphi 0, %s111
    %s113 = sphi 0, %s111
    %s114 = sphi 0, %s113
    %s128 = sphi 0, %s114
    %s132 = sphi 0, %s132
    %s134 = sphi 0, %s132
    %s135 = sphi 0, %s134
    %s149 = sphi 0, %s135
    %s153 = sphi 0, %s153
    %s155 = sphi 0, %s153
    %s156 = sphi 0, %s155
    %s170 = sphi 0, %s156
    %s174 = sphi 0, %s174
    %s176 = sphi 0, %s174
    %s177 = sphi 0, %s176
    %s191 = sphi 0, %s177
    %s197 = sphi 0, %s199
    %s200 = sphi 0, %s197
    %s201 = sphi 0, %s200
    %s217 = sphi 0, %s201
  $region4: #{_lambda_.1} parent=0 // loop_header_branch
    %17 = sbr.rel (%p15) target = $region8
  $region5: #{_lambda_.1} parent=0 // loop_body
    %s19 = ssub.s32 %s14, 1
    %s20 = ssub.s32 %s14, 2
    %s21 = sadd.s32 %s14, 1
    %s22 = ssub.s32 %s14, %s21
    %p23 = scmp.eq.s32.totalorder %s22, 0
    %s25 = sadd.s32 %s24, 1
    %s26 = scalar_select %p23, %s24, %s25
    %p29 = pneg %p23
    %p30 = scmp.eq.s32.totalorder %s14, 1
    %p31 = por %p29, %p30
    %p32 = scmp.ne.s32.totalorder %s24, %s27
    %p33 = scmp.eq.s32.totalorder %s14, 0
    %p34 = por %p32, %p33
    %p35 = scmp.ne.s32.totalorder %s24, %s27
    %p36 = scmp.eq.s32.totalorder %s19, 1
    %p37 = por %p35, %p36
    %p38 = scmp.ne.s32.totalorder %s27, %s28
    %p39 = scmp.eq.s32.totalorder %s19, 0
    %p40 = por %p38, %p39
    %p41 = scmp.ne.s32.totalorder %s27, %s28
    %p42 = scmp.eq.s32.totalorder %s20, 1
    %p43 = por %p41, %p42
    %p45 = scmp.ne.s32.totalorder %s28, %s44
    %p46 = scmp.eq.s32.totalorder %s20, 0
    %p47 = por %p45, %p46
    %s49 = sadd.s32 %s48, 1
    %p52 = scmp.eq.s32.totalorder %s14, 1
    %p53 = scmp.ne.s32.totalorder %s48, %s50
    %p54 = scmp.eq.s32.totalorder %s14, 0
    %p55 = por %p53, %p54
    %p56 = scmp.ne.s32.totalorder %s48, %s50
    %p57 = scmp.eq.s32.totalorder %s19, 1
    %p58 = por %p56, %p57
    %p59 = scmp.ne.s32.totalorder %s50, %s51
    %p60 = scmp.eq.s32.totalorder %s19, 0
    %p61 = por %p59, %p60
    %p62 = scmp.ne.s32.totalorder %s50, %s51
    %p63 = scmp.eq.s32.totalorder %s20, 1
    %p64 = por %p62, %p63
    %p66 = scmp.ne.s32.totalorder %s51, %s65
    %p67 = scmp.eq.s32.totalorder %s20, 0
    %p68 = por %p66, %p67
    %s70 = sadd.s32 %s69, 1
    %p73 = scmp.eq.s32.totalorder %s14, 1
    %p74 = scmp.ne.s32.totalorder %s69, %s71
    %p75 = scmp.eq.s32.totalorder %s14, 0
    %p76 = por %p74, %p75
    %p77 = scmp.ne.s32.totalorder %s69, %s71
    %p78 = scmp.eq.s32.totalorder %s19, 1
    %p79 = por %p77, %p78
    %p80 = scmp.ne.s32.totalorder %s71, %s72
    %p81 = scmp.eq.s32.totalorder %s19, 0
    %p82 = por %p80, %p81
    %p83 = scmp.ne.s32.totalorder %s71, %s72
    %p84 = scmp.eq.s32.totalorder %s20, 1
    %p85 = por %p83, %p84
    %p87 = scmp.ne.s32.totalorder %s72, %s86
    %p88 = scmp.eq.s32.totalorder %s20, 0
    %p89 = por %p87, %p88
    %s91 = sadd.s32 %s90, 1
    %p94 = scmp.eq.s32.totalorder %s14, 1
    %p95 = scmp.ne.s32.totalorder %s90, %s92
    %p96 = scmp.eq.s32.totalorder %s14, 0
    %p97 = por %p95, %p96
    %p98 = scmp.ne.s32.totalorder %s90, %s92
    %p99 = scmp.eq.s32.totalorder %s19, 1
    %p100 = por %p98, %p99
    %p101 = scmp.ne.s32.totalorder %s92, %s93
    %p102 = scmp.eq.s32.totalorder %s19, 0
    %p103 = por %p101, %p102
    %p104 = scmp.ne.s32.totalorder %s92, %s93
    %p105 = scmp.eq.s32.totalorder %s20, 1
    %p106 = por %p104, %p105
    %p108 = scmp.ne.s32.totalorder %s93, %s107
    %p109 = scmp.eq.s32.totalorder %s20, 0
    %p110 = por %p108, %p109
    %s112 = sadd.s32 %s111, 1
    %p115 = scmp.eq.s32.totalorder %s14, 1
    %p116 = scmp.ne.s32.totalorder %s111, %s113
    %p117 = scmp.eq.s32.totalorder %s14, 0
    %p118 = por %p116, %p117
    %p119 = scmp.ne.s32.totalorder %s111, %s113
    %p120 = scmp.eq.s32.totalorder %s19, 1
    %p121 = por %p119, %p120
    %p122 = scmp.ne.s32.totalorder %s113, %s114
    %p123 = scmp.eq.s32.totalorder %s19, 0
    %p124 = por %p122, %p123
    %p125 = scmp.ne.s32.totalorder %s113, %s114
    %p126 = scmp.eq.s32.totalorder %s20, 1
    %p127 = por %p125, %p126
    %p129 = scmp.ne.s32.totalorder %s114, %s128
    %p130 = scmp.eq.s32.totalorder %s20, 0
    %p131 = por %p129, %p130
    %s133 = sadd.s32 %s132, 1
    %p136 = scmp.eq.s32.totalorder %s14, 1
    %p137 = scmp.ne.s32.totalorder %s132, %s134
    %p138 = scmp.eq.s32.totalorder %s14, 0
    %p139 = por %p137, %p138
    %p140 = scmp.ne.s32.totalorder %s132, %s134
    %p141 = scmp.eq.s32.totalorder %s19, 1
    %p142 = por %p140, %p141
    %p143 = scmp.ne.s32.totalorder %s134, %s135
    %p144 = scmp.eq.s32.totalorder %s19, 0
    %p145 = por %p143, %p144
    %p146 = scmp.ne.s32.totalorder %s134, %s135
    %p147 = scmp.eq.s32.totalorder %s20, 1
    %p148 = por %p146, %p147
    %p150 = scmp.ne.s32.totalorder %s135, %s149
    %p151 = scmp.eq.s32.totalorder %s20, 0
    %p152 = por %p150, %p151
    %s154 = sadd.s32 %s153, 1
    %p157 = scmp.eq.s32.totalorder %s14, 1
    %p158 = scmp.ne.s32.totalorder %s153, %s155
    %p159 = scmp.eq.s32.totalorder %s14, 0
    %p160 = por %p158, %p159
    %p161 = scmp.ne.s32.totalorder %s153, %s155
    %p162 = scmp.eq.s32.totalorder %s19, 1
    %p163 = por %p161, %p162
    %p164 = scmp.ne.s32.totalorder %s155, %s156
    %p165 = scmp.eq.s32.totalorder %s19, 0
    %p166 = por %p164, %p165
    %p167 = scmp.ne.s32.totalorder %s155, %s156
    %p168 = scmp.eq.s32.totalorder %s20, 1
    %p169 = por %p167, %p168
    %p171 = scmp.ne.s32.totalorder %s156, %s170
    %p172 = scmp.eq.s32.totalorder %s20, 0
    %p173 = por %p171, %p172
    %s175 = sadd.s32 %s174, 1
    %p178 = scmp.eq.s32.totalorder %s14, 1
    %p179 = scmp.ne.s32.totalorder %s174, %s176
    %p180 = scmp.eq.s32.totalorder %s14, 0
    %p181 = por %p179, %p180
    %p182 = scmp.ne.s32.totalorder %s174, %s176
    %p183 = scmp.eq.s32.totalorder %s19, 1
    %p184 = por %p182, %p183
    %p185 = scmp.ne.s32.totalorder %s176, %s177
    %p186 = scmp.eq.s32.totalorder %s19, 0
    %p187 = por %p185, %p186
    %p188 = scmp.ne.s32.totalorder %s176, %s177
    %p189 = scmp.eq.s32.totalorder %s20, 1
    %p190 = por %p188, %p189
    %p192 = scmp.ne.s32.totalorder %s177, %s191
    %p193 = scmp.eq.s32.totalorder %s20, 0
    %p194 = por %p192, %p193
    %s195 = ssub.s32 %s14, %s21
    %p196 = scmp.eq.s32.totalorder %s195, 0
    %s198 = sadd.s32 %s197, 1
    %s199 = scalar_select %p196, %s197, %s198
    %p202 = pneg %p196
    %p203 = scmp.eq.s32.totalorder %s14, 1
    %p204 = por %p202, %p203
    %p205 = scmp.ne.s32.totalorder %s197, %s200
    %p206 = scmp.eq.s32.totalorder %s14, 0
    %p207 = por %p205, %p206
    %p208 = scmp.ne.s32.totalorder %s197, %s200
    %p209 = scmp.eq.s32.totalorder %s19, 1
    %p210 = por %p208, %p209
    %p211 = scmp.ne.s32.totalorder %s200, %s201
    %p212 = scmp.eq.s32.totalorder %s19, 0
    %p213 = por %p211, %p212
    %p214 = scmp.ne.s32.totalorder %s200, %s201
    %p215 = scmp.eq.s32.totalorder %s20, 1
    %p216 = por %p214, %p215
    %p218 = scmp.ne.s32.totalorder %s201, %s217
    %p219 = scmp.eq.s32.totalorder %s20, 0
    %p220 = por %p218, %p219
    %p221 = scmp.le.s32.totalorder 1, %s14
    %p222 = scmp.lt.s32.totalorder %s14, 3
    %p223 = pnand %p221, %p222
    %p224 = pneg %p223
    // Predicated region
    $region9: #{_lambda_.1} parent=5 // pred_check
      _
    $region10: #{_lambda_.1} parent=5 // pred_check_branch
      %226 = sbr.rel (%p223) target = $region12
    $region11: #{_lambda_.1} parent=5 // pred_region
      %s227 = ssub.s32 %s14, 1
      // Predicated region
      $region13: #{_lambda_.1} parent=11 // pred_check
        %p228 = pneg %p61
      $region14: #{_lambda_.1} parent=11 // pred_check_branch
        %230 = sbr.rel (%p228) target = $region16
      $region15: #{_lambda_.1} parent=11 // pred_region
        _
      $region16: #{_lambda_.1} parent=11 // pred_fallthru
        _
      // Predicated region
      $region17: #{_lambda_.1} parent=11 // pred_check
        %p231 = pneg %p82
      $region18: #{_lambda_.1} parent=11 // pred_check_branch
        %233 = sbr.rel (%p231) target = $region20
      $region19: #{_lambda_.1} parent=11 // pred_region
        _
      $region20: #{_lambda_.1} parent=11 // pred_fallthru
        _
      // Predicated region
      $region21: #{_lambda_.1} parent=11 // pred_check
        %p234 = pneg %p103
      $region22: #{_lambda_.1} parent=11 // pred_check_branch
        %236 = sbr.rel (%p234) target = $region24
      $region23: #{_lambda_.1} parent=11 // pred_region
        _
      $region24: #{_lambda_.1} parent=11 // pred_fallthru
        _
      // Predicated region
      $region25: #{_lambda_.1} parent=11 // pred_check
        %p237 = pneg %p124
      $region26: #{_lambda_.1} parent=11 // pred_check_branch
        %239 = sbr.rel (%p237) target = $region28
      $region27: #{_lambda_.1} parent=11 // pred_region
        _
      $region28: #{_lambda_.1} parent=11 // pred_fallthru
        _
      // Predicated region
      $region29: #{_lambda_.1} parent=11 // pred_check
        %p240 = pneg %p145
      $region30: #{_lambda_.1} parent=11 // pred_check_branch
        %242 = sbr.rel (%p240) target = $region32
      $region31: #{_lambda_.1} parent=11 // pred_region
        _
      $region32: #{_lambda_.1} parent=11 // pred_fallthru
        _
      // Predicated region
      $region33: #{_lambda_.1} parent=11 // pred_check
        %p243 = pneg %p166
      $region34: #{_lambda_.1} parent=11 // pred_check_branch
        %245 = sbr.rel (%p243) target = $region36
      $region35: #{_lambda_.1} parent=11 // pred_region
        _
      $region36: #{_lambda_.1} parent=11 // pred_fallthru
        _
      // Predicated region
      $region37: #{_lambda_.1} parent=11 // pred_check
        %p246 = pneg %p187
      $region38: #{_lambda_.1} parent=11 // pred_check_branch
        %248 = sbr.rel (%p246) target = $region40
      $region39: #{_lambda_.1} parent=11 // pred_region
        _
      $region40: #{_lambda_.1} parent=11 // pred_fallthru
        _
    $region12: #{_lambda_.1} parent=5 // pred_fallthru
      _
    %p249 = scmp.lt.s32.totalorder %s14, 2
    // Predicated region
    $region41: #{_lambda_.1} parent=5 // pred_check
      %p250 = pneg %p249
    $region42: #{_lambda_.1} parent=5 // pred_check_branch
      %252 = sbr.rel (%p250) target = $region44
    $region43: #{_lambda_.1} parent=5 // pred_region
      // Predicated region
      $region45: #{_lambda_.1} parent=43 // pred_check
        %p253 = pneg %p34
      $region46: #{_lambda_.1} parent=43 // pred_check_branch
        %255 = sbr.rel (%p253) target = $region48
      $region47: #{_lambda_.1} parent=43 // pred_region
        %p256 = scmp.lt.s32.totalorder %s14, 1
        %s257 = scalar_select %p256, %s14, 1
        %s258 = smul.addr %s257, 46
        %s259 = smul.addr %s258, 8
        %s260 = scalar_lea.vmem %s0, %s259
      $region48: #{_lambda_.1} parent=43 // pred_fallthru
        _
    $region44: #{_lambda_.1} parent=5 // pred_fallthru
      _
    %p261 = scmp.le.s32.totalorder 1, %s14
    %p262 = scmp.lt.s32.totalorder %s14, 3
    %p263 = pnand %p261, %p262
    %p264 = pneg %p263
    // Predicated region
    $region49: #{_lambda_.1} parent=5 // pred_check
      _
    $region50: #{_lambda_.1} parent=5 // pred_check_branch
      %266 = sbr.rel (%p263) target = $region52
    $region51: #{_lambda_.1} parent=5 // pred_region
      %s267 = ssub.s32 %s14, 1
      %p268 = scmp.lt.s32.totalorder %s19, 1
      %s269 = scalar_select %p268, %s19, 1
      %s270 = smul.addr %s269, 46
      %s271 = smul.addr %s270, 8
      %s272 = scalar_lea.vmem %s0, %s271
      %p273 = pneg %p40
      %p274 = pneg %p37
      %p275 = pneg %p61
      %p276 = pneg %p58
      %p277 = pneg %p82
      %p278 = pneg %p79
      %p279 = pneg %p103
      %p280 = pneg %p100
      %p281 = pneg %p124
      %p282 = pneg %p121
      %p283 = pneg %p145
      %p284 = pneg %p142
      %p285 = pneg %p166
      %p286 = pneg %p163
      %p287 = pneg %p187
      %p288 = pneg %p184
      %p289 = pneg %p213
      %p290 = pneg %p210
      %p291 = scmp.lt.s32.totalorder %s19, 1
      %s292 = scalar_select %p291, %s19, 1
      %s293 = smul.addr %s292, 41
      %s294 = smul.addr %s293, 8
      %s295 = scalar_lea.vmem %s8, %s294
      %p296 = scmp.lt.s32.totalorder %s19, 1
      %s297 = scalar_select %p296, %s19, 1
      %s298 = smul.addr %s297, 46
      %s299 = smul.addr %s298, 8
      %s300 = scalar_lea.vmem %s0, %s299
      %p301 = scmp.lt.s32.totalorder %s19, 1
      %s302 = scalar_select %p301, %s19, 1
      %s303 = smul.addr %s302, 41
      %s304 = smul.addr %s303, 8
      %s305 = scalar_lea.vmem %s8, %s304
      %v307 = vld [vmem:[%s1] sm:$0xff]
      %v308 = vld [vmem:[%s1 + $0x8] sm:$0xff]
      %v309 = vld [vmem:[%s1 + $0x10] sm:$0xff]
      %v310 = vld [vmem:[%s1 + $0x18] sm:$0xff]
      %v311 = vld [vmem:[%s1 + $0x20] sm:$0xff]
      %v312 = vld [vmem:[%s1 + $0x28] sm:$0xff]
      %v313 = vld [vmem:[%s1 + $0x30] sm:$0xff]
      %v314 = vld [vmem:[%s1 + $0x38] sm:$0xff]
      %v315 = vld [vmem:[%s1 + $0x40] sm:$0xff]
      %v316 = vld [vmem:[%s1 + $0x48] sm:$0xff]
      %v317 = vld [vmem:[%s1 + $0x50] sm:$0xff]
      %v318 = vld [vmem:[%s1 + $0x58] sm:$0xff]
      %v319 = vld [vmem:[%s1 + $0x60] sm:$0xff]
      %v320 = vld [vmem:[%s1 + $0x68] sm:$0xff]
      %v321 = vld [vmem:[%s1 + $0x70] sm:$0xff]
      %v322 = vld [vmem:[%s1 + $0x78] sm:$0xff]
      %v323 = vld [vmem:[%s1 + $0x80] sm:$0xff]
      %v324 = vld [vmem:[%s1 + $0x88] sm:$0xff]
      %v325 = vld [vmem:[%s1 + $0x90] sm:$0xff]
      %v326 = vld [vmem:[%s1 + $0x98] sm:$0xff]
      %v327 = vld [vmem:[%s1 + $0xa0] sm:$0xff]
      %v328 = vld [vmem:[%s1 + $0xa8] sm:$0xff]
      %v329 = vld [vmem:[%s1 + $0xb0] sm:$0xff]
      %v330 = vld [vmem:[%s1 + $0xb8] sm:$0xff]
      %v331 = vld [vmem:[%s1 + $0xc0] sm:$0xff]
      %v332 = vld [vmem:[%s1 + $0xc8] sm:$0xff]
      %v333 = vld [vmem:[%s1 + $0xd0] sm:$0xff]
      %v334 = vld [vmem:[%s1 + $0xd8] sm:$0xff]
      %v335 = vld [vmem:[%s1 + $0xe0] sm:$0xff]
      %v336 = vld [vmem:[%s1 + $0xe8] sm:$0xff]
      %v337 = vld [vmem:[%s1 + $0xf0] sm:$0xff]
      %v338 = vld [vmem:[%s1 + $0xf8] sm:$0xff]
      %v339 = vld [vmem:[%s1 + $0x100] sm:$0xff]
      %v340 = vld [vmem:[%s1 + $0x108] sm:$0xff]
      %v341 = vld [vmem:[%s1 + $0x110] sm:$0xff]
      %v342 = vld [vmem:[%s1 + $0x118] sm:$0xff]
      %v343 = vld [vmem:[%s1 + $0x120] sm:$0xff]
      %v344 = vld [vmem:[%s1 + $0x128] sm:$0xff]
      %v345 = vld [vmem:[%s1 + $0x130] sm:$0xff]
      %v346 = vld [vmem:[%s1 + $0x138] sm:$0xff]
      %v347 = vld [vmem:[%s1 + $0x140] sm:$0xf]
      %v348 = vld [vmem:[%s300] sm:$0xff]
      %v349 = vld [vmem:[%s300 + $0x8] sm:$0xff]
      %v350 = vld [vmem:[%s300 + $0x10] sm:$0xff]
      %v351 = vld [vmem:[%s300 + $0x18] sm:$0xff]
      %v352 = vld [vmem:[%s300 + $0x20] sm:$0xff]
      %v353 = vld [vmem:[%s300 + $0x28] sm:$0xff]
      %v354 = vld [vmem:[%s300 + $0x30] sm:$0xff]
      %v355 = vld [vmem:[%s300 + $0x38] sm:$0xff]
      %v356 = vld [vmem:[%s300 + $0x40] sm:$0xff]
      %v357 = vld [vmem:[%s300 + $0x48] sm:$0xff]
      %v358 = vld [vmem:[%s300 + $0x50] sm:$0xff]
      %v359 = vld [vmem:[%s300 + $0x58] sm:$0xff]
      %v360 = vld [vmem:[%s300 + $0x60] sm:$0xff]
      %v361 = vld [vmem:[%s300 + $0x68] sm:$0xff]
      %v362 = vld [vmem:[%s300 + $0x70] sm:$0xff]
      %v363 = vld [vmem:[%s300 + $0x78] sm:$0xff]
      %v364 = vld [vmem:[%s300 + $0x80] sm:$0xff]
      %v365 = vld [vmem:[%s300 + $0x88] sm:$0xff]
      %v366 = vld [vmem:[%s300 + $0x90] sm:$0xff]
      %v367 = vld [vmem:[%s300 + $0x98] sm:$0xff]
      %v368 = vld [vmem:[%s300 + $0xa0] sm:$0xff]
      %v369 = vld [vmem:[%s300 + $0xa8] sm:$0xff]
      %v370 = vld [vmem:[%s300 + $0xb0] sm:$0xff]
      %v371 = vld [vmem:[%s300 + $0xb8] sm:$0xff]
      %v372 = vld [vmem:[%s300 + $0xc0] sm:$0xff]
      %v373 = vld [vmem:[%s300 + $0xc8] sm:$0xff]
      %v374 = vld [vmem:[%s300 + $0xd0] sm:$0xff]
      %v375 = vld [vmem:[%s300 + $0xd8] sm:$0xff]
      %v376 = vld [vmem:[%s300 + $0xe0] sm:$0xff]
      %v377 = vld [vmem:[%s300 + $0xe8] sm:$0xff]
      %v378 = vld [vmem:[%s300 + $0xf0] sm:$0xff]
      %v379 = vld [vmem:[%s300 + $0xf8] sm:$0xff]
      %v380 = vld [vmem:[%s300 + $0x100] sm:$0xff]
      %v381 = vld [vmem:[%s300 + $0x108] sm:$0xff]
      %v382 = vld [vmem:[%s300 + $0x110] sm:$0xff]
      %v383 = vld [vmem:[%s300 + $0x118] sm:$0xff]
      %v384 = vld [vmem:[%s300 + $0x120] sm:$0xff]
      %v385 = vld [vmem:[%s300 + $0x128] sm:$0xff]
      %v386 = vld [vmem:[%s300 + $0x130] sm:$0xff]
      %v387 = vld [vmem:[%s300 + $0x138] sm:$0xff]
      %v388 = vld [vmem:[%s300 + $0x140] sm:$0xf]
      %v389 = vpack.c.bf16 %v349, %v348
      %v390 = vpack.c.bf16 %v351, %v350
      %v391 = vpack.c.bf16 %v353, %v352
      %v392 = vpack.c.bf16 %v355, %v354
      %v393 = vpack.c.bf16 %v357, %v356
      %v394 = vpack.c.bf16 %v359, %v358
      %v395 = vpack.c.bf16 %v361, %v360
      %v396 = vpack.c.bf16 %v363, %v362
      %v397 = vpack.c.bf16 %v365, %v364
      %v398 = vpack.c.bf16 %v367, %v366
      %v399 = vpack.c.bf16 %v369, %v368
      %v400 = vpack.c.bf16 %v371, %v370
      %v401 = vpack.c.bf16 %v373, %v372
      %v402 = vpack.c.bf16 %v375, %v374
      %v403 = vpack.c.bf16 %v377, %v376
      %v404 = vpack.c.bf16 %v379, %v378
      %v405 = vpack.c.bf16 %v381, %v380
      %v406 = vpack.c.bf16 %v383, %v382
      %v407 = vpack.c.bf16 %v385, %v384
      %v408 = vpack.c.bf16 %v387, %v386
      %v409 = vpack.c.bf16 %v388, %v388
      %v410 = vld [vmem:[%s2] sm:$0xf]
      %v411 = vld [vmem:[%s2 + $0x4] sm:$0xf]
      %v412 = vld [vmem:[%s2 + $0x8] sm:$0xf]
      %v413 = vld [vmem:[%s2 + $0xc] sm:$0xf]
      %v414 = vld [vmem:[%s2 + $0x10] sm:$0xf]
      %v415 = vld [vmem:[%s2 + $0x14] sm:$0xf]
      %v416 = vld [vmem:[%s2 + $0x18] sm:$0xf]
      %v417 = vld [vmem:[%s2 + $0x1c] sm:$0xf]
      %v418 = vld [vmem:[%s2 + $0x20] sm:$0xf]
      %v419 = vld [vmem:[%s2 + $0x24] sm:$0xf]
      %v420 = vld [vmem:[%s2 + $0x28] sm:$0xf]
      %v421 = vld [vmem:[%s2 + $0x2c] sm:$0xf]
      %v422 = vld [vmem:[%s2 + $0x30] sm:$0xf]
      %v423 = vld [vmem:[%s2 + $0x34] sm:$0xf]
      %v424 = vld [vmem:[%s2 + $0x38] sm:$0xf]
      %v425 = vld [vmem:[%s2 + $0x3c] sm:$0xf]
      %v426 = vld [vmem:[%s300 + $0x1] sm:$0xff]
      %v427 = vld [vmem:[%s300 + $0x9] sm:$0xff]
      %v428 = vld [vmem:[%s300 + $0x11] sm:$0xff]
      %v429 = vld [vmem:[%s300 + $0x19] sm:$0xff]
      %v430 = vld [vmem:[%s300 + $0x21] sm:$0xff]
      %v431 = vld [vmem:[%s300 + $0x29] sm:$0xff]
      %v432 = vld [vmem:[%s300 + $0x31] sm:$0xff]
      %v433 = vld [vmem:[%s300 + $0x39] sm:$0xff]
      %v434 = vld [vmem:[%s300 + $0x41] sm:$0xff]
      %v435 = vld [vmem:[%s300 + $0x49] sm:$0xff]
      %v436 = vld [vmem:[%s300 + $0x51] sm:$0xff]
      %v437 = vld [vmem:[%s300 + $0x59] sm:$0xff]
      %v438 = vld [vmem:[%s300 + $0x61] sm:$0xff]
      %v439 = vld [vmem:[%s300 + $0x69] sm:$0xff]
      %v440 = vld [vmem:[%s300 + $0x71] sm:$0xff]
      %v441 = vld [vmem:[%s300 + $0x79] sm:$0xff]
      %v442 = vld [vmem:[%s300 + $0x81] sm:$0xff]
      %v443 = vld [vmem:[%s300 + $0x89] sm:$0xff]
      %v444 = vld [vmem:[%s300 + $0x91] sm:$0xff]
      %v445 = vld [vmem:[%s300 + $0x99] sm:$0xff]
      %v446 = vld [vmem:[%s300 + $0xa1] sm:$0xff]
      %v447 = vld [vmem:[%s300 + $0xa9] sm:$0xff]
      %v448 = vld [vmem:[%s300 + $0xb1] sm:$0xff]
      %v449 = vld [vmem:[%s300 + $0xb9] sm:$0xff]
      %v450 = vld [vmem:[%s300 + $0xc1] sm:$0xff]
      %v451 = vld [vmem:[%s300 + $0xc9] sm:$0xff]
      %v452 = vld [vmem:[%s300 + $0xd1] sm:$0xff]
      %v453 = vld [vmem:[%s300 + $0xd9] sm:$0xff]
      %v454 = vld [vmem:[%s300 + $0xe1] sm:$0xff]
      %v455 = vld [vmem:[%s300 + $0xe9] sm:$0xff]
      %v456 = vld [vmem:[%s300 + $0xf1] sm:$0xff]
      %v457 = vld [vmem:[%s300 + $0xf9] sm:$0xff]
      %v458 = vld [vmem:[%s300 + $0x101] sm:$0xff]
      %v459 = vld [vmem:[%s300 + $0x109] sm:$0xff]
      %v460 = vld [vmem:[%s300 + $0x111] sm:$0xff]
      %v461 = vld [vmem:[%s300 + $0x119] sm:$0xff]
      %v462 = vld [vmem:[%s300 + $0x121] sm:$0xff]
      %v463 = vld [vmem:[%s300 + $0x129] sm:$0xff]
      %v464 = vld [vmem:[%s300 + $0x131] sm:$0xff]
      %v465 = vld [vmem:[%s300 + $0x139] sm:$0xff]
      %v466 = vld [vmem:[%s300 + $0x141] sm:$0xf]
      %v467 = vpack.c.bf16 %v427, %v426
      %v468 = vpack.c.bf16 %v429, %v428
      %v469 = vpack.c.bf16 %v431, %v430
      %v470 = vpack.c.bf16 %v433, %v432
      %v471 = vpack.c.bf16 %v435, %v434
      %v472 = vpack.c.bf16 %v437, %v436
      %v473 = vpack.c.bf16 %v439, %v438
      %v474 = vpack.c.bf16 %v441, %v440
      %v475 = vpack.c.bf16 %v443, %v442
      %v476 = vpack.c.bf16 %v445, %v444
      %v477 = vpack.c.bf16 %v447, %v446
      %v478 = vpack.c.bf16 %v449, %v448
      %v479 = vpack.c.bf16 %v451, %v450
      %v480 = vpack.c.bf16 %v453, %v452
      %v481 = vpack.c.bf16 %v455, %v454
      %v482 = vpack.c.bf16 %v457, %v456
      %v483 = vpack.c.bf16 %v459, %v458
      %v484 = vpack.c.bf16 %v461, %v460
      %v485 = vpack.c.bf16 %v463, %v462
      %v486 = vpack.c.bf16 %v465, %v464
      %v487 = vpack.c.bf16 %v466, %v466
      %s488 = scalar_lea.vmem %s2, 64
      %v489 = vld [vmem:[%s488] sm:$0xf]
      %v490 = vld [vmem:[%s488 + $0x4] sm:$0xf]
      %v491 = vld [vmem:[%s488 + $0x8] sm:$0xf]
      %v492 = vld [vmem:[%s488 + $0xc] sm:$0xf]
      %v493 = vld [vmem:[%s488 + $0x10] sm:$0xf]
      %v494 = vld [vmem:[%s488 + $0x14] sm:$0xf]
      %v495 = vld [vmem:[%s488 + $0x18] sm:$0xf]
      %v496 = vld [vmem:[%s488 + $0x1c] sm:$0xf]
      %v497 = vld [vmem:[%s488 + $0x20] sm:$0xf]
      %v498 = vld [vmem:[%s488 + $0x24] sm:$0xf]
      %v499 = vld [vmem:[%s488 + $0x28] sm:$0xf]
      %v500 = vld [vmem:[%s488 + $0x2c] sm:$0xf]
      %v501 = vld [vmem:[%s488 + $0x30] sm:$0xf]
      %v502 = vld [vmem:[%s488 + $0x34] sm:$0xf]
      %v503 = vld [vmem:[%s488 + $0x38] sm:$0xf]
      %v504 = vld [vmem:[%s488 + $0x3c] sm:$0xf]
      %v521 = vunpack.c.l.b16 %v489
      %v522 = vunpack.c.l.b16 %v490
      %v523 = vunpack.c.l.b16 %v491
      %v524 = vunpack.c.l.b16 %v492
      %v525 = vunpack.c.l.b16 %v493
      %v526 = vunpack.c.l.b16 %v494
      %v527 = vunpack.c.l.b16 %v495
      %v528 = vunpack.c.l.b16 %v496
      %v529 = vunpack.c.l.b16 %v497
      %v530 = vunpack.c.l.b16 %v498
      %v531 = vunpack.c.l.b16 %v499
      %v532 = vunpack.c.l.b16 %v500
      %v533 = vunpack.c.l.b16 %v501
      %v534 = vunpack.c.l.b16 %v502
      %v535 = vunpack.c.l.b16 %v503
      %v536 = vunpack.c.l.b16 %v504
      %v537 = vpack.c.b16 %v522, %v521
      %v538 = vpack.c.b16 %v524, %v523
      %v539 = vpack.c.b16 %v526, %v525
      %v540 = vpack.c.b16 %v528, %v527
      %v541 = vpack.c.b16 %v530, %v529
      %v542 = vpack.c.b16 %v532, %v531
      %v543 = vpack.c.b16 %v534, %v533
      %v544 = vpack.c.b16 %v536, %v535
      %553 = vmatprep.subr.bf16.mxu0 0
      %554 = vmatpush1.bf16.msra.mxu0 %v544
      %555 = vmatprep.subr.bf16.mxu0 0
      %556 = vmatpush1.bf16.msra.mxu0 %v543
      %557 = vmatprep.subr.bf16.mxu0 0
      %558 = vmatpush1.bf16.msra.mxu0 %v542
      %559 = vmatprep.subr.bf16.mxu0 0
      %560 = vmatpush1.bf16.msra.mxu0 %v541
      %561 = vmatprep.subr.bf16.mxu0 0
      %562 = vmatpush1.bf16.msra.mxu0 %v540
      %563 = vmatprep.subr.bf16.mxu0 0
      %564 = vmatpush1.bf16.msra.mxu0 %v539
      %565 = vmatprep.subr.bf16.mxu0 0
      %566 = vmatpush1.bf16.msra.mxu0 %v538
      %567 = vmatprep.subr.bf16.mxu0 0
      %568 = vmatpush1.bf16.msra.mxu0 %v537
      %569 = vmatprep.subr.bf16.mxu0 0
      %570 = vmatpush2.bf16.msra.mxu0 0
      %571 = vmatprep.subr.bf16.mxu0 0
      %572 = vmatpush2.bf16.msra.mxu0 0
      %573 = vmatprep.subr.bf16.mxu0 0
      %574 = vmatpush2.bf16.msra.mxu0 0
      %575 = vmatprep.subr.bf16.mxu0 0
      %576 = vmatpush2.bf16.msra.mxu0 0
      %577 = vmatprep.subr.bf16.mxu0 0
      %578 = vmatpush2.bf16.msra.mxu0 0
      %579 = vmatprep.subr.bf16.mxu0 0
      %580 = vmatpush2.bf16.msra.mxu0 0
      %581 = vmatprep.subr.bf16.mxu0 0
      %582 = vmatpush2.bf16.msra.mxu0 0
      %583 = vmatprep.subr.bf16.mxu0 0
      %584 = vmatpush2.bf16.msra.mxu0 0
      %585 = vmatprep.mubr.bf16.mxu0 0
      %586 = vmatmul.mubr.bf16.gmra.mxu0 %v467
      %v587 = vpop.f32.mrf.mxu0
      %v588 = vadd.f32 0.0, %v587
      %v589 = vpop.f32.mrf.mxu0
      %v590 = vpop.f32.mrf.mxu0
      %v591 = vadd.f32 0.0, %v590
      %v592 = vpop.f32.mrf.mxu0
      %593 = vmatprep.mubr.bf16.mxu0 0
      %594 = vmatmul.mubr.bf16.gmra.mxu0 %v468
      %v595 = vpop.f32.mrf.mxu0
      %v596 = vadd.f32 0.0, %v595
      %v597 = vpop.f32.mrf.mxu0
      %v598 = vpop.f32.mrf.mxu0
      %v599 = vadd.f32 0.0, %v598
      %v600 = vpop.f32.mrf.mxu0
      %601 = vmatprep.mubr.bf16.mxu0 0
      %602 = vmatmul.mubr.bf16.gmra.mxu0 %v469
      %v603 = vpop.f32.mrf.mxu0
      %v604 = vadd.f32 0.0, %v603
      %v605 = vpop.f32.mrf.mxu0
      %v606 = vpop.f32.mrf.mxu0
      %v607 = vadd.f32 0.0, %v606
      %v608 = vpop.f32.mrf.mxu0
      %609 = vmatprep.mubr.bf16.mxu0 0
      %610 = vmatmul.mubr.bf16.gmra.mxu0 %v470
      %v611 = vpop.f32.mrf.mxu0
      %v612 = vadd.f32 0.0, %v611
      %v613 = vpop.f32.mrf.mxu0
      %v614 = vpop.f32.mrf.mxu0
      %v615 = vadd.f32 0.0, %v614
      %v616 = vpop.f32.mrf.mxu0
      %617 = vmatprep.mubr.bf16.mxu0 0
      %618 = vmatmul.mubr.bf16.gmra.mxu0 %v471
      %v619 = vpop.f32.mrf.mxu0
      %v620 = vadd.f32 0.0, %v619
      %v621 = vpop.f32.mrf.mxu0
      %v622 = vpop.f32.mrf.mxu0
      %v623 = vadd.f32 0.0, %v622
      %v624 = vpop.f32.mrf.mxu0
      %625 = vmatprep.mubr.bf16.mxu0 0
      %626 = vmatmul.mubr.bf16.gmra.mxu0 %v472
      %v627 = vpop.f32.mrf.mxu0
      %v628 = vadd.f32 0.0, %v627
      %v629 = vpop.f32.mrf.mxu0
      %v630 = vpop.f32.mrf.mxu0
      %v631 = vadd.f32 0.0, %v630
      %v632 = vpop.f32.mrf.mxu0
      %633 = vmatprep.mubr.bf16.mxu0 0
      %634 = vmatmul.mubr.bf16.gmra.mxu0 %v473
      %v635 = vpop.f32.mrf.mxu0
      %v636 = vadd.f32 0.0, %v635
      %v637 = vpop.f32.mrf.mxu0
      %v638 = vpop.f32.mrf.mxu0
      %v639 = vadd.f32 0.0, %v638
      %v640 = vpop.f32.mrf.mxu0
      %641 = vmatprep.mubr.bf16.mxu0 0
      %642 = vmatmul.mubr.bf16.gmra.mxu0 %v474
      %v643 = vpop.f32.mrf.mxu0
      %v644 = vadd.f32 0.0, %v643
      %v645 = vpop.f32.mrf.mxu0
      %v646 = vpop.f32.mrf.mxu0
      %v647 = vadd.f32 0.0, %v646
      %v648 = vpop.f32.mrf.mxu0
      %649 = vmatprep.mubr.bf16.mxu0 0
      %650 = vmatmul.mubr.bf16.gmra.mxu0 %v475
      %v651 = vpop.f32.mrf.mxu0
      %v652 = vadd.f32 0.0, %v651
      %v653 = vpop.f32.mrf.mxu0
      %v654 = vpop.f32.mrf.mxu0
      %v655 = vadd.f32 0.0, %v654
      %v656 = vpop.f32.mrf.mxu0
      %657 = vmatprep.mubr.bf16.mxu0 0
      %658 = vmatmul.mubr.bf16.gmra.mxu0 %v476
      %v659 = vpop.f32.mrf.mxu0
      %v660 = vadd.f32 0.0, %v659
      %v661 = vpop.f32.mrf.mxu0
      %v662 = vpop.f32.mrf.mxu0
      %v663 = vadd.f32 0.0, %v662
      %v664 = vpop.f32.mrf.mxu0
      %665 = vmatprep.mubr.bf16.mxu0 0
      %666 = vmatmul.mubr.bf16.gmra.mxu0 %v477
      %v667 = vpop.f32.mrf.mxu0
      %v668 = vadd.f32 0.0, %v667
      %v669 = vpop.f32.mrf.mxu0
      %v670 = vpop.f32.mrf.mxu0
      %v671 = vadd.f32 0.0, %v670
      %v672 = vpop.f32.mrf.mxu0
      %673 = vmatprep.mubr.bf16.mxu0 0
      %674 = vmatmul.mubr.bf16.gmra.mxu0 %v478
      %v675 = vpop.f32.mrf.mxu0
      %v676 = vadd.f32 0.0, %v675
      %v677 = vpop.f32.mrf.mxu0
      %v678 = vpop.f32.mrf.mxu0
      %v679 = vadd.f32 0.0, %v678
      %v680 = vpop.f32.mrf.mxu0
      %681 = vmatprep.mubr.bf16.mxu0 0
      %682 = vmatmul.mubr.bf16.gmra.mxu0 %v479
      %v683 = vpop.f32.mrf.mxu0
      %v684 = vadd.f32 0.0, %v683
      %v685 = vpop.f32.mrf.mxu0
      %v686 = vpop.f32.mrf.mxu0
      %v687 = vadd.f32 0.0, %v686
      %v688 = vpop.f32.mrf.mxu0
      %689 = vmatprep.mubr.bf16.mxu0 0
      %690 = vmatmul.mubr.bf16.gmra.mxu0 %v480
      %v691 = vpop.f32.mrf.mxu0
      %v692 = vadd.f32 0.0, %v691
      %v693 = vpop.f32.mrf.mxu0
      %v694 = vpop.f32.mrf.mxu0
      %v695 = vadd.f32 0.0, %v694
      %v696 = vpop.f32.mrf.mxu0
      %697 = vmatprep.mubr.bf16.mxu0 0
      %698 = vmatmul.mubr.bf16.gmra.mxu0 %v481
      %v699 = vpop.f32.mrf.mxu0
      %v700 = vadd.f32 0.0, %v699
      %v701 = vpop.f32.mrf.mxu0
      %v702 = vpop.f32.mrf.mxu0
      %v703 = vadd.f32 0.0, %v702
      %v704 = vpop.f32.mrf.mxu0
      %705 = vmatprep.mubr.bf16.mxu0 0
      %706 = vmatmul.mubr.bf16.gmra.mxu0 %v482
      %v707 = vpop.f32.mrf.mxu0
      %v708 = vadd.f32 0.0, %v707
      %v709 = vpop.f32.mrf.mxu0
      %v710 = vpop.f32.mrf.mxu0
      %v711 = vadd.f32 0.0, %v710
      %v712 = vpop.f32.mrf.mxu0
      %713 = vmatprep.mubr.bf16.mxu0 0
      %714 = vmatmul.mubr.bf16.gmra.mxu0 %v483
      %v715 = vpop.f32.mrf.mxu0
      %v716 = vadd.f32 0.0, %v715
      %v717 = vpop.f32.mrf.mxu0
      %v718 = vpop.f32.mrf.mxu0
      %v719 = vadd.f32 0.0, %v718
      %v720 = vpop.f32.mrf.mxu0
      %721 = vmatprep.mubr.bf16.mxu0 0
      %722 = vmatmul.mubr.bf16.gmra.mxu0 %v484
      %v723 = vpop.f32.mrf.mxu0
      %v724 = vadd.f32 0.0, %v723
      %v725 = vpop.f32.mrf.mxu0
      %v726 = vpop.f32.mrf.mxu0
      %v727 = vadd.f32 0.0, %v726
      %v728 = vpop.f32.mrf.mxu0
      %729 = vmatprep.mubr.bf16.mxu0 0
      %730 = vmatmul.mubr.bf16.gmra.mxu0 %v485
      %v731 = vpop.f32.mrf.mxu0
      %v732 = vadd.f32 0.0, %v731
      %v733 = vpop.f32.mrf.mxu0
      %v734 = vpop.f32.mrf.mxu0
      %v735 = vadd.f32 0.0, %v734
      %v736 = vpop.f32.mrf.mxu0
      %737 = vmatprep.mubr.bf16.mxu0 0
      %738 = vmatmul.mubr.bf16.gmra.mxu0 %v486
      %v739 = vpop.f32.mrf.mxu0
      %v740 = vadd.f32 0.0, %v739
      %v741 = vpop.f32.mrf.mxu0
      %v742 = vpop.f32.mrf.mxu0
      %v743 = vadd.f32 0.0, %v742
      %v744 = vpop.f32.mrf.mxu0
      %745 = vmatprep.mubr.bf16.mxu0 0
      %746 = vmatmul.mubr.bf16.gmra.mxu0 %v487
      %v747 = vpop.f32.mrf.mxu0
      %v748 = vadd.f32 0.0, %v747
      %v749 = vpop.f32.mrf.mxu0
      %v750 = vpop.f32.mrf.mxu0
      %v751 = vpop.f32.mrf.mxu0
      %752 = vdwg.mxu0
      %v769 = vunpack.c.l.b16 %v410
      %v770 = vunpack.c.l.b16 %v411
      %v771 = vunpack.c.l.b16 %v412
      %v772 = vunpack.c.l.b16 %v413
      %v773 = vunpack.c.l.b16 %v414
      %v774 = vunpack.c.l.b16 %v415
      %v775 = vunpack.c.l.b16 %v416
      %v776 = vunpack.c.l.b16 %v417
      %v777 = vunpack.c.l.b16 %v418
      %v778 = vunpack.c.l.b16 %v419
      %v779 = vunpack.c.l.b16 %v420
      %v780 = vunpack.c.l.b16 %v421
      %v781 = vunpack.c.l.b16 %v422
      %v782 = vunpack.c.l.b16 %v423
      %v783 = vunpack.c.l.b16 %v424
      %v784 = vunpack.c.l.b16 %v425
      %v785 = vpack.c.b16 %v770, %v769
      %v786 = vpack.c.b16 %v772, %v771
      %v787 = vpack.c.b16 %v774, %v773
      %v788 = vpack.c.b16 %v776, %v775
      %v789 = vpack.c.b16 %v778, %v777
      %v790 = vpack.c.b16 %v780, %v779
      %v791 = vpack.c.b16 %v782, %v781
      %v792 = vpack.c.b16 %v784, %v783
      %801 = vmatprep.subr.bf16.mxu0 0
      %802 = vmatpush1.bf16.msra.mxu0 %v792
      %803 = vmatprep.subr.bf16.mxu0 0
      %804 = vmatpush1.bf16.msra.mxu0 %v791
      %805 = vmatprep.subr.bf16.mxu0 0
      %806 = vmatpush1.bf16.msra.mxu0 %v790
      %807 = vmatprep.subr.bf16.mxu0 0
      %808 = vmatpush1.bf16.msra.mxu0 %v789
      %809 = vmatprep.subr.bf16.mxu0 0
      %810 = vmatpush1.bf16.msra.mxu0 %v788
      %811 = vmatprep.subr.bf16.mxu0 0
      %812 = vmatpush1.bf16.msra.mxu0 %v787
      %813 = vmatprep.subr.bf16.mxu0 0
      %814 = vmatpush1.bf16.msra.mxu0 %v786
      %815 = vmatprep.subr.bf16.mxu0 0
      %816 = vmatpush1.bf16.msra.mxu0 %v785
      %817 = vmatprep.subr.bf16.mxu0 0
      %818 = vmatpush2.bf16.msra.mxu0 0
      %819 = vmatprep.subr.bf16.mxu0 0
      %820 = vmatpush2.bf16.msra.mxu0 0
      %821 = vmatprep.subr.bf16.mxu0 0
      %822 = vmatpush2.bf16.msra.mxu0 0
      %823 = vmatprep.subr.bf16.mxu0 0
      %824 = vmatpush2.bf16.msra.mxu0 0
      %825 = vmatprep.subr.bf16.mxu0 0
      %826 = vmatpush2.bf16.msra.mxu0 0
      %827 = vmatprep.subr.bf16.mxu0 0
      %828 = vmatpush2.bf16.msra.mxu0 0
      %829 = vmatprep.subr.bf16.mxu0 0
      %830 = vmatpush2.bf16.msra.mxu0 0
      %831 = vmatprep.subr.bf16.mxu0 0
      %832 = vmatpush2.bf16.msra.mxu0 0
      %833 = vmatprep.mubr.bf16.mxu0 0
      %834 = vmatmul.mubr.bf16.gmra.mxu0 %v389
      %v835 = vpop.f32.mrf.mxu0
      %v836 = vadd.f32 %v588, %v835
      %v837 = vpop.f32.mrf.mxu0
      %v838 = vpop.f32.mrf.mxu0
      %v839 = vadd.f32 %v591, %v838
      %v840 = vpop.f32.mrf.mxu0
      %841 = vmatprep.mubr.bf16.mxu0 0
      %842 = vmatmul.mubr.bf16.gmra.mxu0 %v390
      %v843 = vpop.f32.mrf.mxu0
      %v844 = vadd.f32 %v596, %v843
      %v845 = vpop.f32.mrf.mxu0
      %v846 = vpop.f32.mrf.mxu0
      %v847 = vadd.f32 %v599, %v846
      %v848 = vpop.f32.mrf.mxu0
      %849 = vmatprep.mubr.bf16.mxu0 0
      %850 = vmatmul.mubr.bf16.gmra.mxu0 %v391
      %v851 = vpop.f32.mrf.mxu0
      %v852 = vadd.f32 %v604, %v851
      %v853 = vpop.f32.mrf.mxu0
      %v854 = vpop.f32.mrf.mxu0
      %v855 = vadd.f32 %v607, %v854
      %v856 = vpop.f32.mrf.mxu0
      %857 = vmatprep.mubr.bf16.mxu0 0
      %858 = vmatmul.mubr.bf16.gmra.mxu0 %v392
      %v859 = vpop.f32.mrf.mxu0
      %v860 = vadd.f32 %v612, %v859
      %v861 = vpop.f32.mrf.mxu0
      %v862 = vpop.f32.mrf.mxu0
      %v863 = vadd.f32 %v615, %v862
      %v864 = vpop.f32.mrf.mxu0
      %865 = vmatprep.mubr.bf16.mxu0 0
      %866 = vmatmul.mubr.bf16.gmra.mxu0 %v393
      %v867 = vpop.f32.mrf.mxu0
      %v868 = vadd.f32 %v620, %v867
      %v869 = vpop.f32.mrf.mxu0
      %v870 = vpop.f32.mrf.mxu0
      %v871 = vadd.f32 %v623, %v870
      %v872 = vpop.f32.mrf.mxu0
      %873 = vmatprep.mubr.bf16.mxu0 0
      %874 = vmatmul.mubr.bf16.gmra.mxu0 %v394
      %v875 = vpop.f32.mrf.mxu0
      %v876 = vadd.f32 %v628, %v875
      %v877 = vpop.f32.mrf.mxu0
      %v878 = vpop.f32.mrf.mxu0
      %v879 = vadd.f32 %v631, %v878
      %v880 = vpop.f32.mrf.mxu0
      %881 = vmatprep.mubr.bf16.mxu0 0
      %882 = vmatmul.mubr.bf16.gmra.mxu0 %v395
      %v883 = vpop.f32.mrf.mxu0
      %v884 = vadd.f32 %v636, %v883
      %v885 = vpop.f32.mrf.mxu0
      %v886 = vpop.f32.mrf.mxu0
      %v887 = vadd.f32 %v639, %v886
      %v888 = vpop.f32.mrf.mxu0
      %889 = vmatprep.mubr.bf16.mxu0 0
      %890 = vmatmul.mubr.bf16.gmra.mxu0 %v396
      %v891 = vpop.f32.mrf.mxu0
      %v892 = vadd.f32 %v644, %v891
      %v893 = vpop.f32.mrf.mxu0
      %v894 = vpop.f32.mrf.mxu0
      %v895 = vadd.f32 %v647, %v894
      %v896 = vpop.f32.mrf.mxu0
      %897 = vmatprep.mubr.bf16.mxu0 0
      %898 = vmatmul.mubr.bf16.gmra.mxu0 %v397
      %v899 = vpop.f32.mrf.mxu0
      %v900 = vadd.f32 %v652, %v899
      %v901 = vpop.f32.mrf.mxu0
      %v902 = vpop.f32.mrf.mxu0
      %v903 = vadd.f32 %v655, %v902
      %v904 = vpop.f32.mrf.mxu0
      %905 = vmatprep.mubr.bf16.mxu0 0
      %906 = vmatmul.mubr.bf16.gmra.mxu0 %v398
      %v907 = vpop.f32.mrf.mxu0
      %v908 = vadd.f32 %v660, %v907
      %v909 = vpop.f32.mrf.mxu0
      %v910 = vpop.f32.mrf.mxu0
      %v911 = vadd.f32 %v663, %v910
      %v912 = vpop.f32.mrf.mxu0
      %913 = vmatprep.mubr.bf16.mxu0 0
      %914 = vmatmul.mubr.bf16.gmra.mxu0 %v399
      %v915 = vpop.f32.mrf.mxu0
      %v916 = vadd.f32 %v668, %v915
      %v917 = vpop.f32.mrf.mxu0
      %v918 = vpop.f32.mrf.mxu0
      %v919 = vadd.f32 %v671, %v918
      %v920 = vpop.f32.mrf.mxu0
      %921 = vmatprep.mubr.bf16.mxu0 0
      %922 = vmatmul.mubr.bf16.gmra.mxu0 %v400
      %v923 = vpop.f32.mrf.mxu0
      %v924 = vadd.f32 %v676, %v923
      %v925 = vpop.f32.mrf.mxu0
      %v926 = vpop.f32.mrf.mxu0
      %v927 = vadd.f32 %v679, %v926
      %v928 = vpop.f32.mrf.mxu0
      %929 = vmatprep.mubr.bf16.mxu0 0
      %930 = vmatmul.mubr.bf16.gmra.mxu0 %v401
      %v931 = vpop.f32.mrf.mxu0
      %v932 = vadd.f32 %v684, %v931
      %v933 = vpop.f32.mrf.mxu0
      %v934 = vpop.f32.mrf.mxu0
      %v935 = vadd.f32 %v687, %v934
      %v936 = vpop.f32.mrf.mxu0
      %937 = vmatprep.mubr.bf16.mxu0 0
      %938 = vmatmul.mubr.bf16.gmra.mxu0 %v402
      %v939 = vpop.f32.mrf.mxu0
      %v940 = vadd.f32 %v692, %v939
      %v941 = vpop.f32.mrf.mxu0
      %v942 = vpop.f32.mrf.mxu0
      %v943 = vadd.f32 %v695, %v942
      %v944 = vpop.f32.mrf.mxu0
      %945 = vmatprep.mubr.bf16.mxu0 0
      %946 = vmatmul.mubr.bf16.gmra.mxu0 %v403
      %v947 = vpop.f32.mrf.mxu0
      %v948 = vadd.f32 %v700, %v947
      %v949 = vpop.f32.mrf.mxu0
      %v950 = vpop.f32.mrf.mxu0
      %v951 = vadd.f32 %v703, %v950
      %v952 = vpop.f32.mrf.mxu0
      %953 = vmatprep.mubr.bf16.mxu0 0
      %954 = vmatmul.mubr.bf16.gmra.mxu0 %v404
      %v955 = vpop.f32.mrf.mxu0
      %v956 = vadd.f32 %v708, %v955
      %v957 = vpop.f32.mrf.mxu0
      %v958 = vpop.f32.mrf.mxu0
      %v959 = vadd.f32 %v711, %v958
      %v960 = vpop.f32.mrf.mxu0
      %961 = vmatprep.mubr.bf16.mxu0 0
      %962 = vmatmul.mubr.bf16.gmra.mxu0 %v405
      %v963 = vpop.f32.mrf.mxu0
      %v964 = vadd.f32 %v716, %v963
      %v965 = vpop.f32.mrf.mxu0
      %v966 = vpop.f32.mrf.mxu0
      %v967 = vadd.f32 %v719, %v966
      %v968 = vpop.f32.mrf.mxu0
      %969 = vmatprep.mubr.bf16.mxu0 0
      %970 = vmatmul.mubr.bf16.gmra.mxu0 %v406
      %v971 = vpop.f32.mrf.mxu0
      %v972 = vadd.f32 %v724, %v971
      %v973 = vpop.f32.mrf.mxu0
      %v974 = vpop.f32.mrf.mxu0
      %v975 = vadd.f32 %v727, %v974
      %v976 = vpop.f32.mrf.mxu0
      %977 = vmatprep.mubr.bf16.mxu0 0
      %978 = vmatmul.mubr.bf16.gmra.mxu0 %v407
      %v979 = vpop.f32.mrf.mxu0
      %v980 = vadd.f32 %v732, %v979
      %v981 = vpop.f32.mrf.mxu0
      %v982 = vpop.f32.mrf.mxu0
      %v983 = vadd.f32 %v735, %v982
      %v984 = vpop.f32.mrf.mxu0
      %985 = vmatprep.mubr.bf16.mxu0 0
      %986 = vmatmul.mubr.bf16.gmra.mxu0 %v408
      %v987 = vpop.f32.mrf.mxu0
      %v988 = vadd.f32 %v740, %v987
      %v989 = vpop.f32.mrf.mxu0
      %v990 = vpop.f32.mrf.mxu0
      %v991 = vadd.f32 %v743, %v990
      %v992 = vpop.f32.mrf.mxu0
      %993 = vmatprep.mubr.bf16.mxu0 0
      %994 = vmatmul.mubr.bf16.gmra.mxu0 %v409
      %v995 = vpop.f32.mrf.mxu0
      %v996 = vadd.f32 %v748, %v995
      %v997 = vpop.f32.mrf.mxu0
      %v998 = vpop.f32.mrf.mxu0
      %v999 = vpop.f32.mrf.mxu0
      %1000 = vdwg.mxu0
      %v1001 = vld [vmem:[%s300 + $0x2] sm:$0xff]
      %v1002 = vld [vmem:[%s300 + $0xa] sm:$0xff]
      %v1003 = vld [vmem:[%s300 + $0x12] sm:$0xff]
      %v1004 = vld [vmem:[%s300 + $0x1a] sm:$0xff]
      %v1005 = vld [vmem:[%s300 + $0x22] sm:$0xff]
      %v1006 = vld [vmem:[%s300 + $0x2a] sm:$0xff]
      %v1007 = vld [vmem:[%s300 + $0x32] sm:$0xff]
      %v1008 = vld [vmem:[%s300 + $0x3a] sm:$0xff]
      %v1009 = vld [vmem:[%s300 + $0x42] sm:$0xff]
      %v1010 = vld [vmem:[%s300 + $0x4a] sm:$0xff]
      %v1011 = vld [vmem:[%s300 + $0x52] sm:$0xff]
      %v1012 = vld [vmem:[%s300 + $0x5a] sm:$0xff]
      %v1013 = vld [vmem:[%s300 + $0x62] sm:$0xff]
      %v1014 = vld [vmem:[%s300 + $0x6a] sm:$0xff]
      %v1015 = vld [vmem:[%s300 + $0x72] sm:$0xff]
      %v1016 = vld [vmem:[%s300 + $0x7a] sm:$0xff]
      %v1017 = vld [vmem:[%s300 + $0x82] sm:$0xff]
      %v1018 = vld [vmem:[%s300 + $0x8a] sm:$0xff]
      %v1019 = vld [vmem:[%s300 + $0x92] sm:$0xff]
      %v1020 = vld [vmem:[%s300 + $0x9a] sm:$0xff]
      %v1021 = vld [vmem:[%s300 + $0xa2] sm:$0xff]
      %v1022 = vld [vmem:[%s300 + $0xaa] sm:$0xff]
      %v1023 = vld [vmem:[%s300 + $0xb2] sm:$0xff]
      %v1024 = vld [vmem:[%s300 + $0xba] sm:$0xff]
      %v1025 = vld [vmem:[%s300 + $0xc2] sm:$0xff]
      %v1026 = vld [vmem:[%s300 + $0xca] sm:$0xff]
      %v1027 = vld [vmem:[%s300 + $0xd2] sm:$0xff]
      %v1028 = vld [vmem:[%s300 + $0xda] sm:$0xff]
      %v1029 = vld [vmem:[%s300 + $0xe2] sm:$0xff]
      %v1030 = vld [vmem:[%s300 + $0xea] sm:$0xff]
      %v1031 = vld [vmem:[%s300 + $0xf2] sm:$0xff]
      %v1032 = vld [vmem:[%s300 + $0xfa] sm:$0xff]
      %v1033 = vld [vmem:[%s300 + $0x102] sm:$0xff]
      %v1034 = vld [vmem:[%s300 + $0x10a] sm:$0xff]
      %v1035 = vld [vmem:[%s300 + $0x112] sm:$0xff]
      %v1036 = vld [vmem:[%s300 + $0x11a] sm:$0xff]
      %v1037 = vld [vmem:[%s300 + $0x122] sm:$0xff]
      %v1038 = vld [vmem:[%s300 + $0x12a] sm:$0xff]
      %v1039 = vld [vmem:[%s300 + $0x132] sm:$0xff]
      %v1040 = vld [vmem:[%s300 + $0x13a] sm:$0xff]
      %v1041 = vld [vmem:[%s300 + $0x142] sm:$0xf]
      %v1042 = vpack.c.bf16 %v1002, %v1001
      %v1043 = vpack.c.bf16 %v1004, %v1003
      %v1044 = vpack.c.bf16 %v1006, %v1005
      %v1045 = vpack.c.bf16 %v1008, %v1007
      %v1046 = vpack.c.bf16 %v1010, %v1009
      %v1047 = vpack.c.bf16 %v1012, %v1011
      %v1048 = vpack.c.bf16 %v1014, %v1013
      %v1049 = vpack.c.bf16 %v1016, %v1015
      %v1050 = vpack.c.bf16 %v1018, %v1017
      %v1051 = vpack.c.bf16 %v1020, %v1019
      %v1052 = vpack.c.bf16 %v1022, %v1021
      %v1053 = vpack.c.bf16 %v1024, %v1023
      %v1054 = vpack.c.bf16 %v1026, %v1025
      %v1055 = vpack.c.bf16 %v1028, %v1027
      %v1056 = vpack.c.bf16 %v1030, %v1029
      %v1057 = vpack.c.bf16 %v1032, %v1031
      %v1058 = vpack.c.bf16 %v1034, %v1033
      %v1059 = vpack.c.bf16 %v1036, %v1035
      %v1060 = vpack.c.bf16 %v1038, %v1037
      %v1061 = vpack.c.bf16 %v1040, %v1039
      %v1062 = vpack.c.bf16 %v1041, %v1041
      %s1063 = scalar_lea.vmem %s2, 128
      %v1064 = vld [vmem:[%s1063] sm:$0xf]
      %v1065 = vld [vmem:[%s1063 + $0x4] sm:$0xf]
      %v1066 = vld [vmem:[%s1063 + $0x8] sm:$0xf]
      %v1067 = vld [vmem:[%s1063 + $0xc] sm:$0xf]
      %v1068 = vld [vmem:[%s1063 + $0x10] sm:$0xf]
      %v1069 = vld [vmem:[%s1063 + $0x14] sm:$0xf]
      %v1070 = vld [vmem:[%s1063 + $0x18] sm:$0xf]
      %v1071 = vld [vmem:[%s1063 + $0x1c] sm:$0xf]
      %v1072 = vld [vmem:[%s1063 + $0x20] sm:$0xf]
      %v1073 = vld [vmem:[%s1063 + $0x24] sm:$0xf]
      %v1074 = vld [vmem:[%s1063 + $0x28] sm:$0xf]
      %v1075 = vld [vmem:[%s1063 + $0x2c] sm:$0xf]
      %v1076 = vld [vmem:[%s1063 + $0x30] sm:$0xf]
      %v1077 = vld [vmem:[%s1063 + $0x34] sm:$0xf]
      %v1078 = vld [vmem:[%s1063 + $0x38] sm:$0xf]
      %v1079 = vld [vmem:[%s1063 + $0x3c] sm:$0xf]
      %v1096 = vunpack.c.l.b16 %v1064
      %v1097 = vunpack.c.l.b16 %v1065
      %v1098 = vunpack.c.l.b16 %v1066
      %v1099 = vunpack.c.l.b16 %v1067
      %v1100 = vunpack.c.l.b16 %v1068
      %v1101 = vunpack.c.l.b16 %v1069
      %v1102 = vunpack.c.l.b16 %v1070
      %v1103 = vunpack.c.l.b16 %v1071
      %v1104 = vunpack.c.l.b16 %v1072
      %v1105 = vunpack.c.l.b16 %v1073
      %v1106 = vunpack.c.l.b16 %v1074
      %v1107 = vunpack.c.l.b16 %v1075
      %v1108 = vunpack.c.l.b16 %v1076
      %v1109 = vunpack.c.l.b16 %v1077
      %v1110 = vunpack.c.l.b16 %v1078
      %v1111 = vunpack.c.l.b16 %v1079
      %v1112 = vpack.c.b16 %v1097, %v1096
      %v1113 = vpack.c.b16 %v1099, %v1098
      %v1114 = vpack.c.b16 %v1101, %v1100
      %v1115 = vpack.c.b16 %v1103, %v1102
      %v1116 = vpack.c.b16 %v1105, %v1104
      %v1117 = vpack.c.b16 %v1107, %v1106
      %v1118 = vpack.c.b16 %v1109, %v1108
      %v1119 = vpack.c.b16 %v1111, %v1110
      %1128 = vmatprep.subr.bf16.mxu0 0
      %1129 = vmatpush1.bf16.msra.mxu0 %v1119
      %1130 = vmatprep.subr.bf16.mxu0 0
      %1131 = vmatpush1.bf16.msra.mxu0 %v1118
      %1132 = vmatprep.subr.bf16.mxu0 0
      %1133 = vmatpush1.bf16.msra.mxu0 %v1117
      %1134 = vmatprep.subr.bf16.mxu0 0
      %1135 = vmatpush1.bf16.msra.mxu0 %v1116
      %1136 = vmatprep.subr.bf16.mxu0 0
      %1137 = vmatpush1.bf16.msra.mxu0 %v1115
      %1138 = vmatprep.subr.bf16.mxu0 0
      %1139 = vmatpush1.bf16.msra.mxu0 %v1114
      %1140 = vmatprep.subr.bf16.mxu0 0
      %1141 = vmatpush1.bf16.msra.mxu0 %v1113
      %1142 = vmatprep.subr.bf16.mxu0 0
      %1143 = vmatpush1.bf16.msra.mxu0 %v1112
      %1144 = vmatprep.subr.bf16.mxu0 0
      %1145 = vmatpush2.bf16.msra.mxu0 0
      %1146 = vmatprep.subr.bf16.mxu0 0
      %1147 = vmatpush2.bf16.msra.mxu0 0
      %1148 = vmatprep.subr.bf16.mxu0 0
      %1149 = vmatpush2.bf16.msra.mxu0 0
      %1150 = vmatprep.subr.bf16.mxu0 0
      %1151 = vmatpush2.bf16.msra.mxu0 0
      %1152 = vmatprep.subr.bf16.mxu0 0
      %1153 = vmatpush2.bf16.msra.mxu0 0
      %1154 = vmatprep.subr.bf16.mxu0 0
      %1155 = vmatpush2.bf16.msra.mxu0 0
      %1156 = vmatprep.subr.bf16.mxu0 0
      %1157 = vmatpush2.bf16.msra.mxu0 0
      %1158 = vmatprep.subr.bf16.mxu0 0
      %1159 = vmatpush2.bf16.msra.mxu0 0
      %1160 = vmatprep.mubr.bf16.mxu0 0
      %1161 = vmatmul.mubr.bf16.gmra.mxu0 %v1042
      %v1162 = vpop.f32.mrf.mxu0
      %v1163 = vadd.f32 0.0, %v1162
      %v1164 = vpop.f32.mrf.mxu0
      %v1165 = vpop.f32.mrf.mxu0
      %v1166 = vadd.f32 0.0, %v1165
      %v1167 = vpop.f32.mrf.mxu0
      %1168 = vmatprep.mubr.bf16.mxu0 0
      %1169 = vmatmul.mubr.bf16.gmra.mxu0 %v1043
      %v1170 = vpop.f32.mrf.mxu0
      %v1171 = vadd.f32 0.0, %v1170
      %v1172 = vpop.f32.mrf.mxu0
      %v1173 = vpop.f32.mrf.mxu0
      %v1174 = vadd.f32 0.0, %v1173
      %v1175 = vpop.f32.mrf.mxu0
      %1176 = vmatprep.mubr.bf16.mxu0 0
      %1177 = vmatmul.mubr.bf16.gmra.mxu0 %v1044
      %v1178 = vpop.f32.mrf.mxu0
      %v1179 = vadd.f32 0.0, %v1178
      %v1180 = vpop.f32.mrf.mxu0
      %v1181 = vpop.f32.mrf.mxu0
      %v1182 = vadd.f32 0.0, %v1181
      %v1183 = vpop.f32.mrf.mxu0
      %1184 = vmatprep.mubr.bf16.mxu0 0
      %1185 = vmatmul.mubr.bf16.gmra.mxu0 %v1045
      %v1186 = vpop.f32.mrf.mxu0
      %v1187 = vadd.f32 0.0, %v1186
      %v1188 = vpop.f32.mrf.mxu0
      %v1189 = vpop.f32.mrf.mxu0
      %v1190 = vadd.f32 0.0, %v1189
      %v1191 = vpop.f32.mrf.mxu0
      %1192 = vmatprep.mubr.bf16.mxu0 0
      %1193 = vmatmul.mubr.bf16.gmra.mxu0 %v1046
      %v1194 = vpop.f32.mrf.mxu0
      %v1195 = vadd.f32 0.0, %v1194
      %v1196 = vpop.f32.mrf.mxu0
      %v1197 = vpop.f32.mrf.mxu0
      %v1198 = vadd.f32 0.0, %v1197
      %v1199 = vpop.f32.mrf.mxu0
      %1200 = vmatprep.mubr.bf16.mxu0 0
      %1201 = vmatmul.mubr.bf16.gmra.mxu0 %v1047
      %v1202 = vpop.f32.mrf.mxu0
      %v1203 = vadd.f32 0.0, %v1202
      %v1204 = vpop.f32.mrf.mxu0
      %v1205 = vpop.f32.mrf.mxu0
      %v1206 = vadd.f32 0.0, %v1205
      %v1207 = vpop.f32.mrf.mxu0
      %1208 = vmatprep.mubr.bf16.mxu0 0
      %1209 = vmatmul.mubr.bf16.gmra.mxu0 %v1048
      %v1210 = vpop.f32.mrf.mxu0
      %v1211 = vadd.f32 0.0, %v1210
      %v1212 = vpop.f32.mrf.mxu0
      %v1213 = vpop.f32.mrf.mxu0
      %v1214 = vadd.f32 0.0, %v1213
      %v1215 = vpop.f32.mrf.mxu0
      %1216 = vmatprep.mubr.bf16.mxu0 0
      %1217 = vmatmul.mubr.bf16.gmra.mxu0 %v1049
      %v1218 = vpop.f32.mrf.mxu0
      %v1219 = vadd.f32 0.0, %v1218
      %v1220 = vpop.f32.mrf.mxu0
      %v1221 = vpop.f32.mrf.mxu0
      %v1222 = vadd.f32 0.0, %v1221
      %v1223 = vpop.f32.mrf.mxu0
      %1224 = vmatprep.mubr.bf16.mxu0 0
      %1225 = vmatmul.mubr.bf16.gmra.mxu0 %v1050
      %v1226 = vpop.f32.mrf.mxu0
      %v1227 = vadd.f32 0.0, %v1226
      %v1228 = vpop.f32.mrf.mxu0
      %v1229 = vpop.f32.mrf.mxu0
      %v1230 = vadd.f32 0.0, %v1229
      %v1231 = vpop.f32.mrf.mxu0
      %1232 = vmatprep.mubr.bf16.mxu0 0
      %1233 = vmatmul.mubr.bf16.gmra.mxu0 %v1051
      %v1234 = vpop.f32.mrf.mxu0
      %v1235 = vadd.f32 0.0, %v1234
      %v1236 = vpop.f32.mrf.mxu0
      %v1237 = vpop.f32.mrf.mxu0
      %v1238 = vadd.f32 0.0, %v1237
      %v1239 = vpop.f32.mrf.mxu0
      %1240 = vmatprep.mubr.bf16.mxu0 0
      %1241 = vmatmul.mubr.bf16.gmra.mxu0 %v1052
      %v1242 = vpop.f32.mrf.mxu0
      %v1243 = vadd.f32 0.0, %v1242
      %v1244 = vpop.f32.mrf.mxu0
      %v1245 = vpop.f32.mrf.mxu0
      %v1246 = vadd.f32 0.0, %v1245
      %v1247 = vpop.f32.mrf.mxu0
      %1248 = vmatprep.mubr.bf16.mxu0 0
      %1249 = vmatmul.mubr.bf16.gmra.mxu0 %v1053
      %v1250 = vpop.f32.mrf.mxu0
      %v1251 = vadd.f32 0.0, %v1250
      %v1252 = vpop.f32.mrf.mxu0
      %v1253 = vpop.f32.mrf.mxu0
      %v1254 = vadd.f32 0.0, %v1253
      %v1255 = vpop.f32.mrf.mxu0
      %1256 = vmatprep.mubr.bf16.mxu0 0
      %1257 = vmatmul.mubr.bf16.gmra.mxu0 %v1054
      %v1258 = vpop.f32.mrf.mxu0
      %v1259 = vadd.f32 0.0, %v1258
      %v1260 = vpop.f32.mrf.mxu0
      %v1261 = vpop.f32.mrf.mxu0
      %v1262 = vadd.f32 0.0, %v1261
      %v1263 = vpop.f32.mrf.mxu0
      %1264 = vmatprep.mubr.bf16.mxu0 0
      %1265 = vmatmul.mubr.bf16.gmra.mxu0 %v1055
      %v1266 = vpop.f32.mrf.mxu0
      %v1267 = vadd.f32 0.0, %v1266
      %v1268 = vpop.f32.mrf.mxu0
      %v1269 = vpop.f32.mrf.mxu0
      %v1270 = vadd.f32 0.0, %v1269
      %v1271 = vpop.f32.mrf.mxu0
      %1272 = vmatprep.mubr.bf16.mxu0 0
      %1273 = vmatmul.mubr.bf16.gmra.mxu0 %v1056
      %v1274 = vpop.f32.mrf.mxu0
      %v1275 = vadd.f32 0.0, %v1274
      %v1276 = vpop.f32.mrf.mxu0
      %v1277 = vpop.f32.mrf.mxu0
      %v1278 = vadd.f32 0.0, %v1277
      %v1279 = vpop.f32.mrf.mxu0
      %1280 = vmatprep.mubr.bf16.mxu0 0
      %1281 = vmatmul.mubr.bf16.gmra.mxu0 %v1057
      %v1282 = vpop.f32.mrf.mxu0
      %v1283 = vadd.f32 0.0, %v1282
      %v1284 = vpop.f32.mrf.mxu0
      %v1285 = vpop.f32.mrf.mxu0
      %v1286 = vadd.f32 0.0, %v1285
      %v1287 = vpop.f32.mrf.mxu0
      %1288 = vmatprep.mubr.bf16.mxu0 0
      %1289 = vmatmul.mubr.bf16.gmra.mxu0 %v1058
      %v1290 = vpop.f32.mrf.mxu0
      %v1291 = vadd.f32 0.0, %v1290
      %v1292 = vpop.f32.mrf.mxu0
      %v1293 = vpop.f32.mrf.mxu0
      %v1294 = vadd.f32 0.0, %v1293
      %v1295 = vpop.f32.mrf.mxu0
      %1296 = vmatprep.mubr.bf16.mxu0 0
      %1297 = vmatmul.mubr.bf16.gmra.mxu0 %v1059
      %v1298 = vpop.f32.mrf.mxu0
      %v1299 = vadd.f32 0.0, %v1298
      %v1300 = vpop.f32.mrf.mxu0
      %v1301 = vpop.f32.mrf.mxu0
      %v1302 = vadd.f32 0.0, %v1301
      %v1303 = vpop.f32.mrf.mxu0
      %1304 = vmatprep.mubr.bf16.mxu0 0
      %1305 = vmatmul.mubr.bf16.gmra.mxu0 %v1060
      %v1306 = vpop.f32.mrf.mxu0
      %v1307 = vadd.f32 0.0, %v1306
      %v1308 = vpop.f32.mrf.mxu0
      %v1309 = vpop.f32.mrf.mxu0
      %v1310 = vadd.f32 0.0, %v1309
      %v1311 = vpop.f32.mrf.mxu0
      %1312 = vmatprep.mubr.bf16.mxu0 0
      %1313 = vmatmul.mubr.bf16.gmra.mxu0 %v1061
      %v1314 = vpop.f32.mrf.mxu0
      %v1315 = vadd.f32 0.0, %v1314
      %v1316 = vpop.f32.mrf.mxu0
      %v1317 = vpop.f32.mrf.mxu0
      %v1318 = vadd.f32 0.0, %v1317
      %v1319 = vpop.f32.mrf.mxu0
      %1320 = vmatprep.mubr.bf16.mxu0 0
      %1321 = vmatmul.mubr.bf16.gmra.mxu0 %v1062
      %v1322 = vpop.f32.mrf.mxu0
      %v1323 = vadd.f32 0.0, %v1322
      %v1324 = vpop.f32.mrf.mxu0
      %v1325 = vpop.f32.mrf.mxu0
      %v1326 = vpop.f32.mrf.mxu0
      %1327 = vdwg.mxu0
      %v1328 = vadd.f32 %v836, %v1163
      %v1329 = vadd.f32 %v839, %v1166
      %v1330 = vadd.f32 %v844, %v1171
      %v1331 = vadd.f32 %v847, %v1174
      %v1332 = vadd.f32 %v852, %v1179
      %v1333 = vadd.f32 %v855, %v1182
      %v1334 = vadd.f32 %v860, %v1187
      %v1335 = vadd.f32 %v863, %v1190
      %v1336 = vadd.f32 %v868, %v1195
      %v1337 = vadd.f32 %v871, %v1198
      %v1338 = vadd.f32 %v876, %v1203
      %v1339 = vadd.f32 %v879, %v1206
      %v1340 = vadd.f32 %v884, %v1211
      %v1341 = vadd.f32 %v887, %v1214
      %v1342 = vadd.f32 %v892, %v1219
      %v1343 = vadd.f32 %v895, %v1222
      %v1344 = vadd.f32 %v900, %v1227
      %v1345 = vadd.f32 %v903, %v1230
      %v1346 = vadd.f32 %v908, %v1235
      %v1347 = vadd.f32 %v911, %v1238
      %v1348 = vadd.f32 %v916, %v1243
      %v1349 = vadd.f32 %v919, %v1246
      %v1350 = vadd.f32 %v924, %v1251
      %v1351 = vadd.f32 %v927, %v1254
      %v1352 = vadd.f32 %v932, %v1259
      %v1353 = vadd.f32 %v935, %v1262
      %v1354 = vadd.f32 %v940, %v1267
      %v1355 = vadd.f32 %v943, %v1270
      %v1356 = vadd.f32 %v948, %v1275
      %v1357 = vadd.f32 %v951, %v1278
      %v1358 = vadd.f32 %v956, %v1283
      %v1359 = vadd.f32 %v959, %v1286
      %v1360 = vadd.f32 %v964, %v1291
      %v1361 = vadd.f32 %v967, %v1294
      %v1362 = vadd.f32 %v972, %v1299
      %v1363 = vadd.f32 %v975, %v1302
      %v1364 = vadd.f32 %v980, %v1307
      %v1365 = vadd.f32 %v983, %v1310
      %v1366 = vadd.f32 %v988, %v1315
      %v1367 = vadd.f32 %v991, %v1318
      %v1368 = vadd.f32 %v996, %v1323
      %v1369 = vld [vmem:[%s300 + $0x12] sm:$0xff]
      %v1370 = vld [vmem:[%s300 + $0x1a] sm:$0xff]
      %v1371 = vld [vmem:[%s300 + $0x22] sm:$0xff]
      %v1372 = vld [vmem:[%s300 + $0x2a] sm:$0xff]
      %v1373 = vld [vmem:[%s300 + $0x32] sm:$0xff]
      %v1374 = vld [vmem:[%s300 + $0x3a] sm:$0xff]
      %v1375 = vld [vmem:[%s300 + $0x42] sm:$0xff]
      %v1376 = vld [vmem:[%s300 + $0x4a] sm:$0xff]
      %v1377 = vld [vmem:[%s300 + $0x52] sm:$0xff]
      %v1378 = vld [vmem:[%s300 + $0x5a] sm:$0xff]
      %v1379 = vld [vmem:[%s300 + $0x62] sm:$0xff]
      %v1380 = vld [vmem:[%s300 + $0x6a] sm:$0xff]
      %v1381 = vld [vmem:[%s300 + $0x72] sm:$0xff]
      %v1382 = vld [vmem:[%s300 + $0x7a] sm:$0xff]
      %v1383 = vld [vmem:[%s300 + $0x82] sm:$0xff]
      %v1384 = vld [vmem:[%s300 + $0x8a] sm:$0xff]
      %v1385 = vld [vmem:[%s300 + $0x92] sm:$0xff]
      %v1386 = vld [vmem:[%s300 + $0x9a] sm:$0xff]
      %v1387 = vld [vmem:[%s300 + $0xa2] sm:$0xff]
      %v1388 = vld [vmem:[%s300 + $0xaa] sm:$0xff]
      %v1389 = vld [vmem:[%s300 + $0xb2] sm:$0xff]
      %v1390 = vld [vmem:[%s300 + $0xba] sm:$0xff]
      %v1391 = vld [vmem:[%s300 + $0xc2] sm:$0xff]
      %v1392 = vld [vmem:[%s300 + $0xca] sm:$0xff]
      %v1393 = vld [vmem:[%s300 + $0xd2] sm:$0xff]
      %v1394 = vld [vmem:[%s300 + $0xda] sm:$0xff]
      %v1395 = vld [vmem:[%s300 + $0xe2] sm:$0xff]
      %v1396 = vld [vmem:[%s300 + $0xea] sm:$0xff]
      %v1397 = vld [vmem:[%s300 + $0xf2] sm:$0xff]
      %v1398 = vld [vmem:[%s300 + $0xfa] sm:$0xff]
      %v1399 = vld [vmem:[%s300 + $0x102] sm:$0xff]
      %v1400 = vld [vmem:[%s300 + $0x10a] sm:$0xff]
      %v1401 = vld [vmem:[%s300 + $0x112] sm:$0xff]
      %v1402 = vld [vmem:[%s300 + $0x11a] sm:$0xff]
      %v1403 = vld [vmem:[%s300 + $0x122] sm:$0xff]
      %v1404 = vld [vmem:[%s300 + $0x12a] sm:$0xff]
      %v1405 = vld [vmem:[%s300 + $0x132] sm:$0xff]
      %v1406 = vld [vmem:[%s300 + $0x13a] sm:$0xff]
      %v1407 = vld [vmem:[%s300 + $0x142] sm:$0xff]
      %v1408 = vld [vmem:[%s300 + $0x14a] sm:$0xff]
      %v1409 = vld [vmem:[%s300 + $0x152] sm:$0xf]
      %v1410 = vpack.c.bf16 %v1370, %v1369
      %v1411 = vpack.c.bf16 %v1372, %v1371
      %v1412 = vpack.c.bf16 %v1374, %v1373
      %v1413 = vpack.c.bf16 %v1376, %v1375
      %v1414 = vpack.c.bf16 %v1378, %v1377
      %v1415 = vpack.c.bf16 %v1380, %v1379
      %v1416 = vpack.c.bf16 %v1382, %v1381
      %v1417 = vpack.c.bf16 %v1384, %v1383
      %v1418 = vpack.c.bf16 %v1386, %v1385
      %v1419 = vpack.c.bf16 %v1388, %v1387
      %v1420 = vpack.c.bf16 %v1390, %v1389
      %v1421 = vpack.c.bf16 %v1392, %v1391
      %v1422 = vpack.c.bf16 %v1394, %v1393
      %v1423 = vpack.c.bf16 %v1396, %v1395
      %v1424 = vpack.c.bf16 %v1398, %v1397
      %v1425 = vpack.c.bf16 %v1400, %v1399
      %v1426 = vpack.c.bf16 %v1402, %v1401
      %v1427 = vpack.c.bf16 %v1404, %v1403
      %v1428 = vpack.c.bf16 %v1406, %v1405
      %v1429 = vpack.c.bf16 %v1408, %v1407
      %v1430 = vpack.c.bf16 %v1409, %v1409
      %s1431 = scalar_lea.vmem %s2, 192
      %v1432 = vld [vmem:[%s1431] sm:$0xf]
      %v1433 = vld [vmem:[%s1431 + $0x4] sm:$0xf]
      %v1434 = vld [vmem:[%s1431 + $0x8] sm:$0xf]
      %v1435 = vld [vmem:[%s1431 + $0xc] sm:$0xf]
      %v1436 = vld [vmem:[%s1431 + $0x10] sm:$0xf]
      %v1437 = vld [vmem:[%s1431 + $0x14] sm:$0xf]
      %v1438 = vld [vmem:[%s1431 + $0x18] sm:$0xf]
      %v1439 = vld [vmem:[%s1431 + $0x1c] sm:$0xf]
      %v1440 = vld [vmem:[%s1431 + $0x20] sm:$0xf]
      %v1441 = vld [vmem:[%s1431 + $0x24] sm:$0xf]
      %v1442 = vld [vmem:[%s1431 + $0x28] sm:$0xf]
      %v1443 = vld [vmem:[%s1431 + $0x2c] sm:$0xf]
      %v1444 = vld [vmem:[%s1431 + $0x30] sm:$0xf]
      %v1445 = vld [vmem:[%s1431 + $0x34] sm:$0xf]
      %v1446 = vld [vmem:[%s1431 + $0x38] sm:$0xf]
      %v1447 = vld [vmem:[%s1431 + $0x3c] sm:$0xf]
      %v1464 = vunpack.c.l.b16 %v1432
      %v1465 = vunpack.c.l.b16 %v1433
      %v1466 = vunpack.c.l.b16 %v1434
      %v1467 = vunpack.c.l.b16 %v1435
      %v1468 = vunpack.c.l.b16 %v1436
      %v1469 = vunpack.c.l.b16 %v1437
      %v1470 = vunpack.c.l.b16 %v1438
      %v1471 = vunpack.c.l.b16 %v1439
      %v1472 = vunpack.c.l.b16 %v1440
      %v1473 = vunpack.c.l.b16 %v1441
      %v1474 = vunpack.c.l.b16 %v1442
      %v1475 = vunpack.c.l.b16 %v1443
      %v1476 = vunpack.c.l.b16 %v1444
      %v1477 = vunpack.c.l.b16 %v1445
      %v1478 = vunpack.c.l.b16 %v1446
      %v1479 = vunpack.c.l.b16 %v1447
      %v1480 = vpack.c.b16 %v1465, %v1464
      %v1481 = vpack.c.b16 %v1467, %v1466
      %v1482 = vpack.c.b16 %v1469, %v1468
      %v1483 = vpack.c.b16 %v1471, %v1470
      %v1484 = vpack.c.b16 %v1473, %v1472
      %v1485 = vpack.c.b16 %v1475, %v1474
      %v1486 = vpack.c.b16 %v1477, %v1476
      %v1487 = vpack.c.b16 %v1479, %v1478
      %1496 = vmatprep.subr.bf16.mxu0 0
      %1497 = vmatpush1.bf16.msra.mxu0 %v1487
      %1498 = vmatprep.subr.bf16.mxu0 0
      %1499 = vmatpush1.bf16.msra.mxu0 %v1486
      %1500 = vmatprep.subr.bf16.mxu0 0
      %1501 = vmatpush1.bf16.msra.mxu0 %v1485
      %1502 = vmatprep.subr.bf16.mxu0 0
      %1503 = vmatpush1.bf16.msra.mxu0 %v1484
      %1504 = vmatprep.subr.bf16.mxu0 0
      %1505 = vmatpush1.bf16.msra.mxu0 %v1483
      %1506 = vmatprep.subr.bf16.mxu0 0
      %1507 = vmatpush1.bf16.msra.mxu0 %v1482
      %1508 = vmatprep.subr.bf16.mxu0 0
      %1509 = vmatpush1.bf16.msra.mxu0 %v1481
      %1510 = vmatprep.subr.bf16.mxu0 0
      %1511 = vmatpush1.bf16.msra.mxu0 %v1480
      %1512 = vmatprep.subr.bf16.mxu0 0
      %1513 = vmatpush2.bf16.msra.mxu0 0
      %1514 = vmatprep.subr.bf16.mxu0 0
      %1515 = vmatpush2.bf16.msra.mxu0 0
      %1516 = vmatprep.subr.bf16.mxu0 0
      %1517 = vmatpush2.bf16.msra.mxu0 0
      %1518 = vmatprep.subr.bf16.mxu0 0
      %1519 = vmatpush2.bf16.msra.mxu0 0
      %1520 = vmatprep.subr.bf16.mxu0 0
      %1521 = vmatpush2.bf16.msra.mxu0 0
      %1522 = vmatprep.subr.bf16.mxu0 0
      %1523 = vmatpush2.bf16.msra.mxu0 0
      %1524 = vmatprep.subr.bf16.mxu0 0
      %1525 = vmatpush2.bf16.msra.mxu0 0
      %1526 = vmatprep.subr.bf16.mxu0 0
      %1527 = vmatpush2.bf16.msra.mxu0 0
      %1528 = vmatprep.mubr.bf16.mxu0 0
      %1529 = vmatmul.mubr.bf16.gmra.mxu0 %v1410
      %v1530 = vpop.f32.mrf.mxu0
      %v1531 = vadd.f32 0.0, %v1530
      %v1532 = vpop.f32.mrf.mxu0
      %v1533 = vpop.f32.mrf.mxu0
      %v1534 = vadd.f32 0.0, %v1533
      %v1535 = vpop.f32.mrf.mxu0
      %1536 = vmatprep.mubr.bf16.mxu0 0
      %1537 = vmatmul.mubr.bf16.gmra.mxu0 %v1411
      %v1538 = vpop.f32.mrf.mxu0
      %v1539 = vadd.f32 0.0, %v1538
      %v1540 = vpop.f32.mrf.mxu0
      %v1541 = vpop.f32.mrf.mxu0
      %v1542 = vadd.f32 0.0, %v1541
      %v1543 = vpop.f32.mrf.mxu0
      %1544 = vmatprep.mubr.bf16.mxu0 0
      %1545 = vmatmul.mubr.bf16.gmra.mxu0 %v1412
      %v1546 = vpop.f32.mrf.mxu0
      %v1547 = vadd.f32 0.0, %v1546
      %v1548 = vpop.f32.mrf.mxu0
      %v1549 = vpop.f32.mrf.mxu0
      %v1550 = vadd.f32 0.0, %v1549
      %v1551 = vpop.f32.mrf.mxu0
      %1552 = vmatprep.mubr.bf16.mxu0 0
      %1553 = vmatmul.mubr.bf16.gmra.mxu0 %v1413
      %v1554 = vpop.f32.mrf.mxu0
      %v1555 = vadd.f32 0.0, %v1554
      %v1556 = vpop.f32.mrf.mxu0
      %v1557 = vpop.f32.mrf.mxu0
      %v1558 = vadd.f32 0.0, %v1557
      %v1559 = vpop.f32.mrf.mxu0
      %1560 = vmatprep.mubr.bf16.mxu0 0
      %1561 = vmatmul.mubr.bf16.gmra.mxu0 %v1414
      %v1562 = vpop.f32.mrf.mxu0
      %v1563 = vadd.f32 0.0, %v1562
      %v1564 = vpop.f32.mrf.mxu0
      %v1565 = vpop.f32.mrf.mxu0
      %v1566 = vadd.f32 0.0, %v1565
      %v1567 = vpop.f32.mrf.mxu0
      %1568 = vmatprep.mubr.bf16.mxu0 0
      %1569 = vmatmul.mubr.bf16.gmra.mxu0 %v1415
      %v1570 = vpop.f32.mrf.mxu0
      %v1571 = vadd.f32 0.0, %v1570
      %v1572 = vpop.f32.mrf.mxu0
      %v1573 = vpop.f32.mrf.mxu0
      %v1574 = vadd.f32 0.0, %v1573
      %v1575 = vpop.f32.mrf.mxu0
      %1576 = vmatprep.mubr.bf16.mxu0 0
      %1577 = vmatmul.mubr.bf16.gmra.mxu0 %v1416
      %v1578 = vpop.f32.mrf.mxu0
      %v1579 = vadd.f32 0.0, %v1578
      %v1580 = vpop.f32.mrf.mxu0
      %v1581 = vpop.f32.mrf.mxu0
      %v1582 = vadd.f32 0.0, %v1581
      %v1583 = vpop.f32.mrf.mxu0
      %1584 = vmatprep.mubr.bf16.mxu0 0
      %1585 = vmatmul.mubr.bf16.gmra.mxu0 %v1417
      %v1586 = vpop.f32.mrf.mxu0
      %v1587 = vadd.f32 0.0, %v1586
      %v1588 = vpop.f32.mrf.mxu0
      %v1589 = vpop.f32.mrf.mxu0
      %v1590 = vadd.f32 0.0, %v1589
      %v1591 = vpop.f32.mrf.mxu0
      %1592 = vmatprep.mubr.bf16.mxu0 0
      %1593 = vmatmul.mubr.bf16.gmra.mxu0 %v1418
      %v1594 = vpop.f32.mrf.mxu0
      %v1595 = vadd.f32 0.0, %v1594
      %v1596 = vpop.f32.mrf.mxu0
      %v1597 = vpop.f32.mrf.mxu0
      %v1598 = vadd.f32 0.0, %v1597
      %v1599 = vpop.f32.mrf.mxu0
      %1600 = vmatprep.mubr.bf16.mxu0 0
      %1601 = vmatmul.mubr.bf16.gmra.mxu0 %v1419
      %v1602 = vpop.f32.mrf.mxu0
      %v1603 = vadd.f32 0.0, %v1602
      %v1604 = vpop.f32.mrf.mxu0
      %v1605 = vpop.f32.mrf.mxu0
      %v1606 = vadd.f32 0.0, %v1605
      %v1607 = vpop.f32.mrf.mxu0
      %1608 = vmatprep.mubr.bf16.mxu0 0
      %1609 = vmatmul.mubr.bf16.gmra.mxu0 %v1420
      %v1610 = vpop.f32.mrf.mxu0
      %v1611 = vadd.f32 0.0, %v1610
      %v1612 = vpop.f32.mrf.mxu0
      %v1613 = vpop.f32.mrf.mxu0
      %v1614 = vadd.f32 0.0, %v1613
      %v1615 = vpop.f32.mrf.mxu0
      %1616 = vmatprep.mubr.bf16.mxu0 0
      %1617 = vmatmul.mubr.bf16.gmra.mxu0 %v1421
      %v1618 = vpop.f32.mrf.mxu0
      %v1619 = vadd.f32 0.0, %v1618
      %v1620 = vpop.f32.mrf.mxu0
      %v1621 = vpop.f32.mrf.mxu0
      %v1622 = vadd.f32 0.0, %v1621
      %v1623 = vpop.f32.mrf.mxu0
      %1624 = vmatprep.mubr.bf16.mxu0 0
      %1625 = vmatmul.mubr.bf16.gmra.mxu0 %v1422
      %v1626 = vpop.f32.mrf.mxu0
      %v1627 = vadd.f32 0.0, %v1626
      %v1628 = vpop.f32.mrf.mxu0
      %v1629 = vpop.f32.mrf.mxu0
      %v1630 = vadd.f32 0.0, %v1629
      %v1631 = vpop.f32.mrf.mxu0
      %1632 = vmatprep.mubr.bf16.mxu0 0
      %1633 = vmatmul.mubr.bf16.gmra.mxu0 %v1423
      %v1634 = vpop.f32.mrf.mxu0
      %v1635 = vadd.f32 0.0, %v1634
      %v1636 = vpop.f32.mrf.mxu0
      %v1637 = vpop.f32.mrf.mxu0
      %v1638 = vadd.f32 0.0, %v1637
      %v1639 = vpop.f32.mrf.mxu0
      %1640 = vmatprep.mubr.bf16.mxu0 0
      %1641 = vmatmul.mubr.bf16.gmra.mxu0 %v1424
      %v1642 = vpop.f32.mrf.mxu0
      %v1643 = vadd.f32 0.0, %v1642
      %v1644 = vpop.f32.mrf.mxu0
      %v1645 = vpop.f32.mrf.mxu0
      %v1646 = vadd.f32 0.0, %v1645
      %v1647 = vpop.f32.mrf.mxu0
      %1648 = vmatprep.mubr.bf16.mxu0 0
      %1649 = vmatmul.mubr.bf16.gmra.mxu0 %v1425
      %v1650 = vpop.f32.mrf.mxu0
      %v1651 = vadd.f32 0.0, %v1650
      %v1652 = vpop.f32.mrf.mxu0
      %v1653 = vpop.f32.mrf.mxu0
      %v1654 = vadd.f32 0.0, %v1653
      %v1655 = vpop.f32.mrf.mxu0
      %1656 = vmatprep.mubr.bf16.mxu0 0
      %1657 = vmatmul.mubr.bf16.gmra.mxu0 %v1426
      %v1658 = vpop.f32.mrf.mxu0
      %v1659 = vadd.f32 0.0, %v1658
      %v1660 = vpop.f32.mrf.mxu0
      %v1661 = vpop.f32.mrf.mxu0
      %v1662 = vadd.f32 0.0, %v1661
      %v1663 = vpop.f32.mrf.mxu0
      %1664 = vmatprep.mubr.bf16.mxu0 0
      %1665 = vmatmul.mubr.bf16.gmra.mxu0 %v1427
      %v1666 = vpop.f32.mrf.mxu0
      %v1667 = vadd.f32 0.0, %v1666
      %v1668 = vpop.f32.mrf.mxu0
      %v1669 = vpop.f32.mrf.mxu0
      %v1670 = vadd.f32 0.0, %v1669
      %v1671 = vpop.f32.mrf.mxu0
      %1672 = vmatprep.mubr.bf16.mxu0 0
      %1673 = vmatmul.mubr.bf16.gmra.mxu0 %v1428
      %v1674 = vpop.f32.mrf.mxu0
      %v1675 = vadd.f32 0.0, %v1674
      %v1676 = vpop.f32.mrf.mxu0
      %v1677 = vpop.f32.mrf.mxu0
      %v1678 = vadd.f32 0.0, %v1677
      %v1679 = vpop.f32.mrf.mxu0
      %1680 = vmatprep.mubr.bf16.mxu0 0
      %1681 = vmatmul.mubr.bf16.gmra.mxu0 %v1429
      %v1682 = vpop.f32.mrf.mxu0
      %v1683 = vadd.f32 0.0, %v1682
      %v1684 = vpop.f32.mrf.mxu0
      %v1685 = vpop.f32.mrf.mxu0
      %v1686 = vadd.f32 0.0, %v1685
      %v1687 = vpop.f32.mrf.mxu0
      %1688 = vmatprep.mubr.bf16.mxu0 0
      %1689 = vmatmul.mubr.bf16.gmra.mxu0 %v1430
      %v1690 = vpop.f32.mrf.mxu0
      %v1691 = vadd.f32 0.0, %v1690
      %v1692 = vpop.f32.mrf.mxu0
      %v1693 = vpop.f32.mrf.mxu0
      %v1694 = vpop.f32.mrf.mxu0
      %1695 = vdwg.mxu0
      %v1696 = vadd.f32 %v1328, %v1531
      %v1697 = vadd.f32 %v1329, %v1534
      %v1698 = vadd.f32 %v1330, %v1539
      %v1699 = vadd.f32 %v1331, %v1542
      %v1700 = vadd.f32 %v1332, %v1547
      %v1701 = vadd.f32 %v1333, %v1550
      %v1702 = vadd.f32 %v1334, %v1555
      %v1703 = vadd.f32 %v1335, %v1558
      %v1704 = vadd.f32 %v1336, %v1563
      %v1705 = vadd.f32 %v1337, %v1566
      %v1706 = vadd.f32 %v1338, %v1571
      %v1707 = vadd.f32 %v1339, %v1574
      %v1708 = vadd.f32 %v1340, %v1579
      %v1709 = vadd.f32 %v1341, %v1582
      %v1710 = vadd.f32 %v1342, %v1587
      %v1711 = vadd.f32 %v1343, %v1590
      %v1712 = vadd.f32 %v1344, %v1595
      %v1713 = vadd.f32 %v1345, %v1598
      %v1714 = vadd.f32 %v1346, %v1603
      %v1715 = vadd.f32 %v1347, %v1606
      %v1716 = vadd.f32 %v1348, %v1611
      %v1717 = vadd.f32 %v1349, %v1614
      %v1718 = vadd.f32 %v1350, %v1619
      %v1719 = vadd.f32 %v1351, %v1622
      %v1720 = vadd.f32 %v1352, %v1627
      %v1721 = vadd.f32 %v1353, %v1630
      %v1722 = vadd.f32 %v1354, %v1635
      %v1723 = vadd.f32 %v1355, %v1638
      %v1724 = vadd.f32 %v1356, %v1643
      %v1725 = vadd.f32 %v1357, %v1646
      %v1726 = vadd.f32 %v1358, %v1651
      %v1727 = vadd.f32 %v1359, %v1654
      %v1728 = vadd.f32 %v1360, %v1659
      %v1729 = vadd.f32 %v1361, %v1662
      %v1730 = vadd.f32 %v1362, %v1667
      %v1731 = vadd.f32 %v1363, %v1670
      %v1732 = vadd.f32 %v1364, %v1675
      %v1733 = vadd.f32 %v1365, %v1678
      %v1734 = vadd.f32 %v1366, %v1683
      %v1735 = vadd.f32 %v1367, %v1686
      %v1736 = vadd.f32 %v1368, %v1691
      %v1737 = vld [vmem:[%s300 + $0x13] sm:$0xff]
      %v1738 = vld [vmem:[%s300 + $0x1b] sm:$0xff]
      %v1739 = vld [vmem:[%s300 + $0x23] sm:$0xff]
      %v1740 = vld [vmem:[%s300 + $0x2b] sm:$0xff]
      %v1741 = vld [vmem:[%s300 + $0x33] sm:$0xff]
      %v1742 = vld [vmem:[%s300 + $0x3b] sm:$0xff]
      %v1743 = vld [vmem:[%s300 + $0x43] sm:$0xff]
      %v1744 = vld [vmem:[%s300 + $0x4b] sm:$0xff]
      %v1745 = vld [vmem:[%s300 + $0x53] sm:$0xff]
      %v1746 = vld [vmem:[%s300 + $0x5b] sm:$0xff]
      %v1747 = vld [vmem:[%s300 + $0x63] sm:$0xff]
      %v1748 = vld [vmem:[%s300 + $0x6b] sm:$0xff]
      %v1749 = vld [vmem:[%s300 + $0x73] sm:$0xff]
      %v1750 = vld [vmem:[%s300 + $0x7b] sm:$0xff]
      %v1751 = vld [vmem:[%s300 + $0x83] sm:$0xff]
      %v1752 = vld [vmem:[%s300 + $0x8b] sm:$0xff]
      %v1753 = vld [vmem:[%s300 + $0x93] sm:$0xff]
      %v1754 = vld [vmem:[%s300 + $0x9b] sm:$0xff]
      %v1755 = vld [vmem:[%s300 + $0xa3] sm:$0xff]
      %v1756 = vld [vmem:[%s300 + $0xab] sm:$0xff]
      %v1757 = vld [vmem:[%s300 + $0xb3] sm:$0xff]
      %v1758 = vld [vmem:[%s300 + $0xbb] sm:$0xff]
      %v1759 = vld [vmem:[%s300 + $0xc3] sm:$0xff]
      %v1760 = vld [vmem:[%s300 + $0xcb] sm:$0xff]
      %v1761 = vld [vmem:[%s300 + $0xd3] sm:$0xff]
      %v1762 = vld [vmem:[%s300 + $0xdb] sm:$0xff]
      %v1763 = vld [vmem:[%s300 + $0xe3] sm:$0xff]
      %v1764 = vld [vmem:[%s300 + $0xeb] sm:$0xff]
      %v1765 = vld [vmem:[%s300 + $0xf3] sm:$0xff]
      %v1766 = vld [vmem:[%s300 + $0xfb] sm:$0xff]
      %v1767 = vld [vmem:[%s300 + $0x103] sm:$0xff]
      %v1768 = vld [vmem:[%s300 + $0x10b] sm:$0xff]
      %v1769 = vld [vmem:[%s300 + $0x113] sm:$0xff]
      %v1770 = vld [vmem:[%s300 + $0x11b] sm:$0xff]
      %v1771 = vld [vmem:[%s300 + $0x123] sm:$0xff]
      %v1772 = vld [vmem:[%s300 + $0x12b] sm:$0xff]
      %v1773 = vld [vmem:[%s300 + $0x133] sm:$0xff]
      %v1774 = vld [vmem:[%s300 + $0x13b] sm:$0xff]
      %v1775 = vld [vmem:[%s300 + $0x143] sm:$0xff]
      %v1776 = vld [vmem:[%s300 + $0x14b] sm:$0xff]
      %v1777 = vld [vmem:[%s300 + $0x153] sm:$0xf]
      %v1778 = vpack.c.bf16 %v1738, %v1737
      %v1779 = vpack.c.bf16 %v1740, %v1739
      %v1780 = vpack.c.bf16 %v1742, %v1741
      %v1781 = vpack.c.bf16 %v1744, %v1743
      %v1782 = vpack.c.bf16 %v1746, %v1745
      %v1783 = vpack.c.bf16 %v1748, %v1747
      %v1784 = vpack.c.bf16 %v1750, %v1749
      %v1785 = vpack.c.bf16 %v1752, %v1751
      %v1786 = vpack.c.bf16 %v1754, %v1753
      %v1787 = vpack.c.bf16 %v1756, %v1755
      %v1788 = vpack.c.bf16 %v1758, %v1757
      %v1789 = vpack.c.bf16 %v1760, %v1759
      %v1790 = vpack.c.bf16 %v1762, %v1761
      %v1791 = vpack.c.bf16 %v1764, %v1763
      %v1792 = vpack.c.bf16 %v1766, %v1765
      %v1793 = vpack.c.bf16 %v1768, %v1767
      %v1794 = vpack.c.bf16 %v1770, %v1769
      %v1795 = vpack.c.bf16 %v1772, %v1771
      %v1796 = vpack.c.bf16 %v1774, %v1773
      %v1797 = vpack.c.bf16 %v1776, %v1775
      %v1798 = vpack.c.bf16 %v1777, %v1777
      %s1799 = scalar_lea.vmem %s2, 256
      %v1800 = vld [vmem:[%s1799] sm:$0xf]
      %v1801 = vld [vmem:[%s1799 + $0x4] sm:$0xf]
      %v1802 = vld [vmem:[%s1799 + $0x8] sm:$0xf]
      %v1803 = vld [vmem:[%s1799 + $0xc] sm:$0xf]
      %v1804 = vld [vmem:[%s1799 + $0x10] sm:$0xf]
      %v1805 = vld [vmem:[%s1799 + $0x14] sm:$0xf]
      %v1806 = vld [vmem:[%s1799 + $0x18] sm:$0xf]
      %v1807 = vld [vmem:[%s1799 + $0x1c] sm:$0xf]
      %v1808 = vld [vmem:[%s1799 + $0x20] sm:$0xf]
      %v1809 = vld [vmem:[%s1799 + $0x24] sm:$0xf]
      %v1810 = vld [vmem:[%s1799 + $0x28] sm:$0xf]
      %v1811 = vld [vmem:[%s1799 + $0x2c] sm:$0xf]
      %v1812 = vld [vmem:[%s1799 + $0x30] sm:$0xf]
      %v1813 = vld [vmem:[%s1799 + $0x34] sm:$0xf]
      %v1814 = vld [vmem:[%s1799 + $0x38] sm:$0xf]
      %v1815 = vld [vmem:[%s1799 + $0x3c] sm:$0xf]
      %v1832 = vunpack.c.l.b16 %v1800
      %v1833 = vunpack.c.l.b16 %v1801
      %v1834 = vunpack.c.l.b16 %v1802
      %v1835 = vunpack.c.l.b16 %v1803
      %v1836 = vunpack.c.l.b16 %v1804
      %v1837 = vunpack.c.l.b16 %v1805
      %v1838 = vunpack.c.l.b16 %v1806
      %v1839 = vunpack.c.l.b16 %v1807
      %v1840 = vunpack.c.l.b16 %v1808
      %v1841 = vunpack.c.l.b16 %v1809
      %v1842 = vunpack.c.l.b16 %v1810
      %v1843 = vunpack.c.l.b16 %v1811
      %v1844 = vunpack.c.l.b16 %v1812
      %v1845 = vunpack.c.l.b16 %v1813
      %v1846 = vunpack.c.l.b16 %v1814
      %v1847 = vunpack.c.l.b16 %v1815
      %v1848 = vpack.c.b16 %v1833, %v1832
      %v1849 = vpack.c.b16 %v1835, %v1834
      %v1850 = vpack.c.b16 %v1837, %v1836
      %v1851 = vpack.c.b16 %v1839, %v1838
      %v1852 = vpack.c.b16 %v1841, %v1840
      %v1853 = vpack.c.b16 %v1843, %v1842
      %v1854 = vpack.c.b16 %v1845, %v1844
      %v1855 = vpack.c.b16 %v1847, %v1846
      %1864 = vmatprep.subr.bf16.mxu0 0
      %1865 = vmatpush1.bf16.msra.mxu0 %v1855
      %1866 = vmatprep.subr.bf16.mxu0 0
      %1867 = vmatpush1.bf16.msra.mxu0 %v1854
      %1868 = vmatprep.subr.bf16.mxu0 0
      %1869 = vmatpush1.bf16.msra.mxu0 %v1853
      %1870 = vmatprep.subr.bf16.mxu0 0
      %1871 = vmatpush1.bf16.msra.mxu0 %v1852
      %1872 = vmatprep.subr.bf16.mxu0 0
      %1873 = vmatpush1.bf16.msra.mxu0 %v1851
      %1874 = vmatprep.subr.bf16.mxu0 0
      %1875 = vmatpush1.bf16.msra.mxu0 %v1850
      %1876 = vmatprep.subr.bf16.mxu0 0
      %1877 = vmatpush1.bf16.msra.mxu0 %v1849
      %1878 = vmatprep.subr.bf16.mxu0 0
      %1879 = vmatpush1.bf16.msra.mxu0 %v1848
      %1880 = vmatprep.subr.bf16.mxu0 0
      %1881 = vmatpush2.bf16.msra.mxu0 0
      %1882 = vmatprep.subr.bf16.mxu0 0
      %1883 = vmatpush2.bf16.msra.mxu0 0
      %1884 = vmatprep.subr.bf16.mxu0 0
      %1885 = vmatpush2.bf16.msra.mxu0 0
      %1886 = vmatprep.subr.bf16.mxu0 0
      %1887 = vmatpush2.bf16.msra.mxu0 0
      %1888 = vmatprep.subr.bf16.mxu0 0
      %1889 = vmatpush2.bf16.msra.mxu0 0
      %1890 = vmatprep.subr.bf16.mxu0 0
      %1891 = vmatpush2.bf16.msra.mxu0 0
      %1892 = vmatprep.subr.bf16.mxu0 0
      %1893 = vmatpush2.bf16.msra.mxu0 0
      %1894 = vmatprep.subr.bf16.mxu0 0
      %1895 = vmatpush2.bf16.msra.mxu0 0
      %1896 = vmatprep.mubr.bf16.mxu0 0
      %1897 = vmatmul.mubr.bf16.gmra.mxu0 %v1778
      %v1898 = vpop.f32.mrf.mxu0
      %v1899 = vadd.f32 0.0, %v1898
      %v1900 = vpop.f32.mrf.mxu0
      %v1901 = vpop.f32.mrf.mxu0
      %v1902 = vadd.f32 0.0, %v1901
      %v1903 = vpop.f32.mrf.mxu0
      %1904 = vmatprep.mubr.bf16.mxu0 0
      %1905 = vmatmul.mubr.bf16.gmra.mxu0 %v1779
      %v1906 = vpop.f32.mrf.mxu0
      %v1907 = vadd.f32 0.0, %v1906
      %v1908 = vpop.f32.mrf.mxu0
      %v1909 = vpop.f32.mrf.mxu0
      %v1910 = vadd.f32 0.0, %v1909
      %v1911 = vpop.f32.mrf.mxu0
      %1912 = vmatprep.mubr.bf16.mxu0 0
      %1913 = vmatmul.mubr.bf16.gmra.mxu0 %v1780
      %v1914 = vpop.f32.mrf.mxu0
      %v1915 = vadd.f32 0.0, %v1914
      %v1916 = vpop.f32.mrf.mxu0
      %v1917 = vpop.f32.mrf.mxu0
      %v1918 = vadd.f32 0.0, %v1917
      %v1919 = vpop.f32.mrf.mxu0
      %1920 = vmatprep.mubr.bf16.mxu0 0
      %1921 = vmatmul.mubr.bf16.gmra.mxu0 %v1781
      %v1922 = vpop.f32.mrf.mxu0
      %v1923 = vadd.f32 0.0, %v1922
      %v1924 = vpop.f32.mrf.mxu0
      %v1925 = vpop.f32.mrf.mxu0
      %v1926 = vadd.f32 0.0, %v1925
      %v1927 = vpop.f32.mrf.mxu0
      %1928 = vmatprep.mubr.bf16.mxu0 0
      %1929 = vmatmul.mubr.bf16.gmra.mxu0 %v1782
      %v1930 = vpop.f32.mrf.mxu0
      %v1931 = vadd.f32 0.0, %v1930
      %v1932 = vpop.f32.mrf.mxu0
      %v1933 = vpop.f32.mrf.mxu0
      %v1934 = vadd.f32 0.0, %v1933
      %v1935 = vpop.f32.mrf.mxu0
      %1936 = vmatprep.mubr.bf16.mxu0 0
      %1937 = vmatmul.mubr.bf16.gmra.mxu0 %v1783
      %v1938 = vpop.f32.mrf.mxu0
      %v1939 = vadd.f32 0.0, %v1938
      %v1940 = vpop.f32.mrf.mxu0
      %v1941 = vpop.f32.mrf.mxu0
      %v1942 = vadd.f32 0.0, %v1941
      %v1943 = vpop.f32.mrf.mxu0
      %1944 = vmatprep.mubr.bf16.mxu0 0
      %1945 = vmatmul.mubr.bf16.gmra.mxu0 %v1784
      %v1946 = vpop.f32.mrf.mxu0
      %v1947 = vadd.f32 0.0, %v1946
      %v1948 = vpop.f32.mrf.mxu0
      %v1949 = vpop.f32.mrf.mxu0
      %v1950 = vadd.f32 0.0, %v1949
      %v1951 = vpop.f32.mrf.mxu0
      %1952 = vmatprep.mubr.bf16.mxu0 0
      %1953 = vmatmul.mubr.bf16.gmra.mxu0 %v1785
      %v1954 = vpop.f32.mrf.mxu0
      %v1955 = vadd.f32 0.0, %v1954
      %v1956 = vpop.f32.mrf.mxu0
      %v1957 = vpop.f32.mrf.mxu0
      %v1958 = vadd.f32 0.0, %v1957
      %v1959 = vpop.f32.mrf.mxu0
      %1960 = vmatprep.mubr.bf16.mxu0 0
      %1961 = vmatmul.mubr.bf16.gmra.mxu0 %v1786
      %v1962 = vpop.f32.mrf.mxu0
      %v1963 = vadd.f32 0.0, %v1962
      %v1964 = vpop.f32.mrf.mxu0
      %v1965 = vpop.f32.mrf.mxu0
      %v1966 = vadd.f32 0.0, %v1965
      %v1967 = vpop.f32.mrf.mxu0
      %1968 = vmatprep.mubr.bf16.mxu0 0
      %1969 = vmatmul.mubr.bf16.gmra.mxu0 %v1787
      %v1970 = vpop.f32.mrf.mxu0
      %v1971 = vadd.f32 0.0, %v1970
      %v1972 = vpop.f32.mrf.mxu0
      %v1973 = vpop.f32.mrf.mxu0
      %v1974 = vadd.f32 0.0, %v1973
      %v1975 = vpop.f32.mrf.mxu0
      %1976 = vmatprep.mubr.bf16.mxu0 0
      %1977 = vmatmul.mubr.bf16.gmra.mxu0 %v1788
      %v1978 = vpop.f32.mrf.mxu0
      %v1979 = vadd.f32 0.0, %v1978
      %v1980 = vpop.f32.mrf.mxu0
      %v1981 = vpop.f32.mrf.mxu0
      %v1982 = vadd.f32 0.0, %v1981
      %v1983 = vpop.f32.mrf.mxu0
      %1984 = vmatprep.mubr.bf16.mxu0 0
      %1985 = vmatmul.mubr.bf16.gmra.mxu0 %v1789
      %v1986 = vpop.f32.mrf.mxu0
      %v1987 = vadd.f32 0.0, %v1986
      %v1988 = vpop.f32.mrf.mxu0
      %v1989 = vpop.f32.mrf.mxu0
      %v1990 = vadd.f32 0.0, %v1989
      %v1991 = vpop.f32.mrf.mxu0
      %1992 = vmatprep.mubr.bf16.mxu0 0
      %1993 = vmatmul.mubr.bf16.gmra.mxu0 %v1790
      %v1994 = vpop.f32.mrf.mxu0
      %v1995 = vadd.f32 0.0, %v1994
      %v1996 = vpop.f32.mrf.mxu0
      %v1997 = vpop.f32.mrf.mxu0
      %v1998 = vadd.f32 0.0, %v1997
      %v1999 = vpop.f32.mrf.mxu0
      %2000 = vmatprep.mubr.bf16.mxu0 0
      %2001 = vmatmul.mubr.bf16.gmra.mxu0 %v1791
      %v2002 = vpop.f32.mrf.mxu0
      %v2003 = vadd.f32 0.0, %v2002
      %v2004 = vpop.f32.mrf.mxu0
      %v2005 = vpop.f32.mrf.mxu0
      %v2006 = vadd.f32 0.0, %v2005
      %v2007 = vpop.f32.mrf.mxu0
      %2008 = vmatprep.mubr.bf16.mxu0 0
      %2009 = vmatmul.mubr.bf16.gmra.mxu0 %v1792
      %v2010 = vpop.f32.mrf.mxu0
      %v2011 = vadd.f32 0.0, %v2010
      %v2012 = vpop.f32.mrf.mxu0
      %v2013 = vpop.f32.mrf.mxu0
      %v2014 = vadd.f32 0.0, %v2013
      %v2015 = vpop.f32.mrf.mxu0
      %2016 = vmatprep.mubr.bf16.mxu0 0
      %2017 = vmatmul.mubr.bf16.gmra.mxu0 %v1793
      %v2018 = vpop.f32.mrf.mxu0
      %v2019 = vadd.f32 0.0, %v2018
      %v2020 = vpop.f32.mrf.mxu0
      %v2021 = vpop.f32.mrf.mxu0
      %v2022 = vadd.f32 0.0, %v2021
      %v2023 = vpop.f32.mrf.mxu0
      %2024 = vmatprep.mubr.bf16.mxu0 0
      %2025 = vmatmul.mubr.bf16.gmra.mxu0 %v1794
      %v2026 = vpop.f32.mrf.mxu0
      %v2027 = vadd.f32 0.0, %v2026
      %v2028 = vpop.f32.mrf.mxu0
      %v2029 = vpop.f32.mrf.mxu0
      %v2030 = vadd.f32 0.0, %v2029
      %v2031 = vpop.f32.mrf.mxu0
      %2032 = vmatprep.mubr.bf16.mxu0 0
      %2033 = vmatmul.mubr.bf16.gmra.mxu0 %v1795
      %v2034 = vpop.f32.mrf.mxu0
      %v2035 = vadd.f32 0.0, %v2034
      %v2036 = vpop.f32.mrf.mxu0
      %v2037 = vpop.f32.mrf.mxu0
      %v2038 = vadd.f32 0.0, %v2037
      %v2039 = vpop.f32.mrf.mxu0
      %2040 = vmatprep.mubr.bf16.mxu0 0
      %2041 = vmatmul.mubr.bf16.gmra.mxu0 %v1796
      %v2042 = vpop.f32.mrf.mxu0
      %v2043 = vadd.f32 0.0, %v2042
      %v2044 = vpop.f32.mrf.mxu0
      %v2045 = vpop.f32.mrf.mxu0
      %v2046 = vadd.f32 0.0, %v2045
      %v2047 = vpop.f32.mrf.mxu0
      %2048 = vmatprep.mubr.bf16.mxu0 0
      %2049 = vmatmul.mubr.bf16.gmra.mxu0 %v1797
      %v2050 = vpop.f32.mrf.mxu0
      %v2051 = vadd.f32 0.0, %v2050
      %v2052 = vpop.f32.mrf.mxu0
      %v2053 = vpop.f32.mrf.mxu0
      %v2054 = vadd.f32 0.0, %v2053
      %v2055 = vpop.f32.mrf.mxu0
      %2056 = vmatprep.mubr.bf16.mxu0 0
      %2057 = vmatmul.mubr.bf16.gmra.mxu0 %v1798
      %v2058 = vpop.f32.mrf.mxu0
      %v2059 = vadd.f32 0.0, %v2058
      %v2060 = vpop.f32.mrf.mxu0
      %v2061 = vpop.f32.mrf.mxu0
      %v2062 = vpop.f32.mrf.mxu0
      %2063 = vdwg.mxu0
      %v2064 = vadd.f32 %v1696, %v1899
      %v2065 = vadd.f32 %v1697, %v1902
      %v2066 = vadd.f32 %v1698, %v1907
      %v2067 = vadd.f32 %v1699, %v1910
      %v2068 = vadd.f32 %v1700, %v1915
      %v2069 = vadd.f32 %v1701, %v1918
      %v2070 = vadd.f32 %v1702, %v1923
      %v2071 = vadd.f32 %v1703, %v1926
      %v2072 = vadd.f32 %v1704, %v1931
      %v2073 = vadd.f32 %v1705, %v1934
      %v2074 = vadd.f32 %v1706, %v1939
      %v2075 = vadd.f32 %v1707, %v1942
      %v2076 = vadd.f32 %v1708, %v1947
      %v2077 = vadd.f32 %v1709, %v1950
      %v2078 = vadd.f32 %v1710, %v1955
      %v2079 = vadd.f32 %v1711, %v1958
      %v2080 = vadd.f32 %v1712, %v1963
      %v2081 = vadd.f32 %v1713, %v1966
      %v2082 = vadd.f32 %v1714, %v1971
      %v2083 = vadd.f32 %v1715, %v1974
      %v2084 = vadd.f32 %v1716, %v1979
      %v2085 = vadd.f32 %v1717, %v1982
      %v2086 = vadd.f32 %v1718, %v1987
      %v2087 = vadd.f32 %v1719, %v1990
      %v2088 = vadd.f32 %v1720, %v1995
      %v2089 = vadd.f32 %v1721, %v1998
      %v2090 = vadd.f32 %v1722, %v2003
      %v2091 = vadd.f32 %v1723, %v2006
      %v2092 = vadd.f32 %v1724, %v2011
      %v2093 = vadd.f32 %v1725, %v2014
      %v2094 = vadd.f32 %v1726, %v2019
      %v2095 = vadd.f32 %v1727, %v2022
      %v2096 = vadd.f32 %v1728, %v2027
      %v2097 = vadd.f32 %v1729, %v2030
      %v2098 = vadd.f32 %v1730, %v2035
      %v2099 = vadd.f32 %v1731, %v2038
      %v2100 = vadd.f32 %v1732, %v2043
      %v2101 = vadd.f32 %v1733, %v2046
      %v2102 = vadd.f32 %v1734, %v2051
      %v2103 = vadd.f32 %v1735, %v2054
      %v2104 = vadd.f32 %v1736, %v2059
      %v2105 = vld [vmem:[%s300 + $0x14] sm:$0xff]
      %v2106 = vld [vmem:[%s300 + $0x1c] sm:$0xff]
      %v2107 = vld [vmem:[%s300 + $0x24] sm:$0xff]
      %v2108 = vld [vmem:[%s300 + $0x2c] sm:$0xff]
      %v2109 = vld [vmem:[%s300 + $0x34] sm:$0xff]
      %v2110 = vld [vmem:[%s300 + $0x3c] sm:$0xff]
      %v2111 = vld [vmem:[%s300 + $0x44] sm:$0xff]
      %v2112 = vld [vmem:[%s300 + $0x4c] sm:$0xff]
      %v2113 = vld [vmem:[%s300 + $0x54] sm:$0xff]
      %v2114 = vld [vmem:[%s300 + $0x5c] sm:$0xff]
      %v2115 = vld [vmem:[%s300 + $0x64] sm:$0xff]
      %v2116 = vld [vmem:[%s300 + $0x6c] sm:$0xff]
      %v2117 = vld [vmem:[%s300 + $0x74] sm:$0xff]
      %v2118 = vld [vmem:[%s300 + $0x7c] sm:$0xff]
      %v2119 = vld [vmem:[%s300 + $0x84] sm:$0xff]
      %v2120 = vld [vmem:[%s300 + $0x8c] sm:$0xff]
      %v2121 = vld [vmem:[%s300 + $0x94] sm:$0xff]
      %v2122 = vld [vmem:[%s300 + $0x9c] sm:$0xff]
      %v2123 = vld [vmem:[%s300 + $0xa4] sm:$0xff]
      %v2124 = vld [vmem:[%s300 + $0xac] sm:$0xff]
      %v2125 = vld [vmem:[%s300 + $0xb4] sm:$0xff]
      %v2126 = vld [vmem:[%s300 + $0xbc] sm:$0xff]
      %v2127 = vld [vmem:[%s300 + $0xc4] sm:$0xff]
      %v2128 = vld [vmem:[%s300 + $0xcc] sm:$0xff]
      %v2129 = vld [vmem:[%s300 + $0xd4] sm:$0xff]
      %v2130 = vld [vmem:[%s300 + $0xdc] sm:$0xff]
      %v2131 = vld [vmem:[%s300 + $0xe4] sm:$0xff]
      %v2132 = vld [vmem:[%s300 + $0xec] sm:$0xff]
      %v2133 = vld [vmem:[%s300 + $0xf4] sm:$0xff]
      %v2134 = vld [vmem:[%s300 + $0xfc] sm:$0xff]
      %v2135 = vld [vmem:[%s300 + $0x104] sm:$0xff]
      %v2136 = vld [vmem:[%s300 + $0x10c] sm:$0xff]
      %v2137 = vld [vmem:[%s300 + $0x114] sm:$0xff]
      %v2138 = vld [vmem:[%s300 + $0x11c] sm:$0xff]
      %v2139 = vld [vmem:[%s300 + $0x124] sm:$0xff]
      %v2140 = vld [vmem:[%s300 + $0x12c] sm:$0xff]
      %v2141 = vld [vmem:[%s300 + $0x134] sm:$0xff]
      %v2142 = vld [vmem:[%s300 + $0x13c] sm:$0xff]
      %v2143 = vld [vmem:[%s300 + $0x144] sm:$0xff]
      %v2144 = vld [vmem:[%s300 + $0x14c] sm:$0xff]
      %v2145 = vld [vmem:[%s300 + $0x154] sm:$0xf]
      %v2146 = vpack.c.bf16 %v2106, %v2105
      %v2147 = vpack.c.bf16 %v2108, %v2107
      %v2148 = vpack.c.bf16 %v2110, %v2109
      %v2149 = vpack.c.bf16 %v2112, %v2111
      %v2150 = vpack.c.bf16 %v2114, %v2113
      %v2151 = vpack.c.bf16 %v2116, %v2115
      %v2152 = vpack.c.bf16 %v2118, %v2117
      %v2153 = vpack.c.bf16 %v2120, %v2119
      %v2154 = vpack.c.bf16 %v2122, %v2121
      %v2155 = vpack.c.bf16 %v2124, %v2123
      %v2156 = vpack.c.bf16 %v2126, %v2125
      %v2157 = vpack.c.bf16 %v2128, %v2127
      %v2158 = vpack.c.bf16 %v2130, %v2129
      %v2159 = vpack.c.bf16 %v2132, %v2131
      %v2160 = vpack.c.bf16 %v2134, %v2133
      %v2161 = vpack.c.bf16 %v2136, %v2135
      %v2162 = vpack.c.bf16 %v2138, %v2137
      %v2163 = vpack.c.bf16 %v2140, %v2139
      %v2164 = vpack.c.bf16 %v2142, %v2141
      %v2165 = vpack.c.bf16 %v2144, %v2143
      %v2166 = vpack.c.bf16 %v2145, %v2145
      %s2167 = scalar_lea.vmem %s2, 320
      %v2168 = vld [vmem:[%s2167] sm:$0xf]
      %v2169 = vld [vmem:[%s2167 + $0x4] sm:$0xf]
      %v2170 = vld [vmem:[%s2167 + $0x8] sm:$0xf]
      %v2171 = vld [vmem:[%s2167 + $0xc] sm:$0xf]
      %v2172 = vld [vmem:[%s2167 + $0x10] sm:$0xf]
      %v2173 = vld [vmem:[%s2167 + $0x14] sm:$0xf]
      %v2174 = vld [vmem:[%s2167 + $0x18] sm:$0xf]
      %v2175 = vld [vmem:[%s2167 + $0x1c] sm:$0xf]
      %v2176 = vld [vmem:[%s2167 + $0x20] sm:$0xf]
      %v2177 = vld [vmem:[%s2167 + $0x24] sm:$0xf]
      %v2178 = vld [vmem:[%s2167 + $0x28] sm:$0xf]
      %v2179 = vld [vmem:[%s2167 + $0x2c] sm:$0xf]
      %v2180 = vld [vmem:[%s2167 + $0x30] sm:$0xf]
      %v2181 = vld [vmem:[%s2167 + $0x34] sm:$0xf]
      %v2182 = vld [vmem:[%s2167 + $0x38] sm:$0xf]
      %v2183 = vld [vmem:[%s2167 + $0x3c] sm:$0xf]
      %v2200 = vunpack.c.l.b16 %v2168
      %v2201 = vunpack.c.l.b16 %v2169
      %v2202 = vunpack.c.l.b16 %v2170
      %v2203 = vunpack.c.l.b16 %v2171
      %v2204 = vunpack.c.l.b16 %v2172
      %v2205 = vunpack.c.l.b16 %v2173
      %v2206 = vunpack.c.l.b16 %v2174
      %v2207 = vunpack.c.l.b16 %v2175
      %v2208 = vunpack.c.l.b16 %v2176
      %v2209 = vunpack.c.l.b16 %v2177
      %v2210 = vunpack.c.l.b16 %v2178
      %v2211 = vunpack.c.l.b16 %v2179
      %v2212 = vunpack.c.l.b16 %v2180
      %v2213 = vunpack.c.l.b16 %v2181
      %v2214 = vunpack.c.l.b16 %v2182
      %v2215 = vunpack.c.l.b16 %v2183
      %v2216 = vpack.c.b16 %v2201, %v2200
      %v2217 = vpack.c.b16 %v2203, %v2202
      %v2218 = vpack.c.b16 %v2205, %v2204
      %v2219 = vpack.c.b16 %v2207, %v2206
      %v2220 = vpack.c.b16 %v2209, %v2208
      %v2221 = vpack.c.b16 %v2211, %v2210
      %v2222 = vpack.c.b16 %v2213, %v2212
      %v2223 = vpack.c.b16 %v2215, %v2214
      %2232 = vmatprep.subr.bf16.mxu0 0
      %2233 = vmatpush1.bf16.msra.mxu0 %v2223
      %2234 = vmatprep.subr.bf16.mxu0 0
      %2235 = vmatpush1.bf16.msra.mxu0 %v2222
      %2236 = vmatprep.subr.bf16.mxu0 0
      %2237 = vmatpush1.bf16.msra.mxu0 %v2221
      %2238 = vmatprep.subr.bf16.mxu0 0
      %2239 = vmatpush1.bf16.msra.mxu0 %v2220
      %2240 = vmatprep.subr.bf16.mxu0 0
      %2241 = vmatpush1.bf16.msra.mxu0 %v2219
      %2242 = vmatprep.subr.bf16.mxu0 0
      %2243 = vmatpush1.bf16.msra.mxu0 %v2218
      %2244 = vmatprep.subr.bf16.mxu0 0
      %2245 = vmatpush1.bf16.msra.mxu0 %v2217
      %2246 = vmatprep.subr.bf16.mxu0 0
      %2247 = vmatpush1.bf16.msra.mxu0 %v2216
      %2248 = vmatprep.subr.bf16.mxu0 0
      %2249 = vmatpush2.bf16.msra.mxu0 0
      %2250 = vmatprep.subr.bf16.mxu0 0
      %2251 = vmatpush2.bf16.msra.mxu0 0
      %2252 = vmatprep.subr.bf16.mxu0 0
      %2253 = vmatpush2.bf16.msra.mxu0 0
      %2254 = vmatprep.subr.bf16.mxu0 0
      %2255 = vmatpush2.bf16.msra.mxu0 0
      %2256 = vmatprep.subr.bf16.mxu0 0
      %2257 = vmatpush2.bf16.msra.mxu0 0
      %2258 = vmatprep.subr.bf16.mxu0 0
      %2259 = vmatpush2.bf16.msra.mxu0 0
      %2260 = vmatprep.subr.bf16.mxu0 0
      %2261 = vmatpush2.bf16.msra.mxu0 0
      %2262 = vmatprep.subr.bf16.mxu0 0
      %2263 = vmatpush2.bf16.msra.mxu0 0
      %2264 = vmatprep.mubr.bf16.mxu0 0
      %2265 = vmatmul.mubr.bf16.gmra.mxu0 %v2146
      %v2266 = vpop.f32.mrf.mxu0
      %v2267 = vadd.f32 0.0, %v2266
      %v2268 = vpop.f32.mrf.mxu0
      %v2269 = vpop.f32.mrf.mxu0
      %v2270 = vadd.f32 0.0, %v2269
      %v2271 = vpop.f32.mrf.mxu0
      %2272 = vmatprep.mubr.bf16.mxu0 0
      %2273 = vmatmul.mubr.bf16.gmra.mxu0 %v2147
      %v2274 = vpop.f32.mrf.mxu0
      %v2275 = vadd.f32 0.0, %v2274
      %v2276 = vpop.f32.mrf.mxu0
      %v2277 = vpop.f32.mrf.mxu0
      %v2278 = vadd.f32 0.0, %v2277
      %v2279 = vpop.f32.mrf.mxu0
      %2280 = vmatprep.mubr.bf16.mxu0 0
      %2281 = vmatmul.mubr.bf16.gmra.mxu0 %v2148
      %v2282 = vpop.f32.mrf.mxu0
      %v2283 = vadd.f32 0.0, %v2282
      %v2284 = vpop.f32.mrf.mxu0
      %v2285 = vpop.f32.mrf.mxu0
      %v2286 = vadd.f32 0.0, %v2285
      %v2287 = vpop.f32.mrf.mxu0
      %2288 = vmatprep.mubr.bf16.mxu0 0
      %2289 = vmatmul.mubr.bf16.gmra.mxu0 %v2149
      %v2290 = vpop.f32.mrf.mxu0
      %v2291 = vadd.f32 0.0, %v2290
      %v2292 = vpop.f32.mrf.mxu0
      %v2293 = vpop.f32.mrf.mxu0
      %v2294 = vadd.f32 0.0, %v2293
      %v2295 = vpop.f32.mrf.mxu0
      %2296 = vmatprep.mubr.bf16.mxu0 0
      %2297 = vmatmul.mubr.bf16.gmra.mxu0 %v2150
      %v2298 = vpop.f32.mrf.mxu0
      %v2299 = vadd.f32 0.0, %v2298
      %v2300 = vpop.f32.mrf.mxu0
      %v2301 = vpop.f32.mrf.mxu0
      %v2302 = vadd.f32 0.0, %v2301
      %v2303 = vpop.f32.mrf.mxu0
      %2304 = vmatprep.mubr.bf16.mxu0 0
      %2305 = vmatmul.mubr.bf16.gmra.mxu0 %v2151
      %v2306 = vpop.f32.mrf.mxu0
      %v2307 = vadd.f32 0.0, %v2306
      %v2308 = vpop.f32.mrf.mxu0
      %v2309 = vpop.f32.mrf.mxu0
      %v2310 = vadd.f32 0.0, %v2309
      %v2311 = vpop.f32.mrf.mxu0
      %2312 = vmatprep.mubr.bf16.mxu0 0
      %2313 = vmatmul.mubr.bf16.gmra.mxu0 %v2152
      %v2314 = vpop.f32.mrf.mxu0
      %v2315 = vadd.f32 0.0, %v2314
      %v2316 = vpop.f32.mrf.mxu0
      %v2317 = vpop.f32.mrf.mxu0
      %v2318 = vadd.f32 0.0, %v2317
      %v2319 = vpop.f32.mrf.mxu0
      %2320 = vmatprep.mubr.bf16.mxu0 0
      %2321 = vmatmul.mubr.bf16.gmra.mxu0 %v2153
      %v2322 = vpop.f32.mrf.mxu0
      %v2323 = vadd.f32 0.0, %v2322
      %v2324 = vpop.f32.mrf.mxu0
      %v2325 = vpop.f32.mrf.mxu0
      %v2326 = vadd.f32 0.0, %v2325
      %v2327 = vpop.f32.mrf.mxu0
      %2328 = vmatprep.mubr.bf16.mxu0 0
      %2329 = vmatmul.mubr.bf16.gmra.mxu0 %v2154
      %v2330 = vpop.f32.mrf.mxu0
      %v2331 = vadd.f32 0.0, %v2330
      %v2332 = vpop.f32.mrf.mxu0
      %v2333 = vpop.f32.mrf.mxu0
      %v2334 = vadd.f32 0.0, %v2333
      %v2335 = vpop.f32.mrf.mxu0
      %2336 = vmatprep.mubr.bf16.mxu0 0
      %2337 = vmatmul.mubr.bf16.gmra.mxu0 %v2155
      %v2338 = vpop.f32.mrf.mxu0
      %v2339 = vadd.f32 0.0, %v2338
      %v2340 = vpop.f32.mrf.mxu0
      %v2341 = vpop.f32.mrf.mxu0
      %v2342 = vadd.f32 0.0, %v2341
      %v2343 = vpop.f32.mrf.mxu0
      %2344 = vmatprep.mubr.bf16.mxu0 0
      %2345 = vmatmul.mubr.bf16.gmra.mxu0 %v2156
      %v2346 = vpop.f32.mrf.mxu0
      %v2347 = vadd.f32 0.0, %v2346
      %v2348 = vpop.f32.mrf.mxu0
      %v2349 = vpop.f32.mrf.mxu0
      %v2350 = vadd.f32 0.0, %v2349
      %v2351 = vpop.f32.mrf.mxu0
      %2352 = vmatprep.mubr.bf16.mxu0 0
      %2353 = vmatmul.mubr.bf16.gmra.mxu0 %v2157
      %v2354 = vpop.f32.mrf.mxu0
      %v2355 = vadd.f32 0.0, %v2354
      %v2356 = vpop.f32.mrf.mxu0
      %v2357 = vpop.f32.mrf.mxu0
      %v2358 = vadd.f32 0.0, %v2357
      %v2359 = vpop.f32.mrf.mxu0
      %2360 = vmatprep.mubr.bf16.mxu0 0
      %2361 = vmatmul.mubr.bf16.gmra.mxu0 %v2158
      %v2362 = vpop.f32.mrf.mxu0
      %v2363 = vadd.f32 0.0, %v2362
      %v2364 = vpop.f32.mrf.mxu0
      %v2365 = vpop.f32.mrf.mxu0
      %v2366 = vadd.f32 0.0, %v2365
      %v2367 = vpop.f32.mrf.mxu0
      %2368 = vmatprep.mubr.bf16.mxu0 0
      %2369 = vmatmul.mubr.bf16.gmra.mxu0 %v2159
      %v2370 = vpop.f32.mrf.mxu0
      %v2371 = vadd.f32 0.0, %v2370
      %v2372 = vpop.f32.mrf.mxu0
      %v2373 = vpop.f32.mrf.mxu0
      %v2374 = vadd.f32 0.0, %v2373
      %v2375 = vpop.f32.mrf.mxu0
      %2376 = vmatprep.mubr.bf16.mxu0 0
      %2377 = vmatmul.mubr.bf16.gmra.mxu0 %v2160
      %v2378 = vpop.f32.mrf.mxu0
      %v2379 = vadd.f32 0.0, %v2378
      %v2380 = vpop.f32.mrf.mxu0
      %v2381 = vpop.f32.mrf.mxu0
      %v2382 = vadd.f32 0.0, %v2381
      %v2383 = vpop.f32.mrf.mxu0
      %2384 = vmatprep.mubr.bf16.mxu0 0
      %2385 = vmatmul.mubr.bf16.gmra.mxu0 %v2161
      %v2386 = vpop.f32.mrf.mxu0
      %v2387 = vadd.f32 0.0, %v2386
      %v2388 = vpop.f32.mrf.mxu0
      %v2389 = vpop.f32.mrf.mxu0
      %v2390 = vadd.f32 0.0, %v2389
      %v2391 = vpop.f32.mrf.mxu0
      %2392 = vmatprep.mubr.bf16.mxu0 0
      %2393 = vmatmul.mubr.bf16.gmra.mxu0 %v2162
      %v2394 = vpop.f32.mrf.mxu0
      %v2395 = vadd.f32 0.0, %v2394
      %v2396 = vpop.f32.mrf.mxu0
      %v2397 = vpop.f32.mrf.mxu0
      %v2398 = vadd.f32 0.0, %v2397
      %v2399 = vpop.f32.mrf.mxu0
      %2400 = vmatprep.mubr.bf16.mxu0 0
      %2401 = vmatmul.mubr.bf16.gmra.mxu0 %v2163
      %v2402 = vpop.f32.mrf.mxu0
      %v2403 = vadd.f32 0.0, %v2402
      %v2404 = vpop.f32.mrf.mxu0
      %v2405 = vpop.f32.mrf.mxu0
      %v2406 = vadd.f32 0.0, %v2405
      %v2407 = vpop.f32.mrf.mxu0
      %2408 = vmatprep.mubr.bf16.mxu0 0
      %2409 = vmatmul.mubr.bf16.gmra.mxu0 %v2164
      %v2410 = vpop.f32.mrf.mxu0
      %v2411 = vadd.f32 0.0, %v2410
      %v2412 = vpop.f32.mrf.mxu0
      %v2413 = vpop.f32.mrf.mxu0
      %v2414 = vadd.f32 0.0, %v2413
      %v2415 = vpop.f32.mrf.mxu0
      %2416 = vmatprep.mubr.bf16.mxu0 0
      %2417 = vmatmul.mubr.bf16.gmra.mxu0 %v2165
      %v2418 = vpop.f32.mrf.mxu0
      %v2419 = vadd.f32 0.0, %v2418
      %v2420 = vpop.f32.mrf.mxu0
      %v2421 = vpop.f32.mrf.mxu0
      %v2422 = vadd.f32 0.0, %v2421
      %v2423 = vpop.f32.mrf.mxu0
      %2424 = vmatprep.mubr.bf16.mxu0 0
      %2425 = vmatmul.mubr.bf16.gmra.mxu0 %v2166
      %v2426 = vpop.f32.mrf.mxu0
      %v2427 = vadd.f32 0.0, %v2426
      %v2428 = vpop.f32.mrf.mxu0
      %v2429 = vpop.f32.mrf.mxu0
      %v2430 = vpop.f32.mrf.mxu0
      %2431 = vdwg.mxu0
      %v2432 = vadd.f32 %v2064, %v2267
      %v2433 = vadd.f32 %v2065, %v2270
      %v2434 = vadd.f32 %v2066, %v2275
      %v2435 = vadd.f32 %v2067, %v2278
      %v2436 = vadd.f32 %v2068, %v2283
      %v2437 = vadd.f32 %v2069, %v2286
      %v2438 = vadd.f32 %v2070, %v2291
      %v2439 = vadd.f32 %v2071, %v2294
      %v2440 = vadd.f32 %v2072, %v2299
      %v2441 = vadd.f32 %v2073, %v2302
      %v2442 = vadd.f32 %v2074, %v2307
      %v2443 = vadd.f32 %v2075, %v2310
      %v2444 = vadd.f32 %v2076, %v2315
      %v2445 = vadd.f32 %v2077, %v2318
      %v2446 = vadd.f32 %v2078, %v2323
      %v2447 = vadd.f32 %v2079, %v2326
      %v2448 = vadd.f32 %v2080, %v2331
      %v2449 = vadd.f32 %v2081, %v2334
      %v2450 = vadd.f32 %v2082, %v2339
      %v2451 = vadd.f32 %v2083, %v2342
      %v2452 = vadd.f32 %v2084, %v2347
      %v2453 = vadd.f32 %v2085, %v2350
      %v2454 = vadd.f32 %v2086, %v2355
      %v2455 = vadd.f32 %v2087, %v2358
      %v2456 = vadd.f32 %v2088, %v2363
      %v2457 = vadd.f32 %v2089, %v2366
      %v2458 = vadd.f32 %v2090, %v2371
      %v2459 = vadd.f32 %v2091, %v2374
      %v2460 = vadd.f32 %v2092, %v2379
      %v2461 = vadd.f32 %v2093, %v2382
      %v2462 = vadd.f32 %v2094, %v2387
      %v2463 = vadd.f32 %v2095, %v2390
      %v2464 = vadd.f32 %v2096, %v2395
      %v2465 = vadd.f32 %v2097, %v2398
      %v2466 = vadd.f32 %v2098, %v2403
      %v2467 = vadd.f32 %v2099, %v2406
      %v2468 = vadd.f32 %v2100, %v2411
      %v2469 = vadd.f32 %v2101, %v2414
      %v2470 = vadd.f32 %v2102, %v2419
      %v2471 = vadd.f32 %v2103, %v2422
      %v2472 = vadd.f32 %v2104, %v2427
      %v2473 = vld [vmem:[%s300 + $0x24] sm:$0xff]
      %v2474 = vld [vmem:[%s300 + $0x2c] sm:$0xff]
      %v2475 = vld [vmem:[%s300 + $0x34] sm:$0xff]
      %v2476 = vld [vmem:[%s300 + $0x3c] sm:$0xff]
      %v2477 = vld [vmem:[%s300 + $0x44] sm:$0xff]
      %v2478 = vld [vmem:[%s300 + $0x4c] sm:$0xff]
      %v2479 = vld [vmem:[%s300 + $0x54] sm:$0xff]
      %v2480 = vld [vmem:[%s300 + $0x5c] sm:$0xff]
      %v2481 = vld [vmem:[%s300 + $0x64] sm:$0xff]
      %v2482 = vld [vmem:[%s300 + $0x6c] sm:$0xff]
      %v2483 = vld [vmem:[%s300 + $0x74] sm:$0xff]
      %v2484 = vld [vmem:[%s300 + $0x7c] sm:$0xff]
      %v2485 = vld [vmem:[%s300 + $0x84] sm:$0xff]
      %v2486 = vld [vmem:[%s300 + $0x8c] sm:$0xff]
      %v2487 = vld [vmem:[%s300 + $0x94] sm:$0xff]
      %v2488 = vld [vmem:[%s300 + $0x9c] sm:$0xff]
      %v2489 = vld [vmem:[%s300 + $0xa4] sm:$0xff]
      %v2490 = vld [vmem:[%s300 + $0xac] sm:$0xff]
      %v2491 = vld [vmem:[%s300 + $0xb4] sm:$0xff]
      %v2492 = vld [vmem:[%s300 + $0xbc] sm:$0xff]
      %v2493 = vld [vmem:[%s300 + $0xc4] sm:$0xff]
      %v2494 = vld [vmem:[%s300 + $0xcc] sm:$0xff]
      %v2495 = vld [vmem:[%s300 + $0xd4] sm:$0xff]
      %v2496 = vld [vmem:[%s300 + $0xdc] sm:$0xff]
      %v2497 = vld [vmem:[%s300 + $0xe4] sm:$0xff]
      %v2498 = vld [vmem:[%s300 + $0xec] sm:$0xff]
      %v2499 = vld [vmem:[%s300 + $0xf4] sm:$0xff]
      %v2500 = vld [vmem:[%s300 + $0xfc] sm:$0xff]
      %v2501 = vld [vmem:[%s300 + $0x104] sm:$0xff]
      %v2502 = vld [vmem:[%s300 + $0x10c] sm:$0xff]
      %v2503 = vld [vmem:[%s300 + $0x114] sm:$0xff]
      %v2504 = vld [vmem:[%s300 + $0x11c] sm:$0xff]
      %v2505 = vld [vmem:[%s300 + $0x124] sm:$0xff]
      %v2506 = vld [vmem:[%s300 + $0x12c] sm:$0xff]
      %v2507 = vld [vmem:[%s300 + $0x134] sm:$0xff]
      %v2508 = vld [vmem:[%s300 + $0x13c] sm:$0xff]
      %v2509 = vld [vmem:[%s300 + $0x144] sm:$0xff]
      %v2510 = vld [vmem:[%s300 + $0x14c] sm:$0xff]
      %v2511 = vld [vmem:[%s300 + $0x154] sm:$0xff]
      %v2512 = vld [vmem:[%s300 + $0x15c] sm:$0xff]
      %v2513 = vld [vmem:[%s300 + $0x164] sm:$0xf]
      %v2514 = vpack.c.bf16 %v2474, %v2473
      %v2515 = vpack.c.bf16 %v2476, %v2475
      %v2516 = vpack.c.bf16 %v2478, %v2477
      %v2517 = vpack.c.bf16 %v2480, %v2479
      %v2518 = vpack.c.bf16 %v2482, %v2481
      %v2519 = vpack.c.bf16 %v2484, %v2483
      %v2520 = vpack.c.bf16 %v2486, %v2485
      %v2521 = vpack.c.bf16 %v2488, %v2487
      %v2522 = vpack.c.bf16 %v2490, %v2489
      %v2523 = vpack.c.bf16 %v2492, %v2491
      %v2524 = vpack.c.bf16 %v2494, %v2493
      %v2525 = vpack.c.bf16 %v2496, %v2495
      %v2526 = vpack.c.bf16 %v2498, %v2497
      %v2527 = vpack.c.bf16 %v2500, %v2499
      %v2528 = vpack.c.bf16 %v2502, %v2501
      %v2529 = vpack.c.bf16 %v2504, %v2503
      %v2530 = vpack.c.bf16 %v2506, %v2505
      %v2531 = vpack.c.bf16 %v2508, %v2507
      %v2532 = vpack.c.bf16 %v2510, %v2509
      %v2533 = vpack.c.bf16 %v2512, %v2511
      %v2534 = vpack.c.bf16 %v2513, %v2513
      %s2535 = scalar_lea.vmem %s2, 384
      %v2536 = vld [vmem:[%s2535] sm:$0xf]
      %v2537 = vld [vmem:[%s2535 + $0x4] sm:$0xf]
      %v2538 = vld [vmem:[%s2535 + $0x8] sm:$0xf]
      %v2539 = vld [vmem:[%s2535 + $0xc] sm:$0xf]
      %v2540 = vld [vmem:[%s2535 + $0x10] sm:$0xf]
      %v2541 = vld [vmem:[%s2535 + $0x14] sm:$0xf]
      %v2542 = vld [vmem:[%s2535 + $0x18] sm:$0xf]
      %v2543 = vld [vmem:[%s2535 + $0x1c] sm:$0xf]
      %v2544 = vld [vmem:[%s2535 + $0x20] sm:$0xf]
      %v2545 = vld [vmem:[%s2535 + $0x24] sm:$0xf]
      %v2546 = vld [vmem:[%s2535 + $0x28] sm:$0xf]
      %v2547 = vld [vmem:[%s2535 + $0x2c] sm:$0xf]
      %v2548 = vld [vmem:[%s2535 + $0x30] sm:$0xf]
      %v2549 = vld [vmem:[%s2535 + $0x34] sm:$0xf]
      %v2550 = vld [vmem:[%s2535 + $0x38] sm:$0xf]
      %v2551 = vld [vmem:[%s2535 + $0x3c] sm:$0xf]
      %v2568 = vunpack.c.l.b16 %v2536
      %v2569 = vunpack.c.l.b16 %v2537
      %v2570 = vunpack.c.l.b16 %v2538
      %v2571 = vunpack.c.l.b16 %v2539
      %v2572 = vunpack.c.l.b16 %v2540
      %v2573 = vunpack.c.l.b16 %v2541
      %v2574 = vunpack.c.l.b16 %v2542
      %v2575 = vunpack.c.l.b16 %v2543
      %v2576 = vunpack.c.l.b16 %v2544
      %v2577 = vunpack.c.l.b16 %v2545
      %v2578 = vunpack.c.l.b16 %v2546
      %v2579 = vunpack.c.l.b16 %v2547
      %v2580 = vunpack.c.l.b16 %v2548
      %v2581 = vunpack.c.l.b16 %v2549
      %v2582 = vunpack.c.l.b16 %v2550
      %v2583 = vunpack.c.l.b16 %v2551
      %v2584 = vpack.c.b16 %v2569, %v2568
      %v2585 = vpack.c.b16 %v2571, %v2570
      %v2586 = vpack.c.b16 %v2573, %v2572
      %v2587 = vpack.c.b16 %v2575, %v2574
      %v2588 = vpack.c.b16 %v2577, %v2576
      %v2589 = vpack.c.b16 %v2579, %v2578
      %v2590 = vpack.c.b16 %v2581, %v2580
      %v2591 = vpack.c.b16 %v2583, %v2582
      %2600 = vmatprep.subr.bf16.mxu0 0
      %2601 = vmatpush1.bf16.msra.mxu0 %v2591
      %2602 = vmatprep.subr.bf16.mxu0 0
      %2603 = vmatpush1.bf16.msra.mxu0 %v2590
      %2604 = vmatprep.subr.bf16.mxu0 0
      %2605 = vmatpush1.bf16.msra.mxu0 %v2589
      %2606 = vmatprep.subr.bf16.mxu0 0
      %2607 = vmatpush1.bf16.msra.mxu0 %v2588
      %2608 = vmatprep.subr.bf16.mxu0 0
      %2609 = vmatpush1.bf16.msra.mxu0 %v2587
      %2610 = vmatprep.subr.bf16.mxu0 0
      %2611 = vmatpush1.bf16.msra.mxu0 %v2586
      %2612 = vmatprep.subr.bf16.mxu0 0
      %2613 = vmatpush1.bf16.msra.mxu0 %v2585
      %2614 = vmatprep.subr.bf16.mxu0 0
      %2615 = vmatpush1.bf16.msra.mxu0 %v2584
      %2616 = vmatprep.subr.bf16.mxu0 0
      %2617 = vmatpush2.bf16.msra.mxu0 0
      %2618 = vmatprep.subr.bf16.mxu0 0
      %2619 = vmatpush2.bf16.msra.mxu0 0
      %2620 = vmatprep.subr.bf16.mxu0 0
      %2621 = vmatpush2.bf16.msra.mxu0 0
      %2622 = vmatprep.subr.bf16.mxu0 0
      %2623 = vmatpush2.bf16.msra.mxu0 0
      %2624 = vmatprep.subr.bf16.mxu0 0
      %2625 = vmatpush2.bf16.msra.mxu0 0
      %2626 = vmatprep.subr.bf16.mxu0 0
      %2627 = vmatpush2.bf16.msra.mxu0 0
      %2628 = vmatprep.subr.bf16.mxu0 0
      %2629 = vmatpush2.bf16.msra.mxu0 0
      %2630 = vmatprep.subr.bf16.mxu0 0
      %2631 = vmatpush2.bf16.msra.mxu0 0
      %2632 = vmatprep.mubr.bf16.mxu0 0
      %2633 = vmatmul.mubr.bf16.gmra.mxu0 %v2514
      %v2634 = vpop.f32.mrf.mxu0
      %v2635 = vadd.f32 0.0, %v2634
      %v2636 = vpop.f32.mrf.mxu0
      %v2637 = vpop.f32.mrf.mxu0
      %v2638 = vadd.f32 0.0, %v2637
      %v2639 = vpop.f32.mrf.mxu0
      %2640 = vmatprep.mubr.bf16.mxu0 0
      %2641 = vmatmul.mubr.bf16.gmra.mxu0 %v2515
      %v2642 = vpop.f32.mrf.mxu0
      %v2643 = vadd.f32 0.0, %v2642
      %v2644 = vpop.f32.mrf.mxu0
      %v2645 = vpop.f32.mrf.mxu0
      %v2646 = vadd.f32 0.0, %v2645
      %v2647 = vpop.f32.mrf.mxu0
      %2648 = vmatprep.mubr.bf16.mxu0 0
      %2649 = vmatmul.mubr.bf16.gmra.mxu0 %v2516
      %v2650 = vpop.f32.mrf.mxu0
      %v2651 = vadd.f32 0.0, %v2650
      %v2652 = vpop.f32.mrf.mxu0
      %v2653 = vpop.f32.mrf.mxu0
      %v2654 = vadd.f32 0.0, %v2653
      %v2655 = vpop.f32.mrf.mxu0
      %2656 = vmatprep.mubr.bf16.mxu0 0
      %2657 = vmatmul.mubr.bf16.gmra.mxu0 %v2517
      %v2658 = vpop.f32.mrf.mxu0
      %v2659 = vadd.f32 0.0, %v2658
      %v2660 = vpop.f32.mrf.mxu0
      %v2661 = vpop.f32.mrf.mxu0
      %v2662 = vadd.f32 0.0, %v2661
      %v2663 = vpop.f32.mrf.mxu0
      %2664 = vmatprep.mubr.bf16.mxu0 0
      %2665 = vmatmul.mubr.bf16.gmra.mxu0 %v2518
      %v2666 = vpop.f32.mrf.mxu0
      %v2667 = vadd.f32 0.0, %v2666
      %v2668 = vpop.f32.mrf.mxu0
      %v2669 = vpop.f32.mrf.mxu0
      %v2670 = vadd.f32 0.0, %v2669
      %v2671 = vpop.f32.mrf.mxu0
      %2672 = vmatprep.mubr.bf16.mxu0 0
      %2673 = vmatmul.mubr.bf16.gmra.mxu0 %v2519
      %v2674 = vpop.f32.mrf.mxu0
      %v2675 = vadd.f32 0.0, %v2674
      %v2676 = vpop.f32.mrf.mxu0
      %v2677 = vpop.f32.mrf.mxu0
      %v2678 = vadd.f32 0.0, %v2677
      %v2679 = vpop.f32.mrf.mxu0
      %2680 = vmatprep.mubr.bf16.mxu0 0
      %2681 = vmatmul.mubr.bf16.gmra.mxu0 %v2520
      %v2682 = vpop.f32.mrf.mxu0
      %v2683 = vadd.f32 0.0, %v2682
      %v2684 = vpop.f32.mrf.mxu0
      %v2685 = vpop.f32.mrf.mxu0
      %v2686 = vadd.f32 0.0, %v2685
      %v2687 = vpop.f32.mrf.mxu0
      %2688 = vmatprep.mubr.bf16.mxu0 0
      %2689 = vmatmul.mubr.bf16.gmra.mxu0 %v2521
      %v2690 = vpop.f32.mrf.mxu0
      %v2691 = vadd.f32 0.0, %v2690
      %v2692 = vpop.f32.mrf.mxu0
      %v2693 = vpop.f32.mrf.mxu0
      %v2694 = vadd.f32 0.0, %v2693
      %v2695 = vpop.f32.mrf.mxu0
      %2696 = vmatprep.mubr.bf16.mxu0 0
      %2697 = vmatmul.mubr.bf16.gmra.mxu0 %v2522
      %v2698 = vpop.f32.mrf.mxu0
      %v2699 = vadd.f32 0.0, %v2698
      %v2700 = vpop.f32.mrf.mxu0
      %v2701 = vpop.f32.mrf.mxu0
      %v2702 = vadd.f32 0.0, %v2701
      %v2703 = vpop.f32.mrf.mxu0
      %2704 = vmatprep.mubr.bf16.mxu0 0
      %2705 = vmatmul.mubr.bf16.gmra.mxu0 %v2523
      %v2706 = vpop.f32.mrf.mxu0
      %v2707 = vadd.f32 0.0, %v2706
      %v2708 = vpop.f32.mrf.mxu0
      %v2709 = vpop.f32.mrf.mxu0
      %v2710 = vadd.f32 0.0, %v2709
      %v2711 = vpop.f32.mrf.mxu0
      %2712 = vmatprep.mubr.bf16.mxu0 0
      %2713 = vmatmul.mubr.bf16.gmra.mxu0 %v2524
      %v2714 = vpop.f32.mrf.mxu0
      %v2715 = vadd.f32 0.0, %v2714
      %v2716 = vpop.f32.mrf.mxu0
      %v2717 = vpop.f32.mrf.mxu0
      %v2718 = vadd.f32 0.0, %v2717
      %v2719 = vpop.f32.mrf.mxu0
      %2720 = vmatprep.mubr.bf16.mxu0 0
      %2721 = vmatmul.mubr.bf16.gmra.mxu0 %v2525
      %v2722 = vpop.f32.mrf.mxu0
      %v2723 = vadd.f32 0.0, %v2722
      %v2724 = vpop.f32.mrf.mxu0
      %v2725 = vpop.f32.mrf.mxu0
      %v2726 = vadd.f32 0.0, %v2725
      %v2727 = vpop.f32.mrf.mxu0
      %2728 = vmatprep.mubr.bf16.mxu0 0
      %2729 = vmatmul.mubr.bf16.gmra.mxu0 %v2526
      %v2730 = vpop.f32.mrf.mxu0
      %v2731 = vadd.f32 0.0, %v2730
      %v2732 = vpop.f32.mrf.mxu0
      %v2733 = vpop.f32.mrf.mxu0
      %v2734 = vadd.f32 0.0, %v2733
      %v2735 = vpop.f32.mrf.mxu0
      %2736 = vmatprep.mubr.bf16.mxu0 0
      %2737 = vmatmul.mubr.bf16.gmra.mxu0 %v2527
      %v2738 = vpop.f32.mrf.mxu0
      %v2739 = vadd.f32 0.0, %v2738
      %v2740 = vpop.f32.mrf.mxu0
      %v2741 = vpop.f32.mrf.mxu0
      %v2742 = vadd.f32 0.0, %v2741
      %v2743 = vpop.f32.mrf.mxu0
      %2744 = vmatprep.mubr.bf16.mxu0 0
      %2745 = vmatmul.mubr.bf16.gmra.mxu0 %v2528
      %v2746 = vpop.f32.mrf.mxu0
      %v2747 = vadd.f32 0.0, %v2746
      %v2748 = vpop.f32.mrf.mxu0
      %v2749 = vpop.f32.mrf.mxu0
      %v2750 = vadd.f32 0.0, %v2749
      %v2751 = vpop.f32.mrf.mxu0
      %2752 = vmatprep.mubr.bf16.mxu0 0
      %2753 = vmatmul.mubr.bf16.gmra.mxu0 %v2529
      %v2754 = vpop.f32.mrf.mxu0
      %v2755 = vadd.f32 0.0, %v2754
      %v2756 = vpop.f32.mrf.mxu0
      %v2757 = vpop.f32.mrf.mxu0
      %v2758 = vadd.f32 0.0, %v2757
      %v2759 = vpop.f32.mrf.mxu0
      %2760 = vmatprep.mubr.bf16.mxu0 0
      %2761 = vmatmul.mubr.bf16.gmra.mxu0 %v2530
      %v2762 = vpop.f32.mrf.mxu0
      %v2763 = vadd.f32 0.0, %v2762
      %v2764 = vpop.f32.mrf.mxu0
      %v2765 = vpop.f32.mrf.mxu0
      %v2766 = vadd.f32 0.0, %v2765
      %v2767 = vpop.f32.mrf.mxu0
      %2768 = vmatprep.mubr.bf16.mxu0 0
      %2769 = vmatmul.mubr.bf16.gmra.mxu0 %v2531
      %v2770 = vpop.f32.mrf.mxu0
      %v2771 = vadd.f32 0.0, %v2770
      %v2772 = vpop.f32.mrf.mxu0
      %v2773 = vpop.f32.mrf.mxu0
      %v2774 = vadd.f32 0.0, %v2773
      %v2775 = vpop.f32.mrf.mxu0
      %2776 = vmatprep.mubr.bf16.mxu0 0
      %2777 = vmatmul.mubr.bf16.gmra.mxu0 %v2532
      %v2778 = vpop.f32.mrf.mxu0
      %v2779 = vadd.f32 0.0, %v2778
      %v2780 = vpop.f32.mrf.mxu0
      %v2781 = vpop.f32.mrf.mxu0
      %v2782 = vadd.f32 0.0, %v2781
      %v2783 = vpop.f32.mrf.mxu0
      %2784 = vmatprep.mubr.bf16.mxu0 0
      %2785 = vmatmul.mubr.bf16.gmra.mxu0 %v2533
      %v2786 = vpop.f32.mrf.mxu0
      %v2787 = vadd.f32 0.0, %v2786
      %v2788 = vpop.f32.mrf.mxu0
      %v2789 = vpop.f32.mrf.mxu0
      %v2790 = vadd.f32 0.0, %v2789
      %v2791 = vpop.f32.mrf.mxu0
      %2792 = vmatprep.mubr.bf16.mxu0 0
      %2793 = vmatmul.mubr.bf16.gmra.mxu0 %v2534
      %v2794 = vpop.f32.mrf.mxu0
      %v2795 = vadd.f32 0.0, %v2794
      %v2796 = vpop.f32.mrf.mxu0
      %v2797 = vpop.f32.mrf.mxu0
      %v2798 = vpop.f32.mrf.mxu0
      %2799 = vdwg.mxu0
      %v2800 = vadd.f32 %v2432, %v2635
      %v2801 = vadd.f32 %v2433, %v2638
      %v2802 = vadd.f32 %v2434, %v2643
      %v2803 = vadd.f32 %v2435, %v2646
      %v2804 = vadd.f32 %v2436, %v2651
      %v2805 = vadd.f32 %v2437, %v2654
      %v2806 = vadd.f32 %v2438, %v2659
      %v2807 = vadd.f32 %v2439, %v2662
      %v2808 = vadd.f32 %v2440, %v2667
      %v2809 = vadd.f32 %v2441, %v2670
      %v2810 = vadd.f32 %v2442, %v2675
      %v2811 = vadd.f32 %v2443, %v2678
      %v2812 = vadd.f32 %v2444, %v2683
      %v2813 = vadd.f32 %v2445, %v2686
      %v2814 = vadd.f32 %v2446, %v2691
      %v2815 = vadd.f32 %v2447, %v2694
      %v2816 = vadd.f32 %v2448, %v2699
      %v2817 = vadd.f32 %v2449, %v2702
      %v2818 = vadd.f32 %v2450, %v2707
      %v2819 = vadd.f32 %v2451, %v2710
      %v2820 = vadd.f32 %v2452, %v2715
      %v2821 = vadd.f32 %v2453, %v2718
      %v2822 = vadd.f32 %v2454, %v2723
      %v2823 = vadd.f32 %v2455, %v2726
      %v2824 = vadd.f32 %v2456, %v2731
      %v2825 = vadd.f32 %v2457, %v2734
      %v2826 = vadd.f32 %v2458, %v2739
      %v2827 = vadd.f32 %v2459, %v2742
      %v2828 = vadd.f32 %v2460, %v2747
      %v2829 = vadd.f32 %v2461, %v2750
      %v2830 = vadd.f32 %v2462, %v2755
      %v2831 = vadd.f32 %v2463, %v2758
      %v2832 = vadd.f32 %v2464, %v2763
      %v2833 = vadd.f32 %v2465, %v2766
      %v2834 = vadd.f32 %v2466, %v2771
      %v2835 = vadd.f32 %v2467, %v2774
      %v2836 = vadd.f32 %v2468, %v2779
      %v2837 = vadd.f32 %v2469, %v2782
      %v2838 = vadd.f32 %v2470, %v2787
      %v2839 = vadd.f32 %v2471, %v2790
      %v2840 = vadd.f32 %v2472, %v2795
      %v2841 = vld [vmem:[%s300 + $0x25] sm:$0xff]
      %v2842 = vld [vmem:[%s300 + $0x2d] sm:$0xff]
      %v2843 = vld [vmem:[%s300 + $0x35] sm:$0xff]
      %v2844 = vld [vmem:[%s300 + $0x3d] sm:$0xff]
      %v2845 = vld [vmem:[%s300 + $0x45] sm:$0xff]
      %v2846 = vld [vmem:[%s300 + $0x4d] sm:$0xff]
      %v2847 = vld [vmem:[%s300 + $0x55] sm:$0xff]
      %v2848 = vld [vmem:[%s300 + $0x5d] sm:$0xff]
      %v2849 = vld [vmem:[%s300 + $0x65] sm:$0xff]
      %v2850 = vld [vmem:[%s300 + $0x6d] sm:$0xff]
      %v2851 = vld [vmem:[%s300 + $0x75] sm:$0xff]
      %v2852 = vld [vmem:[%s300 + $0x7d] sm:$0xff]
      %v2853 = vld [vmem:[%s300 + $0x85] sm:$0xff]
      %v2854 = vld [vmem:[%s300 + $0x8d] sm:$0xff]
      %v2855 = vld [vmem:[%s300 + $0x95] sm:$0xff]
      %v2856 = vld [vmem:[%s300 + $0x9d] sm:$0xff]
      %v2857 = vld [vmem:[%s300 + $0xa5] sm:$0xff]
      %v2858 = vld [vmem:[%s300 + $0xad] sm:$0xff]
      %v2859 = vld [vmem:[%s300 + $0xb5] sm:$0xff]
      %v2860 = vld [vmem:[%s300 + $0xbd] sm:$0xff]
      %v2861 = vld [vmem:[%s300 + $0xc5] sm:$0xff]
      %v2862 = vld [vmem:[%s300 + $0xcd] sm:$0xff]
      %v2863 = vld [vmem:[%s300 + $0xd5] sm:$0xff]
      %v2864 = vld [vmem:[%s300 + $0xdd] sm:$0xff]
      %v2865 = vld [vmem:[%s300 + $0xe5] sm:$0xff]
      %v2866 = vld [vmem:[%s300 + $0xed] sm:$0xff]
      %v2867 = vld [vmem:[%s300 + $0xf5] sm:$0xff]
      %v2868 = vld [vmem:[%s300 + $0xfd] sm:$0xff]
      %v2869 = vld [vmem:[%s300 + $0x105] sm:$0xff]
      %v2870 = vld [vmem:[%s300 + $0x10d] sm:$0xff]
      %v2871 = vld [vmem:[%s300 + $0x115] sm:$0xff]
      %v2872 = vld [vmem:[%s300 + $0x11d] sm:$0xff]
      %v2873 = vld [vmem:[%s300 + $0x125] sm:$0xff]
      %v2874 = vld [vmem:[%s300 + $0x12d] sm:$0xff]
      %v2875 = vld [vmem:[%s300 + $0x135] sm:$0xff]
      %v2876 = vld [vmem:[%s300 + $0x13d] sm:$0xff]
      %v2877 = vld [vmem:[%s300 + $0x145] sm:$0xff]
      %v2878 = vld [vmem:[%s300 + $0x14d] sm:$0xff]
      %v2879 = vld [vmem:[%s300 + $0x155] sm:$0xff]
      %v2880 = vld [vmem:[%s300 + $0x15d] sm:$0xff]
      %v2881 = vld [vmem:[%s300 + $0x165] sm:$0xf]
      %v2882 = vpack.c.bf16 %v2842, %v2841
      %v2883 = vpack.c.bf16 %v2844, %v2843
      %v2884 = vpack.c.bf16 %v2846, %v2845
      %v2885 = vpack.c.bf16 %v2848, %v2847
      %v2886 = vpack.c.bf16 %v2850, %v2849
      %v2887 = vpack.c.bf16 %v2852, %v2851
      %v2888 = vpack.c.bf16 %v2854, %v2853
      %v2889 = vpack.c.bf16 %v2856, %v2855
      %v2890 = vpack.c.bf16 %v2858, %v2857
      %v2891 = vpack.c.bf16 %v2860, %v2859
      %v2892 = vpack.c.bf16 %v2862, %v2861
      %v2893 = vpack.c.bf16 %v2864, %v2863
      %v2894 = vpack.c.bf16 %v2866, %v2865
      %v2895 = vpack.c.bf16 %v2868, %v2867
      %v2896 = vpack.c.bf16 %v2870, %v2869
      %v2897 = vpack.c.bf16 %v2872, %v2871
      %v2898 = vpack.c.bf16 %v2874, %v2873
      %v2899 = vpack.c.bf16 %v2876, %v2875
      %v2900 = vpack.c.bf16 %v2878, %v2877
      %v2901 = vpack.c.bf16 %v2880, %v2879
      %v2902 = vpack.c.bf16 %v2881, %v2881
      %s2903 = scalar_lea.vmem %s2, 448
      %v2904 = vld [vmem:[%s2903] sm:$0xf]
      %v2905 = vld [vmem:[%s2903 + $0x4] sm:$0xf]
      %v2906 = vld [vmem:[%s2903 + $0x8] sm:$0xf]
      %v2907 = vld [vmem:[%s2903 + $0xc] sm:$0xf]
      %v2908 = vld [vmem:[%s2903 + $0x10] sm:$0xf]
      %v2909 = vld [vmem:[%s2903 + $0x14] sm:$0xf]
      %v2910 = vld [vmem:[%s2903 + $0x18] sm:$0xf]
      %v2911 = vld [vmem:[%s2903 + $0x1c] sm:$0xf]
      %v2912 = vld [vmem:[%s2903 + $0x20] sm:$0xf]
      %v2913 = vld [vmem:[%s2903 + $0x24] sm:$0xf]
      %v2914 = vld [vmem:[%s2903 + $0x28] sm:$0xf]
      %v2915 = vld [vmem:[%s2903 + $0x2c] sm:$0xf]
      %v2916 = vld [vmem:[%s2903 + $0x30] sm:$0xf]
      %v2917 = vld [vmem:[%s2903 + $0x34] sm:$0xf]
      %v2918 = vld [vmem:[%s2903 + $0x38] sm:$0xf]
      %v2919 = vld [vmem:[%s2903 + $0x3c] sm:$0xf]
      %v2936 = vunpack.c.l.b16 %v2904
      %v2937 = vunpack.c.l.b16 %v2905
      %v2938 = vunpack.c.l.b16 %v2906
      %v2939 = vunpack.c.l.b16 %v2907
      %v2940 = vunpack.c.l.b16 %v2908
      %v2941 = vunpack.c.l.b16 %v2909
      %v2942 = vunpack.c.l.b16 %v2910
      %v2943 = vunpack.c.l.b16 %v2911
      %v2944 = vunpack.c.l.b16 %v2912
      %v2945 = vunpack.c.l.b16 %v2913
      %v2946 = vunpack.c.l.b16 %v2914
      %v2947 = vunpack.c.l.b16 %v2915
      %v2948 = vunpack.c.l.b16 %v2916
      %v2949 = vunpack.c.l.b16 %v2917
      %v2950 = vunpack.c.l.b16 %v2918
      %v2951 = vunpack.c.l.b16 %v2919
      %v2952 = vpack.c.b16 %v2937, %v2936
      %v2953 = vpack.c.b16 %v2939, %v2938
      %v2954 = vpack.c.b16 %v2941, %v2940
      %v2955 = vpack.c.b16 %v2943, %v2942
      %v2956 = vpack.c.b16 %v2945, %v2944
      %v2957 = vpack.c.b16 %v2947, %v2946
      %v2958 = vpack.c.b16 %v2949, %v2948
      %v2959 = vpack.c.b16 %v2951, %v2950
      %2968 = vmatprep.subr.bf16.mxu0 0
      %2969 = vmatpush1.bf16.msra.mxu0 %v2959
      %2970 = vmatprep.subr.bf16.mxu0 0
      %2971 = vmatpush1.bf16.msra.mxu0 %v2958
      %2972 = vmatprep.subr.bf16.mxu0 0
      %2973 = vmatpush1.bf16.msra.mxu0 %v2957
      %2974 = vmatprep.subr.bf16.mxu0 0
      %2975 = vmatpush1.bf16.msra.mxu0 %v2956
      %2976 = vmatprep.subr.bf16.mxu0 0
      %2977 = vmatpush1.bf16.msra.mxu0 %v2955
      %2978 = vmatprep.subr.bf16.mxu0 0
      %2979 = vmatpush1.bf16.msra.mxu0 %v2954
      %2980 = vmatprep.subr.bf16.mxu0 0
      %2981 = vmatpush1.bf16.msra.mxu0 %v2953
      %2982 = vmatprep.subr.bf16.mxu0 0
      %2983 = vmatpush1.bf16.msra.mxu0 %v2952
      %2984 = vmatprep.subr.bf16.mxu0 0
      %2985 = vmatpush2.bf16.msra.mxu0 0
      %2986 = vmatprep.subr.bf16.mxu0 0
      %2987 = vmatpush2.bf16.msra.mxu0 0
      %2988 = vmatprep.subr.bf16.mxu0 0
      %2989 = vmatpush2.bf16.msra.mxu0 0
      %2990 = vmatprep.subr.bf16.mxu0 0
      %2991 = vmatpush2.bf16.msra.mxu0 0
      %2992 = vmatprep.subr.bf16.mxu0 0
      %2993 = vmatpush2.bf16.msra.mxu0 0
      %2994 = vmatprep.subr.bf16.mxu0 0
      %2995 = vmatpush2.bf16.msra.mxu0 0
      %2996 = vmatprep.subr.bf16.mxu0 0
      %2997 = vmatpush2.bf16.msra.mxu0 0
      %2998 = vmatprep.subr.bf16.mxu0 0
      %2999 = vmatpush2.bf16.msra.mxu0 0
      %3000 = vmatprep.mubr.bf16.mxu0 0
      %3001 = vmatmul.mubr.bf16.gmra.mxu0 %v2882
      %v3002 = vpop.f32.mrf.mxu0
      %v3003 = vadd.f32 0.0, %v3002
      %v3004 = vpop.f32.mrf.mxu0
      %v3005 = vpop.f32.mrf.mxu0
      %v3006 = vadd.f32 0.0, %v3005
      %v3007 = vpop.f32.mrf.mxu0
      %3008 = vmatprep.mubr.bf16.mxu0 0
      %3009 = vmatmul.mubr.bf16.gmra.mxu0 %v2883
      %v3010 = vpop.f32.mrf.mxu0
      %v3011 = vadd.f32 0.0, %v3010
      %v3012 = vpop.f32.mrf.mxu0
      %v3013 = vpop.f32.mrf.mxu0
      %v3014 = vadd.f32 0.0, %v3013
      %v3015 = vpop.f32.mrf.mxu0
      %3016 = vmatprep.mubr.bf16.mxu0 0
      %3017 = vmatmul.mubr.bf16.gmra.mxu0 %v2884
      %v3018 = vpop.f32.mrf.mxu0
      %v3019 = vadd.f32 0.0, %v3018
      %v3020 = vpop.f32.mrf.mxu0
      %v3021 = vpop.f32.mrf.mxu0
      %v3022 = vadd.f32 0.0, %v3021
      %v3023 = vpop.f32.mrf.mxu0
      %3024 = vmatprep.mubr.bf16.mxu0 0
      %3025 = vmatmul.mubr.bf16.gmra.mxu0 %v2885
      %v3026 = vpop.f32.mrf.mxu0
      %v3027 = vadd.f32 0.0, %v3026
      %v3028 = vpop.f32.mrf.mxu0
      %v3029 = vpop.f32.mrf.mxu0
      %v3030 = vadd.f32 0.0, %v3029
      %v3031 = vpop.f32.mrf.mxu0
      %3032 = vmatprep.mubr.bf16.mxu0 0
      %3033 = vmatmul.mubr.bf16.gmra.mxu0 %v2886
      %v3034 = vpop.f32.mrf.mxu0
      %v3035 = vadd.f32 0.0, %v3034
      %v3036 = vpop.f32.mrf.mxu0
      %v3037 = vpop.f32.mrf.mxu0
      %v3038 = vadd.f32 0.0, %v3037
      %v3039 = vpop.f32.mrf.mxu0
      %3040 = vmatprep.mubr.bf16.mxu0 0
      %3041 = vmatmul.mubr.bf16.gmra.mxu0 %v2887
      %v3042 = vpop.f32.mrf.mxu0
      %v3043 = vadd.f32 0.0, %v3042
      %v3044 = vpop.f32.mrf.mxu0
      %v3045 = vpop.f32.mrf.mxu0
      %v3046 = vadd.f32 0.0, %v3045
      %v3047 = vpop.f32.mrf.mxu0
      %3048 = vmatprep.mubr.bf16.mxu0 0
      %3049 = vmatmul.mubr.bf16.gmra.mxu0 %v2888
      %v3050 = vpop.f32.mrf.mxu0
      %v3051 = vadd.f32 0.0, %v3050
      %v3052 = vpop.f32.mrf.mxu0
      %v3053 = vpop.f32.mrf.mxu0
      %v3054 = vadd.f32 0.0, %v3053
      %v3055 = vpop.f32.mrf.mxu0
      %3056 = vmatprep.mubr.bf16.mxu0 0
      %3057 = vmatmul.mubr.bf16.gmra.mxu0 %v2889
      %v3058 = vpop.f32.mrf.mxu0
      %v3059 = vadd.f32 0.0, %v3058
      %v3060 = vpop.f32.mrf.mxu0
      %v3061 = vpop.f32.mrf.mxu0
      %v3062 = vadd.f32 0.0, %v3061
      %v3063 = vpop.f32.mrf.mxu0
      %3064 = vmatprep.mubr.bf16.mxu0 0
      %3065 = vmatmul.mubr.bf16.gmra.mxu0 %v2890
      %v3066 = vpop.f32.mrf.mxu0
      %v3067 = vadd.f32 0.0, %v3066
      %v3068 = vpop.f32.mrf.mxu0
      %v3069 = vpop.f32.mrf.mxu0
      %v3070 = vadd.f32 0.0, %v3069
      %v3071 = vpop.f32.mrf.mxu0
      %3072 = vmatprep.mubr.bf16.mxu0 0
      %3073 = vmatmul.mubr.bf16.gmra.mxu0 %v2891
      %v3074 = vpop.f32.mrf.mxu0
      %v3075 = vadd.f32 0.0, %v3074
      %v3076 = vpop.f32.mrf.mxu0
      %v3077 = vpop.f32.mrf.mxu0
      %v3078 = vadd.f32 0.0, %v3077
      %v3079 = vpop.f32.mrf.mxu0
      %3080 = vmatprep.mubr.bf16.mxu0 0
      %3081 = vmatmul.mubr.bf16.gmra.mxu0 %v2892
      %v3082 = vpop.f32.mrf.mxu0
      %v3083 = vadd.f32 0.0, %v3082
      %v3084 = vpop.f32.mrf.mxu0
      %v3085 = vpop.f32.mrf.mxu0
      %v3086 = vadd.f32 0.0, %v3085
      %v3087 = vpop.f32.mrf.mxu0
      %3088 = vmatprep.mubr.bf16.mxu0 0
      %3089 = vmatmul.mubr.bf16.gmra.mxu0 %v2893
      %v3090 = vpop.f32.mrf.mxu0
      %v3091 = vadd.f32 0.0, %v3090
      %v3092 = vpop.f32.mrf.mxu0
      %v3093 = vpop.f32.mrf.mxu0
      %v3094 = vadd.f32 0.0, %v3093
      %v3095 = vpop.f32.mrf.mxu0
      %3096 = vmatprep.mubr.bf16.mxu0 0
      %3097 = vmatmul.mubr.bf16.gmra.mxu0 %v2894
      %v3098 = vpop.f32.mrf.mxu0
      %v3099 = vadd.f32 0.0, %v3098
      %v3100 = vpop.f32.mrf.mxu0
      %v3101 = vpop.f32.mrf.mxu0
      %v3102 = vadd.f32 0.0, %v3101
      %v3103 = vpop.f32.mrf.mxu0
      %3104 = vmatprep.mubr.bf16.mxu0 0
      %3105 = vmatmul.mubr.bf16.gmra.mxu0 %v2895
      %v3106 = vpop.f32.mrf.mxu0
      %v3107 = vadd.f32 0.0, %v3106
      %v3108 = vpop.f32.mrf.mxu0
      %v3109 = vpop.f32.mrf.mxu0
      %v3110 = vadd.f32 0.0, %v3109
      %v3111 = vpop.f32.mrf.mxu0
      %3112 = vmatprep.mubr.bf16.mxu0 0
      %3113 = vmatmul.mubr.bf16.gmra.mxu0 %v2896
      %v3114 = vpop.f32.mrf.mxu0
      %v3115 = vadd.f32 0.0, %v3114
      %v3116 = vpop.f32.mrf.mxu0
      %v3117 = vpop.f32.mrf.mxu0
      %v3118 = vadd.f32 0.0, %v3117
      %v3119 = vpop.f32.mrf.mxu0
      %3120 = vmatprep.mubr.bf16.mxu0 0
      %3121 = vmatmul.mubr.bf16.gmra.mxu0 %v2897
      %v3122 = vpop.f32.mrf.mxu0
      %v3123 = vadd.f32 0.0, %v3122
      %v3124 = vpop.f32.mrf.mxu0
      %v3125 = vpop.f32.mrf.mxu0
      %v3126 = vadd.f32 0.0, %v3125
      %v3127 = vpop.f32.mrf.mxu0
      %3128 = vmatprep.mubr.bf16.mxu0 0
      %3129 = vmatmul.mubr.bf16.gmra.mxu0 %v2898
      %v3130 = vpop.f32.mrf.mxu0
      %v3131 = vadd.f32 0.0, %v3130
      %v3132 = vpop.f32.mrf.mxu0
      %v3133 = vpop.f32.mrf.mxu0
      %v3134 = vadd.f32 0.0, %v3133
      %v3135 = vpop.f32.mrf.mxu0
      %3136 = vmatprep.mubr.bf16.mxu0 0
      %3137 = vmatmul.mubr.bf16.gmra.mxu0 %v2899
      %v3138 = vpop.f32.mrf.mxu0
      %v3139 = vadd.f32 0.0, %v3138
      %v3140 = vpop.f32.mrf.mxu0
      %v3141 = vpop.f32.mrf.mxu0
      %v3142 = vadd.f32 0.0, %v3141
      %v3143 = vpop.f32.mrf.mxu0
      %3144 = vmatprep.mubr.bf16.mxu0 0
      %3145 = vmatmul.mubr.bf16.gmra.mxu0 %v2900
      %v3146 = vpop.f32.mrf.mxu0
      %v3147 = vadd.f32 0.0, %v3146
      %v3148 = vpop.f32.mrf.mxu0
      %v3149 = vpop.f32.mrf.mxu0
      %v3150 = vadd.f32 0.0, %v3149
      %v3151 = vpop.f32.mrf.mxu0
      %3152 = vmatprep.mubr.bf16.mxu0 0
      %3153 = vmatmul.mubr.bf16.gmra.mxu0 %v2901
      %v3154 = vpop.f32.mrf.mxu0
      %v3155 = vadd.f32 0.0, %v3154
      %v3156 = vpop.f32.mrf.mxu0
      %v3157 = vpop.f32.mrf.mxu0
      %v3158 = vadd.f32 0.0, %v3157
      %v3159 = vpop.f32.mrf.mxu0
      %3160 = vmatprep.mubr.bf16.mxu0 0
      %3161 = vmatmul.mubr.bf16.gmra.mxu0 %v2902
      %v3162 = vpop.f32.mrf.mxu0
      %v3163 = vadd.f32 0.0, %v3162
      %v3164 = vpop.f32.mrf.mxu0
      %v3165 = vpop.f32.mrf.mxu0
      %v3166 = vpop.f32.mrf.mxu0
      %3167 = vdwg.mxu0
      %v3168 = vadd.f32 %v2800, %v3003
      %v3169 = vadd.f32 %v2801, %v3006
      %v3170 = vadd.f32 %v2802, %v3011
      %v3171 = vadd.f32 %v2803, %v3014
      %v3172 = vadd.f32 %v2804, %v3019
      %v3173 = vadd.f32 %v2805, %v3022
      %v3174 = vadd.f32 %v2806, %v3027
      %v3175 = vadd.f32 %v2807, %v3030
      %v3176 = vadd.f32 %v2808, %v3035
      %v3177 = vadd.f32 %v2809, %v3038
      %v3178 = vadd.f32 %v2810, %v3043
      %v3179 = vadd.f32 %v2811, %v3046
      %v3180 = vadd.f32 %v2812, %v3051
      %v3181 = vadd.f32 %v2813, %v3054
      %v3182 = vadd.f32 %v2814, %v3059
      %v3183 = vadd.f32 %v2815, %v3062
      %v3184 = vadd.f32 %v2816, %v3067
      %v3185 = vadd.f32 %v2817, %v3070
      %v3186 = vadd.f32 %v2818, %v3075
      %v3187 = vadd.f32 %v2819, %v3078
      %v3188 = vadd.f32 %v2820, %v3083
      %v3189 = vadd.f32 %v2821, %v3086
      %v3190 = vadd.f32 %v2822, %v3091
      %v3191 = vadd.f32 %v2823, %v3094
      %v3192 = vadd.f32 %v2824, %v3099
      %v3193 = vadd.f32 %v2825, %v3102
      %v3194 = vadd.f32 %v2826, %v3107
      %v3195 = vadd.f32 %v2827, %v3110
      %v3196 = vadd.f32 %v2828, %v3115
      %v3197 = vadd.f32 %v2829, %v3118
      %v3198 = vadd.f32 %v2830, %v3123
      %v3199 = vadd.f32 %v2831, %v3126
      %v3200 = vadd.f32 %v2832, %v3131
      %v3201 = vadd.f32 %v2833, %v3134
      %v3202 = vadd.f32 %v2834, %v3139
      %v3203 = vadd.f32 %v2835, %v3142
      %v3204 = vadd.f32 %v2836, %v3147
      %v3205 = vadd.f32 %v2837, %v3150
      %v3206 = vadd.f32 %v2838, %v3155
      %v3207 = vadd.f32 %v2839, %v3158
      %v3208 = vadd.f32 %v2840, %v3163
      %v3209 = vld [vmem:[%s300 + $0x26] sm:$0xff]
      %v3210 = vld [vmem:[%s300 + $0x2e] sm:$0xff]
      %v3211 = vld [vmem:[%s300 + $0x36] sm:$0xff]
      %v3212 = vld [vmem:[%s300 + $0x3e] sm:$0xff]
      %v3213 = vld [vmem:[%s300 + $0x46] sm:$0xff]
      %v3214 = vld [vmem:[%s300 + $0x4e] sm:$0xff]
      %v3215 = vld [vmem:[%s300 + $0x56] sm:$0xff]
      %v3216 = vld [vmem:[%s300 + $0x5e] sm:$0xff]
      %v3217 = vld [vmem:[%s300 + $0x66] sm:$0xff]
      %v3218 = vld [vmem:[%s300 + $0x6e] sm:$0xff]
      %v3219 = vld [vmem:[%s300 + $0x76] sm:$0xff]
      %v3220 = vld [vmem:[%s300 + $0x7e] sm:$0xff]
      %v3221 = vld [vmem:[%s300 + $0x86] sm:$0xff]
      %v3222 = vld [vmem:[%s300 + $0x8e] sm:$0xff]
      %v3223 = vld [vmem:[%s300 + $0x96] sm:$0xff]
      %v3224 = vld [vmem:[%s300 + $0x9e] sm:$0xff]
      %v3225 = vld [vmem:[%s300 + $0xa6] sm:$0xff]
      %v3226 = vld [vmem:[%s300 + $0xae] sm:$0xff]
      %v3227 = vld [vmem:[%s300 + $0xb6] sm:$0xff]
      %v3228 = vld [vmem:[%s300 + $0xbe] sm:$0xff]
      %v3229 = vld [vmem:[%s300 + $0xc6] sm:$0xff]
      %v3230 = vld [vmem:[%s300 + $0xce] sm:$0xff]
      %v3231 = vld [vmem:[%s300 + $0xd6] sm:$0xff]
      %v3232 = vld [vmem:[%s300 + $0xde] sm:$0xff]
      %v3233 = vld [vmem:[%s300 + $0xe6] sm:$0xff]
      %v3234 = vld [vmem:[%s300 + $0xee] sm:$0xff]
      %v3235 = vld [vmem:[%s300 + $0xf6] sm:$0xff]
      %v3236 = vld [vmem:[%s300 + $0xfe] sm:$0xff]
      %v3237 = vld [vmem:[%s300 + $0x106] sm:$0xff]
      %v3238 = vld [vmem:[%s300 + $0x10e] sm:$0xff]
      %v3239 = vld [vmem:[%s300 + $0x116] sm:$0xff]
      %v3240 = vld [vmem:[%s300 + $0x11e] sm:$0xff]
      %v3241 = vld [vmem:[%s300 + $0x126] sm:$0xff]
      %v3242 = vld [vmem:[%s300 + $0x12e] sm:$0xff]
      %v3243 = vld [vmem:[%s300 + $0x136] sm:$0xff]
      %v3244 = vld [vmem:[%s300 + $0x13e] sm:$0xff]
      %v3245 = vld [vmem:[%s300 + $0x146] sm:$0xff]
      %v3246 = vld [vmem:[%s300 + $0x14e] sm:$0xff]
      %v3247 = vld [vmem:[%s300 + $0x156] sm:$0xff]
      %v3248 = vld [vmem:[%s300 + $0x15e] sm:$0xff]
      %v3249 = vld [vmem:[%s300 + $0x166] sm:$0xf]
      %v3250 = vpack.c.bf16 %v3210, %v3209
      %v3251 = vpack.c.bf16 %v3212, %v3211
      %v3252 = vpack.c.bf16 %v3214, %v3213
      %v3253 = vpack.c.bf16 %v3216, %v3215
      %v3254 = vpack.c.bf16 %v3218, %v3217
      %v3255 = vpack.c.bf16 %v3220, %v3219
      %v3256 = vpack.c.bf16 %v3222, %v3221
      %v3257 = vpack.c.bf16 %v3224, %v3223
      %v3258 = vpack.c.bf16 %v3226, %v3225
      %v3259 = vpack.c.bf16 %v3228, %v3227
      %v3260 = vpack.c.bf16 %v3230, %v3229
      %v3261 = vpack.c.bf16 %v3232, %v3231
      %v3262 = vpack.c.bf16 %v3234, %v3233
      %v3263 = vpack.c.bf16 %v3236, %v3235
      %v3264 = vpack.c.bf16 %v3238, %v3237
      %v3265 = vpack.c.bf16 %v3240, %v3239
      %v3266 = vpack.c.bf16 %v3242, %v3241
      %v3267 = vpack.c.bf16 %v3244, %v3243
      %v3268 = vpack.c.bf16 %v3246, %v3245
      %v3269 = vpack.c.bf16 %v3248, %v3247
      %v3270 = vpack.c.bf16 %v3249, %v3249
      %s3271 = scalar_lea.vmem %s2, 512
      %v3272 = vld [vmem:[%s3271] sm:$0xf]
      %v3273 = vld [vmem:[%s3271 + $0x4] sm:$0xf]
      %v3274 = vld [vmem:[%s3271 + $0x8] sm:$0xf]
      %v3275 = vld [vmem:[%s3271 + $0xc] sm:$0xf]
      %v3276 = vld [vmem:[%s3271 + $0x10] sm:$0xf]
      %v3277 = vld [vmem:[%s3271 + $0x14] sm:$0xf]
      %v3278 = vld [vmem:[%s3271 + $0x18] sm:$0xf]
      %v3279 = vld [vmem:[%s3271 + $0x1c] sm:$0xf]
      %v3280 = vld [vmem:[%s3271 + $0x20] sm:$0xf]
      %v3281 = vld [vmem:[%s3271 + $0x24] sm:$0xf]
      %v3282 = vld [vmem:[%s3271 + $0x28] sm:$0xf]
      %v3283 = vld [vmem:[%s3271 + $0x2c] sm:$0xf]
      %v3284 = vld [vmem:[%s3271 + $0x30] sm:$0xf]
      %v3285 = vld [vmem:[%s3271 + $0x34] sm:$0xf]
      %v3286 = vld [vmem:[%s3271 + $0x38] sm:$0xf]
      %v3287 = vld [vmem:[%s3271 + $0x3c] sm:$0xf]
      %v3304 = vunpack.c.l.b16 %v3272
      %v3305 = vunpack.c.l.b16 %v3273
      %v3306 = vunpack.c.l.b16 %v3274
      %v3307 = vunpack.c.l.b16 %v3275
      %v3308 = vunpack.c.l.b16 %v3276
      %v3309 = vunpack.c.l.b16 %v3277
      %v3310 = vunpack.c.l.b16 %v3278
      %v3311 = vunpack.c.l.b16 %v3279
      %v3312 = vunpack.c.l.b16 %v3280
      %v3313 = vunpack.c.l.b16 %v3281
      %v3314 = vunpack.c.l.b16 %v3282
      %v3315 = vunpack.c.l.b16 %v3283
      %v3316 = vunpack.c.l.b16 %v3284
      %v3317 = vunpack.c.l.b16 %v3285
      %v3318 = vunpack.c.l.b16 %v3286
      %v3319 = vunpack.c.l.b16 %v3287
      %v3320 = vpack.c.b16 %v3305, %v3304
      %v3321 = vpack.c.b16 %v3307, %v3306
      %v3322 = vpack.c.b16 %v3309, %v3308
      %v3323 = vpack.c.b16 %v3311, %v3310
      %v3324 = vpack.c.b16 %v3313, %v3312
      %v3325 = vpack.c.b16 %v3315, %v3314
      %v3326 = vpack.c.b16 %v3317, %v3316
      %v3327 = vpack.c.b16 %v3319, %v3318
      %3336 = vmatprep.subr.bf16.mxu0 0
      %3337 = vmatpush1.bf16.msra.mxu0 %v3327
      %3338 = vmatprep.subr.bf16.mxu0 0
      %3339 = vmatpush1.bf16.msra.mxu0 %v3326
      %3340 = vmatprep.subr.bf16.mxu0 0
      %3341 = vmatpush1.bf16.msra.mxu0 %v3325
      %3342 = vmatprep.subr.bf16.mxu0 0
      %3343 = vmatpush1.bf16.msra.mxu0 %v3324
      %3344 = vmatprep.subr.bf16.mxu0 0
      %3345 = vmatpush1.bf16.msra.mxu0 %v3323
      %3346 = vmatprep.subr.bf16.mxu0 0
      %3347 = vmatpush1.bf16.msra.mxu0 %v3322
      %3348 = vmatprep.subr.bf16.mxu0 0
      %3349 = vmatpush1.bf16.msra.mxu0 %v3321
      %3350 = vmatprep.subr.bf16.mxu0 0
      %3351 = vmatpush1.bf16.msra.mxu0 %v3320
      %3352 = vmatprep.subr.bf16.mxu0 0
      %3353 = vmatpush2.bf16.msra.mxu0 0
      %3354 = vmatprep.subr.bf16.mxu0 0
      %3355 = vmatpush2.bf16.msra.mxu0 0
      %3356 = vmatprep.subr.bf16.mxu0 0
      %3357 = vmatpush2.bf16.msra.mxu0 0
      %3358 = vmatprep.subr.bf16.mxu0 0
      %3359 = vmatpush2.bf16.msra.mxu0 0
      %3360 = vmatprep.subr.bf16.mxu0 0
      %3361 = vmatpush2.bf16.msra.mxu0 0
      %3362 = vmatprep.subr.bf16.mxu0 0
      %3363 = vmatpush2.bf16.msra.mxu0 0
      %3364 = vmatprep.subr.bf16.mxu0 0
      %3365 = vmatpush2.bf16.msra.mxu0 0
      %3366 = vmatprep.subr.bf16.mxu0 0
      %3367 = vmatpush2.bf16.msra.mxu0 0
      %3368 = vmatprep.mubr.bf16.mxu0 0
      %3369 = vmatmul.mubr.bf16.gmra.mxu0 %v3250
      %v3370 = vpop.f32.mrf.mxu0
      %v3371 = vadd.f32 0.0, %v3370
      %v3372 = vpop.f32.mrf.mxu0
      %v3373 = vpop.f32.mrf.mxu0
      %v3374 = vadd.f32 0.0, %v3373
      %v3375 = vpop.f32.mrf.mxu0
      %3376 = vmatprep.mubr.bf16.mxu0 0
      %3377 = vmatmul.mubr.bf16.gmra.mxu0 %v3251
      %v3378 = vpop.f32.mrf.mxu0
      %v3379 = vadd.f32 0.0, %v3378
      %v3380 = vpop.f32.mrf.mxu0
      %v3381 = vpop.f32.mrf.mxu0
      %v3382 = vadd.f32 0.0, %v3381
      %v3383 = vpop.f32.mrf.mxu0
      %3384 = vmatprep.mubr.bf16.mxu0 0
      %3385 = vmatmul.mubr.bf16.gmra.mxu0 %v3252
      %v3386 = vpop.f32.mrf.mxu0
      %v3387 = vadd.f32 0.0, %v3386
      %v3388 = vpop.f32.mrf.mxu0
      %v3389 = vpop.f32.mrf.mxu0
      %v3390 = vadd.f32 0.0, %v3389
      %v3391 = vpop.f32.mrf.mxu0
      %3392 = vmatprep.mubr.bf16.mxu0 0
      %3393 = vmatmul.mubr.bf16.gmra.mxu0 %v3253
      %v3394 = vpop.f32.mrf.mxu0
      %v3395 = vadd.f32 0.0, %v3394
      %v3396 = vpop.f32.mrf.mxu0
      %v3397 = vpop.f32.mrf.mxu0
      %v3398 = vadd.f32 0.0, %v3397
      %v3399 = vpop.f32.mrf.mxu0
      %3400 = vmatprep.mubr.bf16.mxu0 0
      %3401 = vmatmul.mubr.bf16.gmra.mxu0 %v3254
      %v3402 = vpop.f32.mrf.mxu0
      %v3403 = vadd.f32 0.0, %v3402
      %v3404 = vpop.f32.mrf.mxu0
      %v3405 = vpop.f32.mrf.mxu0
      %v3406 = vadd.f32 0.0, %v3405
      %v3407 = vpop.f32.mrf.mxu0
      %3408 = vmatprep.mubr.bf16.mxu0 0
      %3409 = vmatmul.mubr.bf16.gmra.mxu0 %v3255
      %v3410 = vpop.f32.mrf.mxu0
      %v3411 = vadd.f32 0.0, %v3410
      %v3412 = vpop.f32.mrf.mxu0
      %v3413 = vpop.f32.mrf.mxu0
      %v3414 = vadd.f32 0.0, %v3413
      %v3415 = vpop.f32.mrf.mxu0
      %3416 = vmatprep.mubr.bf16.mxu0 0
      %3417 = vmatmul.mubr.bf16.gmra.mxu0 %v3256
      %v3418 = vpop.f32.mrf.mxu0
      %v3419 = vadd.f32 0.0, %v3418
      %v3420 = vpop.f32.mrf.mxu0
      %v3421 = vpop.f32.mrf.mxu0
      %v3422 = vadd.f32 0.0, %v3421
      %v3423 = vpop.f32.mrf.mxu0
      %3424 = vmatprep.mubr.bf16.mxu0 0
      %3425 = vmatmul.mubr.bf16.gmra.mxu0 %v3257
      %v3426 = vpop.f32.mrf.mxu0
      %v3427 = vadd.f32 0.0, %v3426
      %v3428 = vpop.f32.mrf.mxu0
      %v3429 = vpop.f32.mrf.mxu0
      %v3430 = vadd.f32 0.0, %v3429
      %v3431 = vpop.f32.mrf.mxu0
      %3432 = vmatprep.mubr.bf16.mxu0 0
      %3433 = vmatmul.mubr.bf16.gmra.mxu0 %v3258
      %v3434 = vpop.f32.mrf.mxu0
      %v3435 = vadd.f32 0.0, %v3434
      %v3436 = vpop.f32.mrf.mxu0
      %v3437 = vpop.f32.mrf.mxu0
      %v3438 = vadd.f32 0.0, %v3437
      %v3439 = vpop.f32.mrf.mxu0
      %3440 = vmatprep.mubr.bf16.mxu0 0
      %3441 = vmatmul.mubr.bf16.gmra.mxu0 %v3259
      %v3442 = vpop.f32.mrf.mxu0
      %v3443 = vadd.f32 0.0, %v3442
      %v3444 = vpop.f32.mrf.mxu0
      %v3445 = vpop.f32.mrf.mxu0
      %v3446 = vadd.f32 0.0, %v3445
      %v3447 = vpop.f32.mrf.mxu0
      %3448 = vmatprep.mubr.bf16.mxu0 0
      %3449 = vmatmul.mubr.bf16.gmra.mxu0 %v3260
      %v3450 = vpop.f32.mrf.mxu0
      %v3451 = vadd.f32 0.0, %v3450
      %v3452 = vpop.f32.mrf.mxu0
      %v3453 = vpop.f32.mrf.mxu0
      %v3454 = vadd.f32 0.0, %v3453
      %v3455 = vpop.f32.mrf.mxu0
      %3456 = vmatprep.mubr.bf16.mxu0 0
      %3457 = vmatmul.mubr.bf16.gmra.mxu0 %v3261
      %v3458 = vpop.f32.mrf.mxu0
      %v3459 = vadd.f32 0.0, %v3458
      %v3460 = vpop.f32.mrf.mxu0
      %v3461 = vpop.f32.mrf.mxu0
      %v3462 = vadd.f32 0.0, %v3461
      %v3463 = vpop.f32.mrf.mxu0
      %3464 = vmatprep.mubr.bf16.mxu0 0
      %3465 = vmatmul.mubr.bf16.gmra.mxu0 %v3262
      %v3466 = vpop.f32.mrf.mxu0
      %v3467 = vadd.f32 0.0, %v3466
      %v3468 = vpop.f32.mrf.mxu0
      %v3469 = vpop.f32.mrf.mxu0
      %v3470 = vadd.f32 0.0, %v3469
      %v3471 = vpop.f32.mrf.mxu0
      %3472 = vmatprep.mubr.bf16.mxu0 0
      %3473 = vmatmul.mubr.bf16.gmra.mxu0 %v3263
      %v3474 = vpop.f32.mrf.mxu0
      %v3475 = vadd.f32 0.0, %v3474
      %v3476 = vpop.f32.mrf.mxu0
      %v3477 = vpop.f32.mrf.mxu0
      %v3478 = vadd.f32 0.0, %v3477
      %v3479 = vpop.f32.mrf.mxu0
      %3480 = vmatprep.mubr.bf16.mxu0 0
      %3481 = vmatmul.mubr.bf16.gmra.mxu0 %v3264
      %v3482 = vpop.f32.mrf.mxu0
      %v3483 = vadd.f32 0.0, %v3482
      %v3484 = vpop.f32.mrf.mxu0
      %v3485 = vpop.f32.mrf.mxu0
      %v3486 = vadd.f32 0.0, %v3485
      %v3487 = vpop.f32.mrf.mxu0
      %3488 = vmatprep.mubr.bf16.mxu0 0
      %3489 = vmatmul.mubr.bf16.gmra.mxu0 %v3265
      %v3490 = vpop.f32.mrf.mxu0
      %v3491 = vadd.f32 0.0, %v3490
      %v3492 = vpop.f32.mrf.mxu0
      %v3493 = vpop.f32.mrf.mxu0
      %v3494 = vadd.f32 0.0, %v3493
      %v3495 = vpop.f32.mrf.mxu0
      %3496 = vmatprep.mubr.bf16.mxu0 0
      %3497 = vmatmul.mubr.bf16.gmra.mxu0 %v3266
      %v3498 = vpop.f32.mrf.mxu0
      %v3499 = vadd.f32 0.0, %v3498
      %v3500 = vpop.f32.mrf.mxu0
      %v3501 = vpop.f32.mrf.mxu0
      %v3502 = vadd.f32 0.0, %v3501
      %v3503 = vpop.f32.mrf.mxu0
      %3504 = vmatprep.mubr.bf16.mxu0 0
      %3505 = vmatmul.mubr.bf16.gmra.mxu0 %v3267
      %v3506 = vpop.f32.mrf.mxu0
      %v3507 = vadd.f32 0.0, %v3506
      %v3508 = vpop.f32.mrf.mxu0
      %v3509 = vpop.f32.mrf.mxu0
      %v3510 = vadd.f32 0.0, %v3509
      %v3511 = vpop.f32.mrf.mxu0
      %3512 = vmatprep.mubr.bf16.mxu0 0
      %3513 = vmatmul.mubr.bf16.gmra.mxu0 %v3268
      %v3514 = vpop.f32.mrf.mxu0
      %v3515 = vadd.f32 0.0, %v3514
      %v3516 = vpop.f32.mrf.mxu0
      %v3517 = vpop.f32.mrf.mxu0
      %v3518 = vadd.f32 0.0, %v3517
      %v3519 = vpop.f32.mrf.mxu0
      %3520 = vmatprep.mubr.bf16.mxu0 0
      %3521 = vmatmul.mubr.bf16.gmra.mxu0 %v3269
      %v3522 = vpop.f32.mrf.mxu0
      %v3523 = vadd.f32 0.0, %v3522
      %v3524 = vpop.f32.mrf.mxu0
      %v3525 = vpop.f32.mrf.mxu0
      %v3526 = vadd.f32 0.0, %v3525
      %v3527 = vpop.f32.mrf.mxu0
      %3528 = vmatprep.mubr.bf16.mxu0 0
      %3529 = vmatmul.mubr.bf16.gmra.mxu0 %v3270
      %v3530 = vpop.f32.mrf.mxu0
      %v3531 = vadd.f32 0.0, %v3530
      %v3532 = vpop.f32.mrf.mxu0
      %v3533 = vpop.f32.mrf.mxu0
      %v3534 = vpop.f32.mrf.mxu0
      %3535 = vdwg.mxu0
      %v3536 = vadd.f32 %v3168, %v3371
      %v3537 = vadd.f32 %v3169, %v3374
      %v3538 = vadd.f32 %v3170, %v3379
      %v3539 = vadd.f32 %v3171, %v3382
      %v3540 = vadd.f32 %v3172, %v3387
      %v3541 = vadd.f32 %v3173, %v3390
      %v3542 = vadd.f32 %v3174, %v3395
      %v3543 = vadd.f32 %v3175, %v3398
      %v3544 = vadd.f32 %v3176, %v3403
      %v3545 = vadd.f32 %v3177, %v3406
      %v3546 = vadd.f32 %v3178, %v3411
      %v3547 = vadd.f32 %v3179, %v3414
      %v3548 = vadd.f32 %v3180, %v3419
      %v3549 = vadd.f32 %v3181, %v3422
      %v3550 = vadd.f32 %v3182, %v3427
      %v3551 = vadd.f32 %v3183, %v3430
      %v3552 = vadd.f32 %v3184, %v3435
      %v3553 = vadd.f32 %v3185, %v3438
      %v3554 = vadd.f32 %v3186, %v3443
      %v3555 = vadd.f32 %v3187, %v3446
      %v3556 = vadd.f32 %v3188, %v3451
      %v3557 = vadd.f32 %v3189, %v3454
      %v3558 = vadd.f32 %v3190, %v3459
      %v3559 = vadd.f32 %v3191, %v3462
      %v3560 = vadd.f32 %v3192, %v3467
      %v3561 = vadd.f32 %v3193, %v3470
      %v3562 = vadd.f32 %v3194, %v3475
      %v3563 = vadd.f32 %v3195, %v3478
      %v3564 = vadd.f32 %v3196, %v3483
      %v3565 = vadd.f32 %v3197, %v3486
      %v3566 = vadd.f32 %v3198, %v3491
      %v3567 = vadd.f32 %v3199, %v3494
      %v3568 = vadd.f32 %v3200, %v3499
      %v3569 = vadd.f32 %v3201, %v3502
      %v3570 = vadd.f32 %v3202, %v3507
      %v3571 = vadd.f32 %v3203, %v3510
      %v3572 = vadd.f32 %v3204, %v3515
      %v3573 = vadd.f32 %v3205, %v3518
      %v3574 = vadd.f32 %v3206, %v3523
      %v3575 = vadd.f32 %v3207, %v3526
      %v3576 = vadd.f32 %v3208, %v3531
      %v3577 = vld [vmem:[%s3] sm:$0x1]
      %v3579 = vlaneseq
      %v3580 = vshrl.u32 %v3579, 7
      %v3581 = vsub.s32 0, %v3580
      %v3582 = vrot.slane %v3577, %v3581
      %v3584 = vadd.f32 %v3536, %v3582
      %v3585 = vadd.f32 %v3537, %v3582
      %v3586 = vadd.f32 %v3538, %v3582
      %v3587 = vadd.f32 %v3539, %v3582
      %v3588 = vadd.f32 %v3540, %v3582
      %v3589 = vadd.f32 %v3541, %v3582
      %v3590 = vadd.f32 %v3542, %v3582
      %v3591 = vadd.f32 %v3543, %v3582
      %v3592 = vadd.f32 %v3544, %v3582
      %v3593 = vadd.f32 %v3545, %v3582
      %v3594 = vadd.f32 %v3546, %v3582
      %v3595 = vadd.f32 %v3547, %v3582
      %v3596 = vadd.f32 %v3548, %v3582
      %v3597 = vadd.f32 %v3549, %v3582
      %v3598 = vadd.f32 %v3550, %v3582
      %v3599 = vadd.f32 %v3551, %v3582
      %v3600 = vadd.f32 %v3552, %v3582
      %v3601 = vadd.f32 %v3553, %v3582
      %v3602 = vadd.f32 %v3554, %v3582
      %v3603 = vadd.f32 %v3555, %v3582
      %v3604 = vadd.f32 %v3556, %v3582
      %v3605 = vadd.f32 %v3557, %v3582
      %v3606 = vadd.f32 %v3558, %v3582
      %v3607 = vadd.f32 %v3559, %v3582
      %v3608 = vadd.f32 %v3560, %v3582
      %v3609 = vadd.f32 %v3561, %v3582
      %v3610 = vadd.f32 %v3562, %v3582
      %v3611 = vadd.f32 %v3563, %v3582
      %v3612 = vadd.f32 %v3564, %v3582
      %v3613 = vadd.f32 %v3565, %v3582
      %v3614 = vadd.f32 %v3566, %v3582
      %v3615 = vadd.f32 %v3567, %v3582
      %v3616 = vadd.f32 %v3568, %v3582
      %v3617 = vadd.f32 %v3569, %v3582
      %v3618 = vadd.f32 %v3570, %v3582
      %v3619 = vadd.f32 %v3571, %v3582
      %v3620 = vadd.f32 %v3572, %v3582
      %v3621 = vadd.f32 %v3573, %v3582
      %v3622 = vadd.f32 %v3574, %v3582
      %v3623 = vadd.f32 %v3575, %v3582
      %v3624 = vadd.f32 %v3576, %v3582
      %v3625 = vmax.f32 %v3584, 0.0
      %v3626 = vmax.f32 %v3585, 0.0
      %v3627 = vmax.f32 %v3586, 0.0
      %v3628 = vmax.f32 %v3587, 0.0
      %v3629 = vmax.f32 %v3588, 0.0
      %v3630 = vmax.f32 %v3589, 0.0
      %v3631 = vmax.f32 %v3590, 0.0
      %v3632 = vmax.f32 %v3591, 0.0
      %v3633 = vmax.f32 %v3592, 0.0
      %v3634 = vmax.f32 %v3593, 0.0
      %v3635 = vmax.f32 %v3594, 0.0
      %v3636 = vmax.f32 %v3595, 0.0
      %v3637 = vmax.f32 %v3596, 0.0
      %v3638 = vmax.f32 %v3597, 0.0
      %v3639 = vmax.f32 %v3598, 0.0
      %v3640 = vmax.f32 %v3599, 0.0
      %v3641 = vmax.f32 %v3600, 0.0
      %v3642 = vmax.f32 %v3601, 0.0
      %v3643 = vmax.f32 %v3602, 0.0
      %v3644 = vmax.f32 %v3603, 0.0
      %v3645 = vmax.f32 %v3604, 0.0
      %v3646 = vmax.f32 %v3605, 0.0
      %v3647 = vmax.f32 %v3606, 0.0
      %v3648 = vmax.f32 %v3607, 0.0
      %v3649 = vmax.f32 %v3608, 0.0
      %v3650 = vmax.f32 %v3609, 0.0
      %v3651 = vmax.f32 %v3610, 0.0
      %v3652 = vmax.f32 %v3611, 0.0
      %v3653 = vmax.f32 %v3612, 0.0
      %v3654 = vmax.f32 %v3613, 0.0
      %v3655 = vmax.f32 %v3614, 0.0
      %v3656 = vmax.f32 %v3615, 0.0
      %v3657 = vmax.f32 %v3616, 0.0
      %v3658 = vmax.f32 %v3617, 0.0
      %v3659 = vmax.f32 %v3618, 0.0
      %v3660 = vmax.f32 %v3619, 0.0
      %v3661 = vmax.f32 %v3620, 0.0
      %v3662 = vmax.f32 %v3621, 0.0
      %v3663 = vmax.f32 %v3622, 0.0
      %v3664 = vmax.f32 %v3623, 0.0
      %v3665 = vmax.f32 %v3624, 0.0
      %3667 = vset.pattern.permute.xlu0 0
      %3668 = vperm.xlu0 %3667, %v307
      %v3669 = vpop.permute.xlu0 %3668
      %3672 = vset.pattern.permute.xlu0 0
      %3673 = vperm.xlu0 %3672, %v308
      %v3674 = vpop.permute.xlu0 %3673
      %3677 = vset.pattern.permute.xlu0 0
      %3678 = vperm.xlu0 %3677, %v309
      %v3679 = vpop.permute.xlu0 %3678
      %3682 = vset.pattern.permute.xlu0 0
      %3683 = vperm.xlu0 %3682, %v310
      %v3684 = vpop.permute.xlu0 %3683
      %3687 = vset.pattern.permute.xlu0 0
      %3688 = vperm.xlu0 %3687, %v311
      %v3689 = vpop.permute.xlu0 %3688
      %3692 = vset.pattern.permute.xlu0 0
      %3693 = vperm.xlu0 %3692, %v312
      %v3694 = vpop.permute.xlu0 %3693
      %3697 = vset.pattern.permute.xlu0 0
      %3698 = vperm.xlu0 %3697, %v313
      %v3699 = vpop.permute.xlu0 %3698
      %3702 = vset.pattern.permute.xlu0 0
      %3703 = vperm.xlu0 %3702, %v314
      %v3704 = vpop.permute.xlu0 %3703
      %3707 = vset.pattern.permute.xlu0 0
      %3708 = vperm.xlu0 %3707, %v315
      %v3709 = vpop.permute.xlu0 %3708
      %3712 = vset.pattern.permute.xlu0 0
      %3713 = vperm.xlu0 %3712, %v316
      %v3714 = vpop.permute.xlu0 %3713
      %3717 = vset.pattern.permute.xlu0 0
      %3718 = vperm.xlu0 %3717, %v317
      %v3719 = vpop.permute.xlu0 %3718
      %3722 = vset.pattern.permute.xlu0 0
      %3723 = vperm.xlu0 %3722, %v318
      %v3724 = vpop.permute.xlu0 %3723
      %3727 = vset.pattern.permute.xlu0 0
      %3728 = vperm.xlu0 %3727, %v319
      %v3729 = vpop.permute.xlu0 %3728
      %3732 = vset.pattern.permute.xlu0 0
      %3733 = vperm.xlu0 %3732, %v320
      %v3734 = vpop.permute.xlu0 %3733
      %3737 = vset.pattern.permute.xlu0 0
      %3738 = vperm.xlu0 %3737, %v321
      %v3739 = vpop.permute.xlu0 %3738
      %3742 = vset.pattern.permute.xlu0 0
      %3743 = vperm.xlu0 %3742, %v322
      %v3744 = vpop.permute.xlu0 %3743
      %3747 = vset.pattern.permute.xlu0 0
      %3748 = vperm.xlu0 %3747, %v323
      %v3749 = vpop.permute.xlu0 %3748
      %3752 = vset.pattern.permute.xlu0 0
      %3753 = vperm.xlu0 %3752, %v324
      %v3754 = vpop.permute.xlu0 %3753
      %3757 = vset.pattern.permute.xlu0 0
      %3758 = vperm.xlu0 %3757, %v325
      %v3759 = vpop.permute.xlu0 %3758
      %3762 = vset.pattern.permute.xlu0 0
      %3763 = vperm.xlu0 %3762, %v326
      %v3764 = vpop.permute.xlu0 %3763
      %3767 = vset.pattern.permute.xlu0 0
      %3768 = vperm.xlu0 %3767, %v327
      %v3769 = vpop.permute.xlu0 %3768
      %3772 = vset.pattern.permute.xlu0 0
      %3773 = vperm.xlu0 %3772, %v328
      %v3774 = vpop.permute.xlu0 %3773
      %3777 = vset.pattern.permute.xlu0 0
      %3778 = vperm.xlu0 %3777, %v329
      %v3779 = vpop.permute.xlu0 %3778
      %3782 = vset.pattern.permute.xlu0 0
      %3783 = vperm.xlu0 %3782, %v330
      %v3784 = vpop.permute.xlu0 %3783
      %3787 = vset.pattern.permute.xlu0 0
      %3788 = vperm.xlu0 %3787, %v331
      %v3789 = vpop.permute.xlu0 %3788
      %3792 = vset.pattern.permute.xlu0 0
      %3793 = vperm.xlu0 %3792, %v332
      %v3794 = vpop.permute.xlu0 %3793
      %3797 = vset.pattern.permute.xlu0 0
      %3798 = vperm.xlu0 %3797, %v333
      %v3799 = vpop.permute.xlu0 %3798
      %3802 = vset.pattern.permute.xlu0 0
      %3803 = vperm.xlu0 %3802, %v334
      %v3804 = vpop.permute.xlu0 %3803
      %3807 = vset.pattern.permute.xlu0 0
      %3808 = vperm.xlu0 %3807, %v335
      %v3809 = vpop.permute.xlu0 %3808
      %3812 = vset.pattern.permute.xlu0 0
      %3813 = vperm.xlu0 %3812, %v336
      %v3814 = vpop.permute.xlu0 %3813
      %3817 = vset.pattern.permute.xlu0 0
      %3818 = vperm.xlu0 %3817, %v337
      %v3819 = vpop.permute.xlu0 %3818
      %3822 = vset.pattern.permute.xlu0 0
      %3823 = vperm.xlu0 %3822, %v338
      %v3824 = vpop.permute.xlu0 %3823
      %3827 = vset.pattern.permute.xlu0 0
      %3828 = vperm.xlu0 %3827, %v339
      %v3829 = vpop.permute.xlu0 %3828
      %3832 = vset.pattern.permute.xlu0 0
      %3833 = vperm.xlu0 %3832, %v340
      %v3834 = vpop.permute.xlu0 %3833
      %3837 = vset.pattern.permute.xlu0 0
      %3838 = vperm.xlu0 %3837, %v341
      %v3839 = vpop.permute.xlu0 %3838
      %3842 = vset.pattern.permute.xlu0 0
      %3843 = vperm.xlu0 %3842, %v342
      %v3844 = vpop.permute.xlu0 %3843
      %3847 = vset.pattern.permute.xlu0 0
      %3848 = vperm.xlu0 %3847, %v343
      %v3849 = vpop.permute.xlu0 %3848
      %3852 = vset.pattern.permute.xlu0 0
      %3853 = vperm.xlu0 %3852, %v344
      %v3854 = vpop.permute.xlu0 %3853
      %3857 = vset.pattern.permute.xlu0 0
      %3858 = vperm.xlu0 %3857, %v345
      %v3859 = vpop.permute.xlu0 %3858
      %3862 = vset.pattern.permute.xlu0 0
      %3863 = vperm.xlu0 %3862, %v346
      %v3864 = vpop.permute.xlu0 %3863
      %3867 = vset.pattern.permute.xlu0 0
      %3868 = vperm.xlu0 %3867, %v347
      %v3869 = vpop.permute.xlu0 %3868
      %v3871 = vmul.f32 %v3625, %v3669
      %v3872 = vmul.f32 %v3626, %v3674
      %v3873 = vmul.f32 %v3627, %v3679
      %v3874 = vmul.f32 %v3628, %v3684
      %v3875 = vmul.f32 %v3629, %v3689
      %v3876 = vmul.f32 %v3630, %v3694
      %v3877 = vmul.f32 %v3631, %v3699
      %v3878 = vmul.f32 %v3632, %v3704
      %v3879 = vmul.f32 %v3633, %v3709
      %v3880 = vmul.f32 %v3634, %v3714
      %v3881 = vmul.f32 %v3635, %v3719
      %v3882 = vmul.f32 %v3636, %v3724
      %v3883 = vmul.f32 %v3637, %v3729
      %v3884 = vmul.f32 %v3638, %v3734
      %v3885 = vmul.f32 %v3639, %v3739
      %v3886 = vmul.f32 %v3640, %v3744
      %v3887 = vmul.f32 %v3641, %v3749
      %v3888 = vmul.f32 %v3642, %v3754
      %v3889 = vmul.f32 %v3643, %v3759
      %v3890 = vmul.f32 %v3644, %v3764
      %v3891 = vmul.f32 %v3645, %v3769
      %v3892 = vmul.f32 %v3646, %v3774
      %v3893 = vmul.f32 %v3647, %v3779
      %v3894 = vmul.f32 %v3648, %v3784
      %v3895 = vmul.f32 %v3649, %v3789
      %v3896 = vmul.f32 %v3650, %v3794
      %v3897 = vmul.f32 %v3651, %v3799
      %v3898 = vmul.f32 %v3652, %v3804
      %v3899 = vmul.f32 %v3653, %v3809
      %v3900 = vmul.f32 %v3654, %v3814
      %v3901 = vmul.f32 %v3655, %v3819
      %v3902 = vmul.f32 %v3656, %v3824
      %v3903 = vmul.f32 %v3657, %v3829
      %v3904 = vmul.f32 %v3658, %v3834
      %v3905 = vmul.f32 %v3659, %v3839
      %v3906 = vmul.f32 %v3660, %v3844
      %v3907 = vmul.f32 %v3661, %v3849
      %v3908 = vmul.f32 %v3662, %v3854
      %v3909 = vmul.f32 %v3663, %v3859
      %v3910 = vmul.f32 %v3664, %v3864
      %v3911 = vmul.f32 %v3665, %v3869
      %3912 = vst [vmem:[#allocation2] sm:$0xff] 0.0
      %3913 = vst [vmem:[#allocation2 + $0x8] sm:$0xff] 0.0
      %3914 = vst [vmem:[#allocation2 + $0x10] sm:$0xff] 0.0
      %3915 = vst [vmem:[#allocation2 + $0x18] sm:$0xff] 0.0
      %3916 = vst [vmem:[#allocation2 + $0x20] sm:$0xff] 0.0
      %3917 = vst [vmem:[#allocation2 + $0x28] sm:$0xff] 0.0
      %3918 = vst [vmem:[#allocation2 + $0x30] sm:$0xff] 0.0
      %3919 = vst [vmem:[#allocation2 + $0x38] sm:$0xff] 0.0
      %3920 = vst [vmem:[#allocation2 + $0x40] sm:$0xff] 0.0
      %3921 = vst [vmem:[#allocation2 + $0x48] sm:$0xff] 0.0
      %3922 = vst [vmem:[#allocation2 + $0x50] sm:$0xff] 0.0
      %3923 = vst [vmem:[#allocation2 + $0x58] sm:$0xff] 0.0
      %3924 = vst [vmem:[#allocation2 + $0x60] sm:$0xff] 0.0
      %3925 = vst [vmem:[#allocation2 + $0x68] sm:$0xff] 0.0
      %3926 = vst [vmem:[#allocation2 + $0x70] sm:$0xff] 0.0
      %3927 = vst [vmem:[#allocation2 + $0x78] sm:$0xff] 0.0
      %3928 = vst [vmem:[#allocation2 + $0x80] sm:$0xff] 0.0
      %3929 = vst [vmem:[#allocation2 + $0x88] sm:$0xff] 0.0
      %3930 = vst [vmem:[#allocation2 + $0x90] sm:$0xff] 0.0
      %3931 = vst [vmem:[#allocation2 + $0x98] sm:$0xff] 0.0
      %3932 = vst [vmem:[#allocation2 + $0xa0] sm:$0xff] 0.0
      %3933 = vst [vmem:[#allocation2 + $0xa8] sm:$0xff] 0.0
      %3934 = vst [vmem:[#allocation2 + $0xb0] sm:$0xff] 0.0
      %3935 = vst [vmem:[#allocation2 + $0xb8] sm:$0xff] 0.0
      %3936 = vst [vmem:[#allocation2 + $0xc0] sm:$0xff] 0.0
      %3937 = vst [vmem:[#allocation2 + $0xc8] sm:$0xff] 0.0
      %3938 = vst [vmem:[#allocation2 + $0xd0] sm:$0xff] 0.0
      %3939 = vst [vmem:[#allocation2 + $0xd8] sm:$0xff] 0.0
      %3940 = vst [vmem:[#allocation2 + $0xe0] sm:$0xff] 0.0
      %3941 = vst [vmem:[#allocation2 + $0xe8] sm:$0xff] 0.0
      %3942 = vst [vmem:[#allocation2 + $0xf0] sm:$0xff] 0.0
      %3943 = vst [vmem:[#allocation2 + $0xf8] sm:$0xff] 0.0
      %3944 = vst [vmem:[#allocation2 + $0x100] sm:$0xff] 0.0
      %3945 = vst [vmem:[#allocation2 + $0x108] sm:$0xff] 0.0
      %3946 = vst [vmem:[#allocation2 + $0x110] sm:$0xff] 0.0
      %3947 = vst [vmem:[#allocation2 + $0x118] sm:$0xff] 0.0
      %3948 = vst [vmem:[#allocation2 + $0x120] sm:$0xff] 0.0
      %3949 = vst [vmem:[#allocation2 + $0x128] sm:$0xff] 0.0
      %3950 = vst [vmem:[#allocation2 + $0x130] sm:$0xff] 0.0
      %3951 = vst [vmem:[#allocation2 + $0x138] sm:$0xff] 0.0
      %3952 = vst [vmem:[#allocation2 + $0x140] sm:$0xff] 0.0
      %3953 = vst [vmem:[#allocation2 + $0x148] sm:$0xff] 0.0
      %3954 = vst [vmem:[#allocation2 + $0x150] sm:$0xff] 0.0
      %3955 = vst [vmem:[#allocation2 + $0x158] sm:$0xff] 0.0
      %3956 = vst [vmem:[#allocation2 + $0x160] sm:$0xff] 0.0
      %3957 = vst [vmem:[#allocation2 + $0x168] sm:$0x3] 0.0
      %3958 = vst [vmem:[#allocation2 + $0x13] sm:$0xff] %v3871
      %3959 = vst [vmem:[#allocation2 + $0x1b] sm:$0xff] %v3872
      %3960 = vst [vmem:[#allocation2 + $0x23] sm:$0xff] %v3873
      %3961 = vst [vmem:[#allocation2 + $0x2b] sm:$0xff] %v3874
      %3962 = vst [vmem:[#allocation2 + $0x33] sm:$0xff] %v3875
      %3963 = vst [vmem:[#allocation2 + $0x3b] sm:$0xff] %v3876
      %3964 = vst [vmem:[#allocation2 + $0x43] sm:$0xff] %v3877
      %3965 = vst [vmem:[#allocation2 + $0x4b] sm:$0xff] %v3878
      %3966 = vst [vmem:[#allocation2 + $0x53] sm:$0xff] %v3879
      %3967 = vst [vmem:[#allocation2 + $0x5b] sm:$0xff] %v3880
      %3968 = vst [vmem:[#allocation2 + $0x63] sm:$0xff] %v3881
      %3969 = vst [vmem:[#allocation2 + $0x6b] sm:$0xff] %v3882
      %3970 = vst [vmem:[#allocation2 + $0x73] sm:$0xff] %v3883
      %3971 = vst [vmem:[#allocation2 + $0x7b] sm:$0xff] %v3884
      %3972 = vst [vmem:[#allocation2 + $0x83] sm:$0xff] %v3885
      %3973 = vst [vmem:[#allocation2 + $0x8b] sm:$0xff] %v3886
      %3974 = vst [vmem:[#allocation2 + $0x93] sm:$0xff] %v3887
      %3975 = vst [vmem:[#allocation2 + $0x9b] sm:$0xff] %v3888
      %3976 = vst [vmem:[#allocation2 + $0xa3] sm:$0xff] %v3889
      %3977 = vst [vmem:[#allocation2 + $0xab] sm:$0xff] %v3890
      %3978 = vst [vmem:[#allocation2 + $0xb3] sm:$0xff] %v3891
      %3979 = vst [vmem:[#allocation2 + $0xbb] sm:$0xff] %v3892
      %3980 = vst [vmem:[#allocation2 + $0xc3] sm:$0xff] %v3893
      %3981 = vst [vmem:[#allocation2 + $0xcb] sm:$0xff] %v3894
      %3982 = vst [vmem:[#allocation2 + $0xd3] sm:$0xff] %v3895
      %3983 = vst [vmem:[#allocation2 + $0xdb] sm:$0xff] %v3896
      %3984 = vst [vmem:[#allocation2 + $0xe3] sm:$0xff] %v3897
      %3985 = vst [vmem:[#allocation2 + $0xeb] sm:$0xff] %v3898
      %3986 = vst [vmem:[#allocation2 + $0xf3] sm:$0xff] %v3899
      %3987 = vst [vmem:[#allocation2 + $0xfb] sm:$0xff] %v3900
      %3988 = vst [vmem:[#allocation2 + $0x103] sm:$0xff] %v3901
      %3989 = vst [vmem:[#allocation2 + $0x10b] sm:$0xff] %v3902
      %3990 = vst [vmem:[#allocation2 + $0x113] sm:$0xff] %v3903
      %3991 = vst [vmem:[#allocation2 + $0x11b] sm:$0xff] %v3904
      %3992 = vst [vmem:[#allocation2 + $0x123] sm:$0xff] %v3905
      %3993 = vst [vmem:[#allocation2 + $0x12b] sm:$0xff] %v3906
      %3994 = vst [vmem:[#allocation2 + $0x133] sm:$0xff] %v3907
      %3995 = vst [vmem:[#allocation2 + $0x13b] sm:$0xff] %v3908
      %3996 = vst [vmem:[#allocation2 + $0x143] sm:$0xff] %v3909
      %3997 = vst [vmem:[#allocation2 + $0x14b] sm:$0xff] %v3910
      %3998 = vst [vmem:[#allocation2 + $0x153] sm:$0xf] %v3911
      %v3999 = vld [vmem:[#allocation2] sm:$0xff]
      %v4000 = vld [vmem:[#allocation2 + $0x8] sm:$0xff]
      %v4001 = vld [vmem:[#allocation2 + $0x10] sm:$0xff]
      %v4002 = vld [vmem:[#allocation2 + $0x18] sm:$0xff]
      %v4003 = vld [vmem:[#allocation2 + $0x20] sm:$0xff]
      %v4004 = vld [vmem:[#allocation2 + $0x28] sm:$0xff]
      %v4005 = vld [vmem:[#allocation2 + $0x30] sm:$0xff]
      %v4006 = vld [vmem:[#allocation2 + $0x38] sm:$0xff]
      %v4007 = vld [vmem:[#allocation2 + $0x40] sm:$0xff]
      %v4008 = vld [vmem:[#allocation2 + $0x48] sm:$0xff]
      %v4009 = vld [vmem:[#allocation2 + $0x50] sm:$0xff]
      %v4010 = vld [vmem:[#allocation2 + $0x58] sm:$0xff]
      %v4011 = vld [vmem:[#allocation2 + $0x60] sm:$0xff]
      %v4012 = vld [vmem:[#allocation2 + $0x68] sm:$0xff]
      %v4013 = vld [vmem:[#allocation2 + $0x70] sm:$0xff]
      %v4014 = vld [vmem:[#allocation2 + $0x78] sm:$0xff]
      %v4015 = vld [vmem:[#allocation2 + $0x80] sm:$0xff]
      %v4016 = vld [vmem:[#allocation2 + $0x88] sm:$0xff]
      %v4017 = vld [vmem:[#allocation2 + $0x90] sm:$0xff]
      %v4018 = vld [vmem:[#allocation2 + $0x98] sm:$0xff]
      %v4019 = vld [vmem:[#allocation2 + $0xa0] sm:$0xff]
      %v4020 = vld [vmem:[#allocation2 + $0xa8] sm:$0xff]
      %v4021 = vld [vmem:[#allocation2 + $0xb0] sm:$0xff]
      %v4022 = vld [vmem:[#allocation2 + $0xb8] sm:$0xff]
      %v4023 = vld [vmem:[#allocation2 + $0xc0] sm:$0xff]
      %v4024 = vld [vmem:[#allocation2 + $0xc8] sm:$0xff]
      %v4025 = vld [vmem:[#allocation2 + $0xd0] sm:$0xff]
      %v4026 = vld [vmem:[#allocation2 + $0xd8] sm:$0xff]
      %v4027 = vld [vmem:[#allocation2 + $0xe0] sm:$0xff]
      %v4028 = vld [vmem:[#allocation2 + $0xe8] sm:$0xff]
      %v4029 = vld [vmem:[#allocation2 + $0xf0] sm:$0xff]
      %v4030 = vld [vmem:[#allocation2 + $0xf8] sm:$0xff]
      %v4031 = vld [vmem:[#allocation2 + $0x100] sm:$0xff]
      %v4032 = vld [vmem:[#allocation2 + $0x108] sm:$0xff]
      %v4033 = vld [vmem:[#allocation2 + $0x110] sm:$0xff]
      %v4034 = vld [vmem:[#allocation2 + $0x118] sm:$0xff]
      %v4035 = vld [vmem:[#allocation2 + $0x120] sm:$0xff]
      %v4036 = vld [vmem:[#allocation2 + $0x128] sm:$0xff]
      %v4037 = vld [vmem:[#allocation2 + $0x130] sm:$0xff]
      %v4038 = vld [vmem:[#allocation2 + $0x138] sm:$0xff]
      %v4039 = vld [vmem:[#allocation2 + $0x140] sm:$0xf]
      %v4040 = vpack.c.bf16 %v4000, %v3999
      %v4041 = vpack.c.bf16 %v4002, %v4001
      %v4042 = vpack.c.bf16 %v4004, %v4003
      %v4043 = vpack.c.bf16 %v4006, %v4005
      %v4044 = vpack.c.bf16 %v4008, %v4007
      %v4045 = vpack.c.bf16 %v4010, %v4009
      %v4046 = vpack.c.bf16 %v4012, %v4011
      %v4047 = vpack.c.bf16 %v4014, %v4013
      %v4048 = vpack.c.bf16 %v4016, %v4015
      %v4049 = vpack.c.bf16 %v4018, %v4017
      %v4050 = vpack.c.bf16 %v4020, %v4019
      %v4051 = vpack.c.bf16 %v4022, %v4021
      %v4052 = vpack.c.bf16 %v4024, %v4023
      %v4053 = vpack.c.bf16 %v4026, %v4025
      %v4054 = vpack.c.bf16 %v4028, %v4027
      %v4055 = vpack.c.bf16 %v4030, %v4029
      %v4056 = vpack.c.bf16 %v4032, %v4031
      %v4057 = vpack.c.bf16 %v4034, %v4033
      %v4058 = vpack.c.bf16 %v4036, %v4035
      %v4059 = vpack.c.bf16 %v4038, %v4037
      %v4060 = vpack.c.bf16 %v4039, %v4039
      %v4061 = vld [vmem:[%s4] sm:$0xf]
      %v4062 = vld [vmem:[%s4 + $0x4] sm:$0xf]
      %v4063 = vld [vmem:[%s4 + $0x8] sm:$0xf]
      %v4064 = vld [vmem:[%s4 + $0xc] sm:$0xf]
      %v4065 = vld [vmem:[%s4 + $0x10] sm:$0xf]
      %v4066 = vld [vmem:[%s4 + $0x14] sm:$0xf]
      %v4067 = vld [vmem:[%s4 + $0x18] sm:$0xf]
      %v4068 = vld [vmem:[%s4 + $0x1c] sm:$0xf]
      %v4069 = vld [vmem:[%s4 + $0x20] sm:$0xf]
      %v4070 = vld [vmem:[%s4 + $0x24] sm:$0xf]
      %v4071 = vld [vmem:[%s4 + $0x28] sm:$0xf]
      %v4072 = vld [vmem:[%s4 + $0x2c] sm:$0xf]
      %v4073 = vld [vmem:[%s4 + $0x30] sm:$0xf]
      %v4074 = vld [vmem:[%s4 + $0x34] sm:$0xf]
      %v4075 = vld [vmem:[%s4 + $0x38] sm:$0xf]
      %v4076 = vld [vmem:[%s4 + $0x3c] sm:$0xf]
      %v4077 = vld [vmem:[#allocation2 + $0x1] sm:$0xff]
      %v4078 = vld [vmem:[#allocation2 + $0x9] sm:$0xff]
      %v4079 = vld [vmem:[#allocation2 + $0x11] sm:$0xff]
      %v4080 = vld [vmem:[#allocation2 + $0x19] sm:$0xff]
      %v4081 = vld [vmem:[#allocation2 + $0x21] sm:$0xff]
      %v4082 = vld [vmem:[#allocation2 + $0x29] sm:$0xff]
      %v4083 = vld [vmem:[#allocation2 + $0x31] sm:$0xff]
      %v4084 = vld [vmem:[#allocation2 + $0x39] sm:$0xff]
      %v4085 = vld [vmem:[#allocation2 + $0x41] sm:$0xff]
      %v4086 = vld [vmem:[#allocation2 + $0x49] sm:$0xff]
      %v4087 = vld [vmem:[#allocation2 + $0x51] sm:$0xff]
      %v4088 = vld [vmem:[#allocation2 + $0x59] sm:$0xff]
      %v4089 = vld [vmem:[#allocation2 + $0x61] sm:$0xff]
      %v4090 = vld [vmem:[#allocation2 + $0x69] sm:$0xff]
      %v4091 = vld [vmem:[#allocation2 + $0x71] sm:$0xff]
      %v4092 = vld [vmem:[#allocation2 + $0x79] sm:$0xff]
      %v4093 = vld [vmem:[#allocation2 + $0x81] sm:$0xff]
      %v4094 = vld [vmem:[#allocation2 + $0x89] sm:$0xff]
      %v4095 = vld [vmem:[#allocation2 + $0x91] sm:$0xff]
      %v4096 = vld [vmem:[#allocation2 + $0x99] sm:$0xff]
      %v4097 = vld [vmem:[#allocation2 + $0xa1] sm:$0xff]
      %v4098 = vld [vmem:[#allocation2 + $0xa9] sm:$0xff]
      %v4099 = vld [vmem:[#allocation2 + $0xb1] sm:$0xff]
      %v4100 = vld [vmem:[#allocation2 + $0xb9] sm:$0xff]
      %v4101 = vld [vmem:[#allocation2 + $0xc1] sm:$0xff]
      %v4102 = vld [vmem:[#allocation2 + $0xc9] sm:$0xff]
      %v4103 = vld [vmem:[#allocation2 + $0xd1] sm:$0xff]
      %v4104 = vld [vmem:[#allocation2 + $0xd9] sm:$0xff]
      %v4105 = vld [vmem:[#allocation2 + $0xe1] sm:$0xff]
      %v4106 = vld [vmem:[#allocation2 + $0xe9] sm:$0xff]
      %v4107 = vld [vmem:[#allocation2 + $0xf1] sm:$0xff]
      %v4108 = vld [vmem:[#allocation2 + $0xf9] sm:$0xff]
      %v4109 = vld [vmem:[#allocation2 + $0x101] sm:$0xff]
      %v4110 = vld [vmem:[#allocation2 + $0x109] sm:$0xff]
      %v4111 = vld [vmem:[#allocation2 + $0x111] sm:$0xff]
      %v4112 = vld [vmem:[#allocation2 + $0x119] sm:$0xff]
      %v4113 = vld [vmem:[#allocation2 + $0x121] sm:$0xff]
      %v4114 = vld [vmem:[#allocation2 + $0x129] sm:$0xff]
      %v4115 = vld [vmem:[#allocation2 + $0x131] sm:$0xff]
      %v4116 = vld [vmem:[#allocation2 + $0x139] sm:$0xff]
      %v4117 = vld [vmem:[#allocation2 + $0x141] sm:$0xf]
      %v4118 = vpack.c.bf16 %v4078, %v4077
      %v4119 = vpack.c.bf16 %v4080, %v4079
      %v4120 = vpack.c.bf16 %v4082, %v4081
      %v4121 = vpack.c.bf16 %v4084, %v4083
      %v4122 = vpack.c.bf16 %v4086, %v4085
      %v4123 = vpack.c.bf16 %v4088, %v4087
      %v4124 = vpack.c.bf16 %v4090, %v4089
      %v4125 = vpack.c.bf16 %v4092, %v4091
      %v4126 = vpack.c.bf16 %v4094, %v4093
      %v4127 = vpack.c.bf16 %v4096, %v4095
      %v4128 = vpack.c.bf16 %v4098, %v4097
      %v4129 = vpack.c.bf16 %v4100, %v4099
      %v4130 = vpack.c.bf16 %v4102, %v4101
      %v4131 = vpack.c.bf16 %v4104, %v4103
      %v4132 = vpack.c.bf16 %v4106, %v4105
      %v4133 = vpack.c.bf16 %v4108, %v4107
      %v4134 = vpack.c.bf16 %v4110, %v4109
      %v4135 = vpack.c.bf16 %v4112, %v4111
      %v4136 = vpack.c.bf16 %v4114, %v4113
      %v4137 = vpack.c.bf16 %v4116, %v4115
      %v4138 = vpack.c.bf16 %v4117, %v4117
      %s4139 = scalar_lea.vmem %s4, 64
      %v4140 = vld [vmem:[%s4139] sm:$0xf]
      %v4141 = vld [vmem:[%s4139 + $0x4] sm:$0xf]
      %v4142 = vld [vmem:[%s4139 + $0x8] sm:$0xf]
      %v4143 = vld [vmem:[%s4139 + $0xc] sm:$0xf]
      %v4144 = vld [vmem:[%s4139 + $0x10] sm:$0xf]
      %v4145 = vld [vmem:[%s4139 + $0x14] sm:$0xf]
      %v4146 = vld [vmem:[%s4139 + $0x18] sm:$0xf]
      %v4147 = vld [vmem:[%s4139 + $0x1c] sm:$0xf]
      %v4148 = vld [vmem:[%s4139 + $0x20] sm:$0xf]
      %v4149 = vld [vmem:[%s4139 + $0x24] sm:$0xf]
      %v4150 = vld [vmem:[%s4139 + $0x28] sm:$0xf]
      %v4151 = vld [vmem:[%s4139 + $0x2c] sm:$0xf]
      %v4152 = vld [vmem:[%s4139 + $0x30] sm:$0xf]
      %v4153 = vld [vmem:[%s4139 + $0x34] sm:$0xf]
      %v4154 = vld [vmem:[%s4139 + $0x38] sm:$0xf]
      %v4155 = vld [vmem:[%s4139 + $0x3c] sm:$0xf]
      %v4172 = vunpack.c.l.b16 %v4140
      %v4173 = vunpack.c.l.b16 %v4141
      %v4174 = vunpack.c.l.b16 %v4142
      %v4175 = vunpack.c.l.b16 %v4143
      %v4176 = vunpack.c.l.b16 %v4144
      %v4177 = vunpack.c.l.b16 %v4145
      %v4178 = vunpack.c.l.b16 %v4146
      %v4179 = vunpack.c.l.b16 %v4147
      %v4180 = vunpack.c.l.b16 %v4148
      %v4181 = vunpack.c.l.b16 %v4149
      %v4182 = vunpack.c.l.b16 %v4150
      %v4183 = vunpack.c.l.b16 %v4151
      %v4184 = vunpack.c.l.b16 %v4152
      %v4185 = vunpack.c.l.b16 %v4153
      %v4186 = vunpack.c.l.b16 %v4154
      %v4187 = vunpack.c.l.b16 %v4155
      %v4188 = vpack.c.b16 %v4173, %v4172
      %v4189 = vpack.c.b16 %v4175, %v4174
      %v4190 = vpack.c.b16 %v4177, %v4176
      %v4191 = vpack.c.b16 %v4179, %v4178
      %v4192 = vpack.c.b16 %v4181, %v4180
      %v4193 = vpack.c.b16 %v4183, %v4182
      %v4194 = vpack.c.b16 %v4185, %v4184
      %v4195 = vpack.c.b16 %v4187, %v4186
      %4204 = vmatprep.subr.bf16.mxu0 0
      %4205 = vmatpush1.bf16.msra.mxu0 %v4195
      %4206 = vmatprep.subr.bf16.mxu0 0
      %4207 = vmatpush1.bf16.msra.mxu0 %v4194
      %4208 = vmatprep.subr.bf16.mxu0 0
      %4209 = vmatpush1.bf16.msra.mxu0 %v4193
      %4210 = vmatprep.subr.bf16.mxu0 0
      %4211 = vmatpush1.bf16.msra.mxu0 %v4192
      %4212 = vmatprep.subr.bf16.mxu0 0
      %4213 = vmatpush1.bf16.msra.mxu0 %v4191
      %4214 = vmatprep.subr.bf16.mxu0 0
      %4215 = vmatpush1.bf16.msra.mxu0 %v4190
      %4216 = vmatprep.subr.bf16.mxu0 0
      %4217 = vmatpush1.bf16.msra.mxu0 %v4189
      %4218 = vmatprep.subr.bf16.mxu0 0
      %4219 = vmatpush1.bf16.msra.mxu0 %v4188
      %4220 = vmatprep.subr.bf16.mxu0 0
      %4221 = vmatpush2.bf16.msra.mxu0 0
      %4222 = vmatprep.subr.bf16.mxu0 0
      %4223 = vmatpush2.bf16.msra.mxu0 0
      %4224 = vmatprep.subr.bf16.mxu0 0
      %4225 = vmatpush2.bf16.msra.mxu0 0
      %4226 = vmatprep.subr.bf16.mxu0 0
      %4227 = vmatpush2.bf16.msra.mxu0 0
      %4228 = vmatprep.subr.bf16.mxu0 0
      %4229 = vmatpush2.bf16.msra.mxu0 0
      %4230 = vmatprep.subr.bf16.mxu0 0
      %4231 = vmatpush2.bf16.msra.mxu0 0
      %4232 = vmatprep.subr.bf16.mxu0 0
      %4233 = vmatpush2.bf16.msra.mxu0 0
      %4234 = vmatprep.subr.bf16.mxu0 0
      %4235 = vmatpush2.bf16.msra.mxu0 0
      %4236 = vmatprep.mubr.bf16.mxu0 0
      %4237 = vmatmul.mubr.bf16.gmra.mxu0 %v4118
      %v4238 = vpop.f32.mrf.mxu0
      %v4239 = vadd.f32 0.0, %v4238
      %v4240 = vpop.f32.mrf.mxu0
      %v4241 = vpop.f32.mrf.mxu0
      %v4242 = vadd.f32 0.0, %v4241
      %v4243 = vpop.f32.mrf.mxu0
      %4244 = vmatprep.mubr.bf16.mxu0 0
      %4245 = vmatmul.mubr.bf16.gmra.mxu0 %v4119
      %v4246 = vpop.f32.mrf.mxu0
      %v4247 = vadd.f32 0.0, %v4246
      %v4248 = vpop.f32.mrf.mxu0
      %v4249 = vpop.f32.mrf.mxu0
      %v4250 = vadd.f32 0.0, %v4249
      %v4251 = vpop.f32.mrf.mxu0
      %4252 = vmatprep.mubr.bf16.mxu0 0
      %4253 = vmatmul.mubr.bf16.gmra.mxu0 %v4120
      %v4254 = vpop.f32.mrf.mxu0
      %v4255 = vadd.f32 0.0, %v4254
      %v4256 = vpop.f32.mrf.mxu0
      %v4257 = vpop.f32.mrf.mxu0
      %v4258 = vadd.f32 0.0, %v4257
      %v4259 = vpop.f32.mrf.mxu0
      %4260 = vmatprep.mubr.bf16.mxu0 0
      %4261 = vmatmul.mubr.bf16.gmra.mxu0 %v4121
      %v4262 = vpop.f32.mrf.mxu0
      %v4263 = vadd.f32 0.0, %v4262
      %v4264 = vpop.f32.mrf.mxu0
      %v4265 = vpop.f32.mrf.mxu0
      %v4266 = vadd.f32 0.0, %v4265
      %v4267 = vpop.f32.mrf.mxu0
      %4268 = vmatprep.mubr.bf16.mxu0 0
      %4269 = vmatmul.mubr.bf16.gmra.mxu0 %v4122
      %v4270 = vpop.f32.mrf.mxu0
      %v4271 = vadd.f32 0.0, %v4270
      %v4272 = vpop.f32.mrf.mxu0
      %v4273 = vpop.f32.mrf.mxu0
      %v4274 = vadd.f32 0.0, %v4273
      %v4275 = vpop.f32.mrf.mxu0
      %4276 = vmatprep.mubr.bf16.mxu0 0
      %4277 = vmatmul.mubr.bf16.gmra.mxu0 %v4123
      %v4278 = vpop.f32.mrf.mxu0
      %v4279 = vadd.f32 0.0, %v4278
      %v4280 = vpop.f32.mrf.mxu0
      %v4281 = vpop.f32.mrf.mxu0
      %v4282 = vadd.f32 0.0, %v4281
      %v4283 = vpop.f32.mrf.mxu0
      %4284 = vmatprep.mubr.bf16.mxu0 0
      %4285 = vmatmul.mubr.bf16.gmra.mxu0 %v4124
      %v4286 = vpop.f32.mrf.mxu0
      %v4287 = vadd.f32 0.0, %v4286
      %v4288 = vpop.f32.mrf.mxu0
      %v4289 = vpop.f32.mrf.mxu0
      %v4290 = vadd.f32 0.0, %v4289
      %v4291 = vpop.f32.mrf.mxu0
      %4292 = vmatprep.mubr.bf16.mxu0 0
      %4293 = vmatmul.mubr.bf16.gmra.mxu0 %v4125
      %v4294 = vpop.f32.mrf.mxu0
      %v4295 = vadd.f32 0.0, %v4294
      %v4296 = vpop.f32.mrf.mxu0
      %v4297 = vpop.f32.mrf.mxu0
      %v4298 = vadd.f32 0.0, %v4297
      %v4299 = vpop.f32.mrf.mxu0
      %4300 = vmatprep.mubr.bf16.mxu0 0
      %4301 = vmatmul.mubr.bf16.gmra.mxu0 %v4126
      %v4302 = vpop.f32.mrf.mxu0
      %v4303 = vadd.f32 0.0, %v4302
      %v4304 = vpop.f32.mrf.mxu0
      %v4305 = vpop.f32.mrf.mxu0
      %v4306 = vadd.f32 0.0, %v4305
      %v4307 = vpop.f32.mrf.mxu0
      %4308 = vmatprep.mubr.bf16.mxu0 0
      %4309 = vmatmul.mubr.bf16.gmra.mxu0 %v4127
      %v4310 = vpop.f32.mrf.mxu0
      %v4311 = vadd.f32 0.0, %v4310
      %v4312 = vpop.f32.mrf.mxu0
      %v4313 = vpop.f32.mrf.mxu0
      %v4314 = vadd.f32 0.0, %v4313
      %v4315 = vpop.f32.mrf.mxu0
      %4316 = vmatprep.mubr.bf16.mxu0 0
      %4317 = vmatmul.mubr.bf16.gmra.mxu0 %v4128
      %v4318 = vpop.f32.mrf.mxu0
      %v4319 = vadd.f32 0.0, %v4318
      %v4320 = vpop.f32.mrf.mxu0
      %v4321 = vpop.f32.mrf.mxu0
      %v4322 = vadd.f32 0.0, %v4321
      %v4323 = vpop.f32.mrf.mxu0
      %4324 = vmatprep.mubr.bf16.mxu0 0
      %4325 = vmatmul.mubr.bf16.gmra.mxu0 %v4129
      %v4326 = vpop.f32.mrf.mxu0
      %v4327 = vadd.f32 0.0, %v4326
      %v4328 = vpop.f32.mrf.mxu0
      %v4329 = vpop.f32.mrf.mxu0
      %v4330 = vadd.f32 0.0, %v4329
      %v4331 = vpop.f32.mrf.mxu0
      %4332 = vmatprep.mubr.bf16.mxu0 0
      %4333 = vmatmul.mubr.bf16.gmra.mxu0 %v4130
      %v4334 = vpop.f32.mrf.mxu0
      %v4335 = vadd.f32 0.0, %v4334
      %v4336 = vpop.f32.mrf.mxu0
      %v4337 = vpop.f32.mrf.mxu0
      %v4338 = vadd.f32 0.0, %v4337
      %v4339 = vpop.f32.mrf.mxu0
      %4340 = vmatprep.mubr.bf16.mxu0 0
      %4341 = vmatmul.mubr.bf16.gmra.mxu0 %v4131
      %v4342 = vpop.f32.mrf.mxu0
      %v4343 = vadd.f32 0.0, %v4342
      %v4344 = vpop.f32.mrf.mxu0
      %v4345 = vpop.f32.mrf.mxu0
      %v4346 = vadd.f32 0.0, %v4345
      %v4347 = vpop.f32.mrf.mxu0
      %4348 = vmatprep.mubr.bf16.mxu0 0
      %4349 = vmatmul.mubr.bf16.gmra.mxu0 %v4132
      %v4350 = vpop.f32.mrf.mxu0
      %v4351 = vadd.f32 0.0, %v4350
      %v4352 = vpop.f32.mrf.mxu0
      %v4353 = vpop.f32.mrf.mxu0
      %v4354 = vadd.f32 0.0, %v4353
      %v4355 = vpop.f32.mrf.mxu0
      %4356 = vmatprep.mubr.bf16.mxu0 0
      %4357 = vmatmul.mubr.bf16.gmra.mxu0 %v4133
      %v4358 = vpop.f32.mrf.mxu0
      %v4359 = vadd.f32 0.0, %v4358
      %v4360 = vpop.f32.mrf.mxu0
      %v4361 = vpop.f32.mrf.mxu0
      %v4362 = vadd.f32 0.0, %v4361
      %v4363 = vpop.f32.mrf.mxu0
      %4364 = vmatprep.mubr.bf16.mxu0 0
      %4365 = vmatmul.mubr.bf16.gmra.mxu0 %v4134
      %v4366 = vpop.f32.mrf.mxu0
      %v4367 = vadd.f32 0.0, %v4366
      %v4368 = vpop.f32.mrf.mxu0
      %v4369 = vpop.f32.mrf.mxu0
      %v4370 = vadd.f32 0.0, %v4369
      %v4371 = vpop.f32.mrf.mxu0
      %4372 = vmatprep.mubr.bf16.mxu0 0
      %4373 = vmatmul.mubr.bf16.gmra.mxu0 %v4135
      %v4374 = vpop.f32.mrf.mxu0
      %v4375 = vadd.f32 0.0, %v4374
      %v4376 = vpop.f32.mrf.mxu0
      %v4377 = vpop.f32.mrf.mxu0
      %v4378 = vadd.f32 0.0, %v4377
      %v4379 = vpop.f32.mrf.mxu0
      %4380 = vmatprep.mubr.bf16.mxu0 0
      %4381 = vmatmul.mubr.bf16.gmra.mxu0 %v4136
      %v4382 = vpop.f32.mrf.mxu0
      %v4383 = vadd.f32 0.0, %v4382
      %v4384 = vpop.f32.mrf.mxu0
      %v4385 = vpop.f32.mrf.mxu0
      %v4386 = vadd.f32 0.0, %v4385
      %v4387 = vpop.f32.mrf.mxu0
      %4388 = vmatprep.mubr.bf16.mxu0 0
      %4389 = vmatmul.mubr.bf16.gmra.mxu0 %v4137
      %v4390 = vpop.f32.mrf.mxu0
      %v4391 = vadd.f32 0.0, %v4390
      %v4392 = vpop.f32.mrf.mxu0
      %v4393 = vpop.f32.mrf.mxu0
      %v4394 = vadd.f32 0.0, %v4393
      %v4395 = vpop.f32.mrf.mxu0
      %4396 = vmatprep.mubr.bf16.mxu0 0
      %4397 = vmatmul.mubr.bf16.gmra.mxu0 %v4138
      %v4398 = vpop.f32.mrf.mxu0
      %v4399 = vadd.f32 0.0, %v4398
      %v4400 = vpop.f32.mrf.mxu0
      %v4401 = vpop.f32.mrf.mxu0
      %v4402 = vpop.f32.mrf.mxu0
      %4403 = vdwg.mxu0
      %v4420 = vunpack.c.l.b16 %v4061
      %v4421 = vunpack.c.l.b16 %v4062
      %v4422 = vunpack.c.l.b16 %v4063
      %v4423 = vunpack.c.l.b16 %v4064
      %v4424 = vunpack.c.l.b16 %v4065
      %v4425 = vunpack.c.l.b16 %v4066
      %v4426 = vunpack.c.l.b16 %v4067
      %v4427 = vunpack.c.l.b16 %v4068
      %v4428 = vunpack.c.l.b16 %v4069
      %v4429 = vunpack.c.l.b16 %v4070
      %v4430 = vunpack.c.l.b16 %v4071
      %v4431 = vunpack.c.l.b16 %v4072
      %v4432 = vunpack.c.l.b16 %v4073
      %v4433 = vunpack.c.l.b16 %v4074
      %v4434 = vunpack.c.l.b16 %v4075
      %v4435 = vunpack.c.l.b16 %v4076
      %v4436 = vpack.c.b16 %v4421, %v4420
      %v4437 = vpack.c.b16 %v4423, %v4422
      %v4438 = vpack.c.b16 %v4425, %v4424
      %v4439 = vpack.c.b16 %v4427, %v4426
      %v4440 = vpack.c.b16 %v4429, %v4428
      %v4441 = vpack.c.b16 %v4431, %v4430
      %v4442 = vpack.c.b16 %v4433, %v4432
      %v4443 = vpack.c.b16 %v4435, %v4434
      %4452 = vmatprep.subr.bf16.mxu0 0
      %4453 = vmatpush1.bf16.msra.mxu0 %v4443
      %4454 = vmatprep.subr.bf16.mxu0 0
      %4455 = vmatpush1.bf16.msra.mxu0 %v4442
      %4456 = vmatprep.subr.bf16.mxu0 0
      %4457 = vmatpush1.bf16.msra.mxu0 %v4441
      %4458 = vmatprep.subr.bf16.mxu0 0
      %4459 = vmatpush1.bf16.msra.mxu0 %v4440
      %4460 = vmatprep.subr.bf16.mxu0 0
      %4461 = vmatpush1.bf16.msra.mxu0 %v4439
      %4462 = vmatprep.subr.bf16.mxu0 0
      %4463 = vmatpush1.bf16.msra.mxu0 %v4438
      %4464 = vmatprep.subr.bf16.mxu0 0
      %4465 = vmatpush1.bf16.msra.mxu0 %v4437
      %4466 = vmatprep.subr.bf16.mxu0 0
      %4467 = vmatpush1.bf16.msra.mxu0 %v4436
      %4468 = vmatprep.subr.bf16.mxu0 0
      %4469 = vmatpush2.bf16.msra.mxu0 0
      %4470 = vmatprep.subr.bf16.mxu0 0
      %4471 = vmatpush2.bf16.msra.mxu0 0
      %4472 = vmatprep.subr.bf16.mxu0 0
      %4473 = vmatpush2.bf16.msra.mxu0 0
      %4474 = vmatprep.subr.bf16.mxu0 0
      %4475 = vmatpush2.bf16.msra.mxu0 0
      %4476 = vmatprep.subr.bf16.mxu0 0
      %4477 = vmatpush2.bf16.msra.mxu0 0
      %4478 = vmatprep.subr.bf16.mxu0 0
      %4479 = vmatpush2.bf16.msra.mxu0 0
      %4480 = vmatprep.subr.bf16.mxu0 0
      %4481 = vmatpush2.bf16.msra.mxu0 0
      %4482 = vmatprep.subr.bf16.mxu0 0
      %4483 = vmatpush2.bf16.msra.mxu0 0
      %4484 = vmatprep.mubr.bf16.mxu0 0
      %4485 = vmatmul.mubr.bf16.gmra.mxu0 %v4040
      %v4486 = vpop.f32.mrf.mxu0
      %v4487 = vadd.f32 %v4239, %v4486
      %v4488 = vpop.f32.mrf.mxu0
      %v4489 = vpop.f32.mrf.mxu0
      %v4490 = vadd.f32 %v4242, %v4489
      %v4491 = vpop.f32.mrf.mxu0
      %4492 = vmatprep.mubr.bf16.mxu0 0
      %4493 = vmatmul.mubr.bf16.gmra.mxu0 %v4041
      %v4494 = vpop.f32.mrf.mxu0
      %v4495 = vadd.f32 %v4247, %v4494
      %v4496 = vpop.f32.mrf.mxu0
      %v4497 = vpop.f32.mrf.mxu0
      %v4498 = vadd.f32 %v4250, %v4497
      %v4499 = vpop.f32.mrf.mxu0
      %4500 = vmatprep.mubr.bf16.mxu0 0
      %4501 = vmatmul.mubr.bf16.gmra.mxu0 %v4042
      %v4502 = vpop.f32.mrf.mxu0
      %v4503 = vadd.f32 %v4255, %v4502
      %v4504 = vpop.f32.mrf.mxu0
      %v4505 = vpop.f32.mrf.mxu0
      %v4506 = vadd.f32 %v4258, %v4505
      %v4507 = vpop.f32.mrf.mxu0
      %4508 = vmatprep.mubr.bf16.mxu0 0
      %4509 = vmatmul.mubr.bf16.gmra.mxu0 %v4043
      %v4510 = vpop.f32.mrf.mxu0
      %v4511 = vadd.f32 %v4263, %v4510
      %v4512 = vpop.f32.mrf.mxu0
      %v4513 = vpop.f32.mrf.mxu0
      %v4514 = vadd.f32 %v4266, %v4513
      %v4515 = vpop.f32.mrf.mxu0
      %4516 = vmatprep.mubr.bf16.mxu0 0
      %4517 = vmatmul.mubr.bf16.gmra.mxu0 %v4044
      %v4518 = vpop.f32.mrf.mxu0
      %v4519 = vadd.f32 %v4271, %v4518
      %v4520 = vpop.f32.mrf.mxu0
      %v4521 = vpop.f32.mrf.mxu0
      %v4522 = vadd.f32 %v4274, %v4521
      %v4523 = vpop.f32.mrf.mxu0
      %4524 = vmatprep.mubr.bf16.mxu0 0
      %4525 = vmatmul.mubr.bf16.gmra.mxu0 %v4045
      %v4526 = vpop.f32.mrf.mxu0
      %v4527 = vadd.f32 %v4279, %v4526
      %v4528 = vpop.f32.mrf.mxu0
      %v4529 = vpop.f32.mrf.mxu0
      %v4530 = vadd.f32 %v4282, %v4529
      %v4531 = vpop.f32.mrf.mxu0
      %4532 = vmatprep.mubr.bf16.mxu0 0
      %4533 = vmatmul.mubr.bf16.gmra.mxu0 %v4046
      %v4534 = vpop.f32.mrf.mxu0
      %v4535 = vadd.f32 %v4287, %v4534
      %v4536 = vpop.f32.mrf.mxu0
      %v4537 = vpop.f32.mrf.mxu0
      %v4538 = vadd.f32 %v4290, %v4537
      %v4539 = vpop.f32.mrf.mxu0
      %4540 = vmatprep.mubr.bf16.mxu0 0
      %4541 = vmatmul.mubr.bf16.gmra.mxu0 %v4047
      %v4542 = vpop.f32.mrf.mxu0
      %v4543 = vadd.f32 %v4295, %v4542
      %v4544 = vpop.f32.mrf.mxu0
      %v4545 = vpop.f32.mrf.mxu0
      %v4546 = vadd.f32 %v4298, %v4545
      %v4547 = vpop.f32.mrf.mxu0
      %4548 = vmatprep.mubr.bf16.mxu0 0
      %4549 = vmatmul.mubr.bf16.gmra.mxu0 %v4048
      %v4550 = vpop.f32.mrf.mxu0
      %v4551 = vadd.f32 %v4303, %v4550
      %v4552 = vpop.f32.mrf.mxu0
      %v4553 = vpop.f32.mrf.mxu0
      %v4554 = vadd.f32 %v4306, %v4553
      %v4555 = vpop.f32.mrf.mxu0
      %4556 = vmatprep.mubr.bf16.mxu0 0
      %4557 = vmatmul.mubr.bf16.gmra.mxu0 %v4049
      %v4558 = vpop.f32.mrf.mxu0
      %v4559 = vadd.f32 %v4311, %v4558
      %v4560 = vpop.f32.mrf.mxu0
      %v4561 = vpop.f32.mrf.mxu0
      %v4562 = vadd.f32 %v4314, %v4561
      %v4563 = vpop.f32.mrf.mxu0
      %4564 = vmatprep.mubr.bf16.mxu0 0
      %4565 = vmatmul.mubr.bf16.gmra.mxu0 %v4050
      %v4566 = vpop.f32.mrf.mxu0
      %v4567 = vadd.f32 %v4319, %v4566
      %v4568 = vpop.f32.mrf.mxu0
      %v4569 = vpop.f32.mrf.mxu0
      %v4570 = vadd.f32 %v4322, %v4569
      %v4571 = vpop.f32.mrf.mxu0
      %4572 = vmatprep.mubr.bf16.mxu0 0
      %4573 = vmatmul.mubr.bf16.gmra.mxu0 %v4051
      %v4574 = vpop.f32.mrf.mxu0
      %v4575 = vadd.f32 %v4327, %v4574
      %v4576 = vpop.f32.mrf.mxu0
      %v4577 = vpop.f32.mrf.mxu0
      %v4578 = vadd.f32 %v4330, %v4577
      %v4579 = vpop.f32.mrf.mxu0
      %4580 = vmatprep.mubr.bf16.mxu0 0
      %4581 = vmatmul.mubr.bf16.gmra.mxu0 %v4052
      %v4582 = vpop.f32.mrf.mxu0
      %v4583 = vadd.f32 %v4335, %v4582
      %v4584 = vpop.f32.mrf.mxu0
      %v4585 = vpop.f32.mrf.mxu0
      %v4586 = vadd.f32 %v4338, %v4585
      %v4587 = vpop.f32.mrf.mxu0
      %4588 = vmatprep.mubr.bf16.mxu0 0
      %4589 = vmatmul.mubr.bf16.gmra.mxu0 %v4053
      %v4590 = vpop.f32.mrf.mxu0
      %v4591 = vadd.f32 %v4343, %v4590
      %v4592 = vpop.f32.mrf.mxu0
      %v4593 = vpop.f32.mrf.mxu0
      %v4594 = vadd.f32 %v4346, %v4593
      %v4595 = vpop.f32.mrf.mxu0
      %4596 = vmatprep.mubr.bf16.mxu0 0
      %4597 = vmatmul.mubr.bf16.gmra.mxu0 %v4054
      %v4598 = vpop.f32.mrf.mxu0
      %v4599 = vadd.f32 %v4351, %v4598
      %v4600 = vpop.f32.mrf.mxu0
      %v4601 = vpop.f32.mrf.mxu0
      %v4602 = vadd.f32 %v4354, %v4601
      %v4603 = vpop.f32.mrf.mxu0
      %4604 = vmatprep.mubr.bf16.mxu0 0
      %4605 = vmatmul.mubr.bf16.gmra.mxu0 %v4055
      %v4606 = vpop.f32.mrf.mxu0
      %v4607 = vadd.f32 %v4359, %v4606
      %v4608 = vpop.f32.mrf.mxu0
      %v4609 = vpop.f32.mrf.mxu0
      %v4610 = vadd.f32 %v4362, %v4609
      %v4611 = vpop.f32.mrf.mxu0
      %4612 = vmatprep.mubr.bf16.mxu0 0
      %4613 = vmatmul.mubr.bf16.gmra.mxu0 %v4056
      %v4614 = vpop.f32.mrf.mxu0
      %v4615 = vadd.f32 %v4367, %v4614
      %v4616 = vpop.f32.mrf.mxu0
      %v4617 = vpop.f32.mrf.mxu0
      %v4618 = vadd.f32 %v4370, %v4617
      %v4619 = vpop.f32.mrf.mxu0
      %4620 = vmatprep.mubr.bf16.mxu0 0
      %4621 = vmatmul.mubr.bf16.gmra.mxu0 %v4057
      %v4622 = vpop.f32.mrf.mxu0
      %v4623 = vadd.f32 %v4375, %v4622
      %v4624 = vpop.f32.mrf.mxu0
      %v4625 = vpop.f32.mrf.mxu0
      %v4626 = vadd.f32 %v4378, %v4625
      %v4627 = vpop.f32.mrf.mxu0
      %4628 = vmatprep.mubr.bf16.mxu0 0
      %4629 = vmatmul.mubr.bf16.gmra.mxu0 %v4058
      %v4630 = vpop.f32.mrf.mxu0
      %v4631 = vadd.f32 %v4383, %v4630
      %v4632 = vpop.f32.mrf.mxu0
      %v4633 = vpop.f32.mrf.mxu0
      %v4634 = vadd.f32 %v4386, %v4633
      %v4635 = vpop.f32.mrf.mxu0
      %4636 = vmatprep.mubr.bf16.mxu0 0
      %4637 = vmatmul.mubr.bf16.gmra.mxu0 %v4059
      %v4638 = vpop.f32.mrf.mxu0
      %v4639 = vadd.f32 %v4391, %v4638
      %v4640 = vpop.f32.mrf.mxu0
      %v4641 = vpop.f32.mrf.mxu0
      %v4642 = vadd.f32 %v4394, %v4641
      %v4643 = vpop.f32.mrf.mxu0
      %4644 = vmatprep.mubr.bf16.mxu0 0
      %4645 = vmatmul.mubr.bf16.gmra.mxu0 %v4060
      %v4646 = vpop.f32.mrf.mxu0
      %v4647 = vadd.f32 %v4399, %v4646
      %v4648 = vpop.f32.mrf.mxu0
      %v4649 = vpop.f32.mrf.mxu0
      %v4650 = vpop.f32.mrf.mxu0
      %4651 = vdwg.mxu0
      %v4652 = vld [vmem:[#allocation2 + $0x2] sm:$0xff]
      %v4653 = vld [vmem:[#allocation2 + $0xa] sm:$0xff]
      %v4654 = vld [vmem:[#allocation2 + $0x12] sm:$0xff]
      %v4655 = vld [vmem:[#allocation2 + $0x1a] sm:$0xff]
      %v4656 = vld [vmem:[#allocation2 + $0x22] sm:$0xff]
      %v4657 = vld [vmem:[#allocation2 + $0x2a] sm:$0xff]
      %v4658 = vld [vmem:[#allocation2 + $0x32] sm:$0xff]
      %v4659 = vld [vmem:[#allocation2 + $0x3a] sm:$0xff]
      %v4660 = vld [vmem:[#allocation2 + $0x42] sm:$0xff]
      %v4661 = vld [vmem:[#allocation2 + $0x4a] sm:$0xff]
      %v4662 = vld [vmem:[#allocation2 + $0x52] sm:$0xff]
      %v4663 = vld [vmem:[#allocation2 + $0x5a] sm:$0xff]
      %v4664 = vld [vmem:[#allocation2 + $0x62] sm:$0xff]
      %v4665 = vld [vmem:[#allocation2 + $0x6a] sm:$0xff]
      %v4666 = vld [vmem:[#allocation2 + $0x72] sm:$0xff]
      %v4667 = vld [vmem:[#allocation2 + $0x7a] sm:$0xff]
      %v4668 = vld [vmem:[#allocation2 + $0x82] sm:$0xff]
      %v4669 = vld [vmem:[#allocation2 + $0x8a] sm:$0xff]
      %v4670 = vld [vmem:[#allocation2 + $0x92] sm:$0xff]
      %v4671 = vld [vmem:[#allocation2 + $0x9a] sm:$0xff]
      %v4672 = vld [vmem:[#allocation2 + $0xa2] sm:$0xff]
      %v4673 = vld [vmem:[#allocation2 + $0xaa] sm:$0xff]
      %v4674 = vld [vmem:[#allocation2 + $0xb2] sm:$0xff]
      %v4675 = vld [vmem:[#allocation2 + $0xba] sm:$0xff]
      %v4676 = vld [vmem:[#allocation2 + $0xc2] sm:$0xff]
      %v4677 = vld [vmem:[#allocation2 + $0xca] sm:$0xff]
      %v4678 = vld [vmem:[#allocation2 + $0xd2] sm:$0xff]
      %v4679 = vld [vmem:[#allocation2 + $0xda] sm:$0xff]
      %v4680 = vld [vmem:[#allocation2 + $0xe2] sm:$0xff]
      %v4681 = vld [vmem:[#allocation2 + $0xea] sm:$0xff]
      %v4682 = vld [vmem:[#allocation2 + $0xf2] sm:$0xff]
      %v4683 = vld [vmem:[#allocation2 + $0xfa] sm:$0xff]
      %v4684 = vld [vmem:[#allocation2 + $0x102] sm:$0xff]
      %v4685 = vld [vmem:[#allocation2 + $0x10a] sm:$0xff]
      %v4686 = vld [vmem:[#allocation2 + $0x112] sm:$0xff]
      %v4687 = vld [vmem:[#allocation2 + $0x11a] sm:$0xff]
      %v4688 = vld [vmem:[#allocation2 + $0x122] sm:$0xff]
      %v4689 = vld [vmem:[#allocation2 + $0x12a] sm:$0xff]
      %v4690 = vld [vmem:[#allocation2 + $0x132] sm:$0xff]
      %v4691 = vld [vmem:[#allocation2 + $0x13a] sm:$0xff]
      %v4692 = vld [vmem:[#allocation2 + $0x142] sm:$0xf]
      %v4693 = vpack.c.bf16 %v4653, %v4652
      %v4694 = vpack.c.bf16 %v4655, %v4654
      %v4695 = vpack.c.bf16 %v4657, %v4656
      %v4696 = vpack.c.bf16 %v4659, %v4658
      %v4697 = vpack.c.bf16 %v4661, %v4660
      %v4698 = vpack.c.bf16 %v4663, %v4662
      %v4699 = vpack.c.bf16 %v4665, %v4664
      %v4700 = vpack.c.bf16 %v4667, %v4666
      %v4701 = vpack.c.bf16 %v4669, %v4668
      %v4702 = vpack.c.bf16 %v4671, %v4670
      %v4703 = vpack.c.bf16 %v4673, %v4672
      %v4704 = vpack.c.bf16 %v4675, %v4674
      %v4705 = vpack.c.bf16 %v4677, %v4676
      %v4706 = vpack.c.bf16 %v4679, %v4678
      %v4707 = vpack.c.bf16 %v4681, %v4680
      %v4708 = vpack.c.bf16 %v4683, %v4682
      %v4709 = vpack.c.bf16 %v4685, %v4684
      %v4710 = vpack.c.bf16 %v4687, %v4686
      %v4711 = vpack.c.bf16 %v4689, %v4688
      %v4712 = vpack.c.bf16 %v4691, %v4690
      %v4713 = vpack.c.bf16 %v4692, %v4692
      %s4714 = scalar_lea.vmem %s4, 128
      %v4715 = vld [vmem:[%s4714] sm:$0xf]
      %v4716 = vld [vmem:[%s4714 + $0x4] sm:$0xf]
      %v4717 = vld [vmem:[%s4714 + $0x8] sm:$0xf]
      %v4718 = vld [vmem:[%s4714 + $0xc] sm:$0xf]
      %v4719 = vld [vmem:[%s4714 + $0x10] sm:$0xf]
      %v4720 = vld [vmem:[%s4714 + $0x14] sm:$0xf]
      %v4721 = vld [vmem:[%s4714 + $0x18] sm:$0xf]
      %v4722 = vld [vmem:[%s4714 + $0x1c] sm:$0xf]
      %v4723 = vld [vmem:[%s4714 + $0x20] sm:$0xf]
      %v4724 = vld [vmem:[%s4714 + $0x24] sm:$0xf]
      %v4725 = vld [vmem:[%s4714 + $0x28] sm:$0xf]
      %v4726 = vld [vmem:[%s4714 + $0x2c] sm:$0xf]
      %v4727 = vld [vmem:[%s4714 + $0x30] sm:$0xf]
      %v4728 = vld [vmem:[%s4714 + $0x34] sm:$0xf]
      %v4729 = vld [vmem:[%s4714 + $0x38] sm:$0xf]
      %v4730 = vld [vmem:[%s4714 + $0x3c] sm:$0xf]
      %v4747 = vunpack.c.l.b16 %v4715
      %v4748 = vunpack.c.l.b16 %v4716
      %v4749 = vunpack.c.l.b16 %v4717
      %v4750 = vunpack.c.l.b16 %v4718
      %v4751 = vunpack.c.l.b16 %v4719
      %v4752 = vunpack.c.l.b16 %v4720
      %v4753 = vunpack.c.l.b16 %v4721
      %v4754 = vunpack.c.l.b16 %v4722
      %v4755 = vunpack.c.l.b16 %v4723
      %v4756 = vunpack.c.l.b16 %v4724
      %v4757 = vunpack.c.l.b16 %v4725
      %v4758 = vunpack.c.l.b16 %v4726
      %v4759 = vunpack.c.l.b16 %v4727
      %v4760 = vunpack.c.l.b16 %v4728
      %v4761 = vunpack.c.l.b16 %v4729
      %v4762 = vunpack.c.l.b16 %v4730
      %v4763 = vpack.c.b16 %v4748, %v4747
      %v4764 = vpack.c.b16 %v4750, %v4749
      %v4765 = vpack.c.b16 %v4752, %v4751
      %v4766 = vpack.c.b16 %v4754, %v4753
      %v4767 = vpack.c.b16 %v4756, %v4755
      %v4768 = vpack.c.b16 %v4758, %v4757
      %v4769 = vpack.c.b16 %v4760, %v4759
      %v4770 = vpack.c.b16 %v4762, %v4761
      %4779 = vmatprep.subr.bf16.mxu0 0
      %4780 = vmatpush1.bf16.msra.mxu0 %v4770
      %4781 = vmatprep.subr.bf16.mxu0 0
      %4782 = vmatpush1.bf16.msra.mxu0 %v4769
      %4783 = vmatprep.subr.bf16.mxu0 0
      %4784 = vmatpush1.bf16.msra.mxu0 %v4768
      %4785 = vmatprep.subr.bf16.mxu0 0
      %4786 = vmatpush1.bf16.msra.mxu0 %v4767
      %4787 = vmatprep.subr.bf16.mxu0 0
      %4788 = vmatpush1.bf16.msra.mxu0 %v4766
      %4789 = vmatprep.subr.bf16.mxu0 0
      %4790 = vmatpush1.bf16.msra.mxu0 %v4765
      %4791 = vmatprep.subr.bf16.mxu0 0
      %4792 = vmatpush1.bf16.msra.mxu0 %v4764
      %4793 = vmatprep.subr.bf16.mxu0 0
      %4794 = vmatpush1.bf16.msra.mxu0 %v4763
      %4795 = vmatprep.subr.bf16.mxu0 0
      %4796 = vmatpush2.bf16.msra.mxu0 0
      %4797 = vmatprep.subr.bf16.mxu0 0
      %4798 = vmatpush2.bf16.msra.mxu0 0
      %4799 = vmatprep.subr.bf16.mxu0 0
      %4800 = vmatpush2.bf16.msra.mxu0 0
      %4801 = vmatprep.subr.bf16.mxu0 0
      %4802 = vmatpush2.bf16.msra.mxu0 0
      %4803 = vmatprep.subr.bf16.mxu0 0
      %4804 = vmatpush2.bf16.msra.mxu0 0
      %4805 = vmatprep.subr.bf16.mxu0 0
      %4806 = vmatpush2.bf16.msra.mxu0 0
      %4807 = vmatprep.subr.bf16.mxu0 0
      %4808 = vmatpush2.bf16.msra.mxu0 0
      %4809 = vmatprep.subr.bf16.mxu0 0
      %4810 = vmatpush2.bf16.msra.mxu0 0
      %4811 = vmatprep.mubr.bf16.mxu0 0
      %4812 = vmatmul.mubr.bf16.gmra.mxu0 %v4693
      %v4813 = vpop.f32.mrf.mxu0
      %v4814 = vadd.f32 0.0, %v4813
      %v4815 = vpop.f32.mrf.mxu0
      %v4816 = vpop.f32.mrf.mxu0
      %v4817 = vadd.f32 0.0, %v4816
      %v4818 = vpop.f32.mrf.mxu0
      %4819 = vmatprep.mubr.bf16.mxu0 0
      %4820 = vmatmul.mubr.bf16.gmra.mxu0 %v4694
      %v4821 = vpop.f32.mrf.mxu0
      %v4822 = vadd.f32 0.0, %v4821
      %v4823 = vpop.f32.mrf.mxu0
      %v4824 = vpop.f32.mrf.mxu0
      %v4825 = vadd.f32 0.0, %v4824
      %v4826 = vpop.f32.mrf.mxu0
      %4827 = vmatprep.mubr.bf16.mxu0 0
      %4828 = vmatmul.mubr.bf16.gmra.mxu0 %v4695
      %v4829 = vpop.f32.mrf.mxu0
      %v4830 = vadd.f32 0.0, %v4829
      %v4831 = vpop.f32.mrf.mxu0
      %v4832 = vpop.f32.mrf.mxu0
      %v4833 = vadd.f32 0.0, %v4832
      %v4834 = vpop.f32.mrf.mxu0
      %4835 = vmatprep.mubr.bf16.mxu0 0
      %4836 = vmatmul.mubr.bf16.gmra.mxu0 %v4696
      %v4837 = vpop.f32.mrf.mxu0
      %v4838 = vadd.f32 0.0, %v4837
      %v4839 = vpop.f32.mrf.mxu0
      %v4840 = vpop.f32.mrf.mxu0
      %v4841 = vadd.f32 0.0, %v4840
      %v4842 = vpop.f32.mrf.mxu0
      %4843 = vmatprep.mubr.bf16.mxu0 0
      %4844 = vmatmul.mubr.bf16.gmra.mxu0 %v4697
      %v4845 = vpop.f32.mrf.mxu0
      %v4846 = vadd.f32 0.0, %v4845
      %v4847 = vpop.f32.mrf.mxu0
      %v4848 = vpop.f32.mrf.mxu0
      %v4849 = vadd.f32 0.0, %v4848
      %v4850 = vpop.f32.mrf.mxu0
      %4851 = vmatprep.mubr.bf16.mxu0 0
      %4852 = vmatmul.mubr.bf16.gmra.mxu0 %v4698
      %v4853 = vpop.f32.mrf.mxu0
      %v4854 = vadd.f32 0.0, %v4853
      %v4855 = vpop.f32.mrf.mxu0
      %v4856 = vpop.f32.mrf.mxu0
      %v4857 = vadd.f32 0.0, %v4856
      %v4858 = vpop.f32.mrf.mxu0
      %4859 = vmatprep.mubr.bf16.mxu0 0
      %4860 = vmatmul.mubr.bf16.gmra.mxu0 %v4699
      %v4861 = vpop.f32.mrf.mxu0
      %v4862 = vadd.f32 0.0, %v4861
      %v4863 = vpop.f32.mrf.mxu0
      %v4864 = vpop.f32.mrf.mxu0
      %v4865 = vadd.f32 0.0, %v4864
      %v4866 = vpop.f32.mrf.mxu0
      %4867 = vmatprep.mubr.bf16.mxu0 0
      %4868 = vmatmul.mubr.bf16.gmra.mxu0 %v4700
      %v4869 = vpop.f32.mrf.mxu0
      %v4870 = vadd.f32 0.0, %v4869
      %v4871 = vpop.f32.mrf.mxu0
      %v4872 = vpop.f32.mrf.mxu0
      %v4873 = vadd.f32 0.0, %v4872
      %v4874 = vpop.f32.mrf.mxu0
      %4875 = vmatprep.mubr.bf16.mxu0 0
      %4876 = vmatmul.mubr.bf16.gmra.mxu0 %v4701
      %v4877 = vpop.f32.mrf.mxu0
      %v4878 = vadd.f32 0.0, %v4877
      %v4879 = vpop.f32.mrf.mxu0
      %v4880 = vpop.f32.mrf.mxu0
      %v4881 = vadd.f32 0.0, %v4880
      %v4882 = vpop.f32.mrf.mxu0
      %4883 = vmatprep.mubr.bf16.mxu0 0
      %4884 = vmatmul.mubr.bf16.gmra.mxu0 %v4702
      %v4885 = vpop.f32.mrf.mxu0
      %v4886 = vadd.f32 0.0, %v4885
      %v4887 = vpop.f32.mrf.mxu0
      %v4888 = vpop.f32.mrf.mxu0
      %v4889 = vadd.f32 0.0, %v4888
      %v4890 = vpop.f32.mrf.mxu0
      %4891 = vmatprep.mubr.bf16.mxu0 0
      %4892 = vmatmul.mubr.bf16.gmra.mxu0 %v4703
      %v4893 = vpop.f32.mrf.mxu0
      %v4894 = vadd.f32 0.0, %v4893
      %v4895 = vpop.f32.mrf.mxu0
      %v4896 = vpop.f32.mrf.mxu0
      %v4897 = vadd.f32 0.0, %v4896
      %v4898 = vpop.f32.mrf.mxu0
      %4899 = vmatprep.mubr.bf16.mxu0 0
      %4900 = vmatmul.mubr.bf16.gmra.mxu0 %v4704
      %v4901 = vpop.f32.mrf.mxu0
      %v4902 = vadd.f32 0.0, %v4901
      %v4903 = vpop.f32.mrf.mxu0
      %v4904 = vpop.f32.mrf.mxu0
      %v4905 = vadd.f32 0.0, %v4904
      %v4906 = vpop.f32.mrf.mxu0
      %4907 = vmatprep.mubr.bf16.mxu0 0
      %4908 = vmatmul.mubr.bf16.gmra.mxu0 %v4705
      %v4909 = vpop.f32.mrf.mxu0
      %v4910 = vadd.f32 0.0, %v4909
      %v4911 = vpop.f32.mrf.mxu0
      %v4912 = vpop.f32.mrf.mxu0
      %v4913 = vadd.f32 0.0, %v4912
      %v4914 = vpop.f32.mrf.mxu0
      %4915 = vmatprep.mubr.bf16.mxu0 0
      %4916 = vmatmul.mubr.bf16.gmra.mxu0 %v4706
      %v4917 = vpop.f32.mrf.mxu0
      %v4918 = vadd.f32 0.0, %v4917
      %v4919 = vpop.f32.mrf.mxu0
      %v4920 = vpop.f32.mrf.mxu0
      %v4921 = vadd.f32 0.0, %v4920
      %v4922 = vpop.f32.mrf.mxu0
      %4923 = vmatprep.mubr.bf16.mxu0 0
      %4924 = vmatmul.mubr.bf16.gmra.mxu0 %v4707
      %v4925 = vpop.f32.mrf.mxu0
      %v4926 = vadd.f32 0.0, %v4925
      %v4927 = vpop.f32.mrf.mxu0
      %v4928 = vpop.f32.mrf.mxu0
      %v4929 = vadd.f32 0.0, %v4928
      %v4930 = vpop.f32.mrf.mxu0
      %4931 = vmatprep.mubr.bf16.mxu0 0
      %4932 = vmatmul.mubr.bf16.gmra.mxu0 %v4708
      %v4933 = vpop.f32.mrf.mxu0
      %v4934 = vadd.f32 0.0, %v4933
      %v4935 = vpop.f32.mrf.mxu0
      %v4936 = vpop.f32.mrf.mxu0
      %v4937 = vadd.f32 0.0, %v4936
      %v4938 = vpop.f32.mrf.mxu0
      %4939 = vmatprep.mubr.bf16.mxu0 0
      %4940 = vmatmul.mubr.bf16.gmra.mxu0 %v4709
      %v4941 = vpop.f32.mrf.mxu0
      %v4942 = vadd.f32 0.0, %v4941
      %v4943 = vpop.f32.mrf.mxu0
      %v4944 = vpop.f32.mrf.mxu0
      %v4945 = vadd.f32 0.0, %v4944
      %v4946 = vpop.f32.mrf.mxu0
      %4947 = vmatprep.mubr.bf16.mxu0 0
      %4948 = vmatmul.mubr.bf16.gmra.mxu0 %v4710
      %v4949 = vpop.f32.mrf.mxu0
      %v4950 = vadd.f32 0.0, %v4949
      %v4951 = vpop.f32.mrf.mxu0
      %v4952 = vpop.f32.mrf.mxu0
      %v4953 = vadd.f32 0.0, %v4952
      %v4954 = vpop.f32.mrf.mxu0
      %4955 = vmatprep.mubr.bf16.mxu0 0
      %4956 = vmatmul.mubr.bf16.gmra.mxu0 %v4711
      %v4957 = vpop.f32.mrf.mxu0
      %v4958 = vadd.f32 0.0, %v4957
      %v4959 = vpop.f32.mrf.mxu0
      %v4960 = vpop.f32.mrf.mxu0
      %v4961 = vadd.f32 0.0, %v4960
      %v4962 = vpop.f32.mrf.mxu0
      %4963 = vmatprep.mubr.bf16.mxu0 0
      %4964 = vmatmul.mubr.bf16.gmra.mxu0 %v4712
      %v4965 = vpop.f32.mrf.mxu0
      %v4966 = vadd.f32 0.0, %v4965
      %v4967 = vpop.f32.mrf.mxu0
      %v4968 = vpop.f32.mrf.mxu0
      %v4969 = vadd.f32 0.0, %v4968
      %v4970 = vpop.f32.mrf.mxu0
      %4971 = vmatprep.mubr.bf16.mxu0 0
      %4972 = vmatmul.mubr.bf16.gmra.mxu0 %v4713
      %v4973 = vpop.f32.mrf.mxu0
      %v4974 = vadd.f32 0.0, %v4973
      %v4975 = vpop.f32.mrf.mxu0
      %v4976 = vpop.f32.mrf.mxu0
      %v4977 = vpop.f32.mrf.mxu0
      %4978 = vdwg.mxu0
      %v4979 = vadd.f32 %v4487, %v4814
      %v4980 = vadd.f32 %v4490, %v4817
      %v4981 = vadd.f32 %v4495, %v4822
      %v4982 = vadd.f32 %v4498, %v4825
      %v4983 = vadd.f32 %v4503, %v4830
      %v4984 = vadd.f32 %v4506, %v4833
      %v4985 = vadd.f32 %v4511, %v4838
      %v4986 = vadd.f32 %v4514, %v4841
      %v4987 = vadd.f32 %v4519, %v4846
      %v4988 = vadd.f32 %v4522, %v4849
      %v4989 = vadd.f32 %v4527, %v4854
      %v4990 = vadd.f32 %v4530, %v4857
      %v4991 = vadd.f32 %v4535, %v4862
      %v4992 = vadd.f32 %v4538, %v4865
      %v4993 = vadd.f32 %v4543, %v4870
      %v4994 = vadd.f32 %v4546, %v4873
      %v4995 = vadd.f32 %v4551, %v4878
      %v4996 = vadd.f32 %v4554, %v4881
      %v4997 = vadd.f32 %v4559, %v4886
      %v4998 = vadd.f32 %v4562, %v4889
      %v4999 = vadd.f32 %v4567, %v4894
      %v5000 = vadd.f32 %v4570, %v4897
      %v5001 = vadd.f32 %v4575, %v4902
      %v5002 = vadd.f32 %v4578, %v4905
      %v5003 = vadd.f32 %v4583, %v4910
      %v5004 = vadd.f32 %v4586, %v4913
      %v5005 = vadd.f32 %v4591, %v4918
      %v5006 = vadd.f32 %v4594, %v4921
      %v5007 = vadd.f32 %v4599, %v4926
      %v5008 = vadd.f32 %v4602, %v4929
      %v5009 = vadd.f32 %v4607, %v4934
      %v5010 = vadd.f32 %v4610, %v4937
      %v5011 = vadd.f32 %v4615, %v4942
      %v5012 = vadd.f32 %v4618, %v4945
      %v5013 = vadd.f32 %v4623, %v4950
      %v5014 = vadd.f32 %v4626, %v4953
      %v5015 = vadd.f32 %v4631, %v4958
      %v5016 = vadd.f32 %v4634, %v4961
      %v5017 = vadd.f32 %v4639, %v4966
      %v5018 = vadd.f32 %v4642, %v4969
      %v5019 = vadd.f32 %v4647, %v4974
      %v5020 = vld [vmem:[#allocation2 + $0x12] sm:$0xff]
      %v5021 = vld [vmem:[#allocation2 + $0x1a] sm:$0xff]
      %v5022 = vld [vmem:[#allocation2 + $0x22] sm:$0xff]
      %v5023 = vld [vmem:[#allocation2 + $0x2a] sm:$0xff]
      %v5024 = vld [vmem:[#allocation2 + $0x32] sm:$0xff]
      %v5025 = vld [vmem:[#allocation2 + $0x3a] sm:$0xff]
      %v5026 = vld [vmem:[#allocation2 + $0x42] sm:$0xff]
      %v5027 = vld [vmem:[#allocation2 + $0x4a] sm:$0xff]
      %v5028 = vld [vmem:[#allocation2 + $0x52] sm:$0xff]
      %v5029 = vld [vmem:[#allocation2 + $0x5a] sm:$0xff]
      %v5030 = vld [vmem:[#allocation2 + $0x62] sm:$0xff]
      %v5031 = vld [vmem:[#allocation2 + $0x6a] sm:$0xff]
      %v5032 = vld [vmem:[#allocation2 + $0x72] sm:$0xff]
      %v5033 = vld [vmem:[#allocation2 + $0x7a] sm:$0xff]
      %v5034 = vld [vmem:[#allocation2 + $0x82] sm:$0xff]
      %v5035 = vld [vmem:[#allocation2 + $0x8a] sm:$0xff]
      %v5036 = vld [vmem:[#allocation2 + $0x92] sm:$0xff]
      %v5037 = vld [vmem:[#allocation2 + $0x9a] sm:$0xff]
      %v5038 = vld [vmem:[#allocation2 + $0xa2] sm:$0xff]
      %v5039 = vld [vmem:[#allocation2 + $0xaa] sm:$0xff]
      %v5040 = vld [vmem:[#allocation2 + $0xb2] sm:$0xff]
      %v5041 = vld [vmem:[#allocation2 + $0xba] sm:$0xff]
      %v5042 = vld [vmem:[#allocation2 + $0xc2] sm:$0xff]
      %v5043 = vld [vmem:[#allocation2 + $0xca] sm:$0xff]
      %v5044 = vld [vmem:[#allocation2 + $0xd2] sm:$0xff]
      %v5045 = vld [vmem:[#allocation2 + $0xda] sm:$0xff]
      %v5046 = vld [vmem:[#allocation2 + $0xe2] sm:$0xff]
      %v5047 = vld [vmem:[#allocation2 + $0xea] sm:$0xff]
      %v5048 = vld [vmem:[#allocation2 + $0xf2] sm:$0xff]
      %v5049 = vld [vmem:[#allocation2 + $0xfa] sm:$0xff]
      %v5050 = vld [vmem:[#allocation2 + $0x102] sm:$0xff]
      %v5051 = vld [vmem:[#allocation2 + $0x10a] sm:$0xff]
      %v5052 = vld [vmem:[#allocation2 + $0x112] sm:$0xff]
      %v5053 = vld [vmem:[#allocation2 + $0x11a] sm:$0xff]
      %v5054 = vld [vmem:[#allocation2 + $0x122] sm:$0xff]
      %v5055 = vld [vmem:[#allocation2 + $0x12a] sm:$0xff]
      %v5056 = vld [vmem:[#allocation2 + $0x132] sm:$0xff]
      %v5057 = vld [vmem:[#allocation2 + $0x13a] sm:$0xff]
      %v5058 = vld [vmem:[#allocation2 + $0x142] sm:$0xff]
      %v5059 = vld [vmem:[#allocation2 + $0x14a] sm:$0xff]
      %v5060 = vld [vmem:[#allocation2 + $0x152] sm:$0xf]
      %v5061 = vpack.c.bf16 %v5021, %v5020
      %v5062 = vpack.c.bf16 %v5023, %v5022
      %v5063 = vpack.c.bf16 %v5025, %v5024
      %v5064 = vpack.c.bf16 %v5027, %v5026
      %v5065 = vpack.c.bf16 %v5029, %v5028
      %v5066 = vpack.c.bf16 %v5031, %v5030
      %v5067 = vpack.c.bf16 %v5033, %v5032
      %v5068 = vpack.c.bf16 %v5035, %v5034
      %v5069 = vpack.c.bf16 %v5037, %v5036
      %v5070 = vpack.c.bf16 %v5039, %v5038
      %v5071 = vpack.c.bf16 %v5041, %v5040
      %v5072 = vpack.c.bf16 %v5043, %v5042
      %v5073 = vpack.c.bf16 %v5045, %v5044
      %v5074 = vpack.c.bf16 %v5047, %v5046
      %v5075 = vpack.c.bf16 %v5049, %v5048
      %v5076 = vpack.c.bf16 %v5051, %v5050
      %v5077 = vpack.c.bf16 %v5053, %v5052
      %v5078 = vpack.c.bf16 %v5055, %v5054
      %v5079 = vpack.c.bf16 %v5057, %v5056
      %v5080 = vpack.c.bf16 %v5059, %v5058
      %v5081 = vpack.c.bf16 %v5060, %v5060
      %s5082 = scalar_lea.vmem %s4, 192
      %v5083 = vld [vmem:[%s5082] sm:$0xf]
      %v5084 = vld [vmem:[%s5082 + $0x4] sm:$0xf]
      %v5085 = vld [vmem:[%s5082 + $0x8] sm:$0xf]
      %v5086 = vld [vmem:[%s5082 + $0xc] sm:$0xf]
      %v5087 = vld [vmem:[%s5082 + $0x10] sm:$0xf]
      %v5088 = vld [vmem:[%s5082 + $0x14] sm:$0xf]
      %v5089 = vld [vmem:[%s5082 + $0x18] sm:$0xf]
      %v5090 = vld [vmem:[%s5082 + $0x1c] sm:$0xf]
      %v5091 = vld [vmem:[%s5082 + $0x20] sm:$0xf]
      %v5092 = vld [vmem:[%s5082 + $0x24] sm:$0xf]
      %v5093 = vld [vmem:[%s5082 + $0x28] sm:$0xf]
      %v5094 = vld [vmem:[%s5082 + $0x2c] sm:$0xf]
      %v5095 = vld [vmem:[%s5082 + $0x30] sm:$0xf]
      %v5096 = vld [vmem:[%s5082 + $0x34] sm:$0xf]
      %v5097 = vld [vmem:[%s5082 + $0x38] sm:$0xf]
      %v5098 = vld [vmem:[%s5082 + $0x3c] sm:$0xf]
      %v5115 = vunpack.c.l.b16 %v5083
      %v5116 = vunpack.c.l.b16 %v5084
      %v5117 = vunpack.c.l.b16 %v5085
      %v5118 = vunpack.c.l.b16 %v5086
      %v5119 = vunpack.c.l.b16 %v5087
      %v5120 = vunpack.c.l.b16 %v5088
      %v5121 = vunpack.c.l.b16 %v5089
      %v5122 = vunpack.c.l.b16 %v5090
      %v5123 = vunpack.c.l.b16 %v5091
      %v5124 = vunpack.c.l.b16 %v5092
      %v5125 = vunpack.c.l.b16 %v5093
      %v5126 = vunpack.c.l.b16 %v5094
      %v5127 = vunpack.c.l.b16 %v5095
      %v5128 = vunpack.c.l.b16 %v5096
      %v5129 = vunpack.c.l.b16 %v5097
      %v5130 = vunpack.c.l.b16 %v5098
      %v5131 = vpack.c.b16 %v5116, %v5115
      %v5132 = vpack.c.b16 %v5118, %v5117
      %v5133 = vpack.c.b16 %v5120, %v5119
      %v5134 = vpack.c.b16 %v5122, %v5121
      %v5135 = vpack.c.b16 %v5124, %v5123
      %v5136 = vpack.c.b16 %v5126, %v5125
      %v5137 = vpack.c.b16 %v5128, %v5127
      %v5138 = vpack.c.b16 %v5130, %v5129
      %5147 = vmatprep.subr.bf16.mxu0 0
      %5148 = vmatpush1.bf16.msra.mxu0 %v5138
      %5149 = vmatprep.subr.bf16.mxu0 0
      %5150 = vmatpush1.bf16.msra.mxu0 %v5137
      %5151 = vmatprep.subr.bf16.mxu0 0
      %5152 = vmatpush1.bf16.msra.mxu0 %v5136
      %5153 = vmatprep.subr.bf16.mxu0 0
      %5154 = vmatpush1.bf16.msra.mxu0 %v5135
      %5155 = vmatprep.subr.bf16.mxu0 0
      %5156 = vmatpush1.bf16.msra.mxu0 %v5134
      %5157 = vmatprep.subr.bf16.mxu0 0
      %5158 = vmatpush1.bf16.msra.mxu0 %v5133
      %5159 = vmatprep.subr.bf16.mxu0 0
      %5160 = vmatpush1.bf16.msra.mxu0 %v5132
      %5161 = vmatprep.subr.bf16.mxu0 0
      %5162 = vmatpush1.bf16.msra.mxu0 %v5131
      %5163 = vmatprep.subr.bf16.mxu0 0
      %5164 = vmatpush2.bf16.msra.mxu0 0
      %5165 = vmatprep.subr.bf16.mxu0 0
      %5166 = vmatpush2.bf16.msra.mxu0 0
      %5167 = vmatprep.subr.bf16.mxu0 0
      %5168 = vmatpush2.bf16.msra.mxu0 0
      %5169 = vmatprep.subr.bf16.mxu0 0
      %5170 = vmatpush2.bf16.msra.mxu0 0
      %5171 = vmatprep.subr.bf16.mxu0 0
      %5172 = vmatpush2.bf16.msra.mxu0 0
      %5173 = vmatprep.subr.bf16.mxu0 0
      %5174 = vmatpush2.bf16.msra.mxu0 0
      %5175 = vmatprep.subr.bf16.mxu0 0
      %5176 = vmatpush2.bf16.msra.mxu0 0
      %5177 = vmatprep.subr.bf16.mxu0 0
      %5178 = vmatpush2.bf16.msra.mxu0 0
      %5179 = vmatprep.mubr.bf16.mxu0 0
      %5180 = vmatmul.mubr.bf16.gmra.mxu0 %v5061
      %v5181 = vpop.f32.mrf.mxu0
      %v5182 = vadd.f32 0.0, %v5181
      %v5183 = vpop.f32.mrf.mxu0
      %v5184 = vpop.f32.mrf.mxu0
      %v5185 = vadd.f32 0.0, %v5184
      %v5186 = vpop.f32.mrf.mxu0
      %5187 = vmatprep.mubr.bf16.mxu0 0
      %5188 = vmatmul.mubr.bf16.gmra.mxu0 %v5062
      %v5189 = vpop.f32.mrf.mxu0
      %v5190 = vadd.f32 0.0, %v5189
      %v5191 = vpop.f32.mrf.mxu0
      %v5192 = vpop.f32.mrf.mxu0
      %v5193 = vadd.f32 0.0, %v5192
      %v5194 = vpop.f32.mrf.mxu0
      %5195 = vmatprep.mubr.bf16.mxu0 0
      %5196 = vmatmul.mubr.bf16.gmra.mxu0 %v5063
      %v5197 = vpop.f32.mrf.mxu0
      %v5198 = vadd.f32 0.0, %v5197
      %v5199 = vpop.f32.mrf.mxu0
      %v5200 = vpop.f32.mrf.mxu0
      %v5201 = vadd.f32 0.0, %v5200
      %v5202 = vpop.f32.mrf.mxu0
      %5203 = vmatprep.mubr.bf16.mxu0 0
      %5204 = vmatmul.mubr.bf16.gmra.mxu0 %v5064
      %v5205 = vpop.f32.mrf.mxu0
      %v5206 = vadd.f32 0.0, %v5205
      %v5207 = vpop.f32.mrf.mxu0
      %v5208 = vpop.f32.mrf.mxu0
      %v5209 = vadd.f32 0.0, %v5208
      %v5210 = vpop.f32.mrf.mxu0
      %5211 = vmatprep.mubr.bf16.mxu0 0
      %5212 = vmatmul.mubr.bf16.gmra.mxu0 %v5065
      %v5213 = vpop.f32.mrf.mxu0
      %v5214 = vadd.f32 0.0, %v5213
      %v5215 = vpop.f32.mrf.mxu0
      %v5216 = vpop.f32.mrf.mxu0
      %v5217 = vadd.f32 0.0, %v5216
      %v5218 = vpop.f32.mrf.mxu0
      %5219 = vmatprep.mubr.bf16.mxu0 0
      %5220 = vmatmul.mubr.bf16.gmra.mxu0 %v5066
      %v5221 = vpop.f32.mrf.mxu0
      %v5222 = vadd.f32 0.0, %v5221
      %v5223 = vpop.f32.mrf.mxu0
      %v5224 = vpop.f32.mrf.mxu0
      %v5225 = vadd.f32 0.0, %v5224
      %v5226 = vpop.f32.mrf.mxu0
      %5227 = vmatprep.mubr.bf16.mxu0 0
      %5228 = vmatmul.mubr.bf16.gmra.mxu0 %v5067
      %v5229 = vpop.f32.mrf.mxu0
      %v5230 = vadd.f32 0.0, %v5229
      %v5231 = vpop.f32.mrf.mxu0
      %v5232 = vpop.f32.mrf.mxu0
      %v5233 = vadd.f32 0.0, %v5232
      %v5234 = vpop.f32.mrf.mxu0
      %5235 = vmatprep.mubr.bf16.mxu0 0
      %5236 = vmatmul.mubr.bf16.gmra.mxu0 %v5068
      %v5237 = vpop.f32.mrf.mxu0
      %v5238 = vadd.f32 0.0, %v5237
      %v5239 = vpop.f32.mrf.mxu0
      %v5240 = vpop.f32.mrf.mxu0
      %v5241 = vadd.f32 0.0, %v5240
      %v5242 = vpop.f32.mrf.mxu0
      %5243 = vmatprep.mubr.bf16.mxu0 0
      %5244 = vmatmul.mubr.bf16.gmra.mxu0 %v5069
      %v5245 = vpop.f32.mrf.mxu0
      %v5246 = vadd.f32 0.0, %v5245
      %v5247 = vpop.f32.mrf.mxu0
      %v5248 = vpop.f32.mrf.mxu0
      %v5249 = vadd.f32 0.0, %v5248
      %v5250 = vpop.f32.mrf.mxu0
      %5251 = vmatprep.mubr.bf16.mxu0 0
      %5252 = vmatmul.mubr.bf16.gmra.mxu0 %v5070
      %v5253 = vpop.f32.mrf.mxu0
      %v5254 = vadd.f32 0.0, %v5253
      %v5255 = vpop.f32.mrf.mxu0
      %v5256 = vpop.f32.mrf.mxu0
      %v5257 = vadd.f32 0.0, %v5256
      %v5258 = vpop.f32.mrf.mxu0
      %5259 = vmatprep.mubr.bf16.mxu0 0
      %5260 = vmatmul.mubr.bf16.gmra.mxu0 %v5071
      %v5261 = vpop.f32.mrf.mxu0
      %v5262 = vadd.f32 0.0, %v5261
      %v5263 = vpop.f32.mrf.mxu0
      %v5264 = vpop.f32.mrf.mxu0
      %v5265 = vadd.f32 0.0, %v5264
      %v5266 = vpop.f32.mrf.mxu0
      %5267 = vmatprep.mubr.bf16.mxu0 0
      %5268 = vmatmul.mubr.bf16.gmra.mxu0 %v5072
      %v5269 = vpop.f32.mrf.mxu0
      %v5270 = vadd.f32 0.0, %v5269
      %v5271 = vpop.f32.mrf.mxu0
      %v5272 = vpop.f32.mrf.mxu0
      %v5273 = vadd.f32 0.0, %v5272
      %v5274 = vpop.f32.mrf.mxu0
      %5275 = vmatprep.mubr.bf16.mxu0 0
      %5276 = vmatmul.mubr.bf16.gmra.mxu0 %v5073
      %v5277 = vpop.f32.mrf.mxu0
      %v5278 = vadd.f32 0.0, %v5277
      %v5279 = vpop.f32.mrf.mxu0
      %v5280 = vpop.f32.mrf.mxu0
      %v5281 = vadd.f32 0.0, %v5280
      %v5282 = vpop.f32.mrf.mxu0
      %5283 = vmatprep.mubr.bf16.mxu0 0
      %5284 = vmatmul.mubr.bf16.gmra.mxu0 %v5074
      %v5285 = vpop.f32.mrf.mxu0
      %v5286 = vadd.f32 0.0, %v5285
      %v5287 = vpop.f32.mrf.mxu0
      %v5288 = vpop.f32.mrf.mxu0
      %v5289 = vadd.f32 0.0, %v5288
      %v5290 = vpop.f32.mrf.mxu0
      %5291 = vmatprep.mubr.bf16.mxu0 0
      %5292 = vmatmul.mubr.bf16.gmra.mxu0 %v5075
      %v5293 = vpop.f32.mrf.mxu0
      %v5294 = vadd.f32 0.0, %v5293
      %v5295 = vpop.f32.mrf.mxu0
      %v5296 = vpop.f32.mrf.mxu0
      %v5297 = vadd.f32 0.0, %v5296
      %v5298 = vpop.f32.mrf.mxu0
      %5299 = vmatprep.mubr.bf16.mxu0 0
      %5300 = vmatmul.mubr.bf16.gmra.mxu0 %v5076
      %v5301 = vpop.f32.mrf.mxu0
      %v5302 = vadd.f32 0.0, %v5301
      %v5303 = vpop.f32.mrf.mxu0
      %v5304 = vpop.f32.mrf.mxu0
      %v5305 = vadd.f32 0.0, %v5304
      %v5306 = vpop.f32.mrf.mxu0
      %5307 = vmatprep.mubr.bf16.mxu0 0
      %5308 = vmatmul.mubr.bf16.gmra.mxu0 %v5077
      %v5309 = vpop.f32.mrf.mxu0
      %v5310 = vadd.f32 0.0, %v5309
      %v5311 = vpop.f32.mrf.mxu0
      %v5312 = vpop.f32.mrf.mxu0
      %v5313 = vadd.f32 0.0, %v5312
      %v5314 = vpop.f32.mrf.mxu0
      %5315 = vmatprep.mubr.bf16.mxu0 0
      %5316 = vmatmul.mubr.bf16.gmra.mxu0 %v5078
      %v5317 = vpop.f32.mrf.mxu0
      %v5318 = vadd.f32 0.0, %v5317
      %v5319 = vpop.f32.mrf.mxu0
      %v5320 = vpop.f32.mrf.mxu0
      %v5321 = vadd.f32 0.0, %v5320
      %v5322 = vpop.f32.mrf.mxu0
      %5323 = vmatprep.mubr.bf16.mxu0 0
      %5324 = vmatmul.mubr.bf16.gmra.mxu0 %v5079
      %v5325 = vpop.f32.mrf.mxu0
      %v5326 = vadd.f32 0.0, %v5325
      %v5327 = vpop.f32.mrf.mxu0
      %v5328 = vpop.f32.mrf.mxu0
      %v5329 = vadd.f32 0.0, %v5328
      %v5330 = vpop.f32.mrf.mxu0
      %5331 = vmatprep.mubr.bf16.mxu0 0
      %5332 = vmatmul.mubr.bf16.gmra.mxu0 %v5080
      %v5333 = vpop.f32.mrf.mxu0
      %v5334 = vadd.f32 0.0, %v5333
      %v5335 = vpop.f32.mrf.mxu0
      %v5336 = vpop.f32.mrf.mxu0
      %v5337 = vadd.f32 0.0, %v5336
      %v5338 = vpop.f32.mrf.mxu0
      %5339 = vmatprep.mubr.bf16.mxu0 0
      %5340 = vmatmul.mubr.bf16.gmra.mxu0 %v5081
      %v5341 = vpop.f32.mrf.mxu0
      %v5342 = vadd.f32 0.0, %v5341
      %v5343 = vpop.f32.mrf.mxu0
      %v5344 = vpop.f32.mrf.mxu0
      %v5345 = vpop.f32.mrf.mxu0
      %5346 = vdwg.mxu0
      %v5347 = vadd.f32 %v4979, %v5182
      %v5348 = vadd.f32 %v4980, %v5185
      %v5349 = vadd.f32 %v4981, %v5190
      %v5350 = vadd.f32 %v4982, %v5193
      %v5351 = vadd.f32 %v4983, %v5198
      %v5352 = vadd.f32 %v4984, %v5201
      %v5353 = vadd.f32 %v4985, %v5206
      %v5354 = vadd.f32 %v4986, %v5209
      %v5355 = vadd.f32 %v4987, %v5214
      %v5356 = vadd.f32 %v4988, %v5217
      %v5357 = vadd.f32 %v4989, %v5222
      %v5358 = vadd.f32 %v4990, %v5225
      %v5359 = vadd.f32 %v4991, %v5230
      %v5360 = vadd.f32 %v4992, %v5233
      %v5361 = vadd.f32 %v4993, %v5238
      %v5362 = vadd.f32 %v4994, %v5241
      %v5363 = vadd.f32 %v4995, %v5246
      %v5364 = vadd.f32 %v4996, %v5249
      %v5365 = vadd.f32 %v4997, %v5254
      %v5366 = vadd.f32 %v4998, %v5257
      %v5367 = vadd.f32 %v4999, %v5262
      %v5368 = vadd.f32 %v5000, %v5265
      %v5369 = vadd.f32 %v5001, %v5270
      %v5370 = vadd.f32 %v5002, %v5273
      %v5371 = vadd.f32 %v5003, %v5278
      %v5372 = vadd.f32 %v5004, %v5281
      %v5373 = vadd.f32 %v5005, %v5286
      %v5374 = vadd.f32 %v5006, %v5289
      %v5375 = vadd.f32 %v5007, %v5294
      %v5376 = vadd.f32 %v5008, %v5297
      %v5377 = vadd.f32 %v5009, %v5302
      %v5378 = vadd.f32 %v5010, %v5305
      %v5379 = vadd.f32 %v5011, %v5310
      %v5380 = vadd.f32 %v5012, %v5313
      %v5381 = vadd.f32 %v5013, %v5318
      %v5382 = vadd.f32 %v5014, %v5321
      %v5383 = vadd.f32 %v5015, %v5326
      %v5384 = vadd.f32 %v5016, %v5329
      %v5385 = vadd.f32 %v5017, %v5334
      %v5386 = vadd.f32 %v5018, %v5337
      %v5387 = vadd.f32 %v5019, %v5342
      %v5388 = vld [vmem:[#allocation2 + $0x13] sm:$0xff]
      %v5389 = vld [vmem:[#allocation2 + $0x1b] sm:$0xff]
      %v5390 = vld [vmem:[#allocation2 + $0x23] sm:$0xff]
      %v5391 = vld [vmem:[#allocation2 + $0x2b] sm:$0xff]
      %v5392 = vld [vmem:[#allocation2 + $0x33] sm:$0xff]
      %v5393 = vld [vmem:[#allocation2 + $0x3b] sm:$0xff]
      %v5394 = vld [vmem:[#allocation2 + $0x43] sm:$0xff]
      %v5395 = vld [vmem:[#allocation2 + $0x4b] sm:$0xff]
      %v5396 = vld [vmem:[#allocation2 + $0x53] sm:$0xff]
      %v5397 = vld [vmem:[#allocation2 + $0x5b] sm:$0xff]
      %v5398 = vld [vmem:[#allocation2 + $0x63] sm:$0xff]
      %v5399 = vld [vmem:[#allocation2 + $0x6b] sm:$0xff]
      %v5400 = vld [vmem:[#allocation2 + $0x73] sm:$0xff]
      %v5401 = vld [vmem:[#allocation2 + $0x7b] sm:$0xff]
      %v5402 = vld [vmem:[#allocation2 + $0x83] sm:$0xff]
      %v5403 = vld [vmem:[#allocation2 + $0x8b] sm:$0xff]
      %v5404 = vld [vmem:[#allocation2 + $0x93] sm:$0xff]
      %v5405 = vld [vmem:[#allocation2 + $0x9b] sm:$0xff]
      %v5406 = vld [vmem:[#allocation2 + $0xa3] sm:$0xff]
      %v5407 = vld [vmem:[#allocation2 + $0xab] sm:$0xff]
      %v5408 = vld [vmem:[#allocation2 + $0xb3] sm:$0xff]
      %v5409 = vld [vmem:[#allocation2 + $0xbb] sm:$0xff]
      %v5410 = vld [vmem:[#allocation2 + $0xc3] sm:$0xff]
      %v5411 = vld [vmem:[#allocation2 + $0xcb] sm:$0xff]
      %v5412 = vld [vmem:[#allocation2 + $0xd3] sm:$0xff]
      %v5413 = vld [vmem:[#allocation2 + $0xdb] sm:$0xff]
      %v5414 = vld [vmem:[#allocation2 + $0xe3] sm:$0xff]
      %v5415 = vld [vmem:[#allocation2 + $0xeb] sm:$0xff]
      %v5416 = vld [vmem:[#allocation2 + $0xf3] sm:$0xff]
      %v5417 = vld [vmem:[#allocation2 + $0xfb] sm:$0xff]
      %v5418 = vld [vmem:[#allocation2 + $0x103] sm:$0xff]
      %v5419 = vld [vmem:[#allocation2 + $0x10b] sm:$0xff]
      %v5420 = vld [vmem:[#allocation2 + $0x113] sm:$0xff]
      %v5421 = vld [vmem:[#allocation2 + $0x11b] sm:$0xff]
      %v5422 = vld [vmem:[#allocation2 + $0x123] sm:$0xff]
      %v5423 = vld [vmem:[#allocation2 + $0x12b] sm:$0xff]
      %v5424 = vld [vmem:[#allocation2 + $0x133] sm:$0xff]
      %v5425 = vld [vmem:[#allocation2 + $0x13b] sm:$0xff]
      %v5426 = vld [vmem:[#allocation2 + $0x143] sm:$0xff]
      %v5427 = vld [vmem:[#allocation2 + $0x14b] sm:$0xff]
      %v5428 = vld [vmem:[#allocation2 + $0x153] sm:$0xf]
      %v5429 = vpack.c.bf16 %v5389, %v5388
      %v5430 = vpack.c.bf16 %v5391, %v5390
      %v5431 = vpack.c.bf16 %v5393, %v5392
      %v5432 = vpack.c.bf16 %v5395, %v5394
      %v5433 = vpack.c.bf16 %v5397, %v5396
      %v5434 = vpack.c.bf16 %v5399, %v5398
      %v5435 = vpack.c.bf16 %v5401, %v5400
      %v5436 = vpack.c.bf16 %v5403, %v5402
      %v5437 = vpack.c.bf16 %v5405, %v5404
      %v5438 = vpack.c.bf16 %v5407, %v5406
      %v5439 = vpack.c.bf16 %v5409, %v5408
      %v5440 = vpack.c.bf16 %v5411, %v5410
      %v5441 = vpack.c.bf16 %v5413, %v5412
      %v5442 = vpack.c.bf16 %v5415, %v5414
      %v5443 = vpack.c.bf16 %v5417, %v5416
      %v5444 = vpack.c.bf16 %v5419, %v5418
      %v5445 = vpack.c.bf16 %v5421, %v5420
      %v5446 = vpack.c.bf16 %v5423, %v5422
      %v5447 = vpack.c.bf16 %v5425, %v5424
      %v5448 = vpack.c.bf16 %v5427, %v5426
      %v5449 = vpack.c.bf16 %v5428, %v5428
      %s5450 = scalar_lea.vmem %s4, 256
      %v5451 = vld [vmem:[%s5450] sm:$0xf]
      %v5452 = vld [vmem:[%s5450 + $0x4] sm:$0xf]
      %v5453 = vld [vmem:[%s5450 + $0x8] sm:$0xf]
      %v5454 = vld [vmem:[%s5450 + $0xc] sm:$0xf]
      %v5455 = vld [vmem:[%s5450 + $0x10] sm:$0xf]
      %v5456 = vld [vmem:[%s5450 + $0x14] sm:$0xf]
      %v5457 = vld [vmem:[%s5450 + $0x18] sm:$0xf]
      %v5458 = vld [vmem:[%s5450 + $0x1c] sm:$0xf]
      %v5459 = vld [vmem:[%s5450 + $0x20] sm:$0xf]
      %v5460 = vld [vmem:[%s5450 + $0x24] sm:$0xf]
      %v5461 = vld [vmem:[%s5450 + $0x28] sm:$0xf]
      %v5462 = vld [vmem:[%s5450 + $0x2c] sm:$0xf]
      %v5463 = vld [vmem:[%s5450 + $0x30] sm:$0xf]
      %v5464 = vld [vmem:[%s5450 + $0x34] sm:$0xf]
      %v5465 = vld [vmem:[%s5450 + $0x38] sm:$0xf]
      %v5466 = vld [vmem:[%s5450 + $0x3c] sm:$0xf]
      %v5483 = vunpack.c.l.b16 %v5451
      %v5484 = vunpack.c.l.b16 %v5452
      %v5485 = vunpack.c.l.b16 %v5453
      %v5486 = vunpack.c.l.b16 %v5454
      %v5487 = vunpack.c.l.b16 %v5455
      %v5488 = vunpack.c.l.b16 %v5456
      %v5489 = vunpack.c.l.b16 %v5457
      %v5490 = vunpack.c.l.b16 %v5458
      %v5491 = vunpack.c.l.b16 %v5459
      %v5492 = vunpack.c.l.b16 %v5460
      %v5493 = vunpack.c.l.b16 %v5461
      %v5494 = vunpack.c.l.b16 %v5462
      %v5495 = vunpack.c.l.b16 %v5463
      %v5496 = vunpack.c.l.b16 %v5464
      %v5497 = vunpack.c.l.b16 %v5465
      %v5498 = vunpack.c.l.b16 %v5466
      %v5499 = vpack.c.b16 %v5484, %v5483
      %v5500 = vpack.c.b16 %v5486, %v5485
      %v5501 = vpack.c.b16 %v5488, %v5487
      %v5502 = vpack.c.b16 %v5490, %v5489
      %v5503 = vpack.c.b16 %v5492, %v5491
      %v5504 = vpack.c.b16 %v5494, %v5493
      %v5505 = vpack.c.b16 %v5496, %v5495
      %v5506 = vpack.c.b16 %v5498, %v5497
      %5515 = vmatprep.subr.bf16.mxu0 0
      %5516 = vmatpush1.bf16.msra.mxu0 %v5506
      %5517 = vmatprep.subr.bf16.mxu0 0
      %5518 = vmatpush1.bf16.msra.mxu0 %v5505
      %5519 = vmatprep.subr.bf16.mxu0 0
      %5520 = vmatpush1.bf16.msra.mxu0 %v5504
      %5521 = vmatprep.subr.bf16.mxu0 0
      %5522 = vmatpush1.bf16.msra.mxu0 %v5503
      %5523 = vmatprep.subr.bf16.mxu0 0
      %5524 = vmatpush1.bf16.msra.mxu0 %v5502
      %5525 = vmatprep.subr.bf16.mxu0 0
      %5526 = vmatpush1.bf16.msra.mxu0 %v5501
      %5527 = vmatprep.subr.bf16.mxu0 0
      %5528 = vmatpush1.bf16.msra.mxu0 %v5500
      %5529 = vmatprep.subr.bf16.mxu0 0
      %5530 = vmatpush1.bf16.msra.mxu0 %v5499
      %5531 = vmatprep.subr.bf16.mxu0 0
      %5532 = vmatpush2.bf16.msra.mxu0 0
      %5533 = vmatprep.subr.bf16.mxu0 0
      %5534 = vmatpush2.bf16.msra.mxu0 0
      %5535 = vmatprep.subr.bf16.mxu0 0
      %5536 = vmatpush2.bf16.msra.mxu0 0
      %5537 = vmatprep.subr.bf16.mxu0 0
      %5538 = vmatpush2.bf16.msra.mxu0 0
      %5539 = vmatprep.subr.bf16.mxu0 0
      %5540 = vmatpush2.bf16.msra.mxu0 0
      %5541 = vmatprep.subr.bf16.mxu0 0
      %5542 = vmatpush2.bf16.msra.mxu0 0
      %5543 = vmatprep.subr.bf16.mxu0 0
      %5544 = vmatpush2.bf16.msra.mxu0 0
      %5545 = vmatprep.subr.bf16.mxu0 0
      %5546 = vmatpush2.bf16.msra.mxu0 0
      %5547 = vmatprep.mubr.bf16.mxu0 0
      %5548 = vmatmul.mubr.bf16.gmra.mxu0 %v5429
      %v5549 = vpop.f32.mrf.mxu0
      %v5550 = vadd.f32 0.0, %v5549
      %v5551 = vpop.f32.mrf.mxu0
      %v5552 = vpop.f32.mrf.mxu0
      %v5553 = vadd.f32 0.0, %v5552
      %v5554 = vpop.f32.mrf.mxu0
      %5555 = vmatprep.mubr.bf16.mxu0 0
      %5556 = vmatmul.mubr.bf16.gmra.mxu0 %v5430
      %v5557 = vpop.f32.mrf.mxu0
      %v5558 = vadd.f32 0.0, %v5557
      %v5559 = vpop.f32.mrf.mxu0
      %v5560 = vpop.f32.mrf.mxu0
      %v5561 = vadd.f32 0.0, %v5560
      %v5562 = vpop.f32.mrf.mxu0
      %5563 = vmatprep.mubr.bf16.mxu0 0
      %5564 = vmatmul.mubr.bf16.gmra.mxu0 %v5431
      %v5565 = vpop.f32.mrf.mxu0
      %v5566 = vadd.f32 0.0, %v5565
      %v5567 = vpop.f32.mrf.mxu0
      %v5568 = vpop.f32.mrf.mxu0
      %v5569 = vadd.f32 0.0, %v5568
      %v5570 = vpop.f32.mrf.mxu0
      %5571 = vmatprep.mubr.bf16.mxu0 0
      %5572 = vmatmul.mubr.bf16.gmra.mxu0 %v5432
      %v5573 = vpop.f32.mrf.mxu0
      %v5574 = vadd.f32 0.0, %v5573
      %v5575 = vpop.f32.mrf.mxu0
      %v5576 = vpop.f32.mrf.mxu0
      %v5577 = vadd.f32 0.0, %v5576
      %v5578 = vpop.f32.mrf.mxu0
      %5579 = vmatprep.mubr.bf16.mxu0 0
      %5580 = vmatmul.mubr.bf16.gmra.mxu0 %v5433
      %v5581 = vpop.f32.mrf.mxu0
      %v5582 = vadd.f32 0.0, %v5581
      %v5583 = vpop.f32.mrf.mxu0
      %v5584 = vpop.f32.mrf.mxu0
      %v5585 = vadd.f32 0.0, %v5584
      %v5586 = vpop.f32.mrf.mxu0
      %5587 = vmatprep.mubr.bf16.mxu0 0
      %5588 = vmatmul.mubr.bf16.gmra.mxu0 %v5434
      %v5589 = vpop.f32.mrf.mxu0
      %v5590 = vadd.f32 0.0, %v5589
      %v5591 = vpop.f32.mrf.mxu0
      %v5592 = vpop.f32.mrf.mxu0
      %v5593 = vadd.f32 0.0, %v5592
      %v5594 = vpop.f32.mrf.mxu0
      %5595 = vmatprep.mubr.bf16.mxu0 0
      %5596 = vmatmul.mubr.bf16.gmra.mxu0 %v5435
      %v5597 = vpop.f32.mrf.mxu0
      %v5598 = vadd.f32 0.0, %v5597
      %v5599 = vpop.f32.mrf.mxu0
      %v5600 = vpop.f32.mrf.mxu0
      %v5601 = vadd.f32 0.0, %v5600
      %v5602 = vpop.f32.mrf.mxu0
      %5603 = vmatprep.mubr.bf16.mxu0 0
      %5604 = vmatmul.mubr.bf16.gmra.mxu0 %v5436
      %v5605 = vpop.f32.mrf.mxu0
      %v5606 = vadd.f32 0.0, %v5605
      %v5607 = vpop.f32.mrf.mxu0
      %v5608 = vpop.f32.mrf.mxu0
      %v5609 = vadd.f32 0.0, %v5608
      %v5610 = vpop.f32.mrf.mxu0
      %5611 = vmatprep.mubr.bf16.mxu0 0
      %5612 = vmatmul.mubr.bf16.gmra.mxu0 %v5437
      %v5613 = vpop.f32.mrf.mxu0
      %v5614 = vadd.f32 0.0, %v5613
      %v5615 = vpop.f32.mrf.mxu0
      %v5616 = vpop.f32.mrf.mxu0
      %v5617 = vadd.f32 0.0, %v5616
      %v5618 = vpop.f32.mrf.mxu0
      %5619 = vmatprep.mubr.bf16.mxu0 0
      %5620 = vmatmul.mubr.bf16.gmra.mxu0 %v5438
      %v5621 = vpop.f32.mrf.mxu0
      %v5622 = vadd.f32 0.0, %v5621
      %v5623 = vpop.f32.mrf.mxu0
      %v5624 = vpop.f32.mrf.mxu0
      %v5625 = vadd.f32 0.0, %v5624
      %v5626 = vpop.f32.mrf.mxu0
      %5627 = vmatprep.mubr.bf16.mxu0 0
      %5628 = vmatmul.mubr.bf16.gmra.mxu0 %v5439
      %v5629 = vpop.f32.mrf.mxu0
      %v5630 = vadd.f32 0.0, %v5629
      %v5631 = vpop.f32.mrf.mxu0
      %v5632 = vpop.f32.mrf.mxu0
      %v5633 = vadd.f32 0.0, %v5632
      %v5634 = vpop.f32.mrf.mxu0
      %5635 = vmatprep.mubr.bf16.mxu0 0
      %5636 = vmatmul.mubr.bf16.gmra.mxu0 %v5440
      %v5637 = vpop.f32.mrf.mxu0
      %v5638 = vadd.f32 0.0, %v5637
      %v5639 = vpop.f32.mrf.mxu0
      %v5640 = vpop.f32.mrf.mxu0
      %v5641 = vadd.f32 0.0, %v5640
      %v5642 = vpop.f32.mrf.mxu0
      %5643 = vmatprep.mubr.bf16.mxu0 0
      %5644 = vmatmul.mubr.bf16.gmra.mxu0 %v5441
      %v5645 = vpop.f32.mrf.mxu0
      %v5646 = vadd.f32 0.0, %v5645
      %v5647 = vpop.f32.mrf.mxu0
      %v5648 = vpop.f32.mrf.mxu0
      %v5649 = vadd.f32 0.0, %v5648
      %v5650 = vpop.f32.mrf.mxu0
      %5651 = vmatprep.mubr.bf16.mxu0 0
      %5652 = vmatmul.mubr.bf16.gmra.mxu0 %v5442
      %v5653 = vpop.f32.mrf.mxu0
      %v5654 = vadd.f32 0.0, %v5653
      %v5655 = vpop.f32.mrf.mxu0
      %v5656 = vpop.f32.mrf.mxu0
      %v5657 = vadd.f32 0.0, %v5656
      %v5658 = vpop.f32.mrf.mxu0
      %5659 = vmatprep.mubr.bf16.mxu0 0
      %5660 = vmatmul.mubr.bf16.gmra.mxu0 %v5443
      %v5661 = vpop.f32.mrf.mxu0
      %v5662 = vadd.f32 0.0, %v5661
      %v5663 = vpop.f32.mrf.mxu0
      %v5664 = vpop.f32.mrf.mxu0
      %v5665 = vadd.f32 0.0, %v5664
      %v5666 = vpop.f32.mrf.mxu0
      %5667 = vmatprep.mubr.bf16.mxu0 0
      %5668 = vmatmul.mubr.bf16.gmra.mxu0 %v5444
      %v5669 = vpop.f32.mrf.mxu0
      %v5670 = vadd.f32 0.0, %v5669
      %v5671 = vpop.f32.mrf.mxu0
      %v5672 = vpop.f32.mrf.mxu0
      %v5673 = vadd.f32 0.0, %v5672
      %v5674 = vpop.f32.mrf.mxu0
      %5675 = vmatprep.mubr.bf16.mxu0 0
      %5676 = vmatmul.mubr.bf16.gmra.mxu0 %v5445
      %v5677 = vpop.f32.mrf.mxu0
      %v5678 = vadd.f32 0.0, %v5677
      %v5679 = vpop.f32.mrf.mxu0
      %v5680 = vpop.f32.mrf.mxu0
      %v5681 = vadd.f32 0.0, %v5680
      %v5682 = vpop.f32.mrf.mxu0
      %5683 = vmatprep.mubr.bf16.mxu0 0
      %5684 = vmatmul.mubr.bf16.gmra.mxu0 %v5446
      %v5685 = vpop.f32.mrf.mxu0
      %v5686 = vadd.f32 0.0, %v5685
      %v5687 = vpop.f32.mrf.mxu0
      %v5688 = vpop.f32.mrf.mxu0
      %v5689 = vadd.f32 0.0, %v5688
      %v5690 = vpop.f32.mrf.mxu0
      %5691 = vmatprep.mubr.bf16.mxu0 0
      %5692 = vmatmul.mubr.bf16.gmra.mxu0 %v5447
      %v5693 = vpop.f32.mrf.mxu0
      %v5694 = vadd.f32 0.0, %v5693
      %v5695 = vpop.f32.mrf.mxu0
      %v5696 = vpop.f32.mrf.mxu0
      %v5697 = vadd.f32 0.0, %v5696
      %v5698 = vpop.f32.mrf.mxu0
      %5699 = vmatprep.mubr.bf16.mxu0 0
      %5700 = vmatmul.mubr.bf16.gmra.mxu0 %v5448
      %v5701 = vpop.f32.mrf.mxu0
      %v5702 = vadd.f32 0.0, %v5701
      %v5703 = vpop.f32.mrf.mxu0
      %v5704 = vpop.f32.mrf.mxu0
      %v5705 = vadd.f32 0.0, %v5704
      %v5706 = vpop.f32.mrf.mxu0
      %5707 = vmatprep.mubr.bf16.mxu0 0
      %5708 = vmatmul.mubr.bf16.gmra.mxu0 %v5449
      %v5709 = vpop.f32.mrf.mxu0
      %v5710 = vadd.f32 0.0, %v5709
      %v5711 = vpop.f32.mrf.mxu0
      %v5712 = vpop.f32.mrf.mxu0
      %v5713 = vpop.f32.mrf.mxu0
      %5714 = vdwg.mxu0
      %v5715 = vadd.f32 %v5347, %v5550
      %v5716 = vadd.f32 %v5348, %v5553
      %v5717 = vadd.f32 %v5349, %v5558
      %v5718 = vadd.f32 %v5350, %v5561
      %v5719 = vadd.f32 %v5351, %v5566
      %v5720 = vadd.f32 %v5352, %v5569
      %v5721 = vadd.f32 %v5353, %v5574
      %v5722 = vadd.f32 %v5354, %v5577
      %v5723 = vadd.f32 %v5355, %v5582
      %v5724 = vadd.f32 %v5356, %v5585
      %v5725 = vadd.f32 %v5357, %v5590
      %v5726 = vadd.f32 %v5358, %v5593
      %v5727 = vadd.f32 %v5359, %v5598
      %v5728 = vadd.f32 %v5360, %v5601
      %v5729 = vadd.f32 %v5361, %v5606
      %v5730 = vadd.f32 %v5362, %v5609
      %v5731 = vadd.f32 %v5363, %v5614
      %v5732 = vadd.f32 %v5364, %v5617
      %v5733 = vadd.f32 %v5365, %v5622
      %v5734 = vadd.f32 %v5366, %v5625
      %v5735 = vadd.f32 %v5367, %v5630
      %v5736 = vadd.f32 %v5368, %v5633
      %v5737 = vadd.f32 %v5369, %v5638
      %v5738 = vadd.f32 %v5370, %v5641
      %v5739 = vadd.f32 %v5371, %v5646
      %v5740 = vadd.f32 %v5372, %v5649
      %v5741 = vadd.f32 %v5373, %v5654
      %v5742 = vadd.f32 %v5374, %v5657
      %v5743 = vadd.f32 %v5375, %v5662
      %v5744 = vadd.f32 %v5376, %v5665
      %v5745 = vadd.f32 %v5377, %v5670
      %v5746 = vadd.f32 %v5378, %v5673
      %v5747 = vadd.f32 %v5379, %v5678
      %v5748 = vadd.f32 %v5380, %v5681
      %v5749 = vadd.f32 %v5381, %v5686
      %v5750 = vadd.f32 %v5382, %v5689
      %v5751 = vadd.f32 %v5383, %v5694
      %v5752 = vadd.f32 %v5384, %v5697
      %v5753 = vadd.f32 %v5385, %v5702
      %v5754 = vadd.f32 %v5386, %v5705
      %v5755 = vadd.f32 %v5387, %v5710
      %v5756 = vld [vmem:[#allocation2 + $0x14] sm:$0xff]
      %v5757 = vld [vmem:[#allocation2 + $0x1c] sm:$0xff]
      %v5758 = vld [vmem:[#allocation2 + $0x24] sm:$0xff]
      %v5759 = vld [vmem:[#allocation2 + $0x2c] sm:$0xff]
      %v5760 = vld [vmem:[#allocation2 + $0x34] sm:$0xff]
      %v5761 = vld [vmem:[#allocation2 + $0x3c] sm:$0xff]
      %v5762 = vld [vmem:[#allocation2 + $0x44] sm:$0xff]
      %v5763 = vld [vmem:[#allocation2 + $0x4c] sm:$0xff]
      %v5764 = vld [vmem:[#allocation2 + $0x54] sm:$0xff]
      %v5765 = vld [vmem:[#allocation2 + $0x5c] sm:$0xff]
      %v5766 = vld [vmem:[#allocation2 + $0x64] sm:$0xff]
      %v5767 = vld [vmem:[#allocation2 + $0x6c] sm:$0xff]
      %v5768 = vld [vmem:[#allocation2 + $0x74] sm:$0xff]
      %v5769 = vld [vmem:[#allocation2 + $0x7c] sm:$0xff]
      %v5770 = vld [vmem:[#allocation2 + $0x84] sm:$0xff]
      %v5771 = vld [vmem:[#allocation2 + $0x8c] sm:$0xff]
      %v5772 = vld [vmem:[#allocation2 + $0x94] sm:$0xff]
      %v5773 = vld [vmem:[#allocation2 + $0x9c] sm:$0xff]
      %v5774 = vld [vmem:[#allocation2 + $0xa4] sm:$0xff]
      %v5775 = vld [vmem:[#allocation2 + $0xac] sm:$0xff]
      %v5776 = vld [vmem:[#allocation2 + $0xb4] sm:$0xff]
      %v5777 = vld [vmem:[#allocation2 + $0xbc] sm:$0xff]
      %v5778 = vld [vmem:[#allocation2 + $0xc4] sm:$0xff]
      %v5779 = vld [vmem:[#allocation2 + $0xcc] sm:$0xff]
      %v5780 = vld [vmem:[#allocation2 + $0xd4] sm:$0xff]
      %v5781 = vld [vmem:[#allocation2 + $0xdc] sm:$0xff]
      %v5782 = vld [vmem:[#allocation2 + $0xe4] sm:$0xff]
      %v5783 = vld [vmem:[#allocation2 + $0xec] sm:$0xff]
      %v5784 = vld [vmem:[#allocation2 + $0xf4] sm:$0xff]
      %v5785 = vld [vmem:[#allocation2 + $0xfc] sm:$0xff]
      %v5786 = vld [vmem:[#allocation2 + $0x104] sm:$0xff]
      %v5787 = vld [vmem:[#allocation2 + $0x10c] sm:$0xff]
      %v5788 = vld [vmem:[#allocation2 + $0x114] sm:$0xff]
      %v5789 = vld [vmem:[#allocation2 + $0x11c] sm:$0xff]
      %v5790 = vld [vmem:[#allocation2 + $0x124] sm:$0xff]
      %v5791 = vld [vmem:[#allocation2 + $0x12c] sm:$0xff]
      %v5792 = vld [vmem:[#allocation2 + $0x134] sm:$0xff]
      %v5793 = vld [vmem:[#allocation2 + $0x13c] sm:$0xff]
      %v5794 = vld [vmem:[#allocation2 + $0x144] sm:$0xff]
      %v5795 = vld [vmem:[#allocation2 + $0x14c] sm:$0xff]
      %v5796 = vld [vmem:[#allocation2 + $0x154] sm:$0xf]
      %v5797 = vpack.c.bf16 %v5757, %v5756
      %v5798 = vpack.c.bf16 %v5759, %v5758
      %v5799 = vpack.c.bf16 %v5761, %v5760
      %v5800 = vpack.c.bf16 %v5763, %v5762
      %v5801 = vpack.c.bf16 %v5765, %v5764
      %v5802 = vpack.c.bf16 %v5767, %v5766
      %v5803 = vpack.c.bf16 %v5769, %v5768
      %v5804 = vpack.c.bf16 %v5771, %v5770
      %v5805 = vpack.c.bf16 %v5773, %v5772
      %v5806 = vpack.c.bf16 %v5775, %v5774
      %v5807 = vpack.c.bf16 %v5777, %v5776
      %v5808 = vpack.c.bf16 %v5779, %v5778
      %v5809 = vpack.c.bf16 %v5781, %v5780
      %v5810 = vpack.c.bf16 %v5783, %v5782
      %v5811 = vpack.c.bf16 %v5785, %v5784
      %v5812 = vpack.c.bf16 %v5787, %v5786
      %v5813 = vpack.c.bf16 %v5789, %v5788
      %v5814 = vpack.c.bf16 %v5791, %v5790
      %v5815 = vpack.c.bf16 %v5793, %v5792
      %v5816 = vpack.c.bf16 %v5795, %v5794
      %v5817 = vpack.c.bf16 %v5796, %v5796
      %s5818 = scalar_lea.vmem %s4, 320
      %v5819 = vld [vmem:[%s5818] sm:$0xf]
      %v5820 = vld [vmem:[%s5818 + $0x4] sm:$0xf]
      %v5821 = vld [vmem:[%s5818 + $0x8] sm:$0xf]
      %v5822 = vld [vmem:[%s5818 + $0xc] sm:$0xf]
      %v5823 = vld [vmem:[%s5818 + $0x10] sm:$0xf]
      %v5824 = vld [vmem:[%s5818 + $0x14] sm:$0xf]
      %v5825 = vld [vmem:[%s5818 + $0x18] sm:$0xf]
      %v5826 = vld [vmem:[%s5818 + $0x1c] sm:$0xf]
      %v5827 = vld [vmem:[%s5818 + $0x20] sm:$0xf]
      %v5828 = vld [vmem:[%s5818 + $0x24] sm:$0xf]
      %v5829 = vld [vmem:[%s5818 + $0x28] sm:$0xf]
      %v5830 = vld [vmem:[%s5818 + $0x2c] sm:$0xf]
      %v5831 = vld [vmem:[%s5818 + $0x30] sm:$0xf]
      %v5832 = vld [vmem:[%s5818 + $0x34] sm:$0xf]
      %v5833 = vld [vmem:[%s5818 + $0x38] sm:$0xf]
      %v5834 = vld [vmem:[%s5818 + $0x3c] sm:$0xf]
      %v5851 = vunpack.c.l.b16 %v5819
      %v5852 = vunpack.c.l.b16 %v5820
      %v5853 = vunpack.c.l.b16 %v5821
      %v5854 = vunpack.c.l.b16 %v5822
      %v5855 = vunpack.c.l.b16 %v5823
      %v5856 = vunpack.c.l.b16 %v5824
      %v5857 = vunpack.c.l.b16 %v5825
      %v5858 = vunpack.c.l.b16 %v5826
      %v5859 = vunpack.c.l.b16 %v5827
      %v5860 = vunpack.c.l.b16 %v5828
      %v5861 = vunpack.c.l.b16 %v5829
      %v5862 = vunpack.c.l.b16 %v5830
      %v5863 = vunpack.c.l.b16 %v5831
      %v5864 = vunpack.c.l.b16 %v5832
      %v5865 = vunpack.c.l.b16 %v5833
      %v5866 = vunpack.c.l.b16 %v5834
      %v5867 = vpack.c.b16 %v5852, %v5851
      %v5868 = vpack.c.b16 %v5854, %v5853
      %v5869 = vpack.c.b16 %v5856, %v5855
      %v5870 = vpack.c.b16 %v5858, %v5857
      %v5871 = vpack.c.b16 %v5860, %v5859
      %v5872 = vpack.c.b16 %v5862, %v5861
      %v5873 = vpack.c.b16 %v5864, %v5863
      %v5874 = vpack.c.b16 %v5866, %v5865
      %5883 = vmatprep.subr.bf16.mxu0 0
      %5884 = vmatpush1.bf16.msra.mxu0 %v5874
      %5885 = vmatprep.subr.bf16.mxu0 0
      %5886 = vmatpush1.bf16.msra.mxu0 %v5873
      %5887 = vmatprep.subr.bf16.mxu0 0
      %5888 = vmatpush1.bf16.msra.mxu0 %v5872
      %5889 = vmatprep.subr.bf16.mxu0 0
      %5890 = vmatpush1.bf16.msra.mxu0 %v5871
      %5891 = vmatprep.subr.bf16.mxu0 0
      %5892 = vmatpush1.bf16.msra.mxu0 %v5870
      %5893 = vmatprep.subr.bf16.mxu0 0
      %5894 = vmatpush1.bf16.msra.mxu0 %v5869
      %5895 = vmatprep.subr.bf16.mxu0 0
      %5896 = vmatpush1.bf16.msra.mxu0 %v5868
      %5897 = vmatprep.subr.bf16.mxu0 0
      %5898 = vmatpush1.bf16.msra.mxu0 %v5867
      %5899 = vmatprep.subr.bf16.mxu0 0
      %5900 = vmatpush2.bf16.msra.mxu0 0
      %5901 = vmatprep.subr.bf16.mxu0 0
      %5902 = vmatpush2.bf16.msra.mxu0 0
      %5903 = vmatprep.subr.bf16.mxu0 0
      %5904 = vmatpush2.bf16.msra.mxu0 0
      %5905 = vmatprep.subr.bf16.mxu0 0
      %5906 = vmatpush2.bf16.msra.mxu0 0
      %5907 = vmatprep.subr.bf16.mxu0 0
      %5908 = vmatpush2.bf16.msra.mxu0 0
      %5909 = vmatprep.subr.bf16.mxu0 0
      %5910 = vmatpush2.bf16.msra.mxu0 0
      %5911 = vmatprep.subr.bf16.mxu0 0
      %5912 = vmatpush2.bf16.msra.mxu0 0
      %5913 = vmatprep.subr.bf16.mxu0 0
      %5914 = vmatpush2.bf16.msra.mxu0 0
      %5915 = vmatprep.mubr.bf16.mxu0 0
      %5916 = vmatmul.mubr.bf16.gmra.mxu0 %v5797
      %v5917 = vpop.f32.mrf.mxu0
      %v5918 = vadd.f32 0.0, %v5917
      %v5919 = vpop.f32.mrf.mxu0
      %v5920 = vpop.f32.mrf.mxu0
      %v5921 = vadd.f32 0.0, %v5920
      %v5922 = vpop.f32.mrf.mxu0
      %5923 = vmatprep.mubr.bf16.mxu0 0
      %5924 = vmatmul.mubr.bf16.gmra.mxu0 %v5798
      %v5925 = vpop.f32.mrf.mxu0
      %v5926 = vadd.f32 0.0, %v5925
      %v5927 = vpop.f32.mrf.mxu0
      %v5928 = vpop.f32.mrf.mxu0
      %v5929 = vadd.f32 0.0, %v5928
      %v5930 = vpop.f32.mrf.mxu0
      %5931 = vmatprep.mubr.bf16.mxu0 0
      %5932 = vmatmul.mubr.bf16.gmra.mxu0 %v5799
      %v5933 = vpop.f32.mrf.mxu0
      %v5934 = vadd.f32 0.0, %v5933
      %v5935 = vpop.f32.mrf.mxu0
      %v5936 = vpop.f32.mrf.mxu0
      %v5937 = vadd.f32 0.0, %v5936
      %v5938 = vpop.f32.mrf.mxu0
      %5939 = vmatprep.mubr.bf16.mxu0 0
      %5940 = vmatmul.mubr.bf16.gmra.mxu0 %v5800
      %v5941 = vpop.f32.mrf.mxu0
      %v5942 = vadd.f32 0.0, %v5941
      %v5943 = vpop.f32.mrf.mxu0
      %v5944 = vpop.f32.mrf.mxu0
      %v5945 = vadd.f32 0.0, %v5944
      %v5946 = vpop.f32.mrf.mxu0
      %5947 = vmatprep.mubr.bf16.mxu0 0
      %5948 = vmatmul.mubr.bf16.gmra.mxu0 %v5801
      %v5949 = vpop.f32.mrf.mxu0
      %v5950 = vadd.f32 0.0, %v5949
      %v5951 = vpop.f32.mrf.mxu0
      %v5952 = vpop.f32.mrf.mxu0
      %v5953 = vadd.f32 0.0, %v5952
      %v5954 = vpop.f32.mrf.mxu0
      %5955 = vmatprep.mubr.bf16.mxu0 0
      %5956 = vmatmul.mubr.bf16.gmra.mxu0 %v5802
      %v5957 = vpop.f32.mrf.mxu0
      %v5958 = vadd.f32 0.0, %v5957
      %v5959 = vpop.f32.mrf.mxu0
      %v5960 = vpop.f32.mrf.mxu0
      %v5961 = vadd.f32 0.0, %v5960
      %v5962 = vpop.f32.mrf.mxu0
      %5963 = vmatprep.mubr.bf16.mxu0 0
      %5964 = vmatmul.mubr.bf16.gmra.mxu0 %v5803
      %v5965 = vpop.f32.mrf.mxu0
      %v5966 = vadd.f32 0.0, %v5965
      %v5967 = vpop.f32.mrf.mxu0
      %v5968 = vpop.f32.mrf.mxu0
      %v5969 = vadd.f32 0.0, %v5968
      %v5970 = vpop.f32.mrf.mxu0
      %5971 = vmatprep.mubr.bf16.mxu0 0
      %5972 = vmatmul.mubr.bf16.gmra.mxu0 %v5804
      %v5973 = vpop.f32.mrf.mxu0
      %v5974 = vadd.f32 0.0, %v5973
      %v5975 = vpop.f32.mrf.mxu0
      %v5976 = vpop.f32.mrf.mxu0
      %v5977 = vadd.f32 0.0, %v5976
      %v5978 = vpop.f32.mrf.mxu0
      %5979 = vmatprep.mubr.bf16.mxu0 0
      %5980 = vmatmul.mubr.bf16.gmra.mxu0 %v5805
      %v5981 = vpop.f32.mrf.mxu0
      %v5982 = vadd.f32 0.0, %v5981
      %v5983 = vpop.f32.mrf.mxu0
      %v5984 = vpop.f32.mrf.mxu0
      %v5985 = vadd.f32 0.0, %v5984
      %v5986 = vpop.f32.mrf.mxu0
      %5987 = vmatprep.mubr.bf16.mxu0 0
      %5988 = vmatmul.mubr.bf16.gmra.mxu0 %v5806
      %v5989 = vpop.f32.mrf.mxu0
      %v5990 = vadd.f32 0.0, %v5989
      %v5991 = vpop.f32.mrf.mxu0
      %v5992 = vpop.f32.mrf.mxu0
      %v5993 = vadd.f32 0.0, %v5992
      %v5994 = vpop.f32.mrf.mxu0
      %5995 = vmatprep.mubr.bf16.mxu0 0
      %5996 = vmatmul.mubr.bf16.gmra.mxu0 %v5807
      %v5997 = vpop.f32.mrf.mxu0
      %v5998 = vadd.f32 0.0, %v5997
      %v5999 = vpop.f32.mrf.mxu0
      %v6000 = vpop.f32.mrf.mxu0
      %v6001 = vadd.f32 0.0, %v6000
      %v6002 = vpop.f32.mrf.mxu0
      %6003 = vmatprep.mubr.bf16.mxu0 0
      %6004 = vmatmul.mubr.bf16.gmra.mxu0 %v5808
      %v6005 = vpop.f32.mrf.mxu0
      %v6006 = vadd.f32 0.0, %v6005
      %v6007 = vpop.f32.mrf.mxu0
      %v6008 = vpop.f32.mrf.mxu0
      %v6009 = vadd.f32 0.0, %v6008
      %v6010 = vpop.f32.mrf.mxu0
      %6011 = vmatprep.mubr.bf16.mxu0 0
      %6012 = vmatmul.mubr.bf16.gmra.mxu0 %v5809
      %v6013 = vpop.f32.mrf.mxu0
      %v6014 = vadd.f32 0.0, %v6013
      %v6015 = vpop.f32.mrf.mxu0
      %v6016 = vpop.f32.mrf.mxu0
      %v6017 = vadd.f32 0.0, %v6016
      %v6018 = vpop.f32.mrf.mxu0
      %6019 = vmatprep.mubr.bf16.mxu0 0
      %6020 = vmatmul.mubr.bf16.gmra.mxu0 %v5810
      %v6021 = vpop.f32.mrf.mxu0
      %v6022 = vadd.f32 0.0, %v6021
      %v6023 = vpop.f32.mrf.mxu0
      %v6024 = vpop.f32.mrf.mxu0
      %v6025 = vadd.f32 0.0, %v6024
      %v6026 = vpop.f32.mrf.mxu0
      %6027 = vmatprep.mubr.bf16.mxu0 0
      %6028 = vmatmul.mubr.bf16.gmra.mxu0 %v5811
      %v6029 = vpop.f32.mrf.mxu0
      %v6030 = vadd.f32 0.0, %v6029
      %v6031 = vpop.f32.mrf.mxu0
      %v6032 = vpop.f32.mrf.mxu0
      %v6033 = vadd.f32 0.0, %v6032
      %v6034 = vpop.f32.mrf.mxu0
      %6035 = vmatprep.mubr.bf16.mxu0 0
      %6036 = vmatmul.mubr.bf16.gmra.mxu0 %v5812
      %v6037 = vpop.f32.mrf.mxu0
      %v6038 = vadd.f32 0.0, %v6037
      %v6039 = vpop.f32.mrf.mxu0
      %v6040 = vpop.f32.mrf.mxu0
      %v6041 = vadd.f32 0.0, %v6040
      %v6042 = vpop.f32.mrf.mxu0
      %6043 = vmatprep.mubr.bf16.mxu0 0
      %6044 = vmatmul.mubr.bf16.gmra.mxu0 %v5813
      %v6045 = vpop.f32.mrf.mxu0
      %v6046 = vadd.f32 0.0, %v6045
      %v6047 = vpop.f32.mrf.mxu0
      %v6048 = vpop.f32.mrf.mxu0
      %v6049 = vadd.f32 0.0, %v6048
      %v6050 = vpop.f32.mrf.mxu0
      %6051 = vmatprep.mubr.bf16.mxu0 0
      %6052 = vmatmul.mubr.bf16.gmra.mxu0 %v5814
      %v6053 = vpop.f32.mrf.mxu0
      %v6054 = vadd.f32 0.0, %v6053
      %v6055 = vpop.f32.mrf.mxu0
      %v6056 = vpop.f32.mrf.mxu0
      %v6057 = vadd.f32 0.0, %v6056
      %v6058 = vpop.f32.mrf.mxu0
      %6059 = vmatprep.mubr.bf16.mxu0 0
      %6060 = vmatmul.mubr.bf16.gmra.mxu0 %v5815
      %v6061 = vpop.f32.mrf.mxu0
      %v6062 = vadd.f32 0.0, %v6061
      %v6063 = vpop.f32.mrf.mxu0
      %v6064 = vpop.f32.mrf.mxu0
      %v6065 = vadd.f32 0.0, %v6064
      %v6066 = vpop.f32.mrf.mxu0
      %6067 = vmatprep.mubr.bf16.mxu0 0
      %6068 = vmatmul.mubr.bf16.gmra.mxu0 %v5816
      %v6069 = vpop.f32.mrf.mxu0
      %v6070 = vadd.f32 0.0, %v6069
      %v6071 = vpop.f32.mrf.mxu0
      %v6072 = vpop.f32.mrf.mxu0
      %v6073 = vadd.f32 0.0, %v6072
      %v6074 = vpop.f32.mrf.mxu0
      %6075 = vmatprep.mubr.bf16.mxu0 0
      %6076 = vmatmul.mubr.bf16.gmra.mxu0 %v5817
      %v6077 = vpop.f32.mrf.mxu0
      %v6078 = vadd.f32 0.0, %v6077
      %v6079 = vpop.f32.mrf.mxu0
      %v6080 = vpop.f32.mrf.mxu0
      %v6081 = vpop.f32.mrf.mxu0
      %6082 = vdwg.mxu0
      %v6083 = vadd.f32 %v5715, %v5918
      %v6084 = vadd.f32 %v5716, %v5921
      %v6085 = vadd.f32 %v5717, %v5926
      %v6086 = vadd.f32 %v5718, %v5929
      %v6087 = vadd.f32 %v5719, %v5934
      %v6088 = vadd.f32 %v5720, %v5937
      %v6089 = vadd.f32 %v5721, %v5942
      %v6090 = vadd.f32 %v5722, %v5945
      %v6091 = vadd.f32 %v5723, %v5950
      %v6092 = vadd.f32 %v5724, %v5953
      %v6093 = vadd.f32 %v5725, %v5958
      %v6094 = vadd.f32 %v5726, %v5961
      %v6095 = vadd.f32 %v5727, %v5966
      %v6096 = vadd.f32 %v5728, %v5969
      %v6097 = vadd.f32 %v5729, %v5974
      %v6098 = vadd.f32 %v5730, %v5977
      %v6099 = vadd.f32 %v5731, %v5982
      %v6100 = vadd.f32 %v5732, %v5985
      %v6101 = vadd.f32 %v5733, %v5990
      %v6102 = vadd.f32 %v5734, %v5993
      %v6103 = vadd.f32 %v5735, %v5998
      %v6104 = vadd.f32 %v5736, %v6001
      %v6105 = vadd.f32 %v5737, %v6006
      %v6106 = vadd.f32 %v5738, %v6009
      %v6107 = vadd.f32 %v5739, %v6014
      %v6108 = vadd.f32 %v5740, %v6017
      %v6109 = vadd.f32 %v5741, %v6022
      %v6110 = vadd.f32 %v5742, %v6025
      %v6111 = vadd.f32 %v5743, %v6030
      %v6112 = vadd.f32 %v5744, %v6033
      %v6113 = vadd.f32 %v5745, %v6038
      %v6114 = vadd.f32 %v5746, %v6041
      %v6115 = vadd.f32 %v5747, %v6046
      %v6116 = vadd.f32 %v5748, %v6049
      %v6117 = vadd.f32 %v5749, %v6054
      %v6118 = vadd.f32 %v5750, %v6057
      %v6119 = vadd.f32 %v5751, %v6062
      %v6120 = vadd.f32 %v5752, %v6065
      %v6121 = vadd.f32 %v5753, %v6070
      %v6122 = vadd.f32 %v5754, %v6073
      %v6123 = vadd.f32 %v5755, %v6078
      %v6124 = vld [vmem:[#allocation2 + $0x24] sm:$0xff]
      %v6125 = vld [vmem:[#allocation2 + $0x2c] sm:$0xff]
      %v6126 = vld [vmem:[#allocation2 + $0x34] sm:$0xff]
      %v6127 = vld [vmem:[#allocation2 + $0x3c] sm:$0xff]
      %v6128 = vld [vmem:[#allocation2 + $0x44] sm:$0xff]
      %v6129 = vld [vmem:[#allocation2 + $0x4c] sm:$0xff]
      %v6130 = vld [vmem:[#allocation2 + $0x54] sm:$0xff]
      %v6131 = vld [vmem:[#allocation2 + $0x5c] sm:$0xff]
      %v6132 = vld [vmem:[#allocation2 + $0x64] sm:$0xff]
      %v6133 = vld [vmem:[#allocation2 + $0x6c] sm:$0xff]
      %v6134 = vld [vmem:[#allocation2 + $0x74] sm:$0xff]
      %v6135 = vld [vmem:[#allocation2 + $0x7c] sm:$0xff]
      %v6136 = vld [vmem:[#allocation2 + $0x84] sm:$0xff]
      %v6137 = vld [vmem:[#allocation2 + $0x8c] sm:$0xff]
      %v6138 = vld [vmem:[#allocation2 + $0x94] sm:$0xff]
      %v6139 = vld [vmem:[#allocation2 + $0x9c] sm:$0xff]
      %v6140 = vld [vmem:[#allocation2 + $0xa4] sm:$0xff]
      %v6141 = vld [vmem:[#allocation2 + $0xac] sm:$0xff]
      %v6142 = vld [vmem:[#allocation2 + $0xb4] sm:$0xff]
      %v6143 = vld [vmem:[#allocation2 + $0xbc] sm:$0xff]
      %v6144 = vld [vmem:[#allocation2 + $0xc4] sm:$0xff]
      %v6145 = vld [vmem:[#allocation2 + $0xcc] sm:$0xff]
      %v6146 = vld [vmem:[#allocation2 + $0xd4] sm:$0xff]
      %v6147 = vld [vmem:[#allocation2 + $0xdc] sm:$0xff]
      %v6148 = vld [vmem:[#allocation2 + $0xe4] sm:$0xff]
      %v6149 = vld [vmem:[#allocation2 + $0xec] sm:$0xff]
      %v6150 = vld [vmem:[#allocation2 + $0xf4] sm:$0xff]
      %v6151 = vld [vmem:[#allocation2 + $0xfc] sm:$0xff]
      %v6152 = vld [vmem:[#allocation2 + $0x104] sm:$0xff]
      %v6153 = vld [vmem:[#allocation2 + $0x10c] sm:$0xff]
      %v6154 = vld [vmem:[#allocation2 + $0x114] sm:$0xff]
      %v6155 = vld [vmem:[#allocation2 + $0x11c] sm:$0xff]
      %v6156 = vld [vmem:[#allocation2 + $0x124] sm:$0xff]
      %v6157 = vld [vmem:[#allocation2 + $0x12c] sm:$0xff]
      %v6158 = vld [vmem:[#allocation2 + $0x134] sm:$0xff]
      %v6159 = vld [vmem:[#allocation2 + $0x13c] sm:$0xff]
      %v6160 = vld [vmem:[#allocation2 + $0x144] sm:$0xff]
      %v6161 = vld [vmem:[#allocation2 + $0x14c] sm:$0xff]
      %v6162 = vld [vmem:[#allocation2 + $0x154] sm:$0xff]
      %v6163 = vld [vmem:[#allocation2 + $0x15c] sm:$0xff]
      %v6164 = vld [vmem:[#allocation2 + $0x164] sm:$0xf]
      %v6165 = vpack.c.bf16 %v6125, %v6124
      %v6166 = vpack.c.bf16 %v6127, %v6126
      %v6167 = vpack.c.bf16 %v6129, %v6128
      %v6168 = vpack.c.bf16 %v6131, %v6130
      %v6169 = vpack.c.bf16 %v6133, %v6132
      %v6170 = vpack.c.bf16 %v6135, %v6134
      %v6171 = vpack.c.bf16 %v6137, %v6136
      %v6172 = vpack.c.bf16 %v6139, %v6138
      %v6173 = vpack.c.bf16 %v6141, %v6140
      %v6174 = vpack.c.bf16 %v6143, %v6142
      %v6175 = vpack.c.bf16 %v6145, %v6144
      %v6176 = vpack.c.bf16 %v6147, %v6146
      %v6177 = vpack.c.bf16 %v6149, %v6148
      %v6178 = vpack.c.bf16 %v6151, %v6150
      %v6179 = vpack.c.bf16 %v6153, %v6152
      %v6180 = vpack.c.bf16 %v6155, %v6154
      %v6181 = vpack.c.bf16 %v6157, %v6156
      %v6182 = vpack.c.bf16 %v6159, %v6158
      %v6183 = vpack.c.bf16 %v6161, %v6160
      %v6184 = vpack.c.bf16 %v6163, %v6162
      %v6185 = vpack.c.bf16 %v6164, %v6164
      %s6186 = scalar_lea.vmem %s4, 384
      %v6187 = vld [vmem:[%s6186] sm:$0xf]
      %v6188 = vld [vmem:[%s6186 + $0x4] sm:$0xf]
      %v6189 = vld [vmem:[%s6186 + $0x8] sm:$0xf]
      %v6190 = vld [vmem:[%s6186 + $0xc] sm:$0xf]
      %v6191 = vld [vmem:[%s6186 + $0x10] sm:$0xf]
      %v6192 = vld [vmem:[%s6186 + $0x14] sm:$0xf]
      %v6193 = vld [vmem:[%s6186 + $0x18] sm:$0xf]
      %v6194 = vld [vmem:[%s6186 + $0x1c] sm:$0xf]
      %v6195 = vld [vmem:[%s6186 + $0x20] sm:$0xf]
      %v6196 = vld [vmem:[%s6186 + $0x24] sm:$0xf]
      %v6197 = vld [vmem:[%s6186 + $0x28] sm:$0xf]
      %v6198 = vld [vmem:[%s6186 + $0x2c] sm:$0xf]
      %v6199 = vld [vmem:[%s6186 + $0x30] sm:$0xf]
      %v6200 = vld [vmem:[%s6186 + $0x34] sm:$0xf]
      %v6201 = vld [vmem:[%s6186 + $0x38] sm:$0xf]
      %v6202 = vld [vmem:[%s6186 + $0x3c] sm:$0xf]
      %v6219 = vunpack.c.l.b16 %v6187
      %v6220 = vunpack.c.l.b16 %v6188
      %v6221 = vunpack.c.l.b16 %v6189
      %v6222 = vunpack.c.l.b16 %v6190
      %v6223 = vunpack.c.l.b16 %v6191
      %v6224 = vunpack.c.l.b16 %v6192
      %v6225 = vunpack.c.l.b16 %v6193
      %v6226 = vunpack.c.l.b16 %v6194
      %v6227 = vunpack.c.l.b16 %v6195
      %v6228 = vunpack.c.l.b16 %v6196
      %v6229 = vunpack.c.l.b16 %v6197
      %v6230 = vunpack.c.l.b16 %v6198
      %v6231 = vunpack.c.l.b16 %v6199
      %v6232 = vunpack.c.l.b16 %v6200
      %v6233 = vunpack.c.l.b16 %v6201
      %v6234 = vunpack.c.l.b16 %v6202
      %v6235 = vpack.c.b16 %v6220, %v6219
      %v6236 = vpack.c.b16 %v6222, %v6221
      %v6237 = vpack.c.b16 %v6224, %v6223
      %v6238 = vpack.c.b16 %v6226, %v6225
      %v6239 = vpack.c.b16 %v6228, %v6227
      %v6240 = vpack.c.b16 %v6230, %v6229
      %v6241 = vpack.c.b16 %v6232, %v6231
      %v6242 = vpack.c.b16 %v6234, %v6233
      %6251 = vmatprep.subr.bf16.mxu0 0
      %6252 = vmatpush1.bf16.msra.mxu0 %v6242
      %6253 = vmatprep.subr.bf16.mxu0 0
      %6254 = vmatpush1.bf16.msra.mxu0 %v6241
      %6255 = vmatprep.subr.bf16.mxu0 0
      %6256 = vmatpush1.bf16.msra.mxu0 %v6240
      %6257 = vmatprep.subr.bf16.mxu0 0
      %6258 = vmatpush1.bf16.msra.mxu0 %v6239
      %6259 = vmatprep.subr.bf16.mxu0 0
      %6260 = vmatpush1.bf16.msra.mxu0 %v6238
      %6261 = vmatprep.subr.bf16.mxu0 0
      %6262 = vmatpush1.bf16.msra.mxu0 %v6237
      %6263 = vmatprep.subr.bf16.mxu0 0
      %6264 = vmatpush1.bf16.msra.mxu0 %v6236
      %6265 = vmatprep.subr.bf16.mxu0 0
      %6266 = vmatpush1.bf16.msra.mxu0 %v6235
      %6267 = vmatprep.subr.bf16.mxu0 0
      %6268 = vmatpush2.bf16.msra.mxu0 0
      %6269 = vmatprep.subr.bf16.mxu0 0
      %6270 = vmatpush2.bf16.msra.mxu0 0
      %6271 = vmatprep.subr.bf16.mxu0 0
      %6272 = vmatpush2.bf16.msra.mxu0 0
      %6273 = vmatprep.subr.bf16.mxu0 0
      %6274 = vmatpush2.bf16.msra.mxu0 0
      %6275 = vmatprep.subr.bf16.mxu0 0
      %6276 = vmatpush2.bf16.msra.mxu0 0
      %6277 = vmatprep.subr.bf16.mxu0 0
      %6278 = vmatpush2.bf16.msra.mxu0 0
      %6279 = vmatprep.subr.bf16.mxu0 0
      %6280 = vmatpush2.bf16.msra.mxu0 0
      %6281 = vmatprep.subr.bf16.mxu0 0
      %6282 = vmatpush2.bf16.msra.mxu0 0
      %6283 = vmatprep.mubr.bf16.mxu0 0
      %6284 = vmatmul.mubr.bf16.gmra.mxu0 %v6165
      %v6285 = vpop.f32.mrf.mxu0
      %v6286 = vadd.f32 0.0, %v6285
      %v6287 = vpop.f32.mrf.mxu0
      %v6288 = vpop.f32.mrf.mxu0
      %v6289 = vadd.f32 0.0, %v6288
      %v6290 = vpop.f32.mrf.mxu0
      %6291 = vmatprep.mubr.bf16.mxu0 0
      %6292 = vmatmul.mubr.bf16.gmra.mxu0 %v6166
      %v6293 = vpop.f32.mrf.mxu0
      %v6294 = vadd.f32 0.0, %v6293
      %v6295 = vpop.f32.mrf.mxu0
      %v6296 = vpop.f32.mrf.mxu0
      %v6297 = vadd.f32 0.0, %v6296
      %v6298 = vpop.f32.mrf.mxu0
      %6299 = vmatprep.mubr.bf16.mxu0 0
      %6300 = vmatmul.mubr.bf16.gmra.mxu0 %v6167
      %v6301 = vpop.f32.mrf.mxu0
      %v6302 = vadd.f32 0.0, %v6301
      %v6303 = vpop.f32.mrf.mxu0
      %v6304 = vpop.f32.mrf.mxu0
      %v6305 = vadd.f32 0.0, %v6304
      %v6306 = vpop.f32.mrf.mxu0
      %6307 = vmatprep.mubr.bf16.mxu0 0
      %6308 = vmatmul.mubr.bf16.gmra.mxu0 %v6168
      %v6309 = vpop.f32.mrf.mxu0
      %v6310 = vadd.f32 0.0, %v6309
      %v6311 = vpop.f32.mrf.mxu0
      %v6312 = vpop.f32.mrf.mxu0
      %v6313 = vadd.f32 0.0, %v6312
      %v6314 = vpop.f32.mrf.mxu0
      %6315 = vmatprep.mubr.bf16.mxu0 0
      %6316 = vmatmul.mubr.bf16.gmra.mxu0 %v6169
      %v6317 = vpop.f32.mrf.mxu0
      %v6318 = vadd.f32 0.0, %v6317
      %v6319 = vpop.f32.mrf.mxu0
      %v6320 = vpop.f32.mrf.mxu0
      %v6321 = vadd.f32 0.0, %v6320
      %v6322 = vpop.f32.mrf.mxu0
      %6323 = vmatprep.mubr.bf16.mxu0 0
      %6324 = vmatmul.mubr.bf16.gmra.mxu0 %v6170
      %v6325 = vpop.f32.mrf.mxu0
      %v6326 = vadd.f32 0.0, %v6325
      %v6327 = vpop.f32.mrf.mxu0
      %v6328 = vpop.f32.mrf.mxu0
      %v6329 = vadd.f32 0.0, %v6328
      %v6330 = vpop.f32.mrf.mxu0
      %6331 = vmatprep.mubr.bf16.mxu0 0
      %6332 = vmatmul.mubr.bf16.gmra.mxu0 %v6171
      %v6333 = vpop.f32.mrf.mxu0
      %v6334 = vadd.f32 0.0, %v6333
      %v6335 = vpop.f32.mrf.mxu0
      %v6336 = vpop.f32.mrf.mxu0
      %v6337 = vadd.f32 0.0, %v6336
      %v6338 = vpop.f32.mrf.mxu0
      %6339 = vmatprep.mubr.bf16.mxu0 0
      %6340 = vmatmul.mubr.bf16.gmra.mxu0 %v6172
      %v6341 = vpop.f32.mrf.mxu0
      %v6342 = vadd.f32 0.0, %v6341
      %v6343 = vpop.f32.mrf.mxu0
      %v6344 = vpop.f32.mrf.mxu0
      %v6345 = vadd.f32 0.0, %v6344
      %v6346 = vpop.f32.mrf.mxu0
      %6347 = vmatprep.mubr.bf16.mxu0 0
      %6348 = vmatmul.mubr.bf16.gmra.mxu0 %v6173
      %v6349 = vpop.f32.mrf.mxu0
      %v6350 = vadd.f32 0.0, %v6349
      %v6351 = vpop.f32.mrf.mxu0
      %v6352 = vpop.f32.mrf.mxu0
      %v6353 = vadd.f32 0.0, %v6352
      %v6354 = vpop.f32.mrf.mxu0
      %6355 = vmatprep.mubr.bf16.mxu0 0
      %6356 = vmatmul.mubr.bf16.gmra.mxu0 %v6174
      %v6357 = vpop.f32.mrf.mxu0
      %v6358 = vadd.f32 0.0, %v6357
      %v6359 = vpop.f32.mrf.mxu0
      %v6360 = vpop.f32.mrf.mxu0
      %v6361 = vadd.f32 0.0, %v6360
      %v6362 = vpop.f32.mrf.mxu0
      %6363 = vmatprep.mubr.bf16.mxu0 0
      %6364 = vmatmul.mubr.bf16.gmra.mxu0 %v6175
      %v6365 = vpop.f32.mrf.mxu0
      %v6366 = vadd.f32 0.0, %v6365
      %v6367 = vpop.f32.mrf.mxu0
      %v6368 = vpop.f32.mrf.mxu0
      %v6369 = vadd.f32 0.0, %v6368
      %v6370 = vpop.f32.mrf.mxu0
      %6371 = vmatprep.mubr.bf16.mxu0 0
      %6372 = vmatmul.mubr.bf16.gmra.mxu0 %v6176
      %v6373 = vpop.f32.mrf.mxu0
      %v6374 = vadd.f32 0.0, %v6373
      %v6375 = vpop.f32.mrf.mxu0
      %v6376 = vpop.f32.mrf.mxu0
      %v6377 = vadd.f32 0.0, %v6376
      %v6378 = vpop.f32.mrf.mxu0
      %6379 = vmatprep.mubr.bf16.mxu0 0
      %6380 = vmatmul.mubr.bf16.gmra.mxu0 %v6177
      %v6381 = vpop.f32.mrf.mxu0
      %v6382 = vadd.f32 0.0, %v6381
      %v6383 = vpop.f32.mrf.mxu0
      %v6384 = vpop.f32.mrf.mxu0
      %v6385 = vadd.f32 0.0, %v6384
      %v6386 = vpop.f32.mrf.mxu0
      %6387 = vmatprep.mubr.bf16.mxu0 0
      %6388 = vmatmul.mubr.bf16.gmra.mxu0 %v6178
      %v6389 = vpop.f32.mrf.mxu0
      %v6390 = vadd.f32 0.0, %v6389
      %v6391 = vpop.f32.mrf.mxu0
      %v6392 = vpop.f32.mrf.mxu0
      %v6393 = vadd.f32 0.0, %v6392
      %v6394 = vpop.f32.mrf.mxu0
      %6395 = vmatprep.mubr.bf16.mxu0 0
      %6396 = vmatmul.mubr.bf16.gmra.mxu0 %v6179
      %v6397 = vpop.f32.mrf.mxu0
      %v6398 = vadd.f32 0.0, %v6397
      %v6399 = vpop.f32.mrf.mxu0
      %v6400 = vpop.f32.mrf.mxu0
      %v6401 = vadd.f32 0.0, %v6400
      %v6402 = vpop.f32.mrf.mxu0
      %6403 = vmatprep.mubr.bf16.mxu0 0
      %6404 = vmatmul.mubr.bf16.gmra.mxu0 %v6180
      %v6405 = vpop.f32.mrf.mxu0
      %v6406 = vadd.f32 0.0, %v6405
      %v6407 = vpop.f32.mrf.mxu0
      %v6408 = vpop.f32.mrf.mxu0
      %v6409 = vadd.f32 0.0, %v6408
      %v6410 = vpop.f32.mrf.mxu0
      %6411 = vmatprep.mubr.bf16.mxu0 0
      %6412 = vmatmul.mubr.bf16.gmra.mxu0 %v6181
      %v6413 = vpop.f32.mrf.mxu0
      %v6414 = vadd.f32 0.0, %v6413
      %v6415 = vpop.f32.mrf.mxu0
      %v6416 = vpop.f32.mrf.mxu0
      %v6417 = vadd.f32 0.0, %v6416
      %v6418 = vpop.f32.mrf.mxu0
      %6419 = vmatprep.mubr.bf16.mxu0 0
      %6420 = vmatmul.mubr.bf16.gmra.mxu0 %v6182
      %v6421 = vpop.f32.mrf.mxu0
      %v6422 = vadd.f32 0.0, %v6421
      %v6423 = vpop.f32.mrf.mxu0
      %v6424 = vpop.f32.mrf.mxu0
      %v6425 = vadd.f32 0.0, %v6424
      %v6426 = vpop.f32.mrf.mxu0
      %6427 = vmatprep.mubr.bf16.mxu0 0
      %6428 = vmatmul.mubr.bf16.gmra.mxu0 %v6183
      %v6429 = vpop.f32.mrf.mxu0
      %v6430 = vadd.f32 0.0, %v6429
      %v6431 = vpop.f32.mrf.mxu0
      %v6432 = vpop.f32.mrf.mxu0
      %v6433 = vadd.f32 0.0, %v6432
      %v6434 = vpop.f32.mrf.mxu0
      %6435 = vmatprep.mubr.bf16.mxu0 0
      %6436 = vmatmul.mubr.bf16.gmra.mxu0 %v6184
      %v6437 = vpop.f32.mrf.mxu0
      %v6438 = vadd.f32 0.0, %v6437
      %v6439 = vpop.f32.mrf.mxu0
      %v6440 = vpop.f32.mrf.mxu0
      %v6441 = vadd.f32 0.0, %v6440
      %v6442 = vpop.f32.mrf.mxu0
      %6443 = vmatprep.mubr.bf16.mxu0 0
      %6444 = vmatmul.mubr.bf16.gmra.mxu0 %v6185
      %v6445 = vpop.f32.mrf.mxu0
      %v6446 = vadd.f32 0.0, %v6445
      %v6447 = vpop.f32.mrf.mxu0
      %v6448 = vpop.f32.mrf.mxu0
      %v6449 = vpop.f32.mrf.mxu0
      %6450 = vdwg.mxu0
      %v6451 = vadd.f32 %v6083, %v6286
      %v6452 = vadd.f32 %v6084, %v6289
      %v6453 = vadd.f32 %v6085, %v6294
      %v6454 = vadd.f32 %v6086, %v6297
      %v6455 = vadd.f32 %v6087, %v6302
      %v6456 = vadd.f32 %v6088, %v6305
      %v6457 = vadd.f32 %v6089, %v6310
      %v6458 = vadd.f32 %v6090, %v6313
      %v6459 = vadd.f32 %v6091, %v6318
      %v6460 = vadd.f32 %v6092, %v6321
      %v6461 = vadd.f32 %v6093, %v6326
      %v6462 = vadd.f32 %v6094, %v6329
      %v6463 = vadd.f32 %v6095, %v6334
      %v6464 = vadd.f32 %v6096, %v6337
      %v6465 = vadd.f32 %v6097, %v6342
      %v6466 = vadd.f32 %v6098, %v6345
      %v6467 = vadd.f32 %v6099, %v6350
      %v6468 = vadd.f32 %v6100, %v6353
      %v6469 = vadd.f32 %v6101, %v6358
      %v6470 = vadd.f32 %v6102, %v6361
      %v6471 = vadd.f32 %v6103, %v6366
      %v6472 = vadd.f32 %v6104, %v6369
      %v6473 = vadd.f32 %v6105, %v6374
      %v6474 = vadd.f32 %v6106, %v6377
      %v6475 = vadd.f32 %v6107, %v6382
      %v6476 = vadd.f32 %v6108, %v6385
      %v6477 = vadd.f32 %v6109, %v6390
      %v6478 = vadd.f32 %v6110, %v6393
      %v6479 = vadd.f32 %v6111, %v6398
      %v6480 = vadd.f32 %v6112, %v6401
      %v6481 = vadd.f32 %v6113, %v6406
      %v6482 = vadd.f32 %v6114, %v6409
      %v6483 = vadd.f32 %v6115, %v6414
      %v6484 = vadd.f32 %v6116, %v6417
      %v6485 = vadd.f32 %v6117, %v6422
      %v6486 = vadd.f32 %v6118, %v6425
      %v6487 = vadd.f32 %v6119, %v6430
      %v6488 = vadd.f32 %v6120, %v6433
      %v6489 = vadd.f32 %v6121, %v6438
      %v6490 = vadd.f32 %v6122, %v6441
      %v6491 = vadd.f32 %v6123, %v6446
      %v6492 = vld [vmem:[#allocation2 + $0x25] sm:$0xff]
      %v6493 = vld [vmem:[#allocation2 + $0x2d] sm:$0xff]
      %v6494 = vld [vmem:[#allocation2 + $0x35] sm:$0xff]
      %v6495 = vld [vmem:[#allocation2 + $0x3d] sm:$0xff]
      %v6496 = vld [vmem:[#allocation2 + $0x45] sm:$0xff]
      %v6497 = vld [vmem:[#allocation2 + $0x4d] sm:$0xff]
      %v6498 = vld [vmem:[#allocation2 + $0x55] sm:$0xff]
      %v6499 = vld [vmem:[#allocation2 + $0x5d] sm:$0xff]
      %v6500 = vld [vmem:[#allocation2 + $0x65] sm:$0xff]
      %v6501 = vld [vmem:[#allocation2 + $0x6d] sm:$0xff]
      %v6502 = vld [vmem:[#allocation2 + $0x75] sm:$0xff]
      %v6503 = vld [vmem:[#allocation2 + $0x7d] sm:$0xff]
      %v6504 = vld [vmem:[#allocation2 + $0x85] sm:$0xff]
      %v6505 = vld [vmem:[#allocation2 + $0x8d] sm:$0xff]
      %v6506 = vld [vmem:[#allocation2 + $0x95] sm:$0xff]
      %v6507 = vld [vmem:[#allocation2 + $0x9d] sm:$0xff]
      %v6508 = vld [vmem:[#allocation2 + $0xa5] sm:$0xff]
      %v6509 = vld [vmem:[#allocation2 + $0xad] sm:$0xff]
      %v6510 = vld [vmem:[#allocation2 + $0xb5] sm:$0xff]
      %v6511 = vld [vmem:[#allocation2 + $0xbd] sm:$0xff]
      %v6512 = vld [vmem:[#allocation2 + $0xc5] sm:$0xff]
      %v6513 = vld [vmem:[#allocation2 + $0xcd] sm:$0xff]
      %v6514 = vld [vmem:[#allocation2 + $0xd5] sm:$0xff]
      %v6515 = vld [vmem:[#allocation2 + $0xdd] sm:$0xff]
      %v6516 = vld [vmem:[#allocation2 + $0xe5] sm:$0xff]
      %v6517 = vld [vmem:[#allocation2 + $0xed] sm:$0xff]
      %v6518 = vld [vmem:[#allocation2 + $0xf5] sm:$0xff]
      %v6519 = vld [vmem:[#allocation2 + $0xfd] sm:$0xff]
      %v6520 = vld [vmem:[#allocation2 + $0x105] sm:$0xff]
      %v6521 = vld [vmem:[#allocation2 + $0x10d] sm:$0xff]
      %v6522 = vld [vmem:[#allocation2 + $0x115] sm:$0xff]
      %v6523 = vld [vmem:[#allocation2 + $0x11d] sm:$0xff]
      %v6524 = vld [vmem:[#allocation2 + $0x125] sm:$0xff]
      %v6525 = vld [vmem:[#allocation2 + $0x12d] sm:$0xff]
      %v6526 = vld [vmem:[#allocation2 + $0x135] sm:$0xff]
      %v6527 = vld [vmem:[#allocation2 + $0x13d] sm:$0xff]
      %v6528 = vld [vmem:[#allocation2 + $0x145] sm:$0xff]
      %v6529 = vld [vmem:[#allocation2 + $0x14d] sm:$0xff]
      %v6530 = vld [vmem:[#allocation2 + $0x155] sm:$0xff]
      %v6531 = vld [vmem:[#allocation2 + $0x15d] sm:$0xff]
      %v6532 = vld [vmem:[#allocation2 + $0x165] sm:$0xf]
      %v6533 = vpack.c.bf16 %v6493, %v6492
      %v6534 = vpack.c.bf16 %v6495, %v6494
      %v6535 = vpack.c.bf16 %v6497, %v6496
      %v6536 = vpack.c.bf16 %v6499, %v6498
      %v6537 = vpack.c.bf16 %v6501, %v6500
      %v6538 = vpack.c.bf16 %v6503, %v6502
      %v6539 = vpack.c.bf16 %v6505, %v6504
      %v6540 = vpack.c.bf16 %v6507, %v6506
      %v6541 = vpack.c.bf16 %v6509, %v6508
      %v6542 = vpack.c.bf16 %v6511, %v6510
      %v6543 = vpack.c.bf16 %v6513, %v6512
      %v6544 = vpack.c.bf16 %v6515, %v6514
      %v6545 = vpack.c.bf16 %v6517, %v6516
      %v6546 = vpack.c.bf16 %v6519, %v6518
      %v6547 = vpack.c.bf16 %v6521, %v6520
      %v6548 = vpack.c.bf16 %v6523, %v6522
      %v6549 = vpack.c.bf16 %v6525, %v6524
      %v6550 = vpack.c.bf16 %v6527, %v6526
      %v6551 = vpack.c.bf16 %v6529, %v6528
      %v6552 = vpack.c.bf16 %v6531, %v6530
      %v6553 = vpack.c.bf16 %v6532, %v6532
      %s6554 = scalar_lea.vmem %s4, 448
      %v6555 = vld [vmem:[%s6554] sm:$0xf]
      %v6556 = vld [vmem:[%s6554 + $0x4] sm:$0xf]
      %v6557 = vld [vmem:[%s6554 + $0x8] sm:$0xf]
      %v6558 = vld [vmem:[%s6554 + $0xc] sm:$0xf]
      %v6559 = vld [vmem:[%s6554 + $0x10] sm:$0xf]
      %v6560 = vld [vmem:[%s6554 + $0x14] sm:$0xf]
      %v6561 = vld [vmem:[%s6554 + $0x18] sm:$0xf]
      %v6562 = vld [vmem:[%s6554 + $0x1c] sm:$0xf]
      %v6563 = vld [vmem:[%s6554 + $0x20] sm:$0xf]
      %v6564 = vld [vmem:[%s6554 + $0x24] sm:$0xf]
      %v6565 = vld [vmem:[%s6554 + $0x28] sm:$0xf]
      %v6566 = vld [vmem:[%s6554 + $0x2c] sm:$0xf]
      %v6567 = vld [vmem:[%s6554 + $0x30] sm:$0xf]
      %v6568 = vld [vmem:[%s6554 + $0x34] sm:$0xf]
      %v6569 = vld [vmem:[%s6554 + $0x38] sm:$0xf]
      %v6570 = vld [vmem:[%s6554 + $0x3c] sm:$0xf]
      %v6587 = vunpack.c.l.b16 %v6555
      %v6588 = vunpack.c.l.b16 %v6556
      %v6589 = vunpack.c.l.b16 %v6557
      %v6590 = vunpack.c.l.b16 %v6558
      %v6591 = vunpack.c.l.b16 %v6559
      %v6592 = vunpack.c.l.b16 %v6560
      %v6593 = vunpack.c.l.b16 %v6561
      %v6594 = vunpack.c.l.b16 %v6562
      %v6595 = vunpack.c.l.b16 %v6563
      %v6596 = vunpack.c.l.b16 %v6564
      %v6597 = vunpack.c.l.b16 %v6565
      %v6598 = vunpack.c.l.b16 %v6566
      %v6599 = vunpack.c.l.b16 %v6567
      %v6600 = vunpack.c.l.b16 %v6568
      %v6601 = vunpack.c.l.b16 %v6569
      %v6602 = vunpack.c.l.b16 %v6570
      %v6603 = vpack.c.b16 %v6588, %v6587
      %v6604 = vpack.c.b16 %v6590, %v6589
      %v6605 = vpack.c.b16 %v6592, %v6591
      %v6606 = vpack.c.b16 %v6594, %v6593
      %v6607 = vpack.c.b16 %v6596, %v6595
      %v6608 = vpack.c.b16 %v6598, %v6597
      %v6609 = vpack.c.b16 %v6600, %v6599
      %v6610 = vpack.c.b16 %v6602, %v6601
      %6619 = vmatprep.subr.bf16.mxu0 0
      %6620 = vmatpush1.bf16.msra.mxu0 %v6610
      %6621 = vmatprep.subr.bf16.mxu0 0
      %6622 = vmatpush1.bf16.msra.mxu0 %v6609
      %6623 = vmatprep.subr.bf16.mxu0 0
      %6624 = vmatpush1.bf16.msra.mxu0 %v6608
      %6625 = vmatprep.subr.bf16.mxu0 0
      %6626 = vmatpush1.bf16.msra.mxu0 %v6607
      %6627 = vmatprep.subr.bf16.mxu0 0
      %6628 = vmatpush1.bf16.msra.mxu0 %v6606
      %6629 = vmatprep.subr.bf16.mxu0 0
      %6630 = vmatpush1.bf16.msra.mxu0 %v6605
      %6631 = vmatprep.subr.bf16.mxu0 0
      %6632 = vmatpush1.bf16.msra.mxu0 %v6604
      %6633 = vmatprep.subr.bf16.mxu0 0
      %6634 = vmatpush1.bf16.msra.mxu0 %v6603
      %6635 = vmatprep.subr.bf16.mxu0 0
      %6636 = vmatpush2.bf16.msra.mxu0 0
      %6637 = vmatprep.subr.bf16.mxu0 0
      %6638 = vmatpush2.bf16.msra.mxu0 0
      %6639 = vmatprep.subr.bf16.mxu0 0
      %6640 = vmatpush2.bf16.msra.mxu0 0
      %6641 = vmatprep.subr.bf16.mxu0 0
      %6642 = vmatpush2.bf16.msra.mxu0 0
      %6643 = vmatprep.subr.bf16.mxu0 0
      %6644 = vmatpush2.bf16.msra.mxu0 0
      %6645 = vmatprep.subr.bf16.mxu0 0
      %6646 = vmatpush2.bf16.msra.mxu0 0
      %6647 = vmatprep.subr.bf16.mxu0 0
      %6648 = vmatpush2.bf16.msra.mxu0 0
      %6649 = vmatprep.subr.bf16.mxu0 0
      %6650 = vmatpush2.bf16.msra.mxu0 0
      %6651 = vmatprep.mubr.bf16.mxu0 0
      %6652 = vmatmul.mubr.bf16.gmra.mxu0 %v6533
      %v6653 = vpop.f32.mrf.mxu0
      %v6654 = vadd.f32 0.0, %v6653
      %v6655 = vpop.f32.mrf.mxu0
      %v6656 = vpop.f32.mrf.mxu0
      %v6657 = vadd.f32 0.0, %v6656
      %v6658 = vpop.f32.mrf.mxu0
      %6659 = vmatprep.mubr.bf16.mxu0 0
      %6660 = vmatmul.mubr.bf16.gmra.mxu0 %v6534
      %v6661 = vpop.f32.mrf.mxu0
      %v6662 = vadd.f32 0.0, %v6661
      %v6663 = vpop.f32.mrf.mxu0
      %v6664 = vpop.f32.mrf.mxu0
      %v6665 = vadd.f32 0.0, %v6664
      %v6666 = vpop.f32.mrf.mxu0
      %6667 = vmatprep.mubr.bf16.mxu0 0
      %6668 = vmatmul.mubr.bf16.gmra.mxu0 %v6535
      %v6669 = vpop.f32.mrf.mxu0
      %v6670 = vadd.f32 0.0, %v6669
      %v6671 = vpop.f32.mrf.mxu0
      %v6672 = vpop.f32.mrf.mxu0
      %v6673 = vadd.f32 0.0, %v6672
      %v6674 = vpop.f32.mrf.mxu0
      %6675 = vmatprep.mubr.bf16.mxu0 0
      %6676 = vmatmul.mubr.bf16.gmra.mxu0 %v6536
      %v6677 = vpop.f32.mrf.mxu0
      %v6678 = vadd.f32 0.0, %v6677
      %v6679 = vpop.f32.mrf.mxu0
      %v6680 = vpop.f32.mrf.mxu0
      %v6681 = vadd.f32 0.0, %v6680
      %v6682 = vpop.f32.mrf.mxu0
      %6683 = vmatprep.mubr.bf16.mxu0 0
      %6684 = vmatmul.mubr.bf16.gmra.mxu0 %v6537
      %v6685 = vpop.f32.mrf.mxu0
      %v6686 = vadd.f32 0.0, %v6685
      %v6687 = vpop.f32.mrf.mxu0
      %v6688 = vpop.f32.mrf.mxu0
      %v6689 = vadd.f32 0.0, %v6688
      %v6690 = vpop.f32.mrf.mxu0
      %6691 = vmatprep.mubr.bf16.mxu0 0
      %6692 = vmatmul.mubr.bf16.gmra.mxu0 %v6538
      %v6693 = vpop.f32.mrf.mxu0
      %v6694 = vadd.f32 0.0, %v6693
      %v6695 = vpop.f32.mrf.mxu0
      %v6696 = vpop.f32.mrf.mxu0
      %v6697 = vadd.f32 0.0, %v6696
      %v6698 = vpop.f32.mrf.mxu0
      %6699 = vmatprep.mubr.bf16.mxu0 0
      %6700 = vmatmul.mubr.bf16.gmra.mxu0 %v6539
      %v6701 = vpop.f32.mrf.mxu0
      %v6702 = vadd.f32 0.0, %v6701
      %v6703 = vpop.f32.mrf.mxu0
      %v6704 = vpop.f32.mrf.mxu0
      %v6705 = vadd.f32 0.0, %v6704
      %v6706 = vpop.f32.mrf.mxu0
      %6707 = vmatprep.mubr.bf16.mxu0 0
      %6708 = vmatmul.mubr.bf16.gmra.mxu0 %v6540
      %v6709 = vpop.f32.mrf.mxu0
      %v6710 = vadd.f32 0.0, %v6709
      %v6711 = vpop.f32.mrf.mxu0
      %v6712 = vpop.f32.mrf.mxu0
      %v6713 = vadd.f32 0.0, %v6712
      %v6714 = vpop.f32.mrf.mxu0
      %6715 = vmatprep.mubr.bf16.mxu0 0
      %6716 = vmatmul.mubr.bf16.gmra.mxu0 %v6541
      %v6717 = vpop.f32.mrf.mxu0
      %v6718 = vadd.f32 0.0, %v6717
      %v6719 = vpop.f32.mrf.mxu0
      %v6720 = vpop.f32.mrf.mxu0
      %v6721 = vadd.f32 0.0, %v6720
      %v6722 = vpop.f32.mrf.mxu0
      %6723 = vmatprep.mubr.bf16.mxu0 0
      %6724 = vmatmul.mubr.bf16.gmra.mxu0 %v6542
      %v6725 = vpop.f32.mrf.mxu0
      %v6726 = vadd.f32 0.0, %v6725
      %v6727 = vpop.f32.mrf.mxu0
      %v6728 = vpop.f32.mrf.mxu0
      %v6729 = vadd.f32 0.0, %v6728
      %v6730 = vpop.f32.mrf.mxu0
      %6731 = vmatprep.mubr.bf16.mxu0 0
      %6732 = vmatmul.mubr.bf16.gmra.mxu0 %v6543
      %v6733 = vpop.f32.mrf.mxu0
      %v6734 = vadd.f32 0.0, %v6733
      %v6735 = vpop.f32.mrf.mxu0
      %v6736 = vpop.f32.mrf.mxu0
      %v6737 = vadd.f32 0.0, %v6736
      %v6738 = vpop.f32.mrf.mxu0
      %6739 = vmatprep.mubr.bf16.mxu0 0
      %6740 = vmatmul.mubr.bf16.gmra.mxu0 %v6544
      %v6741 = vpop.f32.mrf.mxu0
      %v6742 = vadd.f32 0.0, %v6741
      %v6743 = vpop.f32.mrf.mxu0
      %v6744 = vpop.f32.mrf.mxu0
      %v6745 = vadd.f32 0.0, %v6744
      %v6746 = vpop.f32.mrf.mxu0
      %6747 = vmatprep.mubr.bf16.mxu0 0
      %6748 = vmatmul.mubr.bf16.gmra.mxu0 %v6545
      %v6749 = vpop.f32.mrf.mxu0
      %v6750 = vadd.f32 0.0, %v6749
      %v6751 = vpop.f32.mrf.mxu0
      %v6752 = vpop.f32.mrf.mxu0
      %v6753 = vadd.f32 0.0, %v6752
      %v6754 = vpop.f32.mrf.mxu0
      %6755 = vmatprep.mubr.bf16.mxu0 0
      %6756 = vmatmul.mubr.bf16.gmra.mxu0 %v6546
      %v6757 = vpop.f32.mrf.mxu0
      %v6758 = vadd.f32 0.0, %v6757
      %v6759 = vpop.f32.mrf.mxu0
      %v6760 = vpop.f32.mrf.mxu0
      %v6761 = vadd.f32 0.0, %v6760
      %v6762 = vpop.f32.mrf.mxu0
      %6763 = vmatprep.mubr.bf16.mxu0 0
      %6764 = vmatmul.mubr.bf16.gmra.mxu0 %v6547
      %v6765 = vpop.f32.mrf.mxu0
      %v6766 = vadd.f32 0.0, %v6765
      %v6767 = vpop.f32.mrf.mxu0
      %v6768 = vpop.f32.mrf.mxu0
      %v6769 = vadd.f32 0.0, %v6768
      %v6770 = vpop.f32.mrf.mxu0
      %6771 = vmatprep.mubr.bf16.mxu0 0
      %6772 = vmatmul.mubr.bf16.gmra.mxu0 %v6548
      %v6773 = vpop.f32.mrf.mxu0
      %v6774 = vadd.f32 0.0, %v6773
      %v6775 = vpop.f32.mrf.mxu0
      %v6776 = vpop.f32.mrf.mxu0
      %v6777 = vadd.f32 0.0, %v6776
      %v6778 = vpop.f32.mrf.mxu0
      %6779 = vmatprep.mubr.bf16.mxu0 0
      %6780 = vmatmul.mubr.bf16.gmra.mxu0 %v6549
      %v6781 = vpop.f32.mrf.mxu0
      %v6782 = vadd.f32 0.0, %v6781
      %v6783 = vpop.f32.mrf.mxu0
      %v6784 = vpop.f32.mrf.mxu0
      %v6785 = vadd.f32 0.0, %v6784
      %v6786 = vpop.f32.mrf.mxu0
      %6787 = vmatprep.mubr.bf16.mxu0 0
      %6788 = vmatmul.mubr.bf16.gmra.mxu0 %v6550
      %v6789 = vpop.f32.mrf.mxu0
      %v6790 = vadd.f32 0.0, %v6789
      %v6791 = vpop.f32.mrf.mxu0
      %v6792 = vpop.f32.mrf.mxu0
      %v6793 = vadd.f32 0.0, %v6792
      %v6794 = vpop.f32.mrf.mxu0
      %6795 = vmatprep.mubr.bf16.mxu0 0
      %6796 = vmatmul.mubr.bf16.gmra.mxu0 %v6551
      %v6797 = vpop.f32.mrf.mxu0
      %v6798 = vadd.f32 0.0, %v6797
      %v6799 = vpop.f32.mrf.mxu0
      %v6800 = vpop.f32.mrf.mxu0
      %v6801 = vadd.f32 0.0, %v6800
      %v6802 = vpop.f32.mrf.mxu0
      %6803 = vmatprep.mubr.bf16.mxu0 0
      %6804 = vmatmul.mubr.bf16.gmra.mxu0 %v6552
      %v6805 = vpop.f32.mrf.mxu0
      %v6806 = vadd.f32 0.0, %v6805
      %v6807 = vpop.f32.mrf.mxu0
      %v6808 = vpop.f32.mrf.mxu0
      %v6809 = vadd.f32 0.0, %v6808
      %v6810 = vpop.f32.mrf.mxu0
      %6811 = vmatprep.mubr.bf16.mxu0 0
      %6812 = vmatmul.mubr.bf16.gmra.mxu0 %v6553
      %v6813 = vpop.f32.mrf.mxu0
      %v6814 = vadd.f32 0.0, %v6813
      %v6815 = vpop.f32.mrf.mxu0
      %v6816 = vpop.f32.mrf.mxu0
      %v6817 = vpop.f32.mrf.mxu0
      %6818 = vdwg.mxu0
      %v6819 = vadd.f32 %v6451, %v6654
      %v6820 = vadd.f32 %v6452, %v6657
      %v6821 = vadd.f32 %v6453, %v6662
      %v6822 = vadd.f32 %v6454, %v6665
      %v6823 = vadd.f32 %v6455, %v6670
      %v6824 = vadd.f32 %v6456, %v6673
      %v6825 = vadd.f32 %v6457, %v6678
      %v6826 = vadd.f32 %v6458, %v6681
      %v6827 = vadd.f32 %v6459, %v6686
      %v6828 = vadd.f32 %v6460, %v6689
      %v6829 = vadd.f32 %v6461, %v6694
      %v6830 = vadd.f32 %v6462, %v6697
      %v6831 = vadd.f32 %v6463, %v6702
      %v6832 = vadd.f32 %v6464, %v6705
      %v6833 = vadd.f32 %v6465, %v6710
      %v6834 = vadd.f32 %v6466, %v6713
      %v6835 = vadd.f32 %v6467, %v6718
      %v6836 = vadd.f32 %v6468, %v6721
      %v6837 = vadd.f32 %v6469, %v6726
      %v6838 = vadd.f32 %v6470, %v6729
      %v6839 = vadd.f32 %v6471, %v6734
      %v6840 = vadd.f32 %v6472, %v6737
      %v6841 = vadd.f32 %v6473, %v6742
      %v6842 = vadd.f32 %v6474, %v6745
      %v6843 = vadd.f32 %v6475, %v6750
      %v6844 = vadd.f32 %v6476, %v6753
      %v6845 = vadd.f32 %v6477, %v6758
      %v6846 = vadd.f32 %v6478, %v6761
      %v6847 = vadd.f32 %v6479, %v6766
      %v6848 = vadd.f32 %v6480, %v6769
      %v6849 = vadd.f32 %v6481, %v6774
      %v6850 = vadd.f32 %v6482, %v6777
      %v6851 = vadd.f32 %v6483, %v6782
      %v6852 = vadd.f32 %v6484, %v6785
      %v6853 = vadd.f32 %v6485, %v6790
      %v6854 = vadd.f32 %v6486, %v6793
      %v6855 = vadd.f32 %v6487, %v6798
      %v6856 = vadd.f32 %v6488, %v6801
      %v6857 = vadd.f32 %v6489, %v6806
      %v6858 = vadd.f32 %v6490, %v6809
      %v6859 = vadd.f32 %v6491, %v6814
      %v6860 = vld [vmem:[#allocation2 + $0x26] sm:$0xff]
      %v6861 = vld [vmem:[#allocation2 + $0x2e] sm:$0xff]
      %v6862 = vld [vmem:[#allocation2 + $0x36] sm:$0xff]
      %v6863 = vld [vmem:[#allocation2 + $0x3e] sm:$0xff]
      %v6864 = vld [vmem:[#allocation2 + $0x46] sm:$0xff]
      %v6865 = vld [vmem:[#allocation2 + $0x4e] sm:$0xff]
      %v6866 = vld [vmem:[#allocation2 + $0x56] sm:$0xff]
      %v6867 = vld [vmem:[#allocation2 + $0x5e] sm:$0xff]
      %v6868 = vld [vmem:[#allocation2 + $0x66] sm:$0xff]
      %v6869 = vld [vmem:[#allocation2 + $0x6e] sm:$0xff]
      %v6870 = vld [vmem:[#allocation2 + $0x76] sm:$0xff]
      %v6871 = vld [vmem:[#allocation2 + $0x7e] sm:$0xff]
      %v6872 = vld [vmem:[#allocation2 + $0x86] sm:$0xff]
      %v6873 = vld [vmem:[#allocation2 + $0x8e] sm:$0xff]
      %v6874 = vld [vmem:[#allocation2 + $0x96] sm:$0xff]
      %v6875 = vld [vmem:[#allocation2 + $0x9e] sm:$0xff]
      %v6876 = vld [vmem:[#allocation2 + $0xa6] sm:$0xff]
      %v6877 = vld [vmem:[#allocation2 + $0xae] sm:$0xff]
      %v6878 = vld [vmem:[#allocation2 + $0xb6] sm:$0xff]
      %v6879 = vld [vmem:[#allocation2 + $0xbe] sm:$0xff]
      %v6880 = vld [vmem:[#allocation2 + $0xc6] sm:$0xff]
      %v6881 = vld [vmem:[#allocation2 + $0xce] sm:$0xff]
      %v6882 = vld [vmem:[#allocation2 + $0xd6] sm:$0xff]
      %v6883 = vld [vmem:[#allocation2 + $0xde] sm:$0xff]
      %v6884 = vld [vmem:[#allocation2 + $0xe6] sm:$0xff]
      %v6885 = vld [vmem:[#allocation2 + $0xee] sm:$0xff]
      %v6886 = vld [vmem:[#allocation2 + $0xf6] sm:$0xff]
      %v6887 = vld [vmem:[#allocation2 + $0xfe] sm:$0xff]
      %v6888 = vld [vmem:[#allocation2 + $0x106] sm:$0xff]
      %v6889 = vld [vmem:[#allocation2 + $0x10e] sm:$0xff]
      %v6890 = vld [vmem:[#allocation2 + $0x116] sm:$0xff]
      %v6891 = vld [vmem:[#allocation2 + $0x11e] sm:$0xff]
      %v6892 = vld [vmem:[#allocation2 + $0x126] sm:$0xff]
      %v6893 = vld [vmem:[#allocation2 + $0x12e] sm:$0xff]
      %v6894 = vld [vmem:[#allocation2 + $0x136] sm:$0xff]
      %v6895 = vld [vmem:[#allocation2 + $0x13e] sm:$0xff]
      %v6896 = vld [vmem:[#allocation2 + $0x146] sm:$0xff]
      %v6897 = vld [vmem:[#allocation2 + $0x14e] sm:$0xff]
      %v6898 = vld [vmem:[#allocation2 + $0x156] sm:$0xff]
      %v6899 = vld [vmem:[#allocation2 + $0x15e] sm:$0xff]
      %v6900 = vld [vmem:[#allocation2 + $0x166] sm:$0xf]
      %v6901 = vpack.c.bf16 %v6861, %v6860
      %v6902 = vpack.c.bf16 %v6863, %v6862
      %v6903 = vpack.c.bf16 %v6865, %v6864
      %v6904 = vpack.c.bf16 %v6867, %v6866
      %v6905 = vpack.c.bf16 %v6869, %v6868
      %v6906 = vpack.c.bf16 %v6871, %v6870
      %v6907 = vpack.c.bf16 %v6873, %v6872
      %v6908 = vpack.c.bf16 %v6875, %v6874
      %v6909 = vpack.c.bf16 %v6877, %v6876
      %v6910 = vpack.c.bf16 %v6879, %v6878
      %v6911 = vpack.c.bf16 %v6881, %v6880
      %v6912 = vpack.c.bf16 %v6883, %v6882
      %v6913 = vpack.c.bf16 %v6885, %v6884
      %v6914 = vpack.c.bf16 %v6887, %v6886
      %v6915 = vpack.c.bf16 %v6889, %v6888
      %v6916 = vpack.c.bf16 %v6891, %v6890
      %v6917 = vpack.c.bf16 %v6893, %v6892
      %v6918 = vpack.c.bf16 %v6895, %v6894
      %v6919 = vpack.c.bf16 %v6897, %v6896
      %v6920 = vpack.c.bf16 %v6899, %v6898
      %v6921 = vpack.c.bf16 %v6900, %v6900
      %s6922 = scalar_lea.vmem %s4, 512
      %v6923 = vld [vmem:[%s6922] sm:$0xf]
      %v6924 = vld [vmem:[%s6922 + $0x4] sm:$0xf]
      %v6925 = vld [vmem:[%s6922 + $0x8] sm:$0xf]
      %v6926 = vld [vmem:[%s6922 + $0xc] sm:$0xf]
      %v6927 = vld [vmem:[%s6922 + $0x10] sm:$0xf]
      %v6928 = vld [vmem:[%s6922 + $0x14] sm:$0xf]
      %v6929 = vld [vmem:[%s6922 + $0x18] sm:$0xf]
      %v6930 = vld [vmem:[%s6922 + $0x1c] sm:$0xf]
      %v6931 = vld [vmem:[%s6922 + $0x20] sm:$0xf]
      %v6932 = vld [vmem:[%s6922 + $0x24] sm:$0xf]
      %v6933 = vld [vmem:[%s6922 + $0x28] sm:$0xf]
      %v6934 = vld [vmem:[%s6922 + $0x2c] sm:$0xf]
      %v6935 = vld [vmem:[%s6922 + $0x30] sm:$0xf]
      %v6936 = vld [vmem:[%s6922 + $0x34] sm:$0xf]
      %v6937 = vld [vmem:[%s6922 + $0x38] sm:$0xf]
      %v6938 = vld [vmem:[%s6922 + $0x3c] sm:$0xf]
      %v6955 = vunpack.c.l.b16 %v6923
      %v6956 = vunpack.c.l.b16 %v6924
      %v6957 = vunpack.c.l.b16 %v6925
      %v6958 = vunpack.c.l.b16 %v6926
      %v6959 = vunpack.c.l.b16 %v6927
      %v6960 = vunpack.c.l.b16 %v6928
      %v6961 = vunpack.c.l.b16 %v6929
      %v6962 = vunpack.c.l.b16 %v6930
      %v6963 = vunpack.c.l.b16 %v6931
      %v6964 = vunpack.c.l.b16 %v6932
      %v6965 = vunpack.c.l.b16 %v6933
      %v6966 = vunpack.c.l.b16 %v6934
      %v6967 = vunpack.c.l.b16 %v6935
      %v6968 = vunpack.c.l.b16 %v6936
      %v6969 = vunpack.c.l.b16 %v6937
      %v6970 = vunpack.c.l.b16 %v6938
      %v6971 = vpack.c.b16 %v6956, %v6955
      %v6972 = vpack.c.b16 %v6958, %v6957
      %v6973 = vpack.c.b16 %v6960, %v6959
      %v6974 = vpack.c.b16 %v6962, %v6961
      %v6975 = vpack.c.b16 %v6964, %v6963
      %v6976 = vpack.c.b16 %v6966, %v6965
      %v6977 = vpack.c.b16 %v6968, %v6967
      %v6978 = vpack.c.b16 %v6970, %v6969
      %6987 = vmatprep.subr.bf16.mxu0 0
      %6988 = vmatpush1.bf16.msra.mxu0 %v6978
      %6989 = vmatprep.subr.bf16.mxu0 0
      %6990 = vmatpush1.bf16.msra.mxu0 %v6977
      %6991 = vmatprep.subr.bf16.mxu0 0
      %6992 = vmatpush1.bf16.msra.mxu0 %v6976
      %6993 = vmatprep.subr.bf16.mxu0 0
      %6994 = vmatpush1.bf16.msra.mxu0 %v6975
      %6995 = vmatprep.subr.bf16.mxu0 0
      %6996 = vmatpush1.bf16.msra.mxu0 %v6974
      %6997 = vmatprep.subr.bf16.mxu0 0
      %6998 = vmatpush1.bf16.msra.mxu0 %v6973
      %6999 = vmatprep.subr.bf16.mxu0 0
      %7000 = vmatpush1.bf16.msra.mxu0 %v6972
      %7001 = vmatprep.subr.bf16.mxu0 0
      %7002 = vmatpush1.bf16.msra.mxu0 %v6971
      %7003 = vmatprep.subr.bf16.mxu0 0
      %7004 = vmatpush2.bf16.msra.mxu0 0
      %7005 = vmatprep.subr.bf16.mxu0 0
      %7006 = vmatpush2.bf16.msra.mxu0 0
      %7007 = vmatprep.subr.bf16.mxu0 0
      %7008 = vmatpush2.bf16.msra.mxu0 0
      %7009 = vmatprep.subr.bf16.mxu0 0
      %7010 = vmatpush2.bf16.msra.mxu0 0
      %7011 = vmatprep.subr.bf16.mxu0 0
      %7012 = vmatpush2.bf16.msra.mxu0 0
      %7013 = vmatprep.subr.bf16.mxu0 0
      %7014 = vmatpush2.bf16.msra.mxu0 0
      %7015 = vmatprep.subr.bf16.mxu0 0
      %7016 = vmatpush2.bf16.msra.mxu0 0
      %7017 = vmatprep.subr.bf16.mxu0 0
      %7018 = vmatpush2.bf16.msra.mxu0 0
      %7019 = vmatprep.mubr.bf16.mxu0 0
      %7020 = vmatmul.mubr.bf16.gmra.mxu0 %v6901
      %v7021 = vpop.f32.mrf.mxu0
      %v7022 = vadd.f32 0.0, %v7021
      %v7023 = vpop.f32.mrf.mxu0
      %v7024 = vpop.f32.mrf.mxu0
      %v7025 = vadd.f32 0.0, %v7024
      %v7026 = vpop.f32.mrf.mxu0
      %7027 = vmatprep.mubr.bf16.mxu0 0
      %7028 = vmatmul.mubr.bf16.gmra.mxu0 %v6902
      %v7029 = vpop.f32.mrf.mxu0
      %v7030 = vadd.f32 0.0, %v7029
      %v7031 = vpop.f32.mrf.mxu0
      %v7032 = vpop.f32.mrf.mxu0
      %v7033 = vadd.f32 0.0, %v7032
      %v7034 = vpop.f32.mrf.mxu0
      %7035 = vmatprep.mubr.bf16.mxu0 0
      %7036 = vmatmul.mubr.bf16.gmra.mxu0 %v6903
      %v7037 = vpop.f32.mrf.mxu0
      %v7038 = vadd.f32 0.0, %v7037
      %v7039 = vpop.f32.mrf.mxu0
      %v7040 = vpop.f32.mrf.mxu0
      %v7041 = vadd.f32 0.0, %v7040
      %v7042 = vpop.f32.mrf.mxu0
      %7043 = vmatprep.mubr.bf16.mxu0 0
      %7044 = vmatmul.mubr.bf16.gmra.mxu0 %v6904
      %v7045 = vpop.f32.mrf.mxu0
      %v7046 = vadd.f32 0.0, %v7045
      %v7047 = vpop.f32.mrf.mxu0
      %v7048 = vpop.f32.mrf.mxu0
      %v7049 = vadd.f32 0.0, %v7048
      %v7050 = vpop.f32.mrf.mxu0
      %7051 = vmatprep.mubr.bf16.mxu0 0
      %7052 = vmatmul.mubr.bf16.gmra.mxu0 %v6905
      %v7053 = vpop.f32.mrf.mxu0
      %v7054 = vadd.f32 0.0, %v7053
      %v7055 = vpop.f32.mrf.mxu0
      %v7056 = vpop.f32.mrf.mxu0
      %v7057 = vadd.f32 0.0, %v7056
      %v7058 = vpop.f32.mrf.mxu0
      %7059 = vmatprep.mubr.bf16.mxu0 0
      %7060 = vmatmul.mubr.bf16.gmra.mxu0 %v6906
      %v7061 = vpop.f32.mrf.mxu0
      %v7062 = vadd.f32 0.0, %v7061
      %v7063 = vpop.f32.mrf.mxu0
      %v7064 = vpop.f32.mrf.mxu0
      %v7065 = vadd.f32 0.0, %v7064
      %v7066 = vpop.f32.mrf.mxu0
      %7067 = vmatprep.mubr.bf16.mxu0 0
      %7068 = vmatmul.mubr.bf16.gmra.mxu0 %v6907
      %v7069 = vpop.f32.mrf.mxu0
      %v7070 = vadd.f32 0.0, %v7069
      %v7071 = vpop.f32.mrf.mxu0
      %v7072 = vpop.f32.mrf.mxu0
      %v7073 = vadd.f32 0.0, %v7072
      %v7074 = vpop.f32.mrf.mxu0
      %7075 = vmatprep.mubr.bf16.mxu0 0
      %7076 = vmatmul.mubr.bf16.gmra.mxu0 %v6908
      %v7077 = vpop.f32.mrf.mxu0
      %v7078 = vadd.f32 0.0, %v7077
      %v7079 = vpop.f32.mrf.mxu0
      %v7080 = vpop.f32.mrf.mxu0
      %v7081 = vadd.f32 0.0, %v7080
      %v7082 = vpop.f32.mrf.mxu0
      %7083 = vmatprep.mubr.bf16.mxu0 0
      %7084 = vmatmul.mubr.bf16.gmra.mxu0 %v6909
      %v7085 = vpop.f32.mrf.mxu0
      %v7086 = vadd.f32 0.0, %v7085
      %v7087 = vpop.f32.mrf.mxu0
      %v7088 = vpop.f32.mrf.mxu0
      %v7089 = vadd.f32 0.0, %v7088
      %v7090 = vpop.f32.mrf.mxu0
      %7091 = vmatprep.mubr.bf16.mxu0 0
      %7092 = vmatmul.mubr.bf16.gmra.mxu0 %v6910
      %v7093 = vpop.f32.mrf.mxu0
      %v7094 = vadd.f32 0.0, %v7093
      %v7095 = vpop.f32.mrf.mxu0
      %v7096 = vpop.f32.mrf.mxu0
      %v7097 = vadd.f32 0.0, %v7096
      %v7098 = vpop.f32.mrf.mxu0
      %7099 = vmatprep.mubr.bf16.mxu0 0
      %7100 = vmatmul.mubr.bf16.gmra.mxu0 %v6911
      %v7101 = vpop.f32.mrf.mxu0
      %v7102 = vadd.f32 0.0, %v7101
      %v7103 = vpop.f32.mrf.mxu0
      %v7104 = vpop.f32.mrf.mxu0
      %v7105 = vadd.f32 0.0, %v7104
      %v7106 = vpop.f32.mrf.mxu0
      %7107 = vmatprep.mubr.bf16.mxu0 0
      %7108 = vmatmul.mubr.bf16.gmra.mxu0 %v6912
      %v7109 = vpop.f32.mrf.mxu0
      %v7110 = vadd.f32 0.0, %v7109
      %v7111 = vpop.f32.mrf.mxu0
      %v7112 = vpop.f32.mrf.mxu0
      %v7113 = vadd.f32 0.0, %v7112
      %v7114 = vpop.f32.mrf.mxu0
      %7115 = vmatprep.mubr.bf16.mxu0 0
      %7116 = vmatmul.mubr.bf16.gmra.mxu0 %v6913
      %v7117 = vpop.f32.mrf.mxu0
      %v7118 = vadd.f32 0.0, %v7117
      %v7119 = vpop.f32.mrf.mxu0
      %v7120 = vpop.f32.mrf.mxu0
      %v7121 = vadd.f32 0.0, %v7120
      %v7122 = vpop.f32.mrf.mxu0
      %7123 = vmatprep.mubr.bf16.mxu0 0
      %7124 = vmatmul.mubr.bf16.gmra.mxu0 %v6914
      %v7125 = vpop.f32.mrf.mxu0
      %v7126 = vadd.f32 0.0, %v7125
      %v7127 = vpop.f32.mrf.mxu0
      %v7128 = vpop.f32.mrf.mxu0
      %v7129 = vadd.f32 0.0, %v7128
      %v7130 = vpop.f32.mrf.mxu0
      %7131 = vmatprep.mubr.bf16.mxu0 0
      %7132 = vmatmul.mubr.bf16.gmra.mxu0 %v6915
      %v7133 = vpop.f32.mrf.mxu0
      %v7134 = vadd.f32 0.0, %v7133
      %v7135 = vpop.f32.mrf.mxu0
      %v7136 = vpop.f32.mrf.mxu0
      %v7137 = vadd.f32 0.0, %v7136
      %v7138 = vpop.f32.mrf.mxu0
      %7139 = vmatprep.mubr.bf16.mxu0 0
      %7140 = vmatmul.mubr.bf16.gmra.mxu0 %v6916
      %v7141 = vpop.f32.mrf.mxu0
      %v7142 = vadd.f32 0.0, %v7141
      %v7143 = vpop.f32.mrf.mxu0
      %v7144 = vpop.f32.mrf.mxu0
      %v7145 = vadd.f32 0.0, %v7144
      %v7146 = vpop.f32.mrf.mxu0
      %7147 = vmatprep.mubr.bf16.mxu0 0
      %7148 = vmatmul.mubr.bf16.gmra.mxu0 %v6917
      %v7149 = vpop.f32.mrf.mxu0
      %v7150 = vadd.f32 0.0, %v7149
      %v7151 = vpop.f32.mrf.mxu0
      %v7152 = vpop.f32.mrf.mxu0
      %v7153 = vadd.f32 0.0, %v7152
      %v7154 = vpop.f32.mrf.mxu0
      %7155 = vmatprep.mubr.bf16.mxu0 0
      %7156 = vmatmul.mubr.bf16.gmra.mxu0 %v6918
      %v7157 = vpop.f32.mrf.mxu0
      %v7158 = vadd.f32 0.0, %v7157
      %v7159 = vpop.f32.mrf.mxu0
      %v7160 = vpop.f32.mrf.mxu0
      %v7161 = vadd.f32 0.0, %v7160
      %v7162 = vpop.f32.mrf.mxu0
      %7163 = vmatprep.mubr.bf16.mxu0 0
      %7164 = vmatmul.mubr.bf16.gmra.mxu0 %v6919
      %v7165 = vpop.f32.mrf.mxu0
      %v7166 = vadd.f32 0.0, %v7165
      %v7167 = vpop.f32.mrf.mxu0
      %v7168 = vpop.f32.mrf.mxu0
      %v7169 = vadd.f32 0.0, %v7168
      %v7170 = vpop.f32.mrf.mxu0
      %7171 = vmatprep.mubr.bf16.mxu0 0
      %7172 = vmatmul.mubr.bf16.gmra.mxu0 %v6920
      %v7173 = vpop.f32.mrf.mxu0
      %v7174 = vadd.f32 0.0, %v7173
      %v7175 = vpop.f32.mrf.mxu0
      %v7176 = vpop.f32.mrf.mxu0
      %v7177 = vadd.f32 0.0, %v7176
      %v7178 = vpop.f32.mrf.mxu0
      %7179 = vmatprep.mubr.bf16.mxu0 0
      %7180 = vmatmul.mubr.bf16.gmra.mxu0 %v6921
      %v7181 = vpop.f32.mrf.mxu0
      %v7182 = vadd.f32 0.0, %v7181
      %v7183 = vpop.f32.mrf.mxu0
      %v7184 = vpop.f32.mrf.mxu0
      %v7185 = vpop.f32.mrf.mxu0
      %7186 = vdwg.mxu0
      %v7187 = vadd.f32 %v6819, %v7022
      %v7188 = vadd.f32 %v6820, %v7025
      %v7189 = vadd.f32 %v6821, %v7030
      %v7190 = vadd.f32 %v6822, %v7033
      %v7191 = vadd.f32 %v6823, %v7038
      %v7192 = vadd.f32 %v6824, %v7041
      %v7193 = vadd.f32 %v6825, %v7046
      %v7194 = vadd.f32 %v6826, %v7049
      %v7195 = vadd.f32 %v6827, %v7054
      %v7196 = vadd.f32 %v6828, %v7057
      %v7197 = vadd.f32 %v6829, %v7062
      %v7198 = vadd.f32 %v6830, %v7065
      %v7199 = vadd.f32 %v6831, %v7070
      %v7200 = vadd.f32 %v6832, %v7073
      %v7201 = vadd.f32 %v6833, %v7078
      %v7202 = vadd.f32 %v6834, %v7081
      %v7203 = vadd.f32 %v6835, %v7086
      %v7204 = vadd.f32 %v6836, %v7089
      %v7205 = vadd.f32 %v6837, %v7094
      %v7206 = vadd.f32 %v6838, %v7097
      %v7207 = vadd.f32 %v6839, %v7102
      %v7208 = vadd.f32 %v6840, %v7105
      %v7209 = vadd.f32 %v6841, %v7110
      %v7210 = vadd.f32 %v6842, %v7113
      %v7211 = vadd.f32 %v6843, %v7118
      %v7212 = vadd.f32 %v6844, %v7121
      %v7213 = vadd.f32 %v6845, %v7126
      %v7214 = vadd.f32 %v6846, %v7129
      %v7215 = vadd.f32 %v6847, %v7134
      %v7216 = vadd.f32 %v6848, %v7137
      %v7217 = vadd.f32 %v6849, %v7142
      %v7218 = vadd.f32 %v6850, %v7145
      %v7219 = vadd.f32 %v6851, %v7150
      %v7220 = vadd.f32 %v6852, %v7153
      %v7221 = vadd.f32 %v6853, %v7158
      %v7222 = vadd.f32 %v6854, %v7161
      %v7223 = vadd.f32 %v6855, %v7166
      %v7224 = vadd.f32 %v6856, %v7169
      %v7225 = vadd.f32 %v6857, %v7174
      %v7226 = vadd.f32 %v6858, %v7177
      %v7227 = vadd.f32 %v6859, %v7182
      %v7228 = vld [vmem:[%s5] sm:$0x1]
      %v7230 = vlaneseq
      %v7231 = vshrl.u32 %v7230, 7
      %v7232 = vsub.s32 0, %v7231
      %v7233 = vrot.slane %v7228, %v7232
      %v7235 = vadd.f32 %v7187, %v7233
      %v7236 = vadd.f32 %v7188, %v7233
      %v7237 = vadd.f32 %v7189, %v7233
      %v7238 = vadd.f32 %v7190, %v7233
      %v7239 = vadd.f32 %v7191, %v7233
      %v7240 = vadd.f32 %v7192, %v7233
      %v7241 = vadd.f32 %v7193, %v7233
      %v7242 = vadd.f32 %v7194, %v7233
      %v7243 = vadd.f32 %v7195, %v7233
      %v7244 = vadd.f32 %v7196, %v7233
      %v7245 = vadd.f32 %v7197, %v7233
      %v7246 = vadd.f32 %v7198, %v7233
      %v7247 = vadd.f32 %v7199, %v7233
      %v7248 = vadd.f32 %v7200, %v7233
      %v7249 = vadd.f32 %v7201, %v7233
      %v7250 = vadd.f32 %v7202, %v7233
      %v7251 = vadd.f32 %v7203, %v7233
      %v7252 = vadd.f32 %v7204, %v7233
      %v7253 = vadd.f32 %v7205, %v7233
      %v7254 = vadd.f32 %v7206, %v7233
      %v7255 = vadd.f32 %v7207, %v7233
      %v7256 = vadd.f32 %v7208, %v7233
      %v7257 = vadd.f32 %v7209, %v7233
      %v7258 = vadd.f32 %v7210, %v7233
      %v7259 = vadd.f32 %v7211, %v7233
      %v7260 = vadd.f32 %v7212, %v7233
      %v7261 = vadd.f32 %v7213, %v7233
      %v7262 = vadd.f32 %v7214, %v7233
      %v7263 = vadd.f32 %v7215, %v7233
      %v7264 = vadd.f32 %v7216, %v7233
      %v7265 = vadd.f32 %v7217, %v7233
      %v7266 = vadd.f32 %v7218, %v7233
      %v7267 = vadd.f32 %v7219, %v7233
      %v7268 = vadd.f32 %v7220, %v7233
      %v7269 = vadd.f32 %v7221, %v7233
      %v7270 = vadd.f32 %v7222, %v7233
      %v7271 = vadd.f32 %v7223, %v7233
      %v7272 = vadd.f32 %v7224, %v7233
      %v7273 = vadd.f32 %v7225, %v7233
      %v7274 = vadd.f32 %v7226, %v7233
      %v7275 = vadd.f32 %v7227, %v7233
      %v7276 = vmax.f32 %v7235, 0.0
      %v7277 = vmax.f32 %v7236, 0.0
      %v7278 = vmax.f32 %v7237, 0.0
      %v7279 = vmax.f32 %v7238, 0.0
      %v7280 = vmax.f32 %v7239, 0.0
      %v7281 = vmax.f32 %v7240, 0.0
      %v7282 = vmax.f32 %v7241, 0.0
      %v7283 = vmax.f32 %v7242, 0.0
      %v7284 = vmax.f32 %v7243, 0.0
      %v7285 = vmax.f32 %v7244, 0.0
      %v7286 = vmax.f32 %v7245, 0.0
      %v7287 = vmax.f32 %v7246, 0.0
      %v7288 = vmax.f32 %v7247, 0.0
      %v7289 = vmax.f32 %v7248, 0.0
      %v7290 = vmax.f32 %v7249, 0.0
      %v7291 = vmax.f32 %v7250, 0.0
      %v7292 = vmax.f32 %v7251, 0.0
      %v7293 = vmax.f32 %v7252, 0.0
      %v7294 = vmax.f32 %v7253, 0.0
      %v7295 = vmax.f32 %v7254, 0.0
      %v7296 = vmax.f32 %v7255, 0.0
      %v7297 = vmax.f32 %v7256, 0.0
      %v7298 = vmax.f32 %v7257, 0.0
      %v7299 = vmax.f32 %v7258, 0.0
      %v7300 = vmax.f32 %v7259, 0.0
      %v7301 = vmax.f32 %v7260, 0.0
      %v7302 = vmax.f32 %v7261, 0.0
      %v7303 = vmax.f32 %v7262, 0.0
      %v7304 = vmax.f32 %v7263, 0.0
      %v7305 = vmax.f32 %v7264, 0.0
      %v7306 = vmax.f32 %v7265, 0.0
      %v7307 = vmax.f32 %v7266, 0.0
      %v7308 = vmax.f32 %v7267, 0.0
      %v7309 = vmax.f32 %v7268, 0.0
      %v7310 = vmax.f32 %v7269, 0.0
      %v7311 = vmax.f32 %v7270, 0.0
      %v7312 = vmax.f32 %v7271, 0.0
      %v7313 = vmax.f32 %v7272, 0.0
      %v7314 = vmax.f32 %v7273, 0.0
      %v7315 = vmax.f32 %v7274, 0.0
      %v7316 = vmax.f32 %v7275, 0.0
      %v7317 = vld [vmem:[%s300 + $0x13] sm:$0xff]
      %v7318 = vld [vmem:[%s300 + $0x1b] sm:$0xff]
      %v7319 = vld [vmem:[%s300 + $0x23] sm:$0xff]
      %v7320 = vld [vmem:[%s300 + $0x2b] sm:$0xff]
      %v7321 = vld [vmem:[%s300 + $0x33] sm:$0xff]
      %v7322 = vld [vmem:[%s300 + $0x3b] sm:$0xff]
      %v7323 = vld [vmem:[%s300 + $0x43] sm:$0xff]
      %v7324 = vld [vmem:[%s300 + $0x4b] sm:$0xff]
      %v7325 = vld [vmem:[%s300 + $0x53] sm:$0xff]
      %v7326 = vld [vmem:[%s300 + $0x5b] sm:$0xff]
      %v7327 = vld [vmem:[%s300 + $0x63] sm:$0xff]
      %v7328 = vld [vmem:[%s300 + $0x6b] sm:$0xff]
      %v7329 = vld [vmem:[%s300 + $0x73] sm:$0xff]
      %v7330 = vld [vmem:[%s300 + $0x7b] sm:$0xff]
      %v7331 = vld [vmem:[%s300 + $0x83] sm:$0xff]
      %v7332 = vld [vmem:[%s300 + $0x8b] sm:$0xff]
      %v7333 = vld [vmem:[%s300 + $0x93] sm:$0xff]
      %v7334 = vld [vmem:[%s300 + $0x9b] sm:$0xff]
      %v7335 = vld [vmem:[%s300 + $0xa3] sm:$0xff]
      %v7336 = vld [vmem:[%s300 + $0xab] sm:$0xff]
      %v7337 = vld [vmem:[%s300 + $0xb3] sm:$0xff]
      %v7338 = vld [vmem:[%s300 + $0xbb] sm:$0xff]
      %v7339 = vld [vmem:[%s300 + $0xc3] sm:$0xff]
      %v7340 = vld [vmem:[%s300 + $0xcb] sm:$0xff]
      %v7341 = vld [vmem:[%s300 + $0xd3] sm:$0xff]
      %v7342 = vld [vmem:[%s300 + $0xdb] sm:$0xff]
      %v7343 = vld [vmem:[%s300 + $0xe3] sm:$0xff]
      %v7344 = vld [vmem:[%s300 + $0xeb] sm:$0xff]
      %v7345 = vld [vmem:[%s300 + $0xf3] sm:$0xff]
      %v7346 = vld [vmem:[%s300 + $0xfb] sm:$0xff]
      %v7347 = vld [vmem:[%s300 + $0x103] sm:$0xff]
      %v7348 = vld [vmem:[%s300 + $0x10b] sm:$0xff]
      %v7349 = vld [vmem:[%s300 + $0x113] sm:$0xff]
      %v7350 = vld [vmem:[%s300 + $0x11b] sm:$0xff]
      %v7351 = vld [vmem:[%s300 + $0x123] sm:$0xff]
      %v7352 = vld [vmem:[%s300 + $0x12b] sm:$0xff]
      %v7353 = vld [vmem:[%s300 + $0x133] sm:$0xff]
      %v7354 = vld [vmem:[%s300 + $0x13b] sm:$0xff]
      %v7355 = vld [vmem:[%s300 + $0x143] sm:$0xff]
      %v7356 = vld [vmem:[%s300 + $0x14b] sm:$0xff]
      %v7357 = vld [vmem:[%s300 + $0x153] sm:$0xf]
      %v7358 = vpack.c.bf16 %v7318, %v7317
      %v7359 = vpack.c.bf16 %v7320, %v7319
      %v7360 = vpack.c.bf16 %v7322, %v7321
      %v7361 = vpack.c.bf16 %v7324, %v7323
      %v7362 = vpack.c.bf16 %v7326, %v7325
      %v7363 = vpack.c.bf16 %v7328, %v7327
      %v7364 = vpack.c.bf16 %v7330, %v7329
      %v7365 = vpack.c.bf16 %v7332, %v7331
      %v7366 = vpack.c.bf16 %v7334, %v7333
      %v7367 = vpack.c.bf16 %v7336, %v7335
      %v7368 = vpack.c.bf16 %v7338, %v7337
      %v7369 = vpack.c.bf16 %v7340, %v7339
      %v7370 = vpack.c.bf16 %v7342, %v7341
      %v7371 = vpack.c.bf16 %v7344, %v7343
      %v7372 = vpack.c.bf16 %v7346, %v7345
      %v7373 = vpack.c.bf16 %v7348, %v7347
      %v7374 = vpack.c.bf16 %v7350, %v7349
      %v7375 = vpack.c.bf16 %v7352, %v7351
      %v7376 = vpack.c.bf16 %v7354, %v7353
      %v7377 = vpack.c.bf16 %v7356, %v7355
      %v7378 = vpack.c.bf16 %v7357, %v7357
      %v7379 = vld [vmem:[%s6] sm:$0xf]
      %v7380 = vld [vmem:[%s6 + $0x4] sm:$0xf]
      %v7381 = vld [vmem:[%s6 + $0x8] sm:$0xf]
      %v7382 = vld [vmem:[%s6 + $0xc] sm:$0xf]
      %v7383 = vld [vmem:[%s6 + $0x10] sm:$0xf]
      %v7384 = vld [vmem:[%s6 + $0x14] sm:$0xf]
      %v7385 = vld [vmem:[%s6 + $0x18] sm:$0xf]
      %v7386 = vld [vmem:[%s6 + $0x1c] sm:$0xf]
      %v7387 = vld [vmem:[%s6 + $0x20] sm:$0xf]
      %v7388 = vld [vmem:[%s6 + $0x24] sm:$0xf]
      %v7389 = vld [vmem:[%s6 + $0x28] sm:$0xf]
      %v7390 = vld [vmem:[%s6 + $0x2c] sm:$0xf]
      %v7391 = vld [vmem:[%s6 + $0x30] sm:$0xf]
      %v7392 = vld [vmem:[%s6 + $0x34] sm:$0xf]
      %v7393 = vld [vmem:[%s6 + $0x38] sm:$0xf]
      %v7394 = vld [vmem:[%s6 + $0x3c] sm:$0xf]
      %v7395 = vld [vmem:[%s7] sm:$0x1]
      %v7397 = vlaneseq
      %v7398 = vshrl.u32 %v7397, 7
      %v7399 = vsub.s32 0, %v7398
      %v7400 = vrot.slane %v7395, %v7399
      %v7418 = vunpack.c.l.b16 %v7379
      %v7419 = vunpack.c.l.b16 %v7380
      %v7420 = vunpack.c.l.b16 %v7381
      %v7421 = vunpack.c.l.b16 %v7382
      %v7422 = vunpack.c.l.b16 %v7383
      %v7423 = vunpack.c.l.b16 %v7384
      %v7424 = vunpack.c.l.b16 %v7385
      %v7425 = vunpack.c.l.b16 %v7386
      %v7426 = vunpack.c.l.b16 %v7387
      %v7427 = vunpack.c.l.b16 %v7388
      %v7428 = vunpack.c.l.b16 %v7389
      %v7429 = vunpack.c.l.b16 %v7390
      %v7430 = vunpack.c.l.b16 %v7391
      %v7431 = vunpack.c.l.b16 %v7392
      %v7432 = vunpack.c.l.b16 %v7393
      %v7433 = vunpack.c.l.b16 %v7394
      %v7434 = vpack.c.b16 %v7419, %v7418
      %v7435 = vpack.c.b16 %v7421, %v7420
      %v7436 = vpack.c.b16 %v7423, %v7422
      %v7437 = vpack.c.b16 %v7425, %v7424
      %v7438 = vpack.c.b16 %v7427, %v7426
      %v7439 = vpack.c.b16 %v7429, %v7428
      %v7440 = vpack.c.b16 %v7431, %v7430
      %v7441 = vpack.c.b16 %v7433, %v7432
      %7450 = vmatprep.subr.bf16.mxu0 0
      %7451 = vmatpush1.bf16.msra.mxu0 %v7441
      %7452 = vmatprep.subr.bf16.mxu0 0
      %7453 = vmatpush1.bf16.msra.mxu0 %v7440
      %7454 = vmatprep.subr.bf16.mxu0 0
      %7455 = vmatpush1.bf16.msra.mxu0 %v7439
      %7456 = vmatprep.subr.bf16.mxu0 0
      %7457 = vmatpush1.bf16.msra.mxu0 %v7438
      %7458 = vmatprep.subr.bf16.mxu0 0
      %7459 = vmatpush1.bf16.msra.mxu0 %v7437
      %7460 = vmatprep.subr.bf16.mxu0 0
      %7461 = vmatpush1.bf16.msra.mxu0 %v7436
      %7462 = vmatprep.subr.bf16.mxu0 0
      %7463 = vmatpush1.bf16.msra.mxu0 %v7435
      %7464 = vmatprep.subr.bf16.mxu0 0
      %7465 = vmatpush1.bf16.msra.mxu0 %v7434
      %7466 = vmatprep.subr.bf16.mxu0 0
      %7467 = vmatpush2.bf16.msra.mxu0 0
      %7468 = vmatprep.subr.bf16.mxu0 0
      %7469 = vmatpush2.bf16.msra.mxu0 0
      %7470 = vmatprep.subr.bf16.mxu0 0
      %7471 = vmatpush2.bf16.msra.mxu0 0
      %7472 = vmatprep.subr.bf16.mxu0 0
      %7473 = vmatpush2.bf16.msra.mxu0 0
      %7474 = vmatprep.subr.bf16.mxu0 0
      %7475 = vmatpush2.bf16.msra.mxu0 0
      %7476 = vmatprep.subr.bf16.mxu0 0
      %7477 = vmatpush2.bf16.msra.mxu0 0
      %7478 = vmatprep.subr.bf16.mxu0 0
      %7479 = vmatpush2.bf16.msra.mxu0 0
      %7480 = vmatprep.subr.bf16.mxu0 0
      %7481 = vmatpush2.bf16.msra.mxu0 0
      %7482 = vmatprep.mubr.bf16.mxu0 0
      %7483 = vmatmul.mubr.bf16.gmra.mxu0 %v7358
      %v7484 = vpop.f32.mrf.mxu0
      %v7485 = vadd.f32 %v7400, %v7484
      %v7486 = vpop.f32.mrf.mxu0
      %v7487 = vpop.f32.mrf.mxu0
      %v7488 = vadd.f32 %v7400, %v7487
      %v7489 = vpop.f32.mrf.mxu0
      %7490 = vmatprep.mubr.bf16.mxu0 0
      %7491 = vmatmul.mubr.bf16.gmra.mxu0 %v7359
      %v7492 = vpop.f32.mrf.mxu0
      %v7493 = vadd.f32 %v7400, %v7492
      %v7494 = vpop.f32.mrf.mxu0
      %v7495 = vpop.f32.mrf.mxu0
      %v7496 = vadd.f32 %v7400, %v7495
      %v7497 = vpop.f32.mrf.mxu0
      %7498 = vmatprep.mubr.bf16.mxu0 0
      %7499 = vmatmul.mubr.bf16.gmra.mxu0 %v7360
      %v7500 = vpop.f32.mrf.mxu0
      %v7501 = vadd.f32 %v7400, %v7500
      %v7502 = vpop.f32.mrf.mxu0
      %v7503 = vpop.f32.mrf.mxu0
      %v7504 = vadd.f32 %v7400, %v7503
      %v7505 = vpop.f32.mrf.mxu0
      %7506 = vmatprep.mubr.bf16.mxu0 0
      %7507 = vmatmul.mubr.bf16.gmra.mxu0 %v7361
      %v7508 = vpop.f32.mrf.mxu0
      %v7509 = vadd.f32 %v7400, %v7508
      %v7510 = vpop.f32.mrf.mxu0
      %v7511 = vpop.f32.mrf.mxu0
      %v7512 = vadd.f32 %v7400, %v7511
      %v7513 = vpop.f32.mrf.mxu0
      %7514 = vmatprep.mubr.bf16.mxu0 0
      %7515 = vmatmul.mubr.bf16.gmra.mxu0 %v7362
      %v7516 = vpop.f32.mrf.mxu0
      %v7517 = vadd.f32 %v7400, %v7516
      %v7518 = vpop.f32.mrf.mxu0
      %v7519 = vpop.f32.mrf.mxu0
      %v7520 = vadd.f32 %v7400, %v7519
      %v7521 = vpop.f32.mrf.mxu0
      %7522 = vmatprep.mubr.bf16.mxu0 0
      %7523 = vmatmul.mubr.bf16.gmra.mxu0 %v7363
      %v7524 = vpop.f32.mrf.mxu0
      %v7525 = vadd.f32 %v7400, %v7524
      %v7526 = vpop.f32.mrf.mxu0
      %v7527 = vpop.f32.mrf.mxu0
      %v7528 = vadd.f32 %v7400, %v7527
      %v7529 = vpop.f32.mrf.mxu0
      %7530 = vmatprep.mubr.bf16.mxu0 0
      %7531 = vmatmul.mubr.bf16.gmra.mxu0 %v7364
      %v7532 = vpop.f32.mrf.mxu0
      %v7533 = vadd.f32 %v7400, %v7532
      %v7534 = vpop.f32.mrf.mxu0
      %v7535 = vpop.f32.mrf.mxu0
      %v7536 = vadd.f32 %v7400, %v7535
      %v7537 = vpop.f32.mrf.mxu0
      %7538 = vmatprep.mubr.bf16.mxu0 0
      %7539 = vmatmul.mubr.bf16.gmra.mxu0 %v7365
      %v7540 = vpop.f32.mrf.mxu0
      %v7541 = vadd.f32 %v7400, %v7540
      %v7542 = vpop.f32.mrf.mxu0
      %v7543 = vpop.f32.mrf.mxu0
      %v7544 = vadd.f32 %v7400, %v7543
      %v7545 = vpop.f32.mrf.mxu0
      %7546 = vmatprep.mubr.bf16.mxu0 0
      %7547 = vmatmul.mubr.bf16.gmra.mxu0 %v7366
      %v7548 = vpop.f32.mrf.mxu0
      %v7549 = vadd.f32 %v7400, %v7548
      %v7550 = vpop.f32.mrf.mxu0
      %v7551 = vpop.f32.mrf.mxu0
      %v7552 = vadd.f32 %v7400, %v7551
      %v7553 = vpop.f32.mrf.mxu0
      %7554 = vmatprep.mubr.bf16.mxu0 0
      %7555 = vmatmul.mubr.bf16.gmra.mxu0 %v7367
      %v7556 = vpop.f32.mrf.mxu0
      %v7557 = vadd.f32 %v7400, %v7556
      %v7558 = vpop.f32.mrf.mxu0
      %v7559 = vpop.f32.mrf.mxu0
      %v7560 = vadd.f32 %v7400, %v7559
      %v7561 = vpop.f32.mrf.mxu0
      %7562 = vmatprep.mubr.bf16.mxu0 0
      %7563 = vmatmul.mubr.bf16.gmra.mxu0 %v7368
      %v7564 = vpop.f32.mrf.mxu0
      %v7565 = vadd.f32 %v7400, %v7564
      %v7566 = vpop.f32.mrf.mxu0
      %v7567 = vpop.f32.mrf.mxu0
      %v7568 = vadd.f32 %v7400, %v7567
      %v7569 = vpop.f32.mrf.mxu0
      %7570 = vmatprep.mubr.bf16.mxu0 0
      %7571 = vmatmul.mubr.bf16.gmra.mxu0 %v7369
      %v7572 = vpop.f32.mrf.mxu0
      %v7573 = vadd.f32 %v7400, %v7572
      %v7574 = vpop.f32.mrf.mxu0
      %v7575 = vpop.f32.mrf.mxu0
      %v7576 = vadd.f32 %v7400, %v7575
      %v7577 = vpop.f32.mrf.mxu0
      %7578 = vmatprep.mubr.bf16.mxu0 0
      %7579 = vmatmul.mubr.bf16.gmra.mxu0 %v7370
      %v7580 = vpop.f32.mrf.mxu0
      %v7581 = vadd.f32 %v7400, %v7580
      %v7582 = vpop.f32.mrf.mxu0
      %v7583 = vpop.f32.mrf.mxu0
      %v7584 = vadd.f32 %v7400, %v7583
      %v7585 = vpop.f32.mrf.mxu0
      %7586 = vmatprep.mubr.bf16.mxu0 0
      %7587 = vmatmul.mubr.bf16.gmra.mxu0 %v7371
      %v7588 = vpop.f32.mrf.mxu0
      %v7589 = vadd.f32 %v7400, %v7588
      %v7590 = vpop.f32.mrf.mxu0
      %v7591 = vpop.f32.mrf.mxu0
      %v7592 = vadd.f32 %v7400, %v7591
      %v7593 = vpop.f32.mrf.mxu0
      %7594 = vmatprep.mubr.bf16.mxu0 0
      %7595 = vmatmul.mubr.bf16.gmra.mxu0 %v7372
      %v7596 = vpop.f32.mrf.mxu0
      %v7597 = vadd.f32 %v7400, %v7596
      %v7598 = vpop.f32.mrf.mxu0
      %v7599 = vpop.f32.mrf.mxu0
      %v7600 = vadd.f32 %v7400, %v7599
      %v7601 = vpop.f32.mrf.mxu0
      %7602 = vmatprep.mubr.bf16.mxu0 0
      %7603 = vmatmul.mubr.bf16.gmra.mxu0 %v7373
      %v7604 = vpop.f32.mrf.mxu0
      %v7605 = vadd.f32 %v7400, %v7604
      %v7606 = vpop.f32.mrf.mxu0
      %v7607 = vpop.f32.mrf.mxu0
      %v7608 = vadd.f32 %v7400, %v7607
      %v7609 = vpop.f32.mrf.mxu0
      %7610 = vmatprep.mubr.bf16.mxu0 0
      %7611 = vmatmul.mubr.bf16.gmra.mxu0 %v7374
      %v7612 = vpop.f32.mrf.mxu0
      %v7613 = vadd.f32 %v7400, %v7612
      %v7614 = vpop.f32.mrf.mxu0
      %v7615 = vpop.f32.mrf.mxu0
      %v7616 = vadd.f32 %v7400, %v7615
      %v7617 = vpop.f32.mrf.mxu0
      %7618 = vmatprep.mubr.bf16.mxu0 0
      %7619 = vmatmul.mubr.bf16.gmra.mxu0 %v7375
      %v7620 = vpop.f32.mrf.mxu0
      %v7621 = vadd.f32 %v7400, %v7620
      %v7622 = vpop.f32.mrf.mxu0
      %v7623 = vpop.f32.mrf.mxu0
      %v7624 = vadd.f32 %v7400, %v7623
      %v7625 = vpop.f32.mrf.mxu0
      %7626 = vmatprep.mubr.bf16.mxu0 0
      %7627 = vmatmul.mubr.bf16.gmra.mxu0 %v7376
      %v7628 = vpop.f32.mrf.mxu0
      %v7629 = vadd.f32 %v7400, %v7628
      %v7630 = vpop.f32.mrf.mxu0
      %v7631 = vpop.f32.mrf.mxu0
      %v7632 = vadd.f32 %v7400, %v7631
      %v7633 = vpop.f32.mrf.mxu0
      %7634 = vmatprep.mubr.bf16.mxu0 0
      %7635 = vmatmul.mubr.bf16.gmra.mxu0 %v7377
      %v7636 = vpop.f32.mrf.mxu0
      %v7637 = vadd.f32 %v7400, %v7636
      %v7638 = vpop.f32.mrf.mxu0
      %v7639 = vpop.f32.mrf.mxu0
      %v7640 = vadd.f32 %v7400, %v7639
      %v7641 = vpop.f32.mrf.mxu0
      %7642 = vmatprep.mubr.bf16.mxu0 0
      %7643 = vmatmul.mubr.bf16.gmra.mxu0 %v7378
      %v7644 = vpop.f32.mrf.mxu0
      %v7645 = vadd.f32 %v7400, %v7644
      %v7646 = vpop.f32.mrf.mxu0
      %v7647 = vpop.f32.mrf.mxu0
      %v7648 = vpop.f32.mrf.mxu0
      %7649 = vdwg.mxu0
      %v7650 = vmax.f32 %v7485, 0.0
      %v7651 = vmax.f32 %v7488, 0.0
      %v7652 = vmax.f32 %v7493, 0.0
      %v7653 = vmax.f32 %v7496, 0.0
      %v7654 = vmax.f32 %v7501, 0.0
      %v7655 = vmax.f32 %v7504, 0.0
      %v7656 = vmax.f32 %v7509, 0.0
      %v7657 = vmax.f32 %v7512, 0.0
      %v7658 = vmax.f32 %v7517, 0.0
      %v7659 = vmax.f32 %v7520, 0.0
      %v7660 = vmax.f32 %v7525, 0.0
      %v7661 = vmax.f32 %v7528, 0.0
      %v7662 = vmax.f32 %v7533, 0.0
      %v7663 = vmax.f32 %v7536, 0.0
      %v7664 = vmax.f32 %v7541, 0.0
      %v7665 = vmax.f32 %v7544, 0.0
      %v7666 = vmax.f32 %v7549, 0.0
      %v7667 = vmax.f32 %v7552, 0.0
      %v7668 = vmax.f32 %v7557, 0.0
      %v7669 = vmax.f32 %v7560, 0.0
      %v7670 = vmax.f32 %v7565, 0.0
      %v7671 = vmax.f32 %v7568, 0.0
      %v7672 = vmax.f32 %v7573, 0.0
      %v7673 = vmax.f32 %v7576, 0.0
      %v7674 = vmax.f32 %v7581, 0.0
      %v7675 = vmax.f32 %v7584, 0.0
      %v7676 = vmax.f32 %v7589, 0.0
      %v7677 = vmax.f32 %v7592, 0.0
      %v7678 = vmax.f32 %v7597, 0.0
      %v7679 = vmax.f32 %v7600, 0.0
      %v7680 = vmax.f32 %v7605, 0.0
      %v7681 = vmax.f32 %v7608, 0.0
      %v7682 = vmax.f32 %v7613, 0.0
      %v7683 = vmax.f32 %v7616, 0.0
      %v7684 = vmax.f32 %v7621, 0.0
      %v7685 = vmax.f32 %v7624, 0.0
      %v7686 = vmax.f32 %v7629, 0.0
      %v7687 = vmax.f32 %v7632, 0.0
      %v7688 = vmax.f32 %v7637, 0.0
      %v7689 = vmax.f32 %v7640, 0.0
      %v7690 = vmax.f32 %v7645, 0.0
      %v7691 = vadd.f32 %v7276, %v7650
      %v7692 = vadd.f32 %v7277, %v7651
      %v7693 = vadd.f32 %v7278, %v7652
      %v7694 = vadd.f32 %v7279, %v7653
      %v7695 = vadd.f32 %v7280, %v7654
      %v7696 = vadd.f32 %v7281, %v7655
      %v7697 = vadd.f32 %v7282, %v7656
      %v7698 = vadd.f32 %v7283, %v7657
      %v7699 = vadd.f32 %v7284, %v7658
      %v7700 = vadd.f32 %v7285, %v7659
      %v7701 = vadd.f32 %v7286, %v7660
      %v7702 = vadd.f32 %v7287, %v7661
      %v7703 = vadd.f32 %v7288, %v7662
      %v7704 = vadd.f32 %v7289, %v7663
      %v7705 = vadd.f32 %v7290, %v7664
      %v7706 = vadd.f32 %v7291, %v7665
      %v7707 = vadd.f32 %v7292, %v7666
      %v7708 = vadd.f32 %v7293, %v7667
      %v7709 = vadd.f32 %v7294, %v7668
      %v7710 = vadd.f32 %v7295, %v7669
      %v7711 = vadd.f32 %v7296, %v7670
      %v7712 = vadd.f32 %v7297, %v7671
      %v7713 = vadd.f32 %v7298, %v7672
      %v7714 = vadd.f32 %v7299, %v7673
      %v7715 = vadd.f32 %v7300, %v7674
      %v7716 = vadd.f32 %v7301, %v7675
      %v7717 = vadd.f32 %v7302, %v7676
      %v7718 = vadd.f32 %v7303, %v7677
      %v7719 = vadd.f32 %v7304, %v7678
      %v7720 = vadd.f32 %v7305, %v7679
      %v7721 = vadd.f32 %v7306, %v7680
      %v7722 = vadd.f32 %v7307, %v7681
      %v7723 = vadd.f32 %v7308, %v7682
      %v7724 = vadd.f32 %v7309, %v7683
      %v7725 = vadd.f32 %v7310, %v7684
      %v7726 = vadd.f32 %v7311, %v7685
      %v7727 = vadd.f32 %v7312, %v7686
      %v7728 = vadd.f32 %v7313, %v7687
      %v7729 = vadd.f32 %v7314, %v7688
      %v7730 = vadd.f32 %v7315, %v7689
      %v7731 = vadd.f32 %v7316, %v7690
      %v7732 = vmul.f32 %v7691, %v3669
      %v7733 = vmul.f32 %v7692, %v3674
      %v7734 = vmul.f32 %v7693, %v3679
      %v7735 = vmul.f32 %v7694, %v3684
      %v7736 = vmul.f32 %v7695, %v3689
      %v7737 = vmul.f32 %v7696, %v3694
      %v7738 = vmul.f32 %v7697, %v3699
      %v7739 = vmul.f32 %v7698, %v3704
      %v7740 = vmul.f32 %v7699, %v3709
      %v7741 = vmul.f32 %v7700, %v3714
      %v7742 = vmul.f32 %v7701, %v3719
      %v7743 = vmul.f32 %v7702, %v3724
      %v7744 = vmul.f32 %v7703, %v3729
      %v7745 = vmul.f32 %v7704, %v3734
      %v7746 = vmul.f32 %v7705, %v3739
      %v7747 = vmul.f32 %v7706, %v3744
      %v7748 = vmul.f32 %v7707, %v3749
      %v7749 = vmul.f32 %v7708, %v3754
      %v7750 = vmul.f32 %v7709, %v3759
      %v7751 = vmul.f32 %v7710, %v3764
      %v7752 = vmul.f32 %v7711, %v3769
      %v7753 = vmul.f32 %v7712, %v3774
      %v7754 = vmul.f32 %v7713, %v3779
      %v7755 = vmul.f32 %v7714, %v3784
      %v7756 = vmul.f32 %v7715, %v3789
      %v7757 = vmul.f32 %v7716, %v3794
      %v7758 = vmul.f32 %v7717, %v3799
      %v7759 = vmul.f32 %v7718, %v3804
      %v7760 = vmul.f32 %v7719, %v3809
      %v7761 = vmul.f32 %v7720, %v3814
      %v7762 = vmul.f32 %v7721, %v3819
      %v7763 = vmul.f32 %v7722, %v3824
      %v7764 = vmul.f32 %v7723, %v3829
      %v7765 = vmul.f32 %v7724, %v3834
      %v7766 = vmul.f32 %v7725, %v3839
      %v7767 = vmul.f32 %v7726, %v3844
      %v7768 = vmul.f32 %v7727, %v3849
      %v7769 = vmul.f32 %v7728, %v3854
      %v7770 = vmul.f32 %v7729, %v3859
      %v7771 = vmul.f32 %v7730, %v3864
      %v7772 = vmul.f32 %v7731, %v3869
      %7773 = vst [vmem:[%s305] sm:$0xff] %v7732
      %7774 = vst [vmem:[%s305 + $0x8] sm:$0xff] %v7733
      %7775 = vst [vmem:[%s305 + $0x10] sm:$0xff] %v7734
      %7776 = vst [vmem:[%s305 + $0x18] sm:$0xff] %v7735
      %7777 = vst [vmem:[%s305 + $0x20] sm:$0xff] %v7736
      %7778 = vst [vmem:[%s305 + $0x28] sm:$0xff] %v7737
      %7779 = vst [vmem:[%s305 + $0x30] sm:$0xff] %v7738
      %7780 = vst [vmem:[%s305 + $0x38] sm:$0xff] %v7739
      %7781 = vst [vmem:[%s305 + $0x40] sm:$0xff] %v7740
      %7782 = vst [vmem:[%s305 + $0x48] sm:$0xff] %v7741
      %7783 = vst [vmem:[%s305 + $0x50] sm:$0xff] %v7742
      %7784 = vst [vmem:[%s305 + $0x58] sm:$0xff] %v7743
      %7785 = vst [vmem:[%s305 + $0x60] sm:$0xff] %v7744
      %7786 = vst [vmem:[%s305 + $0x68] sm:$0xff] %v7745
      %7787 = vst [vmem:[%s305 + $0x70] sm:$0xff] %v7746
      %7788 = vst [vmem:[%s305 + $0x78] sm:$0xff] %v7747
      %7789 = vst [vmem:[%s305 + $0x80] sm:$0xff] %v7748
      %7790 = vst [vmem:[%s305 + $0x88] sm:$0xff] %v7749
      %7791 = vst [vmem:[%s305 + $0x90] sm:$0xff] %v7750
      %7792 = vst [vmem:[%s305 + $0x98] sm:$0xff] %v7751
      %7793 = vst [vmem:[%s305 + $0xa0] sm:$0xff] %v7752
      %7794 = vst [vmem:[%s305 + $0xa8] sm:$0xff] %v7753
      %7795 = vst [vmem:[%s305 + $0xb0] sm:$0xff] %v7754
      %7796 = vst [vmem:[%s305 + $0xb8] sm:$0xff] %v7755
      %7797 = vst [vmem:[%s305 + $0xc0] sm:$0xff] %v7756
      %7798 = vst [vmem:[%s305 + $0xc8] sm:$0xff] %v7757
      %7799 = vst [vmem:[%s305 + $0xd0] sm:$0xff] %v7758
      %7800 = vst [vmem:[%s305 + $0xd8] sm:$0xff] %v7759
      %7801 = vst [vmem:[%s305 + $0xe0] sm:$0xff] %v7760
      %7802 = vst [vmem:[%s305 + $0xe8] sm:$0xff] %v7761
      %7803 = vst [vmem:[%s305 + $0xf0] sm:$0xff] %v7762
      %7804 = vst [vmem:[%s305 + $0xf8] sm:$0xff] %v7763
      %7805 = vst [vmem:[%s305 + $0x100] sm:$0xff] %v7764
      %7806 = vst [vmem:[%s305 + $0x108] sm:$0xff] %v7765
      %7807 = vst [vmem:[%s305 + $0x110] sm:$0xff] %v7766
      %7808 = vst [vmem:[%s305 + $0x118] sm:$0xff] %v7767
      %7809 = vst [vmem:[%s305 + $0x120] sm:$0xff] %v7768
      %7810 = vst [vmem:[%s305 + $0x128] sm:$0xff] %v7769
      %7811 = vst [vmem:[%s305 + $0x130] sm:$0xff] %v7770
      %7812 = vst [vmem:[%s305 + $0x138] sm:$0xff] %v7771
      %7813 = vst [vmem:[%s305 + $0x140] sm:$0xf] %v7772
      %p7814 = scmp.lt.s32.totalorder %s19, 1
      %s7815 = scalar_select %p7814, %s19, 1
      %s7816 = smul.addr %s7815, 41
      %s7817 = smul.addr %s7816, 8
      %s7818 = scalar_lea.vmem %s8, %s7817
      // Predicated region
      $region53: #{_lambda_.1} parent=51 // pred_check
        %p7819 = pneg %p210
      $region54: #{_lambda_.1} parent=51 // pred_check_branch
        %7821 = sbr.rel (%p7819) target = $region56
      $region55: #{_lambda_.1} parent=51 // pred_region
        _
      $region56: #{_lambda_.1} parent=51 // pred_fallthru
        _
    $region52: #{_lambda_.1} parent=5 // pred_fallthru
      _
    %p7822 = scmp.le.s32.totalorder 2, %s14
    // Predicated region
    $region57: #{_lambda_.1} parent=5 // pred_check
      %p7823 = pneg %p7822
    $region58: #{_lambda_.1} parent=5 // pred_check_branch
      %7825 = sbr.rel (%p7823) target = $region60
    $region59: #{_lambda_.1} parent=5 // pred_region
      %s7826 = ssub.s32 %s14, 2
      // Predicated region
      $region61: #{_lambda_.1} parent=59 // pred_check
        %p7827 = pneg %p216
      $region62: #{_lambda_.1} parent=59 // pred_check_branch
        %7829 = sbr.rel (%p7827) target = $region64
      $region63: #{_lambda_.1} parent=59 // pred_region
        %p7830 = scmp.lt.s32.totalorder %s20, 1
        %s7831 = scalar_select %p7830, %s20, 1
        %s7832 = smul.addr %s7831, 41
        %s7833 = smul.addr %s7832, 8
        %s7834 = scalar_lea.vmem %s8, %s7833
      $region64: #{_lambda_.1} parent=59 // pred_fallthru
        _
    $region60: #{_lambda_.1} parent=5 // pred_fallthru
      _
  $region6: #{_lambda_.1} parent=0 // loop_footer
    %s18 = sadd.s32 1, %s14
  $region7: #{_lambda_.1} parent=0 // loop_footer_branch
    %13 = sbr.rel target = $region3
  $region8: #{_lambda_.1} parent=0 // loop_exit
    _

</llo_original>
